<compile_context>
chip_gen: v7x
topology: tpu7x:2x2x1
jax: 0.10.0
libtpu: 0.0.40
codegen_flags: <defaults>
</compile_context>

<pallas_src>
import functools

import jax
import jax.numpy as jnp
import numpy as np
from jax.experimental import pallas as pl
from jax.experimental.pallas import tpu as pltpu

_BN_EPS = 1e-5
_LANE = 128                       # channel dims padded to a multiple of this
_TM = 512                         # M (row) tile; sweep 1024 on v5e/v6e
_VMEM_LIMIT = 64 * 1024 * 1024    # <= v7x physical (64 MiB); plenty of headroom


# ------------------------------- helpers ------------------------------------


def _round_up(x, m):
    return (x + m - 1) // m * m


def _pad1(v, n):
    return jnp.pad(v.astype(jnp.float32), (0, n - v.shape[0]))


def _pad2(a, rows, cols, dtype=None):
    if dtype is not None:
        a = a.astype(dtype)
    r, c = a.shape
    return jnp.pad(a, ((0, rows - r), (0, cols - c)))


def _bn_fold(gamma, beta, mean, var):
    scale = gamma / jnp.sqrt(var + _BN_EPS)
    bias = beta - mean * scale
    return scale, bias


def _compiler_params():
    # TODO(synk): on v7x at the largest ResNet stages, audit VMEM and mark the
    # constant-index weight / scale-bias blocks with pipeline_mode=pl.Buffered(1)
    # (kept default double-buffering here for robustness); on v5e/v6e sweep
    # tm=1024 with a ~96 MiB limit.
    return pltpu.CompilerParams(dimension_semantics=("parallel",),
                                vmem_limit_bytes=_VMEM_LIMIT)


def _pick_halo(tm, max_tap):
    """Smallest multiple of 8 that divides tm and covers `max_tap` halo rows."""
    for cand in range(8, tm + 1, 8):
        if tm % cand == 0 and cand >= max_tap:
            return cand
    return tm


# ----------------------------- Pallas kernels -------------------------------


def _matmul_bn_kernel(x_ref, w_ref, sb_ref, o_ref, *, relu):
    # y = [relu]( (x @ w) * scale + bias ); bf16 operands, f32 accumulate.
    scale = sb_ref[0:1, :]
    bias = sb_ref[1:2, :]
    y = jnp.dot(x_ref[...], w_ref[...], preferred_element_type=jnp.float32)
    y = y * scale + bias
    if relu:
        y = jnp.maximum(y, 0.0)
    o_ref[...] = y.astype(o_ref.dtype)


def _conv3x3_bn_relu_kernel(cur_ref, halo_ref, w_ref, sb_ref, o_ref, *, taps):
    # 3x3 conv as a single MXU matmul: build a bf16 im2col tile [tm, 9*cb]
    # from 9 row-shifted slices of (this tile ++ halo rows) and contract
    # against the [9*cb, np] weight; folded BN + ReLU epilogue.
    tm = cur_ref.shape[0]
    scale = sb_ref[0:1, :]
    bias = sb_ref[1:2, :]
    win = jnp.concatenate([cur_ref[...], halo_ref[...]], axis=0)        # bf16
    im2col = jnp.concatenate([win[off:off + tm, :] for off in taps], axis=1)
    y = jnp.dot(im2col, w_ref[...], preferred_element_type=jnp.float32)
    y = y * scale + bias
    o_ref[...] = jnp.maximum(y, 0.0).astype(o_ref.dtype)


def _proj_skip_add_relu_kernel(y_ref, xs_ref, w3_ref, ws_ref, sb_ref, o_ref):
    # out = relu( (y @ w3)*s3 + b3 + (x_s @ ws)*ss + bs )   (bf16 store)
    s3 = sb_ref[0:1, :]
    b3 = sb_ref[1:2, :]
    ss = sb_ref[2:3, :]
    bs = sb_ref[3:4, :]
    main = jnp.dot(y_ref[...], w3_ref[...], preferred_element_type=jnp.float32)
    skip = jnp.dot(xs_ref[...], ws_ref[...], preferred_element_type=jnp.float32)
    y = main * s3 + b3 + skip * ss + bs
    o_ref[...] = jnp.maximum(y, 0.0).astype(o_ref.dtype)


# ----------------------------- stage wrappers --------------------------------


def conv1x1_bn(x2d, w, scale, bias, *, relu, out_dtype=jnp.bfloat16, tm=_TM):
    """[M, K] @ [K, N] with folded BN (+ optional ReLU). Returns [M, N_pad]."""
    m, k = x2d.shape
    n_out = w.shape[1]
    kp, np_ = _round_up(k, _LANE), _round_up(n_out, _LANE)
    nt = pl.cdiv(m, tm)
    mp = nt * tm
    xw = _pad2(x2d, mp, kp, jnp.bfloat16)
    ww = _pad2(w, kp, np_, jnp.bfloat16)
    sb = jnp.stack([_pad1(scale, np_), _pad1(bias, np_)])
    cost = pl.CostEstimate(
        flops=2 * mp * kp * np_, transcendentals=0,
        bytes_accessed=2 * (mp * kp + kp * np_)
        + mp * np_ * jnp.dtype(out_dtype).itemsize)
    out = pl.pallas_call(
        functools.partial(_matmul_bn_kernel, relu=relu),
        out_shape=jax.ShapeDtypeStruct((mp, np_), out_dtype),
        grid_spec=pl.GridSpec(
            grid=(nt,),
            in_specs=[
                pl.BlockSpec((tm, kp), lambda i: (i, 0)),
                pl.BlockSpec((kp, np_), lambda i: (0, 0)),
                pl.BlockSpec((2, np_), lambda i: (0, 0)),
            ],
            out_specs=pl.BlockSpec((tm, np_), lambda i: (i, 0)),
        ),
        compiler_params=_compiler_params(),
        cost_estimate=cost,
    )(xw, ww, sb)
    return out[:m]


def conv3x3_bn_relu(ypf, w2_oihw, scale, bias, *, dilation, row_width, tm=_TM):
    """3x3 conv (+BN+ReLU) over the flattened, spatially padded input.

    ypf: [N*Hp*Wp, Cb_pad] bf16 (zero spatial padding already applied).
    w2_oihw: raw [Cout, Cin, 3, 3] conv weight.
    Returns [nt*tm, Cout_pad] bf16; rows past N*Hp*Wp and at spatial borders
    are junk and are sliced off by the caller (invariant: max(taps) <= halo).
    """
    mp_rows, cb = ypf.shape
    cout = w2_oihw.shape[0]
    np_ = _round_up(cout, _LANE)
    taps = tuple(kh * dilation * row_width + kw * dilation
                 for kh in range(3) for kw in range(3))
    max_tap = max(taps)
    tm = max(tm, _round_up(max_tap, _LANE))      # halo rows must fit in one tile
    halo = _pick_halo(tm, max_tap)               # small halo block (divides tm)
    halo_blocks = tm // halo
    nt = pl.cdiv(mp_rows, tm)
    rows_pad = nt * tm + halo                    # zero rows covering the last halo
    yw = jnp.pad(ypf, ((0, rows_pad - mp_rows), (0, 0)))
    # [kh, kw, Cin, Cout] rows grouped per tap, channel dims lane-padded.
    w2 = jnp.transpose(w2_oihw, (2, 3, 1, 0)).astype(jnp.bfloat16)
    w2 = jnp.pad(w2, ((0, 0), (0, 0),
                      (0, cb - w2.shape[2]), (0, np_ - w2.shape[3])))
    w2 = w2.reshape(9 * cb, np_)
    sb = jnp.stack([_pad1(scale, np_), _pad1(bias, np_)])
    cost = pl.CostEstimate(
        flops=2 * nt * tm * 9 * cb * np_, transcendentals=0,
        bytes_accessed=2 * (nt * (tm + halo) * cb + 9 * cb * np_
                            + nt * tm * np_))
    out = pl.pallas_call(
        functools.partial(_conv3x3_bn_relu_kernel, taps=taps),
        out_shape=jax.ShapeDtypeStruct((nt * tm, np_), jnp.bfloat16),
        grid_spec=pl.GridSpec(
            grid=(nt,),
            in_specs=[
                pl.BlockSpec((tm, cb), lambda i: (i, 0)),
                # small halo block starting right after the current tile
                pl.BlockSpec((halo, cb), lambda i: ((i + 1) * halo_blocks, 0)),
                pl.BlockSpec((9 * cb, np_), lambda i: (0, 0)),
                pl.BlockSpec((2, np_), lambda i: (0, 0)),
            ],
            out_specs=pl.BlockSpec((tm, np_), lambda i: (i, 0)),
        ),
        compiler_params=_compiler_params(),
        cost_estimate=cost,
    )(yw, yw, w2, sb)
    return out


def conv1x1_proj_skip_add_relu(y2, xs, w3, s3, b3, ws, ss, bs, *, tm=_TM):
    """Fused: out = relu( bn3(y2 @ w3) + bn_skip(xs @ ws) ) -> bf16 [M, Cf_pad]."""
    m, kmain = y2.shape                 # kmain already lane-padded
    kskip = xs.shape[1]
    cf = w3.shape[1]
    kskip_p = _round_up(kskip, _LANE)
    cf_p = _round_up(cf, _LANE)
    nt = pl.cdiv(m, tm)
    mp = nt * tm
    y2p = jnp.pad(y2, ((0, mp - m), (0, 0)))
    xsp = _pad2(xs, mp, kskip_p, jnp.bfloat16)
    w3p = _pad2(w3, kmain, cf_p, jnp.bfloat16)
    wsp = _pad2(ws, kskip_p, cf_p, jnp.bfloat16)
    sb = jnp.stack([_pad1(s3, cf_p), _pad1(b3, cf_p),
                    _pad1(ss, cf_p), _pad1(bs, cf_p)])
    cost = pl.CostEstimate(
        flops=2 * mp * (kmain + kskip_p) * cf_p, transcendentals=0,
        bytes_accessed=2 * (mp * (kmain + kskip_p) + (kmain + kskip_p) * cf_p)
        + 2 * mp * cf_p)
    out = pl.pallas_call(
        _proj_skip_add_relu_kernel,
        out_shape=jax.ShapeDtypeStruct((mp, cf_p), jnp.bfloat16),
        grid_spec=pl.GridSpec(
            grid=(nt,),
            in_specs=[
                pl.BlockSpec((tm, kmain), lambda i: (i, 0)),
                pl.BlockSpec((tm, kskip_p), lambda i: (i, 0)),
                pl.BlockSpec((kmain, cf_p), lambda i: (0, 0)),
                pl.BlockSpec((kskip_p, cf_p), lambda i: (0, 0)),
                pl.BlockSpec((4, cf_p), lambda i: (0, 0)),
            ],
            out_specs=pl.BlockSpec((tm, cf_p), lambda i: (i, 0)),
        ),
        compiler_params=_compiler_params(),
        cost_estimate=cost,
    )(y2p, xsp, w3p, wsp, sb)
    return out[:m]


# ------------------------------ forward pass ---------------------------------


def bottleneck_block_forward(x_nchw, params, *, stride=1, dilation=1):
    """Forward pass of BottleneckBlock. Input/output layout: NCHW (PyTorch)."""
    assert stride in (1, 2)
    n, cin, h, w = x_nchw.shape
    base = params["w1"].shape[0]
    cfin = 4 * base

    # NOTE: inside a full network keep activations NHWC (bf16, lane-padded)
    # end-to-end and drop these boundary transposes/casts.
    x_nhwc = jnp.transpose(x_nchw, (0, 2, 3, 1)).astype(jnp.bfloat16)

    # --- main path: conv1x1 -> BN -> ReLU ---
    s1, b1 = _bn_fold(*params["bn1"])
    y1 = conv1x1_bn(x_nhwc.reshape(n * h * w, cin),
                    params["w1"][:, :, 0, 0].T, s1, b1, relu=True)
    cb_p = y1.shape[1]                                   # lane-padded base

    # --- main path: conv3x3 (stride, dilation, pad=dilation) -> BN -> ReLU ---
    pad = dilation
    hp, wp = h + 2 * pad, w + 2 * pad
    y1p = jnp.pad(y1.reshape(n, h, w, cb_p),
                  ((0, 0), (pad, pad), (pad, pad), (0, 0)))
    s2, b2 = _bn_fold(*params["bn2"])
    y2f = conv3x3_bn_relu(y1p.reshape(n * hp * wp, cb_p), params["w2"],
                          s2, b2, dilation=dilation, row_width=wp)
    y2 = y2f[:n * hp * wp].reshape(n, hp, wp, cb_p)[:, :h:stride, :w:stride, :]
    ho, wo = y2.shape[1], y2.shape[2]

    # --- conv1x1 -> BN fused with skip conv1x1 -> BN, residual add, ReLU ---
    s3, b3 = _bn_fold(*params["bn3"])
    ss, bs = _bn_fold(*params["bn_skip"])
    x_s = x_nhwc[:, ::stride, ::stride, :].reshape(n * ho * wo, cin)
    out = conv1x1_proj_skip_add_relu(
        y2.reshape(n * ho * wo, cb_p), x_s,
        params["w3"][:, :, 0, 0].T, s3, b3,
        params["w_skip"][:, :, 0, 0].T, ss, bs)          # [N*Ho*Wo, Cf_p] bf16

    out = out.reshape(n, ho, wo, -1)[..., :cfin]
    # Boundary cast back to f32 to match the PyTorch module's output dtype.
    return jnp.transpose(out, (0, 3, 1, 2)).astype(jnp.float32)


# --------------------------- pure-JAX reference ------------------------------


def _ref_forward(x, params, *, stride, dilation):
    def conv(x, w, s=1, d=1, p=0):
        return jax.lax.conv_general_dilated(
            x, w, window_strides=(s, s), padding=[(p, p), (p, p)],
            rhs_dilation=(d, d), dimension_numbers=("NCHW", "OIHW", "NCHW"))

    def bn(x, stats):
        g, b, m, v = stats
        sh = (1, -1, 1, 1)
        return g.reshape(sh) * (x - m.reshape(sh)) / jnp.sqrt(
            v.reshape(sh) + _BN_EPS) + b.reshape(sh)

    y = jax.nn.relu(bn(conv(x, params["w1"]), params["bn1"]))
    y = jax.nn.relu(bn(conv(y, params["w2"], s=stride, d=dilation, p=dilation),
                       params["bn2"]))
    y = bn(conv(y, params["w3"]), params["bn3"])
    skip = bn(conv(x, params["w_skip"], s=stride), params["bn_skip"])
    return jax.nn.relu(y + skip)


# --------------------------------- main ---------------------------------------


def _init_params(key, in_channels, base):
    cfin = 4 * base
    ks = jax.random.split(key, 20)

    def bn_stats(k, c):
        k1, k2, k3, k4 = jax.random.split(k, 4)
        gamma = jax.random.uniform(k1, (c,), jnp.float32, 0.5, 1.5)
        beta = 0.1 * jax.random.normal(k2, (c,), jnp.float32)
        mean = 0.1 * jax.random.normal(k3, (c,), jnp.float32)
        var = jax.random.uniform(k4, (c,), jnp.float32, 0.5, 1.5)
        return (gamma, beta, mean, var)

    return {
        "w1": 0.1 * jax.random.normal(ks[0], (base, in_channels, 1, 1), jnp.float32),
        "bn1": bn_stats(ks[1], base),
        "w2": 0.1 * jax.random.normal(ks[2], (base, base, 3, 3), jnp.float32),
        "bn2": bn_stats(ks[3], base),
        "w3": 0.1 * jax.random.normal(ks[4], (cfin, base, 1, 1), jnp.float32),
        "bn3": bn_stats(ks[5], cfin),
        "w_skip": 0.1 * jax.random.normal(ks[6], (cfin, in_channels, 1, 1), jnp.float32),
        "bn_skip": bn_stats(ks[7], cfin),
    }


if __name__ == "__main__":
    N, CIN, H, W = 2, 4, 16, 16
    BASE = 4
    STRIDE, DILATION = 1, 1

    key = jax.random.PRNGKey(0)
    kx, kp = jax.random.split(key)
    x = jax.random.normal(kx, (N, CIN, H, W), jnp.float32)
    params = _init_params(kp, CIN, BASE)

    fwd = jax.jit(functools.partial(bottleneck_block_forward,
                                    stride=STRIDE, dilation=DILATION))
    out = jax.block_until_ready(fwd(x, params))

    ref = jax.block_until_ready(
        _ref_forward(x, params, stride=STRIDE, dilation=DILATION))
    # bf16 MXU operands with f32 accumulation plus a bf16 final store ->
    # bf16-level tolerance vs the f32 reference.
    np.testing.assert_allclose(np.asarray(out), np.asarray(ref),
                               rtol=3e-2, atol=3e-2)

    print("KERNEL_OK")
</pallas_src>

<mosaic_0001>
module attributes {stable_mosaic.version = 11 : i64} {
  func.func @_matmul_bn_kernel(%arg0: i32, %arg1: memref<512x128xbf16, #tpu.memory_space<vmem>>, %arg2: memref<128x128xbf16, #tpu.memory_space<vmem>>, %arg3: memref<2x128xf32, #tpu.memory_space<vmem>>, %arg4: memref<512x128xbf16, #tpu.memory_space<vmem>>) attributes {dimension_semantics = [#tpu.dimension_semantics<parallel>], iteration_bounds = array<i64: 1>, scalar_prefetch = 0 : i64, scratch_operands = 0 : i64, tpu.core_type = #tpu.core_type<tc>, window_params = [{transform_indices = @transform_0, window_bounds = array<i64: 512, 128>}, {pipeline_mode = #tpu.pipeline_mode<synchronous>, transform_indices = @transform_1, window_bounds = array<i64: 128, 128>}, {pipeline_mode = #tpu.pipeline_mode<synchronous>, transform_indices = @transform_2, window_bounds = array<i64: 2, 128>}, {transform_indices = @transform_3, window_bounds = array<i64: 512, 128>}]} {
    %c0 = arith.constant 0 : index
    %c0_0 = arith.constant 0 : index
    %0 = vector.load %arg3[%c0, %c0_0] : memref<2x128xf32, #tpu.memory_space<vmem>>, vector<1x128xf32>
    %c1 = arith.constant 1 : index
    %c0_1 = arith.constant 0 : index
    %1 = vector.load %arg3[%c1, %c0_1] : memref<2x128xf32, #tpu.memory_space<vmem>>, vector<1x128xf32>
    %c0_2 = arith.constant 0 : index
    %c0_3 = arith.constant 0 : index
    %2 = vector.load %arg1[%c0_2, %c0_3] : memref<512x128xbf16, #tpu.memory_space<vmem>>, vector<512x128xbf16>
    %c0_4 = arith.constant 0 : index
    %c0_5 = arith.constant 0 : index
    %3 = vector.load %arg2[%c0_4, %c0_5] : memref<128x128xbf16, #tpu.memory_space<vmem>>, vector<128x128xbf16>
    %cst = arith.constant dense<0.000000e+00> : vector<512x128xf32>
    %4 = tpu.matmul %2, %3, %cst {dimension_numbers = #tpu.dot_dimension_numbers<[1], [0], [0], [1], [0, 0, 1, 1], [], []>} : vector<512x128xbf16>, vector<128x128xbf16>, vector<512x128xf32> -> vector<512x128xf32>
    %5 = vector.broadcast %0 : vector<1x128xf32> to vector<512x128xf32>
    %6 = arith.mulf %4, %5 : vector<512x128xf32>
    %7 = vector.broadcast %1 : vector<1x128xf32> to vector<512x128xf32>
    %8 = arith.addf %6, %7 : vector<512x128xf32>
    %cst_6 = arith.constant 0.000000e+00 : f32
    %9 = vector.broadcast %cst_6 : f32 to vector<512x128xf32>
    %10 = arith.maximumf %8, %9 : vector<512x128xf32>
    %11 = arith.truncf %10 : vector<512x128xf32> to vector<512x128xbf16>
    %c0_7 = arith.constant 0 : index
    %c0_8 = arith.constant 0 : index
    %12 = vector.load %arg4[%c0_7, %c0_8] : memref<512x128xbf16, #tpu.memory_space<vmem>>, vector<512x128xbf16>
    tpu.vector_store %arg4[%c0_7, %c0_8], %11 {strides = array<i32>} : memref<512x128xbf16, #tpu.memory_space<vmem>>, vector<512x128xbf16>,
    return
  }
  func.func @transform_0(%arg0: i32) -> (i32, i32) {
    %c0_i32 = arith.constant 0 : i32
    %c0_i32_0 = arith.constant 0 : i32
    return %arg0, %c0_i32 : i32, i32
  }
  func.func @transform_1(%arg0: i32) -> (i32, i32) {
    %c0_i32 = arith.constant 0 : i32
    %c0_i32_0 = arith.constant 0 : i32
    %c0_i32_1 = arith.constant 0 : i32
    return %c0_i32, %c0_i32_0 : i32, i32
  }
  func.func @transform_2(%arg0: i32) -> (i32, i32) {
    %c0_i32 = arith.constant 0 : i32
    %c0_i32_0 = arith.constant 0 : i32
    %c0_i32_1 = arith.constant 0 : i32
    return %c0_i32, %c0_i32_0 : i32, i32
  }
  func.func @transform_3(%arg0: i32) -> (i32, i32) {
    %c0_i32 = arith.constant 0 : i32
    %c0_i32_0 = arith.constant 0 : i32
    return %arg0, %c0_i32 : i32, i32
  }
}

module attributes {stable_mosaic.version = 11 : i64} {
  func.func @_conv3x3_bn_relu_kernel(%arg0: i32, %arg1: memref<512x128xbf16, #tpu.memory_space<vmem>>, %arg2: memref<64x128xbf16, #tpu.memory_space<vmem>>, %arg3: memref<1152x128xbf16, #tpu.memory_space<vmem>>, %arg4: memref<2x128xf32, #tpu.memory_space<vmem>>, %arg5: memref<512x128xbf16, #tpu.memory_space<vmem>>) attributes {dimension_semantics = [#tpu.dimension_semantics<parallel>], iteration_bounds = array<i64: 2>, scalar_prefetch = 0 : i64, scratch_operands = 0 : i64, tpu.core_type = #tpu.core_type<tc>, window_params = [{transform_indices = @transform_0, window_bounds = array<i64: 512, 128>}, {transform_indices = @transform_1, window_bounds = array<i64: 64, 128>}, {pipeline_mode = #tpu.pipeline_mode<synchronous>, transform_indices = @transform_2, window_bounds = array<i64: 1152, 128>}, {pipeline_mode = #tpu.pipeline_mode<synchronous>, transform_indices = @transform_3, window_bounds = array<i64: 2, 128>}, {transform_indices = @transform_4, window_bounds = array<i64: 512, 128>}]} {
    %c0 = arith.constant 0 : index
    %c0_0 = arith.constant 0 : index
    %0 = vector.load %arg4[%c0, %c0_0] : memref<2x128xf32, #tpu.memory_space<vmem>>, vector<1x128xf32>
    %c1 = arith.constant 1 : index
    %c0_1 = arith.constant 0 : index
    %1 = vector.load %arg4[%c1, %c0_1] : memref<2x128xf32, #tpu.memory_space<vmem>>, vector<1x128xf32>
    %c0_2 = arith.constant 0 : index
    %c0_3 = arith.constant 0 : index
    %2 = vector.load %arg1[%c0_2, %c0_3] : memref<512x128xbf16, #tpu.memory_space<vmem>>, vector<512x128xbf16>
    %c0_4 = arith.constant 0 : index
    %c0_5 = arith.constant 0 : index
    %3 = vector.load %arg2[%c0_4, %c0_5] : memref<64x128xbf16, #tpu.memory_space<vmem>>, vector<64x128xbf16>
    %4 = tpu.concatenate %2, %3 in 0 : vector<512x128xbf16>, vector<64x128xbf16> -> vector<576x128xbf16>
    %5 = vector.extract_strided_slice %4 {offsets = [0, 0], sizes = [512, 128], strides = [1, 1]} : vector<576x128xbf16> to vector<512x128xbf16>
    %6 = vector.extract_strided_slice %4 {offsets = [1, 0], sizes = [512, 128], strides = [1, 1]} : vector<576x128xbf16> to vector<512x128xbf16>
    %7 = vector.extract_strided_slice %4 {offsets = [2, 0], sizes = [512, 128], strides = [1, 1]} : vector<576x128xbf16> to vector<512x128xbf16>
    %8 = vector.extract_strided_slice %4 {offsets = [18, 0], sizes = [512, 128], strides = [1, 1]} : vector<576x128xbf16> to vector<512x128xbf16>
    %9 = vector.extract_strided_slice %4 {offsets = [19, 0], sizes = [512, 128], strides = [1, 1]} : vector<576x128xbf16> to vector<512x128xbf16>
    %10 = vector.extract_strided_slice %4 {offsets = [20, 0], sizes = [512, 128], strides = [1, 1]} : vector<576x128xbf16> to vector<512x128xbf16>
    %11 = vector.extract_strided_slice %4 {offsets = [36, 0], sizes = [512, 128], strides = [1, 1]} : vector<576x128xbf16> to vector<512x128xbf16>
    %12 = vector.extract_strided_slice %4 {offsets = [37, 0], sizes = [512, 128], strides = [1, 1]} : vector<576x128xbf16> to vector<512x128xbf16>
    %13 = vector.extract_strided_slice %4 {offsets = [38, 0], sizes = [512, 128], strides = [1, 1]} : vector<576x128xbf16> to vector<512x128xbf16>
    %14 = tpu.concatenate %5, %6, %7, %8, %9, %10, %11, %12, %13 in 1 : vector<512x128xbf16>, vector<512x128xbf16>, vector<512x128xbf16>, vector<512x128xbf16>, vector<512x128xbf16>, vector<512x128xbf16>, vector<512x128xbf16>, vector<512x128xbf16>, vector<512x128xbf16> -> vector<512x1152xbf16>
    %c0_6 = arith.constant 0 : index
    %c0_7 = arith.constant 0 : index
    %15 = vector.load %arg3[%c0_6, %c0_7] : memref<1152x128xbf16, #tpu.memory_space<vmem>>, vector<1152x128xbf16>
    %cst = arith.constant dense<0.000000e+00> : vector<512x128xf32>
    %16 = tpu.matmul %14, %15, %cst {dimension_numbers = #tpu.dot_dimension_numbers<[1], [0], [0], [1], [0, 0, 1, 1], [], []>} : vector<512x1152xbf16>, vector<1152x128xbf16>, vector<512x128xf32> -> vector<512x128xf32>
    %17 = vector.broadcast %0 : vector<1x128xf32> to vector<512x128xf32>
    %18 = arith.mulf %16, %17 : vector<512x128xf32>
    %19 = vector.broadcast %1 : vector<1x128xf32> to vector<512x128xf32>
    %20 = arith.addf %18, %19 : vector<512x128xf32>
    %cst_8 = arith.constant 0.000000e+00 : f32
    %21 = vector.broadcast %cst_8 : f32 to vector<512x128xf32>
    %22 = arith.maximumf %20, %21 : vector<512x128xf32>
    %23 = arith.truncf %22 : vector<512x128xf32> to vector<512x128xbf16>
    %c0_9 = arith.constant 0 : index
    %c0_10 = arith.constant 0 : index
    %24 = vector.load %arg5[%c0_9, %c0_10] : memref<512x128xbf16, #tpu.memory_space<vmem>>, vector<512x128xbf16>
    tpu.vector_store %arg5[%c0_9, %c0_10], %23 {strides = array<i32>} : memref<512x128xbf16, #tpu.memory_space<vmem>>, vector<512x128xbf16>,
    return
  }
  func.func @transform_0(%arg0: i32) -> (i32, i32) {
    %c0_i32 = arith.constant 0 : i32
    %c0_i32_0 = arith.constant 0 : i32
    return %arg0, %c0_i32 : i32, i32
  }
  func.func @transform_1(%arg0: i32) -> (i32, i32) {
    %c1_i32 = arith.constant 1 : i32
    %0 = arith.addi %arg0, %c1_i32 : i32
    %c8_i32 = arith.constant 8 : i32
    %1 = arith.muli %0, %c8_i32 : i32
    %c0_i32 = arith.constant 0 : i32
    %c0_i32_0 = arith.constant 0 : i32
    return %1, %c0_i32 : i32, i32
  }
  func.func @transform_2(%arg0: i32) -> (i32, i32) {
    %c0_i32 = arith.constant 0 : i32
    %c0_i32_0 = arith.constant 0 : i32
    %c0_i32_1 = arith.constant 0 : i32
    return %c0_i32, %c0_i32_0 : i32, i32
  }
  func.func @transform_3(%arg0: i32) -> (i32, i32) {
    %c0_i32 = arith.constant 0 : i32
    %c0_i32_0 = arith.constant 0 : i32
    %c0_i32_1 = arith.constant 0 : i32
    return %c0_i32, %c0_i32_0 : i32, i32
  }
  func.func @transform_4(%arg0: i32) -> (i32, i32) {
    %c0_i32 = arith.constant 0 : i32
    %c0_i32_0 = arith.constant 0 : i32
    return %arg0, %c0_i32 : i32, i32
  }
}

module attributes {stable_mosaic.version = 11 : i64} {
  func.func @_proj_skip_add_relu_kernel(%arg0: i32, %arg1: memref<512x128xbf16, #tpu.memory_space<vmem>>, %arg2: memref<512x128xbf16, #tpu.memory_space<vmem>>, %arg3: memref<128x128xbf16, #tpu.memory_space<vmem>>, %arg4: memref<128x128xbf16, #tpu.memory_space<vmem>>, %arg5: memref<4x128xf32, #tpu.memory_space<vmem>>, %arg6: memref<512x128xbf16, #tpu.memory_space<vmem>>) attributes {dimension_semantics = [#tpu.dimension_semantics<parallel>], iteration_bounds = array<i64: 1>, scalar_prefetch = 0 : i64, scratch_operands = 0 : i64, tpu.core_type = #tpu.core_type<tc>, window_params = [{transform_indices = @transform_0, window_bounds = array<i64: 512, 128>}, {transform_indices = @transform_1, window_bounds = array<i64: 512, 128>}, {pipeline_mode = #tpu.pipeline_mode<synchronous>, transform_indices = @transform_2, window_bounds = array<i64: 128, 128>}, {pipeline_mode = #tpu.pipeline_mode<synchronous>, transform_indices = @transform_3, window_bounds = array<i64: 128, 128>}, {pipeline_mode = #tpu.pipeline_mode<synchronous>, transform_indices = @transform_4, window_bounds = array<i64: 4, 128>}, {transform_indices = @transform_5, window_bounds = array<i64: 512, 128>}]} {
    %c0 = arith.constant 0 : index
    %c0_0 = arith.constant 0 : index
    %0 = vector.load %arg5[%c0, %c0_0] : memref<4x128xf32, #tpu.memory_space<vmem>>, vector<1x128xf32>
    %c1 = arith.constant 1 : index
    %c0_1 = arith.constant 0 : index
    %1 = vector.load %arg5[%c1, %c0_1] : memref<4x128xf32, #tpu.memory_space<vmem>>, vector<1x128xf32>
    %c2 = arith.constant 2 : index
    %c0_2 = arith.constant 0 : index
    %2 = vector.load %arg5[%c2, %c0_2] : memref<4x128xf32, #tpu.memory_space<vmem>>, vector<1x128xf32>
    %c3 = arith.constant 3 : index
    %c0_3 = arith.constant 0 : index
    %3 = vector.load %arg5[%c3, %c0_3] : memref<4x128xf32, #tpu.memory_space<vmem>>, vector<1x128xf32>
    %c0_4 = arith.constant 0 : index
    %c0_5 = arith.constant 0 : index
    %4 = vector.load %arg1[%c0_4, %c0_5] : memref<512x128xbf16, #tpu.memory_space<vmem>>, vector<512x128xbf16>
    %c0_6 = arith.constant 0 : index
    %c0_7 = arith.constant 0 : index
    %5 = vector.load %arg3[%c0_6, %c0_7] : memref<128x128xbf16, #tpu.memory_space<vmem>>, vector<128x128xbf16>
    %cst = arith.constant dense<0.000000e+00> : vector<512x128xf32>
    %6 = tpu.matmul %4, %5, %cst {dimension_numbers = #tpu.dot_dimension_numbers<[1], [0], [0], [1], [0, 0, 1, 1], [], []>} : vector<512x128xbf16>, vector<128x128xbf16>, vector<512x128xf32> -> vector<512x128xf32>
    %c0_8 = arith.constant 0 : index
    %c0_9 = arith.constant 0 : index
    %7 = vector.load %arg2[%c0_8, %c0_9] : memref<512x128xbf16, #tpu.memory_space<vmem>>, vector<512x128xbf16>
    %c0_10 = arith.constant 0 : index
    %c0_11 = arith.constant 0 : index
    %8 = vector.load %arg4[%c0_10, %c0_11] : memref<128x128xbf16, #tpu.memory_space<vmem>>, vector<128x128xbf16>
    %cst_12 = arith.constant dense<0.000000e+00> : vector<512x128xf32>
    %9 = tpu.matmul %7, %8, %cst_12 {dimension_numbers = #tpu.dot_dimension_numbers<[1], [0], [0], [1], [0, 0, 1, 1], [], []>} : vector<512x128xbf16>, vector<128x128xbf16>, vector<512x128xf32> -> vector<512x128xf32>
    %10 = vector.broadcast %0 : vector<1x128xf32> to vector<512x128xf32>
    %11 = arith.mulf %6, %10 : vector<512x128xf32>
    %12 = vector.broadcast %1 : vector<1x128xf32> to vector<512x128xf32>
    %13 = arith.addf %11, %12 : vector<512x128xf32>
    %14 = vector.broadcast %2 : vector<1x128xf32> to vector<512x128xf32>
    %15 = arith.mulf %9, %14 : vector<512x128xf32>
    %16 = arith.addf %13, %15 : vector<512x128xf32>
    %17 = vector.broadcast %3 : vector<1x128xf32> to vector<512x128xf32>
    %18 = arith.addf %16, %17 : vector<512x128xf32>
    %cst_13 = arith.constant 0.000000e+00 : f32
    %19 = vector.broadcast %cst_13 : f32 to vector<512x128xf32>
    %20 = arith.maximumf %18, %19 : vector<512x128xf32>
    %21 = arith.truncf %20 : vector<512x128xf32> to vector<512x128xbf16>
    %c0_14 = arith.constant 0 : index
    %c0_15 = arith.constant 0 : index
    %22 = vector.load %arg6[%c0_14, %c0_15] : memref<512x128xbf16, #tpu.memory_space<vmem>>, vector<512x128xbf16>
    tpu.vector_store %arg6[%c0_14, %c0_15], %21 {strides = array<i32>} : memref<512x128xbf16, #tpu.memory_space<vmem>>, vector<512x128xbf16>,
    return
  }
  func.func @transform_0(%arg0: i32) -> (i32, i32) {
    %c0_i32 = arith.constant 0 : i32
    %c0_i32_0 = arith.constant 0 : i32
    return %arg0, %c0_i32 : i32, i32
  }
  func.func @transform_1(%arg0: i32) -> (i32, i32) {
    %c0_i32 = arith.constant 0 : i32
    %c0_i32_0 = arith.constant 0 : i32
    return %arg0, %c0_i32 : i32, i32
  }
  func.func @transform_2(%arg0: i32) -> (i32, i32) {
    %c0_i32 = arith.constant 0 : i32
    %c0_i32_0 = arith.constant 0 : i32
    %c0_i32_1 = arith.constant 0 : i32
    return %c0_i32, %c0_i32_0 : i32, i32
  }
  func.func @transform_3(%arg0: i32) -> (i32, i32) {
    %c0_i32 = arith.constant 0 : i32
    %c0_i32_0 = arith.constant 0 : i32
    %c0_i32_1 = arith.constant 0 : i32
    return %c0_i32, %c0_i32_0 : i32, i32
  }
  func.func @transform_4(%arg0: i32) -> (i32, i32) {
    %c0_i32 = arith.constant 0 : i32
    %c0_i32_0 = arith.constant 0 : i32
    %c0_i32_1 = arith.constant 0 : i32
    return %c0_i32, %c0_i32_0 : i32, i32
  }
  func.func @transform_5(%arg0: i32) -> (i32, i32) {
    %c0_i32 = arith.constant 0 : i32
    %c0_i32_0 = arith.constant 0 : i32
    return %arg0, %c0_i32 : i32, i32
  }
}

</mosaic_0001>

<llo_original>
// kernel: bottleneck_block_forward.3
$region0: #{bottleneck_block_forward.3}
  #allocation0 [shape = 'u32[]', space=smem, size = 0x4, offset = 0x4, fixed_abs, tag = 'smem constant byte address 0x4 - core index']
  #allocation1 [shape = 'u32[144,128]{1,0:T(1,128)}', space=vmem, size = 0x12000, scoped, tag = 'internal scratch']
  %s0 = inlined_call_operand.hbm [shape: bf16[512,128], index: 0, kind: input, shape index: {}]
  %s1 = inlined_call_operand.hbm [shape: bf16[128,128], index: 1, kind: input, shape index: {}]
  %s2 = inlined_call_operand.hbm [shape: f32[2,128], index: 2, kind: input, shape index: {}]
  %s3 = inlined_call_operand.hbm [shape: bf16[512,128], index: 3, kind: output, shape index: {}]
  %s4 = sld [smem:[#allocation0]]
  $region34: #{bottleneck_block_forward.3} parent=0
    _
  %s6 = ssub.s32 1, %s4
  %s7 = scalar_select 0, %s6, %s4
  $region1: #{bottleneck_block_forward.3} parent=0
    #allocation2 [shape = 'u8[131072]{0}', space=vmem, size = 0x20000, scoped, tag = 'input window, operand 0, single buffered']
    #allocation3 [shape = 's32[1]{0}', space=sflag, size = 0x4, scoped, tag = 'scoped memory for bottleneck_block_forward.3']
    #allocation4 [shape = 's32[1]{0}', space=sflag, size = 0x4, scoped, tag = 'scoped memory for bottleneck_block_forward.3']
    #allocation5 [shape = 'u8[32768]{0}', space=vmem, size = 0x8000, scoped, tag = 'input window, operand 1, single buffered']
    #allocation6 [shape = 's32[1]{0}', space=sflag, size = 0x4, scoped, tag = 'scoped memory for bottleneck_block_forward.3']
    #allocation7 [shape = 'u8[1024]{0}', space=vmem, size = 0x400, scoped, tag = 'input window, operand 2, single buffered']
    #allocation8 [shape = 'u8[131072]{0}', space=vmem, size = 0x20000, scoped, tag = 'output window, operand 0, single buffered']
    %8 = vsyncpa [#allocation3], 0
    %9 = vsyncpa [#allocation6], 0
    %10 = vsyncpa [#allocation4], 0
    // Predicated region
    $region2: #{bottleneck_block_forward.3} parent=1 // pred_check
      _
    $region3: #{bottleneck_block_forward.3} parent=1 // pred_check_branch
      %12 = sbr.rel (0) target = $region5
    $region4: #{bottleneck_block_forward.3} parent=1 // pred_region
      %s14 = ssub.s32 4096, 4096
      %15 = vsyncadd [#allocation3], %s14
      %s16 = sshll.u32 [#allocation2], 4
      %s17 = int_to_ptr.vmem [resolvable:$true] %s16
      %22 = dma.hbm_to_vmem [thread:$0]  %s0, 4096, %s17, [#allocation3], 64, 64, 4
    $region5: #{bottleneck_block_forward.3} parent=1 // pred_fallthru
      _
    // Predicated region
    $region6: #{bottleneck_block_forward.3} parent=1 // pred_check
      _
    $region7: #{bottleneck_block_forward.3} parent=1 // pred_check_branch
      %24 = sbr.rel (0) target = $region9
    $region8: #{bottleneck_block_forward.3} parent=1 // pred_region
      %s26 = ssub.s32 1024, 1024
      %27 = vsyncadd [#allocation6], %s26
      %s28 = sshll.u32 [#allocation5], 4
      %s29 = int_to_ptr.vmem [resolvable:$true] %s28
      %34 = dma.hbm_to_vmem [thread:$0]  %s1, 1024, %s29, [#allocation6], 64, 64, 4
    $region9: #{bottleneck_block_forward.3} parent=1 // pred_fallthru
      _
    // Predicated region
    $region10: #{bottleneck_block_forward.3} parent=1 // pred_check
      _
    $region11: #{bottleneck_block_forward.3} parent=1 // pred_check_branch
      %36 = sbr.rel (0) target = $region13
    $region12: #{bottleneck_block_forward.3} parent=1 // pred_region
      %s38 = ssub.s32 32, 32
      %39 = vsyncadd [#allocation6], %s38
      %s41 = sshll.u32 [#allocation7], 4
      %s42 = int_to_ptr.vmem [resolvable:$true] %s41
      %44 = dma.hbm_to_vmem [thread:$0]  %s2, 32, %s42, [#allocation6]
    $region13: #{bottleneck_block_forward.3} parent=1 // pred_fallthru
      _
    // Predicated region
    $region14: #{bottleneck_block_forward.3} parent=1 // pred_check
      _
    $region15: #{bottleneck_block_forward.3} parent=1 // pred_check_branch
      %46 = sbr.rel (0) target = $region17
    $region16: #{bottleneck_block_forward.3} parent=1 // pred_region
      %47 = dma.done [#allocation3], 4096
    $region17: #{bottleneck_block_forward.3} parent=1 // pred_fallthru
      _
    // Predicated region
    $region18: #{bottleneck_block_forward.3} parent=1 // pred_check
      _
    $region19: #{bottleneck_block_forward.3} parent=1 // pred_check_branch
      %49 = sbr.rel (0) target = $region21
    $region20: #{bottleneck_block_forward.3} parent=1 // pred_region
      %50 = dma.done [#allocation6], 1024
    $region21: #{bottleneck_block_forward.3} parent=1 // pred_fallthru
      _
    // Predicated region
    $region22: #{bottleneck_block_forward.3} parent=1 // pred_check
      _
    $region23: #{bottleneck_block_forward.3} parent=1 // pred_check_branch
      %52 = sbr.rel (0) target = $region25
    $region24: #{bottleneck_block_forward.3} parent=1 // pred_region
      %53 = dma.done [#allocation6], 32
    $region25: #{bottleneck_block_forward.3} parent=1 // pred_fallthru
      _
    %v55 = vld [vmem:[#allocation7] sm:$0x1]
    %v56 = vld [vmem:[#allocation7 + $0x1] sm:$0x1]
    %v57 = vld [vmem:[#allocation2] sm:$0xf]
    %v58 = vld [vmem:[#allocation2 + $0x4] sm:$0xf]
    %v59 = vld [vmem:[#allocation2 + $0x8] sm:$0xf]
    %v60 = vld [vmem:[#allocation2 + $0xc] sm:$0xf]
    %v61 = vld [vmem:[#allocation2 + $0x10] sm:$0xf]
    %v62 = vld [vmem:[#allocation2 + $0x14] sm:$0xf]
    %v63 = vld [vmem:[#allocation2 + $0x18] sm:$0xf]
    %v64 = vld [vmem:[#allocation2 + $0x1c] sm:$0xf]
    %v65 = vld [vmem:[#allocation2 + $0x20] sm:$0xf]
    %v66 = vld [vmem:[#allocation2 + $0x24] sm:$0xf]
    %v67 = vld [vmem:[#allocation2 + $0x28] sm:$0xf]
    %v68 = vld [vmem:[#allocation2 + $0x2c] sm:$0xf]
    %v69 = vld [vmem:[#allocation2 + $0x30] sm:$0xf]
    %v70 = vld [vmem:[#allocation2 + $0x34] sm:$0xf]
    %v71 = vld [vmem:[#allocation2 + $0x38] sm:$0xf]
    %v72 = vld [vmem:[#allocation2 + $0x3c] sm:$0xf]
    %v73 = vld [vmem:[#allocation2 + $0x40] sm:$0xf]
    %v74 = vld [vmem:[#allocation2 + $0x44] sm:$0xf]
    %v75 = vld [vmem:[#allocation2 + $0x48] sm:$0xf]
    %v76 = vld [vmem:[#allocation2 + $0x4c] sm:$0xf]
    %v77 = vld [vmem:[#allocation2 + $0x50] sm:$0xf]
    %v78 = vld [vmem:[#allocation2 + $0x54] sm:$0xf]
    %v79 = vld [vmem:[#allocation2 + $0x58] sm:$0xf]
    %v80 = vld [vmem:[#allocation2 + $0x5c] sm:$0xf]
    %v81 = vld [vmem:[#allocation2 + $0x60] sm:$0xf]
    %v82 = vld [vmem:[#allocation2 + $0x64] sm:$0xf]
    %v83 = vld [vmem:[#allocation2 + $0x68] sm:$0xf]
    %v84 = vld [vmem:[#allocation2 + $0x6c] sm:$0xf]
    %v85 = vld [vmem:[#allocation2 + $0x70] sm:$0xf]
    %v86 = vld [vmem:[#allocation2 + $0x74] sm:$0xf]
    %v87 = vld [vmem:[#allocation2 + $0x78] sm:$0xf]
    %v88 = vld [vmem:[#allocation2 + $0x7c] sm:$0xf]
    %v89 = vld [vmem:[#allocation2 + $0x80] sm:$0xf]
    %v90 = vld [vmem:[#allocation2 + $0x84] sm:$0xf]
    %v91 = vld [vmem:[#allocation2 + $0x88] sm:$0xf]
    %v92 = vld [vmem:[#allocation2 + $0x8c] sm:$0xf]
    %v93 = vld [vmem:[#allocation2 + $0x90] sm:$0xf]
    %v94 = vld [vmem:[#allocation2 + $0x94] sm:$0xf]
    %v95 = vld [vmem:[#allocation2 + $0x98] sm:$0xf]
    %v96 = vld [vmem:[#allocation2 + $0x9c] sm:$0xf]
    %v97 = vld [vmem:[#allocation2 + $0xa0] sm:$0xf]
    %v98 = vld [vmem:[#allocation2 + $0xa4] sm:$0xf]
    %v99 = vld [vmem:[#allocation2 + $0xa8] sm:$0xf]
    %v100 = vld [vmem:[#allocation2 + $0xac] sm:$0xf]
    %v101 = vld [vmem:[#allocation2 + $0xb0] sm:$0xf]
    %v102 = vld [vmem:[#allocation2 + $0xb4] sm:$0xf]
    %v103 = vld [vmem:[#allocation2 + $0xb8] sm:$0xf]
    %v104 = vld [vmem:[#allocation2 + $0xbc] sm:$0xf]
    %v105 = vld [vmem:[#allocation2 + $0xc0] sm:$0xf]
    %v106 = vld [vmem:[#allocation2 + $0xc4] sm:$0xf]
    %v107 = vld [vmem:[#allocation2 + $0xc8] sm:$0xf]
    %v108 = vld [vmem:[#allocation2 + $0xcc] sm:$0xf]
    %v109 = vld [vmem:[#allocation2 + $0xd0] sm:$0xf]
    %v110 = vld [vmem:[#allocation2 + $0xd4] sm:$0xf]
    %v111 = vld [vmem:[#allocation2 + $0xd8] sm:$0xf]
    %v112 = vld [vmem:[#allocation2 + $0xdc] sm:$0xf]
    %v113 = vld [vmem:[#allocation2 + $0xe0] sm:$0xf]
    %v114 = vld [vmem:[#allocation2 + $0xe4] sm:$0xf]
    %v115 = vld [vmem:[#allocation2 + $0xe8] sm:$0xf]
    %v116 = vld [vmem:[#allocation2 + $0xec] sm:$0xf]
    %v117 = vld [vmem:[#allocation2 + $0xf0] sm:$0xf]
    %v118 = vld [vmem:[#allocation2 + $0xf4] sm:$0xf]
    %v119 = vld [vmem:[#allocation2 + $0xf8] sm:$0xf]
    %v120 = vld [vmem:[#allocation2 + $0xfc] sm:$0xf]
    %v121 = vld [vmem:[#allocation5] sm:$0xf]
    %v122 = vld [vmem:[#allocation5 + $0x4] sm:$0xf]
    %v123 = vld [vmem:[#allocation5 + $0x8] sm:$0xf]
    %v124 = vld [vmem:[#allocation5 + $0xc] sm:$0xf]
    %v125 = vld [vmem:[#allocation5 + $0x10] sm:$0xf]
    %v126 = vld [vmem:[#allocation5 + $0x14] sm:$0xf]
    %v127 = vld [vmem:[#allocation5 + $0x18] sm:$0xf]
    %v128 = vld [vmem:[#allocation5 + $0x1c] sm:$0xf]
    %v129 = vld [vmem:[#allocation5 + $0x20] sm:$0xf]
    %v130 = vld [vmem:[#allocation5 + $0x24] sm:$0xf]
    %v131 = vld [vmem:[#allocation5 + $0x28] sm:$0xf]
    %v132 = vld [vmem:[#allocation5 + $0x2c] sm:$0xf]
    %v133 = vld [vmem:[#allocation5 + $0x30] sm:$0xf]
    %v134 = vld [vmem:[#allocation5 + $0x34] sm:$0xf]
    %v135 = vld [vmem:[#allocation5 + $0x38] sm:$0xf]
    %v136 = vld [vmem:[#allocation5 + $0x3c] sm:$0xf]
    %v201 = vunpack.c.l.b16 %v57
    %v202 = vunpack.c.l.b16 %v58
    %v203 = vunpack.c.l.b16 %v59
    %v204 = vunpack.c.l.b16 %v60
    %v205 = vunpack.c.l.b16 %v61
    %v206 = vunpack.c.l.b16 %v62
    %v207 = vunpack.c.l.b16 %v63
    %v208 = vunpack.c.l.b16 %v64
    %v209 = vunpack.c.l.b16 %v65
    %v210 = vunpack.c.l.b16 %v66
    %v211 = vunpack.c.l.b16 %v67
    %v212 = vunpack.c.l.b16 %v68
    %v213 = vunpack.c.l.b16 %v69
    %v214 = vunpack.c.l.b16 %v70
    %v215 = vunpack.c.l.b16 %v71
    %v216 = vunpack.c.l.b16 %v72
    %v217 = vunpack.c.l.b16 %v73
    %v218 = vunpack.c.l.b16 %v74
    %v219 = vunpack.c.l.b16 %v75
    %v220 = vunpack.c.l.b16 %v76
    %v221 = vunpack.c.l.b16 %v77
    %v222 = vunpack.c.l.b16 %v78
    %v223 = vunpack.c.l.b16 %v79
    %v224 = vunpack.c.l.b16 %v80
    %v225 = vunpack.c.l.b16 %v81
    %v226 = vunpack.c.l.b16 %v82
    %v227 = vunpack.c.l.b16 %v83
    %v228 = vunpack.c.l.b16 %v84
    %v229 = vunpack.c.l.b16 %v85
    %v230 = vunpack.c.l.b16 %v86
    %v231 = vunpack.c.l.b16 %v87
    %v232 = vunpack.c.l.b16 %v88
    %v233 = vunpack.c.l.b16 %v89
    %v234 = vunpack.c.l.b16 %v90
    %v235 = vunpack.c.l.b16 %v91
    %v236 = vunpack.c.l.b16 %v92
    %v237 = vunpack.c.l.b16 %v93
    %v238 = vunpack.c.l.b16 %v94
    %v239 = vunpack.c.l.b16 %v95
    %v240 = vunpack.c.l.b16 %v96
    %v241 = vunpack.c.l.b16 %v97
    %v242 = vunpack.c.l.b16 %v98
    %v243 = vunpack.c.l.b16 %v99
    %v244 = vunpack.c.l.b16 %v100
    %v245 = vunpack.c.l.b16 %v101
    %v246 = vunpack.c.l.b16 %v102
    %v247 = vunpack.c.l.b16 %v103
    %v248 = vunpack.c.l.b16 %v104
    %v249 = vunpack.c.l.b16 %v105
    %v250 = vunpack.c.l.b16 %v106
    %v251 = vunpack.c.l.b16 %v107
    %v252 = vunpack.c.l.b16 %v108
    %v253 = vunpack.c.l.b16 %v109
    %v254 = vunpack.c.l.b16 %v110
    %v255 = vunpack.c.l.b16 %v111
    %v256 = vunpack.c.l.b16 %v112
    %v257 = vunpack.c.l.b16 %v113
    %v258 = vunpack.c.l.b16 %v114
    %v259 = vunpack.c.l.b16 %v115
    %v260 = vunpack.c.l.b16 %v116
    %v261 = vunpack.c.l.b16 %v117
    %v262 = vunpack.c.l.b16 %v118
    %v263 = vunpack.c.l.b16 %v119
    %v264 = vunpack.c.l.b16 %v120
    %v265 = vpack.c.b16 %v202, %v201
    %v266 = vpack.c.b16 %v204, %v203
    %v267 = vpack.c.b16 %v206, %v205
    %v268 = vpack.c.b16 %v208, %v207
    %v269 = vpack.c.b16 %v210, %v209
    %v270 = vpack.c.b16 %v212, %v211
    %v271 = vpack.c.b16 %v214, %v213
    %v272 = vpack.c.b16 %v216, %v215
    %v273 = vpack.c.b16 %v218, %v217
    %v274 = vpack.c.b16 %v220, %v219
    %v275 = vpack.c.b16 %v222, %v221
    %v276 = vpack.c.b16 %v224, %v223
    %v277 = vpack.c.b16 %v226, %v225
    %v278 = vpack.c.b16 %v228, %v227
    %v279 = vpack.c.b16 %v230, %v229
    %v280 = vpack.c.b16 %v232, %v231
    %v281 = vpack.c.b16 %v234, %v233
    %v282 = vpack.c.b16 %v236, %v235
    %v283 = vpack.c.b16 %v238, %v237
    %v284 = vpack.c.b16 %v240, %v239
    %v285 = vpack.c.b16 %v242, %v241
    %v286 = vpack.c.b16 %v244, %v243
    %v287 = vpack.c.b16 %v246, %v245
    %v288 = vpack.c.b16 %v248, %v247
    %v289 = vpack.c.b16 %v250, %v249
    %v290 = vpack.c.b16 %v252, %v251
    %v291 = vpack.c.b16 %v254, %v253
    %v292 = vpack.c.b16 %v256, %v255
    %v293 = vpack.c.b16 %v258, %v257
    %v294 = vpack.c.b16 %v260, %v259
    %v295 = vpack.c.b16 %v262, %v261
    %v296 = vpack.c.b16 %v264, %v263
    %v345 = vunpack.c.l.b16 %v121
    %v346 = vunpack.c.l.b16 %v122
    %v347 = vunpack.c.l.b16 %v123
    %v348 = vunpack.c.l.b16 %v124
    %v349 = vunpack.c.l.b16 %v125
    %v350 = vunpack.c.l.b16 %v126
    %v351 = vunpack.c.l.b16 %v127
    %v352 = vunpack.c.l.b16 %v128
    %v353 = vunpack.c.l.b16 %v129
    %v354 = vunpack.c.l.b16 %v130
    %v355 = vunpack.c.l.b16 %v131
    %v356 = vunpack.c.l.b16 %v132
    %v357 = vunpack.c.l.b16 %v133
    %v358 = vunpack.c.l.b16 %v134
    %v359 = vunpack.c.l.b16 %v135
    %v360 = vunpack.c.l.b16 %v136
    %v361 = vpack.c.b16 %v346, %v345
    %v362 = vpack.c.b16 %v348, %v347
    %v363 = vpack.c.b16 %v350, %v349
    %v364 = vpack.c.b16 %v352, %v351
    %v365 = vpack.c.b16 %v354, %v353
    %v366 = vpack.c.b16 %v356, %v355
    %v367 = vpack.c.b16 %v358, %v357
    %v368 = vpack.c.b16 %v360, %v359
    %377 = vmatprep.subr.bf16.mxu0 0
    %378 = vmatpush1.bf16.msra.mxu0 %v361
    %379 = vmatprep.subr.bf16.mxu0 0
    %380 = vmatpush1.bf16.msra.mxu0 %v362
    %381 = vmatprep.subr.bf16.mxu0 0
    %382 = vmatpush1.bf16.msra.mxu0 %v363
    %383 = vmatprep.subr.bf16.mxu0 0
    %384 = vmatpush1.bf16.msra.mxu0 %v364
    %385 = vmatprep.subr.bf16.mxu0 0
    %386 = vmatpush1.bf16.msra.mxu0 %v365
    %387 = vmatprep.subr.bf16.mxu0 0
    %388 = vmatpush1.bf16.msra.mxu0 %v366
    %389 = vmatprep.subr.bf16.mxu0 0
    %390 = vmatpush1.bf16.msra.mxu0 %v367
    %391 = vmatprep.subr.bf16.mxu0 0
    %392 = vmatpush1.bf16.msra.mxu0 %v368
    %393 = vmatprep.subr.bf16.mxu0 0
    %394 = vmatpush1.bf16.msra.mxu0 0
    %395 = vmatprep.subr.bf16.mxu0 0
    %396 = vmatpush1.bf16.msra.mxu0 0
    %397 = vmatprep.subr.bf16.mxu0 0
    %398 = vmatpush1.bf16.msra.mxu0 0
    %399 = vmatprep.subr.bf16.mxu0 0
    %400 = vmatpush1.bf16.msra.mxu0 0
    %401 = vmatprep.subr.bf16.mxu0 0
    %402 = vmatpush1.bf16.msra.mxu0 0
    %403 = vmatprep.subr.bf16.mxu0 0
    %404 = vmatpush1.bf16.msra.mxu0 0
    %405 = vmatprep.subr.bf16.mxu0 0
    %406 = vmatpush1.bf16.msra.mxu0 0
    %407 = vmatprep.subr.bf16.mxu0 0
    %408 = vmatpush1.bf16.msra.mxu0 0
    %409 = vmatprep.mubr.bf16.mxu0 0
    %410 = vmatmul.mubr.bf16.gmra.mrb[0].mxu0 %v265
    %v411 = vpop.f32.mrb[0].mxu0
    %v412 = vadd.f32 0.0, %v411
    %v413 = vpop.f32.mrb[0].mxu0
    %v414 = vpop.f32.mrb[0].mxu0
    %v415 = vadd.f32 0.0, %v414
    %v416 = vpop.f32.mrb[0].mxu0
    %417 = vmatprep.mubr.bf16.mxu0 0
    %418 = vmatmul.mubr.bf16.gmra.mrb[0].mxu0 %v266
    %v419 = vpop.f32.mrb[0].mxu0
    %v420 = vadd.f32 0.0, %v419
    %v421 = vpop.f32.mrb[0].mxu0
    %v422 = vpop.f32.mrb[0].mxu0
    %v423 = vadd.f32 0.0, %v422
    %v424 = vpop.f32.mrb[0].mxu0
    %425 = vmatprep.mubr.bf16.mxu0 0
    %426 = vmatmul.mubr.bf16.gmra.mrb[0].mxu0 %v267
    %v427 = vpop.f32.mrb[0].mxu0
    %v428 = vadd.f32 0.0, %v427
    %v429 = vpop.f32.mrb[0].mxu0
    %v430 = vpop.f32.mrb[0].mxu0
    %v431 = vadd.f32 0.0, %v430
    %v432 = vpop.f32.mrb[0].mxu0
    %433 = vmatprep.mubr.bf16.mxu0 0
    %434 = vmatmul.mubr.bf16.gmra.mrb[0].mxu0 %v268
    %v435 = vpop.f32.mrb[0].mxu0
    %v436 = vadd.f32 0.0, %v435
    %v437 = vpop.f32.mrb[0].mxu0
    %v438 = vpop.f32.mrb[0].mxu0
    %v439 = vadd.f32 0.0, %v438
    %v440 = vpop.f32.mrb[0].mxu0
    %441 = vmatprep.mubr.bf16.mxu0 0
    %442 = vmatmul.mubr.bf16.gmra.mrb[0].mxu0 %v269
    %v443 = vpop.f32.mrb[0].mxu0
    %v444 = vadd.f32 0.0, %v443
    %v445 = vpop.f32.mrb[0].mxu0
    %v446 = vpop.f32.mrb[0].mxu0
    %v447 = vadd.f32 0.0, %v446
    %v448 = vpop.f32.mrb[0].mxu0
    %449 = vmatprep.mubr.bf16.mxu0 0
    %450 = vmatmul.mubr.bf16.gmra.mrb[0].mxu0 %v270
    %v451 = vpop.f32.mrb[0].mxu0
    %v452 = vadd.f32 0.0, %v451
    %v453 = vpop.f32.mrb[0].mxu0
    %v454 = vpop.f32.mrb[0].mxu0
    %v455 = vadd.f32 0.0, %v454
    %v456 = vpop.f32.mrb[0].mxu0
    %457 = vmatprep.mubr.bf16.mxu0 0
    %458 = vmatmul.mubr.bf16.gmra.mrb[0].mxu0 %v271
    %v459 = vpop.f32.mrb[0].mxu0
    %v460 = vadd.f32 0.0, %v459
    %v461 = vpop.f32.mrb[0].mxu0
    %v462 = vpop.f32.mrb[0].mxu0
    %v463 = vadd.f32 0.0, %v462
    %v464 = vpop.f32.mrb[0].mxu0
    %465 = vmatprep.mubr.bf16.mxu0 0
    %466 = vmatmul.mubr.bf16.gmra.mrb[0].mxu0 %v272
    %v467 = vpop.f32.mrb[0].mxu0
    %v468 = vadd.f32 0.0, %v467
    %v469 = vpop.f32.mrb[0].mxu0
    %v470 = vpop.f32.mrb[0].mxu0
    %v471 = vadd.f32 0.0, %v470
    %v472 = vpop.f32.mrb[0].mxu0
    %473 = vmatprep.mubr.bf16.mxu0 0
    %474 = vmatmul.mubr.bf16.gmra.mrb[0].mxu0 %v273
    %v475 = vpop.f32.mrb[0].mxu0
    %v476 = vadd.f32 0.0, %v475
    %v477 = vpop.f32.mrb[0].mxu0
    %v478 = vpop.f32.mrb[0].mxu0
    %v479 = vadd.f32 0.0, %v478
    %v480 = vpop.f32.mrb[0].mxu0
    %481 = vmatprep.mubr.bf16.mxu0 0
    %482 = vmatmul.mubr.bf16.gmra.mrb[0].mxu0 %v274
    %v483 = vpop.f32.mrb[0].mxu0
    %v484 = vadd.f32 0.0, %v483
    %v485 = vpop.f32.mrb[0].mxu0
    %v486 = vpop.f32.mrb[0].mxu0
    %v487 = vadd.f32 0.0, %v486
    %v488 = vpop.f32.mrb[0].mxu0
    %489 = vmatprep.mubr.bf16.mxu0 0
    %490 = vmatmul.mubr.bf16.gmra.mrb[0].mxu0 %v275
    %v491 = vpop.f32.mrb[0].mxu0
    %v492 = vadd.f32 0.0, %v491
    %v493 = vpop.f32.mrb[0].mxu0
    %v494 = vpop.f32.mrb[0].mxu0
    %v495 = vadd.f32 0.0, %v494
    %v496 = vpop.f32.mrb[0].mxu0
    %497 = vmatprep.mubr.bf16.mxu0 0
    %498 = vmatmul.mubr.bf16.gmra.mrb[0].mxu0 %v276
    %v499 = vpop.f32.mrb[0].mxu0
    %v500 = vadd.f32 0.0, %v499
    %v501 = vpop.f32.mrb[0].mxu0
    %v502 = vpop.f32.mrb[0].mxu0
    %v503 = vadd.f32 0.0, %v502
    %v504 = vpop.f32.mrb[0].mxu0
    %505 = vmatprep.mubr.bf16.mxu0 0
    %506 = vmatmul.mubr.bf16.gmra.mrb[0].mxu0 %v277
    %v507 = vpop.f32.mrb[0].mxu0
    %v508 = vadd.f32 0.0, %v507
    %v509 = vpop.f32.mrb[0].mxu0
    %v510 = vpop.f32.mrb[0].mxu0
    %v511 = vadd.f32 0.0, %v510
    %v512 = vpop.f32.mrb[0].mxu0
    %513 = vmatprep.mubr.bf16.mxu0 0
    %514 = vmatmul.mubr.bf16.gmra.mrb[0].mxu0 %v278
    %v515 = vpop.f32.mrb[0].mxu0
    %v516 = vadd.f32 0.0, %v515
    %v517 = vpop.f32.mrb[0].mxu0
    %v518 = vpop.f32.mrb[0].mxu0
    %v519 = vadd.f32 0.0, %v518
    %v520 = vpop.f32.mrb[0].mxu0
    %521 = vmatprep.mubr.bf16.mxu0 0
    %522 = vmatmul.mubr.bf16.gmra.mrb[0].mxu0 %v279
    %v523 = vpop.f32.mrb[0].mxu0
    %v524 = vadd.f32 0.0, %v523
    %v525 = vpop.f32.mrb[0].mxu0
    %v526 = vpop.f32.mrb[0].mxu0
    %v527 = vadd.f32 0.0, %v526
    %v528 = vpop.f32.mrb[0].mxu0
    %529 = vmatprep.mubr.bf16.mxu0 0
    %530 = vmatmul.mubr.bf16.gmra.mrb[0].mxu0 %v280
    %v531 = vpop.f32.mrb[0].mxu0
    %v532 = vadd.f32 0.0, %v531
    %v533 = vpop.f32.mrb[0].mxu0
    %v534 = vpop.f32.mrb[0].mxu0
    %v535 = vadd.f32 0.0, %v534
    %v536 = vpop.f32.mrb[0].mxu0
    %537 = vmatprep.mubr.bf16.mxu0 0
    %538 = vmatmul.mubr.bf16.gmra.mrb[0].mxu0 %v281
    %v539 = vpop.f32.mrb[0].mxu0
    %v540 = vadd.f32 0.0, %v539
    %v541 = vpop.f32.mrb[0].mxu0
    %v542 = vpop.f32.mrb[0].mxu0
    %v543 = vadd.f32 0.0, %v542
    %v544 = vpop.f32.mrb[0].mxu0
    %545 = vmatprep.mubr.bf16.mxu0 0
    %546 = vmatmul.mubr.bf16.gmra.mrb[0].mxu0 %v282
    %v547 = vpop.f32.mrb[0].mxu0
    %v548 = vadd.f32 0.0, %v547
    %v549 = vpop.f32.mrb[0].mxu0
    %v550 = vpop.f32.mrb[0].mxu0
    %v551 = vadd.f32 0.0, %v550
    %v552 = vpop.f32.mrb[0].mxu0
    %553 = vmatprep.mubr.bf16.mxu0 0
    %554 = vmatmul.mubr.bf16.gmra.mrb[0].mxu0 %v283
    %v555 = vpop.f32.mrb[0].mxu0
    %v556 = vadd.f32 0.0, %v555
    %v557 = vpop.f32.mrb[0].mxu0
    %v558 = vpop.f32.mrb[0].mxu0
    %v559 = vadd.f32 0.0, %v558
    %v560 = vpop.f32.mrb[0].mxu0
    %561 = vmatprep.mubr.bf16.mxu0 0
    %562 = vmatmul.mubr.bf16.gmra.mrb[0].mxu0 %v284
    %v563 = vpop.f32.mrb[0].mxu0
    %v564 = vadd.f32 0.0, %v563
    %v565 = vpop.f32.mrb[0].mxu0
    %v566 = vpop.f32.mrb[0].mxu0
    %v567 = vadd.f32 0.0, %v566
    %v568 = vpop.f32.mrb[0].mxu0
    %569 = vmatprep.mubr.bf16.mxu0 0
    %570 = vmatmul.mubr.bf16.gmra.mrb[0].mxu0 %v285
    %v571 = vpop.f32.mrb[0].mxu0
    %v572 = vadd.f32 0.0, %v571
    %v573 = vpop.f32.mrb[0].mxu0
    %v574 = vpop.f32.mrb[0].mxu0
    %v575 = vadd.f32 0.0, %v574
    %v576 = vpop.f32.mrb[0].mxu0
    %577 = vmatprep.mubr.bf16.mxu0 0
    %578 = vmatmul.mubr.bf16.gmra.mrb[0].mxu0 %v286
    %v579 = vpop.f32.mrb[0].mxu0
    %v580 = vadd.f32 0.0, %v579
    %v581 = vpop.f32.mrb[0].mxu0
    %v582 = vpop.f32.mrb[0].mxu0
    %v583 = vadd.f32 0.0, %v582
    %v584 = vpop.f32.mrb[0].mxu0
    %585 = vmatprep.mubr.bf16.mxu0 0
    %586 = vmatmul.mubr.bf16.gmra.mrb[0].mxu0 %v287
    %v587 = vpop.f32.mrb[0].mxu0
    %v588 = vadd.f32 0.0, %v587
    %v589 = vpop.f32.mrb[0].mxu0
    %v590 = vpop.f32.mrb[0].mxu0
    %v591 = vadd.f32 0.0, %v590
    %v592 = vpop.f32.mrb[0].mxu0
    %593 = vmatprep.mubr.bf16.mxu0 0
    %594 = vmatmul.mubr.bf16.gmra.mrb[0].mxu0 %v288
    %v595 = vpop.f32.mrb[0].mxu0
    %v596 = vadd.f32 0.0, %v595
    %v597 = vpop.f32.mrb[0].mxu0
    %v598 = vpop.f32.mrb[0].mxu0
    %v599 = vadd.f32 0.0, %v598
    %v600 = vpop.f32.mrb[0].mxu0
    %601 = vmatprep.mubr.bf16.mxu0 0
    %602 = vmatmul.mubr.bf16.gmra.mrb[0].mxu0 %v289
    %v603 = vpop.f32.mrb[0].mxu0
    %v604 = vadd.f32 0.0, %v603
    %v605 = vpop.f32.mrb[0].mxu0
    %v606 = vpop.f32.mrb[0].mxu0
    %v607 = vadd.f32 0.0, %v606
    %v608 = vpop.f32.mrb[0].mxu0
    %609 = vmatprep.mubr.bf16.mxu0 0
    %610 = vmatmul.mubr.bf16.gmra.mrb[0].mxu0 %v290
    %v611 = vpop.f32.mrb[0].mxu0
    %v612 = vadd.f32 0.0, %v611
    %v613 = vpop.f32.mrb[0].mxu0
    %v614 = vpop.f32.mrb[0].mxu0
    %v615 = vadd.f32 0.0, %v614
    %v616 = vpop.f32.mrb[0].mxu0
    %617 = vmatprep.mubr.bf16.mxu0 0
    %618 = vmatmul.mubr.bf16.gmra.mrb[0].mxu0 %v291
    %v619 = vpop.f32.mrb[0].mxu0
    %v620 = vadd.f32 0.0, %v619
    %v621 = vpop.f32.mrb[0].mxu0
    %v622 = vpop.f32.mrb[0].mxu0
    %v623 = vadd.f32 0.0, %v622
    %v624 = vpop.f32.mrb[0].mxu0
    %625 = vmatprep.mubr.bf16.mxu0 0
    %626 = vmatmul.mubr.bf16.gmra.mrb[0].mxu0 %v292
    %v627 = vpop.f32.mrb[0].mxu0
    %v628 = vadd.f32 0.0, %v627
    %v629 = vpop.f32.mrb[0].mxu0
    %v630 = vpop.f32.mrb[0].mxu0
    %v631 = vadd.f32 0.0, %v630
    %v632 = vpop.f32.mrb[0].mxu0
    %633 = vmatprep.mubr.bf16.mxu0 0
    %634 = vmatmul.mubr.bf16.gmra.mrb[0].mxu0 %v293
    %v635 = vpop.f32.mrb[0].mxu0
    %v636 = vadd.f32 0.0, %v635
    %v637 = vpop.f32.mrb[0].mxu0
    %v638 = vpop.f32.mrb[0].mxu0
    %v639 = vadd.f32 0.0, %v638
    %v640 = vpop.f32.mrb[0].mxu0
    %641 = vmatprep.mubr.bf16.mxu0 0
    %642 = vmatmul.mubr.bf16.gmra.mrb[0].mxu0 %v294
    %v643 = vpop.f32.mrb[0].mxu0
    %v644 = vadd.f32 0.0, %v643
    %v645 = vpop.f32.mrb[0].mxu0
    %v646 = vpop.f32.mrb[0].mxu0
    %v647 = vadd.f32 0.0, %v646
    %v648 = vpop.f32.mrb[0].mxu0
    %649 = vmatprep.mubr.bf16.mxu0 0
    %650 = vmatmul.mubr.bf16.gmra.mrb[0].mxu0 %v295
    %v651 = vpop.f32.mrb[0].mxu0
    %v652 = vadd.f32 0.0, %v651
    %v653 = vpop.f32.mrb[0].mxu0
    %v654 = vpop.f32.mrb[0].mxu0
    %v655 = vadd.f32 0.0, %v654
    %v656 = vpop.f32.mrb[0].mxu0
    %657 = vmatprep.mubr.bf16.mxu0 0
    %658 = vmatmul.mubr.bf16.gmra.mrb[0].mxu0 %v296
    %v659 = vpop.f32.mrb[0].mxu0
    %v660 = vadd.f32 0.0, %v659
    %v661 = vpop.f32.mrb[0].mxu0
    %v662 = vpop.f32.mrb[0].mxu0
    %v663 = vadd.f32 0.0, %v662
    %v664 = vpop.f32.mrb[0].mxu0
    %665 = vdwg.mxu0
    %v666 = vlaneseq
    %v667 = vshrl.u32 %v666, 7
    %v668 = vsub.s32 0, %v667
    %v669 = vrot.slane %v55, %v668
    %v670 = vmul.f32 %v412, %v669
    %v671 = vmul.f32 %v415, %v669
    %v672 = vmul.f32 %v420, %v669
    %v673 = vmul.f32 %v423, %v669
    %v674 = vmul.f32 %v428, %v669
    %v675 = vmul.f32 %v431, %v669
    %v676 = vmul.f32 %v436, %v669
    %v677 = vmul.f32 %v439, %v669
    %v678 = vmul.f32 %v444, %v669
    %v679 = vmul.f32 %v447, %v669
    %v680 = vmul.f32 %v452, %v669
    %v681 = vmul.f32 %v455, %v669
    %v682 = vmul.f32 %v460, %v669
    %v683 = vmul.f32 %v463, %v669
    %v684 = vmul.f32 %v468, %v669
    %v685 = vmul.f32 %v471, %v669
    %v686 = vmul.f32 %v476, %v669
    %v687 = vmul.f32 %v479, %v669
    %v688 = vmul.f32 %v484, %v669
    %v689 = vmul.f32 %v487, %v669
    %v690 = vmul.f32 %v492, %v669
    %v691 = vmul.f32 %v495, %v669
    %v692 = vmul.f32 %v500, %v669
    %v693 = vmul.f32 %v503, %v669
    %v694 = vmul.f32 %v508, %v669
    %v695 = vmul.f32 %v511, %v669
    %v696 = vmul.f32 %v516, %v669
    %v697 = vmul.f32 %v519, %v669
    %v698 = vmul.f32 %v524, %v669
    %v699 = vmul.f32 %v527, %v669
    %v700 = vmul.f32 %v532, %v669
    %v701 = vmul.f32 %v535, %v669
    %v702 = vmul.f32 %v540, %v669
    %v703 = vmul.f32 %v543, %v669
    %v704 = vmul.f32 %v548, %v669
    %v705 = vmul.f32 %v551, %v669
    %v706 = vmul.f32 %v556, %v669
    %v707 = vmul.f32 %v559, %v669
    %v708 = vmul.f32 %v564, %v669
    %v709 = vmul.f32 %v567, %v669
    %v710 = vmul.f32 %v572, %v669
    %v711 = vmul.f32 %v575, %v669
    %v712 = vmul.f32 %v580, %v669
    %v713 = vmul.f32 %v583, %v669
    %v714 = vmul.f32 %v588, %v669
    %v715 = vmul.f32 %v591, %v669
    %v716 = vmul.f32 %v596, %v669
    %v717 = vmul.f32 %v599, %v669
    %v718 = vmul.f32 %v604, %v669
    %v719 = vmul.f32 %v607, %v669
    %v720 = vmul.f32 %v612, %v669
    %v721 = vmul.f32 %v615, %v669
    %v722 = vmul.f32 %v620, %v669
    %v723 = vmul.f32 %v623, %v669
    %v724 = vmul.f32 %v628, %v669
    %v725 = vmul.f32 %v631, %v669
    %v726 = vmul.f32 %v636, %v669
    %v727 = vmul.f32 %v639, %v669
    %v728 = vmul.f32 %v644, %v669
    %v729 = vmul.f32 %v647, %v669
    %v730 = vmul.f32 %v652, %v669
    %v731 = vmul.f32 %v655, %v669
    %v732 = vmul.f32 %v660, %v669
    %v733 = vmul.f32 %v663, %v669
    %v734 = vlaneseq
    %v735 = vshrl.u32 %v734, 7
    %v736 = vsub.s32 0, %v735
    %v737 = vrot.slane %v56, %v736
    %v738 = vadd.f32 %v670, %v737
    %v739 = vadd.f32 %v671, %v737
    %v740 = vadd.f32 %v672, %v737
    %v741 = vadd.f32 %v673, %v737
    %v742 = vadd.f32 %v674, %v737
    %v743 = vadd.f32 %v675, %v737
    %v744 = vadd.f32 %v676, %v737
    %v745 = vadd.f32 %v677, %v737
    %v746 = vadd.f32 %v678, %v737
    %v747 = vadd.f32 %v679, %v737
    %v748 = vadd.f32 %v680, %v737
    %v749 = vadd.f32 %v681, %v737
    %v750 = vadd.f32 %v682, %v737
    %v751 = vadd.f32 %v683, %v737
    %v752 = vadd.f32 %v684, %v737
    %v753 = vadd.f32 %v685, %v737
    %v754 = vadd.f32 %v686, %v737
    %v755 = vadd.f32 %v687, %v737
    %v756 = vadd.f32 %v688, %v737
    %v757 = vadd.f32 %v689, %v737
    %v758 = vadd.f32 %v690, %v737
    %v759 = vadd.f32 %v691, %v737
    %v760 = vadd.f32 %v692, %v737
    %v761 = vadd.f32 %v693, %v737
    %v762 = vadd.f32 %v694, %v737
    %v763 = vadd.f32 %v695, %v737
    %v764 = vadd.f32 %v696, %v737
    %v765 = vadd.f32 %v697, %v737
    %v766 = vadd.f32 %v698, %v737
    %v767 = vadd.f32 %v699, %v737
    %v768 = vadd.f32 %v700, %v737
    %v769 = vadd.f32 %v701, %v737
    %v770 = vadd.f32 %v702, %v737
    %v771 = vadd.f32 %v703, %v737
    %v772 = vadd.f32 %v704, %v737
    %v773 = vadd.f32 %v705, %v737
    %v774 = vadd.f32 %v706, %v737
    %v775 = vadd.f32 %v707, %v737
    %v776 = vadd.f32 %v708, %v737
    %v777 = vadd.f32 %v709, %v737
    %v778 = vadd.f32 %v710, %v737
    %v779 = vadd.f32 %v711, %v737
    %v780 = vadd.f32 %v712, %v737
    %v781 = vadd.f32 %v713, %v737
    %v782 = vadd.f32 %v714, %v737
    %v783 = vadd.f32 %v715, %v737
    %v784 = vadd.f32 %v716, %v737
    %v785 = vadd.f32 %v717, %v737
    %v786 = vadd.f32 %v718, %v737
    %v787 = vadd.f32 %v719, %v737
    %v788 = vadd.f32 %v720, %v737
    %v789 = vadd.f32 %v721, %v737
    %v790 = vadd.f32 %v722, %v737
    %v791 = vadd.f32 %v723, %v737
    %v792 = vadd.f32 %v724, %v737
    %v793 = vadd.f32 %v725, %v737
    %v794 = vadd.f32 %v726, %v737
    %v795 = vadd.f32 %v727, %v737
    %v796 = vadd.f32 %v728, %v737
    %v797 = vadd.f32 %v729, %v737
    %v798 = vadd.f32 %v730, %v737
    %v799 = vadd.f32 %v731, %v737
    %v800 = vadd.f32 %v732, %v737
    %v801 = vadd.f32 %v733, %v737
    %v802 = vmax.f32 %v738, 0.0
    %v803 = vmax.f32 %v739, 0.0
    %v804 = vmax.f32 %v740, 0.0
    %v805 = vmax.f32 %v741, 0.0
    %v806 = vmax.f32 %v742, 0.0
    %v807 = vmax.f32 %v743, 0.0
    %v808 = vmax.f32 %v744, 0.0
    %v809 = vmax.f32 %v745, 0.0
    %v810 = vmax.f32 %v746, 0.0
    %v811 = vmax.f32 %v747, 0.0
    %v812 = vmax.f32 %v748, 0.0
    %v813 = vmax.f32 %v749, 0.0
    %v814 = vmax.f32 %v750, 0.0
    %v815 = vmax.f32 %v751, 0.0
    %v816 = vmax.f32 %v752, 0.0
    %v817 = vmax.f32 %v753, 0.0
    %v818 = vmax.f32 %v754, 0.0
    %v819 = vmax.f32 %v755, 0.0
    %v820 = vmax.f32 %v756, 0.0
    %v821 = vmax.f32 %v757, 0.0
    %v822 = vmax.f32 %v758, 0.0
    %v823 = vmax.f32 %v759, 0.0
    %v824 = vmax.f32 %v760, 0.0
    %v825 = vmax.f32 %v761, 0.0
    %v826 = vmax.f32 %v762, 0.0
    %v827 = vmax.f32 %v763, 0.0
    %v828 = vmax.f32 %v764, 0.0
    %v829 = vmax.f32 %v765, 0.0
    %v830 = vmax.f32 %v766, 0.0
    %v831 = vmax.f32 %v767, 0.0
    %v832 = vmax.f32 %v768, 0.0
    %v833 = vmax.f32 %v769, 0.0
    %v834 = vmax.f32 %v770, 0.0
    %v835 = vmax.f32 %v771, 0.0
    %v836 = vmax.f32 %v772, 0.0
    %v837 = vmax.f32 %v773, 0.0
    %v838 = vmax.f32 %v774, 0.0
    %v839 = vmax.f32 %v775, 0.0
    %v840 = vmax.f32 %v776, 0.0
    %v841 = vmax.f32 %v777, 0.0
    %v842 = vmax.f32 %v778, 0.0
    %v843 = vmax.f32 %v779, 0.0
    %v844 = vmax.f32 %v780, 0.0
    %v845 = vmax.f32 %v781, 0.0
    %v846 = vmax.f32 %v782, 0.0
    %v847 = vmax.f32 %v783, 0.0
    %v848 = vmax.f32 %v784, 0.0
    %v849 = vmax.f32 %v785, 0.0
    %v850 = vmax.f32 %v786, 0.0
    %v851 = vmax.f32 %v787, 0.0
    %v852 = vmax.f32 %v788, 0.0
    %v853 = vmax.f32 %v789, 0.0
    %v854 = vmax.f32 %v790, 0.0
    %v855 = vmax.f32 %v791, 0.0
    %v856 = vmax.f32 %v792, 0.0
    %v857 = vmax.f32 %v793, 0.0
    %v858 = vmax.f32 %v794, 0.0
    %v859 = vmax.f32 %v795, 0.0
    %v860 = vmax.f32 %v796, 0.0
    %v861 = vmax.f32 %v797, 0.0
    %v862 = vmax.f32 %v798, 0.0
    %v863 = vmax.f32 %v799, 0.0
    %v864 = vmax.f32 %v800, 0.0
    %v865 = vmax.f32 %v801, 0.0
    %v866 = vpack.c.bf16 %v803, %v802
    %v867 = vpack.c.bf16 %v805, %v804
    %v868 = vpack.c.bf16 %v807, %v806
    %v869 = vpack.c.bf16 %v809, %v808
    %v870 = vpack.c.bf16 %v811, %v810
    %v871 = vpack.c.bf16 %v813, %v812
    %v872 = vpack.c.bf16 %v815, %v814
    %v873 = vpack.c.bf16 %v817, %v816
    %v874 = vpack.c.bf16 %v819, %v818
    %v875 = vpack.c.bf16 %v821, %v820
    %v876 = vpack.c.bf16 %v823, %v822
    %v877 = vpack.c.bf16 %v825, %v824
    %v878 = vpack.c.bf16 %v827, %v826
    %v879 = vpack.c.bf16 %v829, %v828
    %v880 = vpack.c.bf16 %v831, %v830
    %v881 = vpack.c.bf16 %v833, %v832
    %v882 = vpack.c.bf16 %v835, %v834
    %v883 = vpack.c.bf16 %v837, %v836
    %v884 = vpack.c.bf16 %v839, %v838
    %v885 = vpack.c.bf16 %v841, %v840
    %v886 = vpack.c.bf16 %v843, %v842
    %v887 = vpack.c.bf16 %v845, %v844
    %v888 = vpack.c.bf16 %v847, %v846
    %v889 = vpack.c.bf16 %v849, %v848
    %v890 = vpack.c.bf16 %v851, %v850
    %v891 = vpack.c.bf16 %v853, %v852
    %v892 = vpack.c.bf16 %v855, %v854
    %v893 = vpack.c.bf16 %v857, %v856
    %v894 = vpack.c.bf16 %v859, %v858
    %v895 = vpack.c.bf16 %v861, %v860
    %v896 = vpack.c.bf16 %v863, %v862
    %v897 = vpack.c.bf16 %v865, %v864
    %v930 = vunpack.c.l.b16 %v866
    %v931 = vunpack.c.h.b16 %v866
    %v932 = vunpack.c.l.b16 %v867
    %v933 = vunpack.c.h.b16 %v867
    %v934 = vunpack.c.l.b16 %v868
    %v935 = vunpack.c.h.b16 %v868
    %v936 = vunpack.c.l.b16 %v869
    %v937 = vunpack.c.h.b16 %v869
    %v938 = vunpack.c.l.b16 %v870
    %v939 = vunpack.c.h.b16 %v870
    %v940 = vunpack.c.l.b16 %v871
    %v941 = vunpack.c.h.b16 %v871
    %v942 = vunpack.c.l.b16 %v872
    %v943 = vunpack.c.h.b16 %v872
    %v944 = vunpack.c.l.b16 %v873
    %v945 = vunpack.c.h.b16 %v873
    %v946 = vunpack.c.l.b16 %v874
    %v947 = vunpack.c.h.b16 %v874
    %v948 = vunpack.c.l.b16 %v875
    %v949 = vunpack.c.h.b16 %v875
    %v950 = vunpack.c.l.b16 %v876
    %v951 = vunpack.c.h.b16 %v876
    %v952 = vunpack.c.l.b16 %v877
    %v953 = vunpack.c.h.b16 %v877
    %v954 = vunpack.c.l.b16 %v878
    %v955 = vunpack.c.h.b16 %v878
    %v956 = vunpack.c.l.b16 %v879
    %v957 = vunpack.c.h.b16 %v879
    %v958 = vunpack.c.l.b16 %v880
    %v959 = vunpack.c.h.b16 %v880
    %v960 = vunpack.c.l.b16 %v881
    %v961 = vunpack.c.h.b16 %v881
    %v962 = vunpack.c.l.b16 %v882
    %v963 = vunpack.c.h.b16 %v882
    %v964 = vunpack.c.l.b16 %v883
    %v965 = vunpack.c.h.b16 %v883
    %v966 = vunpack.c.l.b16 %v884
    %v967 = vunpack.c.h.b16 %v884
    %v968 = vunpack.c.l.b16 %v885
    %v969 = vunpack.c.h.b16 %v885
    %v970 = vunpack.c.l.b16 %v886
    %v971 = vunpack.c.h.b16 %v886
    %v972 = vunpack.c.l.b16 %v887
    %v973 = vunpack.c.h.b16 %v887
    %v974 = vunpack.c.l.b16 %v888
    %v975 = vunpack.c.h.b16 %v888
    %v976 = vunpack.c.l.b16 %v889
    %v977 = vunpack.c.h.b16 %v889
    %v978 = vunpack.c.l.b16 %v890
    %v979 = vunpack.c.h.b16 %v890
    %v980 = vunpack.c.l.b16 %v891
    %v981 = vunpack.c.h.b16 %v891
    %v982 = vunpack.c.l.b16 %v892
    %v983 = vunpack.c.h.b16 %v892
    %v984 = vunpack.c.l.b16 %v893
    %v985 = vunpack.c.h.b16 %v893
    %v986 = vunpack.c.l.b16 %v894
    %v987 = vunpack.c.h.b16 %v894
    %v988 = vunpack.c.l.b16 %v895
    %v989 = vunpack.c.h.b16 %v895
    %v990 = vunpack.c.l.b16 %v896
    %v991 = vunpack.c.h.b16 %v896
    %v992 = vunpack.c.l.b16 %v897
    %v993 = vunpack.c.h.b16 %v897
    %v994 = vpack.c.b16 %v930, %v930
    %v995 = vpack.c.b16 %v931, %v931
    %v996 = vpack.c.b16 %v932, %v932
    %v997 = vpack.c.b16 %v933, %v933
    %v998 = vpack.c.b16 %v934, %v934
    %v999 = vpack.c.b16 %v935, %v935
    %v1000 = vpack.c.b16 %v936, %v936
    %v1001 = vpack.c.b16 %v937, %v937
    %v1002 = vpack.c.b16 %v938, %v938
    %v1003 = vpack.c.b16 %v939, %v939
    %v1004 = vpack.c.b16 %v940, %v940
    %v1005 = vpack.c.b16 %v941, %v941
    %v1006 = vpack.c.b16 %v942, %v942
    %v1007 = vpack.c.b16 %v943, %v943
    %v1008 = vpack.c.b16 %v944, %v944
    %v1009 = vpack.c.b16 %v945, %v945
    %v1010 = vpack.c.b16 %v946, %v946
    %v1011 = vpack.c.b16 %v947, %v947
    %v1012 = vpack.c.b16 %v948, %v948
    %v1013 = vpack.c.b16 %v949, %v949
    %v1014 = vpack.c.b16 %v950, %v950
    %v1015 = vpack.c.b16 %v951, %v951
    %v1016 = vpack.c.b16 %v952, %v952
    %v1017 = vpack.c.b16 %v953, %v953
    %v1018 = vpack.c.b16 %v954, %v954
    %v1019 = vpack.c.b16 %v955, %v955
    %v1020 = vpack.c.b16 %v956, %v956
    %v1021 = vpack.c.b16 %v957, %v957
    %v1022 = vpack.c.b16 %v958, %v958
    %v1023 = vpack.c.b16 %v959, %v959
    %v1024 = vpack.c.b16 %v960, %v960
    %v1025 = vpack.c.b16 %v961, %v961
    %v1026 = vpack.c.b16 %v962, %v962
    %v1027 = vpack.c.b16 %v963, %v963
    %v1028 = vpack.c.b16 %v964, %v964
    %v1029 = vpack.c.b16 %v965, %v965
    %v1030 = vpack.c.b16 %v966, %v966
    %v1031 = vpack.c.b16 %v967, %v967
    %v1032 = vpack.c.b16 %v968, %v968
    %v1033 = vpack.c.b16 %v969, %v969
    %v1034 = vpack.c.b16 %v970, %v970
    %v1035 = vpack.c.b16 %v971, %v971
    %v1036 = vpack.c.b16 %v972, %v972
    %v1037 = vpack.c.b16 %v973, %v973
    %v1038 = vpack.c.b16 %v974, %v974
    %v1039 = vpack.c.b16 %v975, %v975
    %v1040 = vpack.c.b16 %v976, %v976
    %v1041 = vpack.c.b16 %v977, %v977
    %v1042 = vpack.c.b16 %v978, %v978
    %v1043 = vpack.c.b16 %v979, %v979
    %v1044 = vpack.c.b16 %v980, %v980
    %v1045 = vpack.c.b16 %v981, %v981
    %v1046 = vpack.c.b16 %v982, %v982
    %v1047 = vpack.c.b16 %v983, %v983
    %v1048 = vpack.c.b16 %v984, %v984
    %v1049 = vpack.c.b16 %v985, %v985
    %v1050 = vpack.c.b16 %v986, %v986
    %v1051 = vpack.c.b16 %v987, %v987
    %v1052 = vpack.c.b16 %v988, %v988
    %v1053 = vpack.c.b16 %v989, %v989
    %v1054 = vpack.c.b16 %v990, %v990
    %v1055 = vpack.c.b16 %v991, %v991
    %v1056 = vpack.c.b16 %v992, %v992
    %v1057 = vpack.c.b16 %v993, %v993
    %1122 = vst [vmem:[#allocation8] sm:$0xf] %v994
    %1123 = vst [vmem:[#allocation8 + $0x4] sm:$0xf] %v995
    %1124 = vst [vmem:[#allocation8 + $0x8] sm:$0xf] %v996
    %1125 = vst [vmem:[#allocation8 + $0xc] sm:$0xf] %v997
    %1126 = vst [vmem:[#allocation8 + $0x10] sm:$0xf] %v998
    %1127 = vst [vmem:[#allocation8 + $0x14] sm:$0xf] %v999
    %1128 = vst [vmem:[#allocation8 + $0x18] sm:$0xf] %v1000
    %1129 = vst [vmem:[#allocation8 + $0x1c] sm:$0xf] %v1001
    %1130 = vst [vmem:[#allocation8 + $0x20] sm:$0xf] %v1002
    %1131 = vst [vmem:[#allocation8 + $0x24] sm:$0xf] %v1003
    %1132 = vst [vmem:[#allocation8 + $0x28] sm:$0xf] %v1004
    %1133 = vst [vmem:[#allocation8 + $0x2c] sm:$0xf] %v1005
    %1134 = vst [vmem:[#allocation8 + $0x30] sm:$0xf] %v1006
    %1135 = vst [vmem:[#allocation8 + $0x34] sm:$0xf] %v1007
    %1136 = vst [vmem:[#allocation8 + $0x38] sm:$0xf] %v1008
    %1137 = vst [vmem:[#allocation8 + $0x3c] sm:$0xf] %v1009
    %1138 = vst [vmem:[#allocation8 + $0x40] sm:$0xf] %v1010
    %1139 = vst [vmem:[#allocation8 + $0x44] sm:$0xf] %v1011
    %1140 = vst [vmem:[#allocation8 + $0x48] sm:$0xf] %v1012
    %1141 = vst [vmem:[#allocation8 + $0x4c] sm:$0xf] %v1013
    %1142 = vst [vmem:[#allocation8 + $0x50] sm:$0xf] %v1014
    %1143 = vst [vmem:[#allocation8 + $0x54] sm:$0xf] %v1015
    %1144 = vst [vmem:[#allocation8 + $0x58] sm:$0xf] %v1016
    %1145 = vst [vmem:[#allocation8 + $0x5c] sm:$0xf] %v1017
    %1146 = vst [vmem:[#allocation8 + $0x60] sm:$0xf] %v1018
    %1147 = vst [vmem:[#allocation8 + $0x64] sm:$0xf] %v1019
    %1148 = vst [vmem:[#allocation8 + $0x68] sm:$0xf] %v1020
    %1149 = vst [vmem:[#allocation8 + $0x6c] sm:$0xf] %v1021
    %1150 = vst [vmem:[#allocation8 + $0x70] sm:$0xf] %v1022
    %1151 = vst [vmem:[#allocation8 + $0x74] sm:$0xf] %v1023
    %1152 = vst [vmem:[#allocation8 + $0x78] sm:$0xf] %v1024
    %1153 = vst [vmem:[#allocation8 + $0x7c] sm:$0xf] %v1025
    %1154 = vst [vmem:[#allocation8 + $0x80] sm:$0xf] %v1026
    %1155 = vst [vmem:[#allocation8 + $0x84] sm:$0xf] %v1027
    %1156 = vst [vmem:[#allocation8 + $0x88] sm:$0xf] %v1028
    %1157 = vst [vmem:[#allocation8 + $0x8c] sm:$0xf] %v1029
    %1158 = vst [vmem:[#allocation8 + $0x90] sm:$0xf] %v1030
    %1159 = vst [vmem:[#allocation8 + $0x94] sm:$0xf] %v1031
    %1160 = vst [vmem:[#allocation8 + $0x98] sm:$0xf] %v1032
    %1161 = vst [vmem:[#allocation8 + $0x9c] sm:$0xf] %v1033
    %1162 = vst [vmem:[#allocation8 + $0xa0] sm:$0xf] %v1034
    %1163 = vst [vmem:[#allocation8 + $0xa4] sm:$0xf] %v1035
    %1164 = vst [vmem:[#allocation8 + $0xa8] sm:$0xf] %v1036
    %1165 = vst [vmem:[#allocation8 + $0xac] sm:$0xf] %v1037
    %1166 = vst [vmem:[#allocation8 + $0xb0] sm:$0xf] %v1038
    %1167 = vst [vmem:[#allocation8 + $0xb4] sm:$0xf] %v1039
    %1168 = vst [vmem:[#allocation8 + $0xb8] sm:$0xf] %v1040
    %1169 = vst [vmem:[#allocation8 + $0xbc] sm:$0xf] %v1041
    %1170 = vst [vmem:[#allocation8 + $0xc0] sm:$0xf] %v1042
    %1171 = vst [vmem:[#allocation8 + $0xc4] sm:$0xf] %v1043
    %1172 = vst [vmem:[#allocation8 + $0xc8] sm:$0xf] %v1044
    %1173 = vst [vmem:[#allocation8 + $0xcc] sm:$0xf] %v1045
    %1174 = vst [vmem:[#allocation8 + $0xd0] sm:$0xf] %v1046
    %1175 = vst [vmem:[#allocation8 + $0xd4] sm:$0xf] %v1047
    %1176 = vst [vmem:[#allocation8 + $0xd8] sm:$0xf] %v1048
    %1177 = vst [vmem:[#allocation8 + $0xdc] sm:$0xf] %v1049
    %1178 = vst [vmem:[#allocation8 + $0xe0] sm:$0xf] %v1050
    %1179 = vst [vmem:[#allocation8 + $0xe4] sm:$0xf] %v1051
    %1180 = vst [vmem:[#allocation8 + $0xe8] sm:$0xf] %v1052
    %1181 = vst [vmem:[#allocation8 + $0xec] sm:$0xf] %v1053
    %1182 = vst [vmem:[#allocation8 + $0xf0] sm:$0xf] %v1054
    %1183 = vst [vmem:[#allocation8 + $0xf4] sm:$0xf] %v1055
    %1184 = vst [vmem:[#allocation8 + $0xf8] sm:$0xf] %v1056
    %1185 = vst [vmem:[#allocation8 + $0xfc] sm:$0xf] %v1057
    // Predicated region
    $region26: #{bottleneck_block_forward.3} parent=1 // pred_check
      _
    $region27: #{bottleneck_block_forward.3} parent=1 // pred_check_branch
      %1187 = sbr.rel (0) target = $region29
    $region28: #{bottleneck_block_forward.3} parent=1 // pred_region
      %s1189 = ssub.s32 4096, 4096
      %1190 = vsyncadd [#allocation4], %s1189
      %s1191 = sshll.u32 [#allocation8], 4
      %s1192 = int_to_ptr.vmem [resolvable:$true] %s1191
      %1197 = dma.vmem_to_hbm [thread:$0]  %s1192, 4096, %s3, [#allocation4], 64, 64, 4
    $region29: #{bottleneck_block_forward.3} parent=1 // pred_fallthru
      _
    // Predicated region
    $region30: #{bottleneck_block_forward.3} parent=1 // pred_check
      _
    $region31: #{bottleneck_block_forward.3} parent=1 // pred_check_branch
      %1199 = sbr.rel (0) target = $region33
    $region32: #{bottleneck_block_forward.3} parent=1 // pred_region
      %1200 = dma.done [#allocation4], 4096
    $region33: #{bottleneck_block_forward.3} parent=1 // pred_fallthru
      _
    %1201 = vsyncpa [#allocation3], 1
    %1202 = vsyncpa [#allocation6], 1
    %1203 = vsyncpa [#allocation4], 1

// kernel: bottleneck_block_forward.4
$region0: #{bottleneck_block_forward.4}
  #allocation0 [shape = 'u32[]', space=smem, size = 0x4, offset = 0x4, fixed_abs, tag = 'smem constant byte address 0x4 - core index']
  #allocation1 [shape = 'u32[144,128]{1,0:T(1,128)}', space=vmem, size = 0x12000, scoped, tag = 'internal scratch']
  %s0 = inlined_call_operand.hbm [shape: bf16[1088,128], index: 0, kind: input, shape index: {}, may-alias: {0,1}]
  %s1 = inlined_call_operand.hbm [shape: bf16[1088,128], index: 1, kind: input, shape index: {}, may-alias: {0,1}]
  %s2 = inlined_call_operand.hbm [shape: bf16[1152,128], index: 2, kind: input, shape index: {}]
  %s3 = inlined_call_operand.hbm [shape: f32[2,128], index: 3, kind: input, shape index: {}]
  %s4 = inlined_call_operand.hbm [shape: bf16[1024,128], index: 4, kind: output, shape index: {}]
  %s5 = sld [smem:[#allocation0]]
  $region65: #{bottleneck_block_forward.4} parent=0
    _
  %s7 = ssub.s32 1, %s5
  %s8 = scalar_select 0, %s7, %s5
  $region1: #{bottleneck_block_forward.4} parent=0
    #allocation2 [shape = 'u8[262144]{0}', space=vmem, size = 0x40000, scoped, tag = 'input window, operand 0']
    #allocation3 [shape = 's32[2]{0}', space=sflag, size = 0x8, scoped, tag = 'scoped memory for bottleneck_block_forward.4']
    #allocation4 [shape = 's32[2]{0}', space=sflag, size = 0x8, scoped, tag = 'scoped memory for bottleneck_block_forward.4']
    #allocation5 [shape = 'u8[32768]{0}', space=vmem, size = 0x8000, scoped, tag = 'input window, operand 1']
    #allocation6 [shape = 's32[2]{0}', space=sflag, size = 0x8, scoped, tag = 'scoped memory for bottleneck_block_forward.4']
    #allocation7 [shape = 'u8[294912]{0}', space=vmem, size = 0x48000, scoped, tag = 'input window, operand 2, single buffered']
    #allocation8 [shape = 'u8[1024]{0}', space=vmem, size = 0x400, scoped, tag = 'input window, operand 3, single buffered']
    #allocation9 [shape = 's32[1]{0}', space=sflag, size = 0x4, scoped, tag = 'scoped memory for bottleneck_block_forward.4']
    #allocation10 [shape = 'u8[262144]{0}', space=vmem, size = 0x40000, scoped, tag = 'output window, operand 0']
    %9 = vsyncpa [#allocation3], 0
    %s10 = scalar_lea.sflag [#allocation3], 1
    %11 = vsyncpa %s10, 0
    %12 = vsyncpa [#allocation6], 0
    %s13 = scalar_lea.sflag [#allocation6], 1
    %14 = vsyncpa %s13, 0
    %15 = vsyncpa [#allocation9], 0
    %16 = vsyncpa [#allocation4], 0
    %s17 = scalar_lea.sflag [#allocation4], 1
    %18 = vsyncpa %s17, 0
    loop: start=0, step=1, limit=4
    $region2: #{bottleneck_block_forward.4} parent=1 // loop_pre_header
      _
    $region3: #{bottleneck_block_forward.4} parent=1 // loop_header
      %s20 = sphi 0, %s24
      %p21 = scmp.ge.s32.totalorder %s20, 4
      %s30 = sphi 0, %s32
      %s33 = sphi 0, %s30
      %s34 = sphi 0, %s33
      %s50 = sphi 0, %s34
      %s60 = sphi 0, %s62
      %s63 = sphi 0, %s60
      %s64 = sphi 0, %s63
      %s80 = sphi 0, %s64
      %s84 = sphi 0, %s84
      %s86 = sphi 0, %s84
      %s87 = sphi 0, %s86
      %s101 = sphi 0, %s87
      %s105 = sphi 0, %s105
      %s107 = sphi 0, %s105
      %s108 = sphi 0, %s107
      %s122 = sphi 0, %s108
      %s128 = sphi 0, %s130
      %s131 = sphi 0, %s128
      %s132 = sphi 0, %s131
      %s148 = sphi 0, %s132
    $region4: #{bottleneck_block_forward.4} parent=1 // loop_header_branch
      %23 = sbr.rel (%p21) target = $region8
    $region5: #{bottleneck_block_forward.4} parent=1 // loop_body
      %s25 = ssub.s32 %s20, 1
      %s26 = ssub.s32 %s20, 2
      %s27 = sadd.s32 %s20, 1
      %s28 = ssub.s32 %s20, %s27
      %p29 = scmp.eq.s32.totalorder %s28, 0
      %s31 = sadd.s32 %s30, 1
      %s32 = scalar_select %p29, %s30, %s31
      %p35 = pneg %p29
      %p36 = scmp.eq.s32.totalorder %s20, 1
      %p37 = por %p35, %p36
      %p38 = scmp.ne.s32.totalorder %s30, %s33
      %p39 = scmp.eq.s32.totalorder %s20, 0
      %p40 = por %p38, %p39
      %p41 = scmp.ne.s32.totalorder %s30, %s33
      %p42 = scmp.eq.s32.totalorder %s25, 1
      %p43 = por %p41, %p42
      %p44 = scmp.ne.s32.totalorder %s33, %s34
      %p45 = scmp.eq.s32.totalorder %s25, 0
      %p46 = por %p44, %p45
      %p47 = scmp.ne.s32.totalorder %s33, %s34
      %p48 = scmp.eq.s32.totalorder %s26, 1
      %p49 = por %p47, %p48
      %p51 = scmp.ne.s32.totalorder %s34, %s50
      %p52 = scmp.eq.s32.totalorder %s26, 0
      %p53 = por %p51, %p52
      %s54 = sadd.s32 %s20, 1
      %s55 = smul.u32 %s54, 8
      %s56 = sadd.s32 %s27, 1
      %s57 = smul.u32 %s56, 8
      %s58 = ssub.s32 %s55, %s57
      %p59 = scmp.eq.s32.totalorder %s58, 0
      %s61 = sadd.s32 %s60, 1
      %s62 = scalar_select %p59, %s60, %s61
      %p65 = pneg %p59
      %p66 = scmp.eq.s32.totalorder %s20, 1
      %p67 = por %p65, %p66
      %p68 = scmp.ne.s32.totalorder %s60, %s63
      %p69 = scmp.eq.s32.totalorder %s20, 0
      %p70 = por %p68, %p69
      %p71 = scmp.ne.s32.totalorder %s60, %s63
      %p72 = scmp.eq.s32.totalorder %s25, 1
      %p73 = por %p71, %p72
      %p74 = scmp.ne.s32.totalorder %s63, %s64
      %p75 = scmp.eq.s32.totalorder %s25, 0
      %p76 = por %p74, %p75
      %p77 = scmp.ne.s32.totalorder %s63, %s64
      %p78 = scmp.eq.s32.totalorder %s26, 1
      %p79 = por %p77, %p78
      %p81 = scmp.ne.s32.totalorder %s64, %s80
      %p82 = scmp.eq.s32.totalorder %s26, 0
      %p83 = por %p81, %p82
      %s85 = sadd.s32 %s84, 1
      %p88 = scmp.eq.s32.totalorder %s20, 1
      %p89 = scmp.ne.s32.totalorder %s84, %s86
      %p90 = scmp.eq.s32.totalorder %s20, 0
      %p91 = por %p89, %p90
      %p92 = scmp.ne.s32.totalorder %s84, %s86
      %p93 = scmp.eq.s32.totalorder %s25, 1
      %p94 = por %p92, %p93
      %p95 = scmp.ne.s32.totalorder %s86, %s87
      %p96 = scmp.eq.s32.totalorder %s25, 0
      %p97 = por %p95, %p96
      %p98 = scmp.ne.s32.totalorder %s86, %s87
      %p99 = scmp.eq.s32.totalorder %s26, 1
      %p100 = por %p98, %p99
      %p102 = scmp.ne.s32.totalorder %s87, %s101
      %p103 = scmp.eq.s32.totalorder %s26, 0
      %p104 = por %p102, %p103
      %s106 = sadd.s32 %s105, 1
      %p109 = scmp.eq.s32.totalorder %s20, 1
      %p110 = scmp.ne.s32.totalorder %s105, %s107
      %p111 = scmp.eq.s32.totalorder %s20, 0
      %p112 = por %p110, %p111
      %p113 = scmp.ne.s32.totalorder %s105, %s107
      %p114 = scmp.eq.s32.totalorder %s25, 1
      %p115 = por %p113, %p114
      %p116 = scmp.ne.s32.totalorder %s107, %s108
      %p117 = scmp.eq.s32.totalorder %s25, 0
      %p118 = por %p116, %p117
      %p119 = scmp.ne.s32.totalorder %s107, %s108
      %p120 = scmp.eq.s32.totalorder %s26, 1
      %p121 = por %p119, %p120
      %p123 = scmp.ne.s32.totalorder %s108, %s122
      %p124 = scmp.eq.s32.totalorder %s26, 0
      %p125 = por %p123, %p124
      %s126 = ssub.s32 %s20, %s27
      %p127 = scmp.eq.s32.totalorder %s126, 0
      %s129 = sadd.s32 %s128, 1
      %s130 = scalar_select %p127, %s128, %s129
      %p133 = pneg %p127
      %p134 = scmp.eq.s32.totalorder %s20, 1
      %p135 = por %p133, %p134
      %p136 = scmp.ne.s32.totalorder %s128, %s131
      %p137 = scmp.eq.s32.totalorder %s20, 0
      %p138 = por %p136, %p137
      %p139 = scmp.ne.s32.totalorder %s128, %s131
      %p140 = scmp.eq.s32.totalorder %s25, 1
      %p141 = por %p139, %p140
      %p142 = scmp.ne.s32.totalorder %s131, %s132
      %p143 = scmp.eq.s32.totalorder %s25, 0
      %p144 = por %p142, %p143
      %p145 = scmp.ne.s32.totalorder %s131, %s132
      %p146 = scmp.eq.s32.totalorder %s26, 1
      %p147 = por %p145, %p146
      %p149 = scmp.ne.s32.totalorder %s132, %s148
      %p150 = scmp.eq.s32.totalorder %s26, 0
      %p151 = por %p149, %p150
      %p152 = scmp.le.s32.totalorder 1, %s20
      %p153 = scmp.lt.s32.totalorder %s20, 3
      %p154 = pnand %p152, %p153
      %p155 = pneg %p154
      // Predicated region
      $region9: #{bottleneck_block_forward.4} parent=5 // pred_check
        _
      $region10: #{bottleneck_block_forward.4} parent=5 // pred_check_branch
        %157 = sbr.rel (%p154) target = $region12
      $region11: #{bottleneck_block_forward.4} parent=5 // pred_region
        %s158 = ssub.s32 %s20, 1
        // Predicated region
        $region13: #{bottleneck_block_forward.4} parent=11 // pred_check
          %p159 = pneg %p97
        $region14: #{bottleneck_block_forward.4} parent=11 // pred_check_branch
          %161 = sbr.rel (%p159) target = $region16
        $region15: #{bottleneck_block_forward.4} parent=11 // pred_region
          %s163 = ssub.s32 9216, 9216
          %164 = vsyncadd [#allocation6], %s163
          %s165 = sshll.u32 [#allocation7], 4
          %s166 = int_to_ptr.vmem [resolvable:$true] %s165
          %171 = dma.hbm_to_vmem [thread:$0]  %s2, 9216, %s166, [#allocation6], 64, 64, 4
        $region16: #{bottleneck_block_forward.4} parent=11 // pred_fallthru
          _
        // Predicated region
        $region17: #{bottleneck_block_forward.4} parent=11 // pred_check
          %p172 = pneg %p118
        $region18: #{bottleneck_block_forward.4} parent=11 // pred_check_branch
          %174 = sbr.rel (%p172) target = $region20
        $region19: #{bottleneck_block_forward.4} parent=11 // pred_region
          %s176 = ssub.s32 32, 32
          %177 = vsyncadd [#allocation9], %s176
          %s179 = sshll.u32 [#allocation8], 4
          %s180 = int_to_ptr.vmem [resolvable:$true] %s179
          %182 = dma.hbm_to_vmem [thread:$0]  %s3, 32, %s180, [#allocation9]
        $region20: #{bottleneck_block_forward.4} parent=11 // pred_fallthru
          _
      $region12: #{bottleneck_block_forward.4} parent=5 // pred_fallthru
        _
      %p183 = scmp.lt.s32.totalorder %s20, 2
      // Predicated region
      $region21: #{bottleneck_block_forward.4} parent=5 // pred_check
        %p184 = pneg %p183
      $region22: #{bottleneck_block_forward.4} parent=5 // pred_check_branch
        %186 = sbr.rel (%p184) target = $region24
      $region23: #{bottleneck_block_forward.4} parent=5 // pred_region
        // Predicated region
        $region25: #{bottleneck_block_forward.4} parent=23 // pred_check
          %p187 = pneg %p40
        $region26: #{bottleneck_block_forward.4} parent=23 // pred_check_branch
          %189 = sbr.rel (%p187) target = $region28
        $region27: #{bottleneck_block_forward.4} parent=23 // pred_region
          %s190 = sand.u32 %s30, 1
          %s191 = scalar_lea.sflag [#allocation3], %s190
          %s192 = sand.u32 %s30, 1
          %s193 = smul.addr %s192, 256
          %s194 = scalar_lea.vmem [#allocation2], %s193
          %s195 = smul.u32 64, %s20
          %s196 = ssub.s32 136, %s195
          %p197 = scmp.lt.s32.totalorder %s196, 64
          %s198 = scalar_select %p197, %s196, 64
          %s199 = smul.u32 64, %s198
          %s201 = ssub.s32 4096, %s199
          %202 = vsyncadd %s191, %s201
          %p203 = scmp.ne.s32.totalorder 0, %s199
          %s204 = smul.addr %s195, 64
          %s205 = scalar_lea.hbm %s0, %s204
          %s206 = smul.u32 4, %s198
          %s207 = sshll.u32 %s194, 4
          %s208 = int_to_ptr.vmem [resolvable:$true] %s207
          %s209 = sshll.u32 %s206, 4
          %213 = dma.hbm_to_vmem [thread:$0]  (%p203), %s205, %s209, %s208, %s191, 64, 64, 4
        $region28: #{bottleneck_block_forward.4} parent=23 // pred_fallthru
          _
        // Predicated region
        $region29: #{bottleneck_block_forward.4} parent=23 // pred_check
          %p214 = pneg %p70
        $region30: #{bottleneck_block_forward.4} parent=23 // pred_check_branch
          %216 = sbr.rel (%p214) target = $region32
        $region31: #{bottleneck_block_forward.4} parent=23 // pred_region
          %s217 = sand.u32 %s20, 1
          %s218 = scalar_lea.sflag [#allocation6], %s217
          %s219 = sand.u32 %s60, 1
          %s220 = smul.addr %s219, 32
          %s221 = scalar_lea.vmem [#allocation5], %s220
          %s222 = sadd.s32 %s20, 1
          %s223 = smul.u32 %s222, 8
          %s224 = smul.u32 8, %s223
          %s226 = ssub.s32 512, 512
          %227 = vsyncadd %s218, %s226
          %s228 = smul.addr %s224, 64
          %s229 = scalar_lea.hbm %s1, %s228
          %s230 = sshll.u32 %s221, 4
          %s231 = int_to_ptr.vmem [resolvable:$true] %s230
          %236 = dma.hbm_to_vmem [thread:$0]  %s229, 512, %s231, %s218, 64, 64, 4
        $region32: #{bottleneck_block_forward.4} parent=23 // pred_fallthru
          _
      $region24: #{bottleneck_block_forward.4} parent=5 // pred_fallthru
        _
      %p237 = scmp.le.s32.totalorder 1, %s20
      %p238 = scmp.lt.s32.totalorder %s20, 3
      %p239 = pnand %p237, %p238
      %p240 = pneg %p239
      // Predicated region
      $region33: #{bottleneck_block_forward.4} parent=5 // pred_check
        _
      $region34: #{bottleneck_block_forward.4} parent=5 // pred_check_branch
        %242 = sbr.rel (%p239) target = $region36
      $region35: #{bottleneck_block_forward.4} parent=5 // pred_region
        %s243 = ssub.s32 %s20, 1
        %s244 = sand.u32 %s33, 1
        %s245 = scalar_lea.sflag [#allocation3], %s244
        %s246 = sand.u32 %s33, 1
        %s247 = smul.addr %s246, 256
        %s248 = scalar_lea.vmem [#allocation2], %s247
        // Predicated region
        $region37: #{bottleneck_block_forward.4} parent=35 // pred_check
          %p249 = pneg %p46
        $region38: #{bottleneck_block_forward.4} parent=35 // pred_check_branch
          %251 = sbr.rel (%p249) target = $region40
        $region39: #{bottleneck_block_forward.4} parent=35 // pred_region
          %252 = dma.done %s245, 4096
        $region40: #{bottleneck_block_forward.4} parent=35 // pred_fallthru
          _
        %s253 = sand.u32 %s25, 1
        %s254 = scalar_lea.sflag [#allocation6], %s253
        %s255 = sand.u32 %s63, 1
        %s256 = smul.addr %s255, 32
        %s257 = scalar_lea.vmem [#allocation5], %s256
        // Predicated region
        $region41: #{bottleneck_block_forward.4} parent=35 // pred_check
          %p258 = pneg %p76
        $region42: #{bottleneck_block_forward.4} parent=35 // pred_check_branch
          %260 = sbr.rel (%p258) target = $region44
        $region43: #{bottleneck_block_forward.4} parent=35 // pred_region
          %261 = dma.done %s254, 512
        $region44: #{bottleneck_block_forward.4} parent=35 // pred_fallthru
          _
        // Predicated region
        $region45: #{bottleneck_block_forward.4} parent=35 // pred_check
          %p262 = pneg %p97
        $region46: #{bottleneck_block_forward.4} parent=35 // pred_check_branch
          %264 = sbr.rel (%p262) target = $region48
        $region47: #{bottleneck_block_forward.4} parent=35 // pred_region
          %265 = dma.done [#allocation6], 9216
        $region48: #{bottleneck_block_forward.4} parent=35 // pred_fallthru
          _
        // Predicated region
        $region49: #{bottleneck_block_forward.4} parent=35 // pred_check
          %p266 = pneg %p118
        $region50: #{bottleneck_block_forward.4} parent=35 // pred_check_branch
          %268 = sbr.rel (%p266) target = $region52
        $region51: #{bottleneck_block_forward.4} parent=35 // pred_region
          %269 = dma.done [#allocation9], 32
        $region52: #{bottleneck_block_forward.4} parent=35 // pred_fallthru
          _
        %s270 = sand.u32 %s33, 1
        %s271 = scalar_lea.sflag [#allocation3], %s270
        %s272 = sand.u32 %s33, 1
        %s273 = smul.addr %s272, 256
        %s274 = scalar_lea.vmem [#allocation2], %s273
        %p275 = pneg %p46
        %p276 = pneg %p43
        %s277 = sand.u32 %s25, 1
        %s278 = scalar_lea.sflag [#allocation6], %s277
        %s279 = sand.u32 %s63, 1
        %s280 = smul.addr %s279, 32
        %s281 = scalar_lea.vmem [#allocation5], %s280
        %p282 = pneg %p76
        %p283 = pneg %p73
        %p284 = pneg %p97
        %p285 = pneg %p94
        %p286 = pneg %p118
        %p287 = pneg %p115
        %p288 = pneg %p144
        %p289 = pneg %p141
        %s290 = sand.u32 %s131, 1
        %s291 = scalar_lea.sflag [#allocation4], %s290
        %s292 = sand.u32 %s131, 1
        %s293 = smul.addr %s292, 256
        %s294 = scalar_lea.vmem [#allocation10], %s293
        %s295 = smul.u32 64, %s25
        %s296 = ssub.s32 136, %s295
        %p297 = scmp.lt.s32.totalorder %s296, 64
        %s298 = scalar_select %p297, %s296, 64
        %s299 = smul.u32 64, %s298
        %s300 = sadd.s32 %s25, 1
        %s301 = smul.u32 %s300, 8
        %s302 = smul.u32 8, %s301
        %s303 = smul.u32 64, %s25
        %v305 = vld [vmem:[#allocation8] sm:$0x1]
        %v306 = vld [vmem:[#allocation8 + $0x1] sm:$0x1]
        %v307 = vld [vmem:[%s248] sm:$0xf]
        %v308 = vld [vmem:[%s248 + $0x4] sm:$0xf]
        %v309 = vld [vmem:[%s248 + $0x8] sm:$0xf]
        %v310 = vld [vmem:[%s248 + $0xc] sm:$0xf]
        %v311 = vld [vmem:[%s248 + $0x10] sm:$0xf]
        %v312 = vld [vmem:[%s248 + $0x14] sm:$0xf]
        %v313 = vld [vmem:[%s248 + $0x18] sm:$0xf]
        %v314 = vld [vmem:[%s248 + $0x1c] sm:$0xf]
        %v315 = vld [vmem:[%s248 + $0x20] sm:$0xf]
        %v316 = vld [vmem:[%s248 + $0x24] sm:$0xf]
        %v317 = vld [vmem:[%s248 + $0x28] sm:$0xf]
        %v318 = vld [vmem:[%s248 + $0x2c] sm:$0xf]
        %v319 = vld [vmem:[%s248 + $0x30] sm:$0xf]
        %v320 = vld [vmem:[%s248 + $0x34] sm:$0xf]
        %v321 = vld [vmem:[%s248 + $0x38] sm:$0xf]
        %v322 = vld [vmem:[%s248 + $0x3c] sm:$0xf]
        %v323 = vld [vmem:[%s248 + $0x40] sm:$0xf]
        %v324 = vld [vmem:[%s248 + $0x44] sm:$0xf]
        %v325 = vld [vmem:[%s248 + $0x48] sm:$0xf]
        %v326 = vld [vmem:[%s248 + $0x4c] sm:$0xf]
        %v327 = vld [vmem:[%s248 + $0x50] sm:$0xf]
        %v328 = vld [vmem:[%s248 + $0x54] sm:$0xf]
        %v329 = vld [vmem:[%s248 + $0x58] sm:$0xf]
        %v330 = vld [vmem:[%s248 + $0x5c] sm:$0xf]
        %v331 = vld [vmem:[%s248 + $0x60] sm:$0xf]
        %v332 = vld [vmem:[%s248 + $0x64] sm:$0xf]
        %v333 = vld [vmem:[%s248 + $0x68] sm:$0xf]
        %v334 = vld [vmem:[%s248 + $0x6c] sm:$0xf]
        %v335 = vld [vmem:[%s248 + $0x70] sm:$0xf]
        %v336 = vld [vmem:[%s248 + $0x74] sm:$0xf]
        %v337 = vld [vmem:[%s248 + $0x78] sm:$0xf]
        %v338 = vld [vmem:[%s248 + $0x7c] sm:$0xf]
        %v339 = vld [vmem:[%s248 + $0x80] sm:$0xf]
        %v340 = vld [vmem:[%s248 + $0x84] sm:$0xf]
        %v341 = vld [vmem:[%s248 + $0x88] sm:$0xf]
        %v342 = vld [vmem:[%s248 + $0x8c] sm:$0xf]
        %v343 = vld [vmem:[%s248 + $0x90] sm:$0xf]
        %v344 = vld [vmem:[%s248 + $0x94] sm:$0xf]
        %v345 = vld [vmem:[%s248 + $0x98] sm:$0xf]
        %v346 = vld [vmem:[%s248 + $0x9c] sm:$0xf]
        %v347 = vld [vmem:[%s248 + $0xa0] sm:$0xf]
        %v348 = vld [vmem:[%s248 + $0xa4] sm:$0xf]
        %v349 = vld [vmem:[%s248 + $0xa8] sm:$0xf]
        %v350 = vld [vmem:[%s248 + $0xac] sm:$0xf]
        %v351 = vld [vmem:[%s248 + $0xb0] sm:$0xf]
        %v352 = vld [vmem:[%s248 + $0xb4] sm:$0xf]
        %v353 = vld [vmem:[%s248 + $0xb8] sm:$0xf]
        %v354 = vld [vmem:[%s248 + $0xbc] sm:$0xf]
        %v355 = vld [vmem:[%s248 + $0xc0] sm:$0xf]
        %v356 = vld [vmem:[%s248 + $0xc4] sm:$0xf]
        %v357 = vld [vmem:[%s248 + $0xc8] sm:$0xf]
        %v358 = vld [vmem:[%s248 + $0xcc] sm:$0xf]
        %v359 = vld [vmem:[%s248 + $0xd0] sm:$0xf]
        %v360 = vld [vmem:[%s248 + $0xd4] sm:$0xf]
        %v361 = vld [vmem:[%s248 + $0xd8] sm:$0xf]
        %v362 = vld [vmem:[%s248 + $0xdc] sm:$0xf]
        %v363 = vld [vmem:[%s248 + $0xe0] sm:$0xf]
        %v364 = vld [vmem:[%s248 + $0xe4] sm:$0xf]
        %v365 = vld [vmem:[%s248 + $0xe8] sm:$0xf]
        %v366 = vld [vmem:[%s248 + $0xec] sm:$0xf]
        %v367 = vld [vmem:[%s248 + $0xf0] sm:$0xf]
        %v368 = vld [vmem:[%s248 + $0xf4] sm:$0xf]
        %v369 = vld [vmem:[%s248 + $0xf8] sm:$0xf]
        %v370 = vld [vmem:[%s248 + $0xfc] sm:$0xf]
        %v371 = vld [vmem:[%s257] sm:$0xf]
        %v372 = vld [vmem:[%s257 + $0x4] sm:$0xf]
        %v373 = vld [vmem:[%s257 + $0x8] sm:$0xf]
        %v374 = vld [vmem:[%s257 + $0xc] sm:$0xf]
        %v375 = vld [vmem:[%s257 + $0x10] sm:$0xf]
        %v376 = vld [vmem:[%s257 + $0x14] sm:$0xf]
        %v441 = vunpack.c.l.b16 %v307
        %v442 = vunpack.c.l.b16 %v308
        %v443 = vunpack.c.l.b16 %v309
        %v444 = vunpack.c.l.b16 %v310
        %v445 = vunpack.c.l.b16 %v311
        %v446 = vunpack.c.l.b16 %v312
        %v447 = vunpack.c.l.b16 %v313
        %v448 = vunpack.c.l.b16 %v314
        %v449 = vunpack.c.l.b16 %v315
        %v450 = vunpack.c.l.b16 %v316
        %v451 = vunpack.c.l.b16 %v317
        %v452 = vunpack.c.l.b16 %v318
        %v453 = vunpack.c.l.b16 %v319
        %v454 = vunpack.c.l.b16 %v320
        %v455 = vunpack.c.l.b16 %v321
        %v456 = vunpack.c.l.b16 %v322
        %v457 = vunpack.c.l.b16 %v323
        %v458 = vunpack.c.l.b16 %v324
        %v459 = vunpack.c.l.b16 %v325
        %v460 = vunpack.c.l.b16 %v326
        %v461 = vunpack.c.l.b16 %v327
        %v462 = vunpack.c.l.b16 %v328
        %v463 = vunpack.c.l.b16 %v329
        %v464 = vunpack.c.l.b16 %v330
        %v465 = vunpack.c.l.b16 %v331
        %v466 = vunpack.c.l.b16 %v332
        %v467 = vunpack.c.l.b16 %v333
        %v468 = vunpack.c.l.b16 %v334
        %v469 = vunpack.c.l.b16 %v335
        %v470 = vunpack.c.l.b16 %v336
        %v471 = vunpack.c.l.b16 %v337
        %v472 = vunpack.c.l.b16 %v338
        %v473 = vunpack.c.l.b16 %v339
        %v474 = vunpack.c.l.b16 %v340
        %v475 = vunpack.c.l.b16 %v341
        %v476 = vunpack.c.l.b16 %v342
        %v477 = vunpack.c.l.b16 %v343
        %v478 = vunpack.c.l.b16 %v344
        %v479 = vunpack.c.l.b16 %v345
        %v480 = vunpack.c.l.b16 %v346
        %v481 = vunpack.c.l.b16 %v347
        %v482 = vunpack.c.l.b16 %v348
        %v483 = vunpack.c.l.b16 %v349
        %v484 = vunpack.c.l.b16 %v350
        %v485 = vunpack.c.l.b16 %v351
        %v486 = vunpack.c.l.b16 %v352
        %v487 = vunpack.c.l.b16 %v353
        %v488 = vunpack.c.l.b16 %v354
        %v489 = vunpack.c.l.b16 %v355
        %v490 = vunpack.c.l.b16 %v356
        %v491 = vunpack.c.l.b16 %v357
        %v492 = vunpack.c.l.b16 %v358
        %v493 = vunpack.c.l.b16 %v359
        %v494 = vunpack.c.l.b16 %v360
        %v495 = vunpack.c.l.b16 %v361
        %v496 = vunpack.c.l.b16 %v362
        %v497 = vunpack.c.l.b16 %v363
        %v498 = vunpack.c.l.b16 %v364
        %v499 = vunpack.c.l.b16 %v365
        %v500 = vunpack.c.l.b16 %v366
        %v501 = vunpack.c.l.b16 %v367
        %v502 = vunpack.c.l.b16 %v368
        %v503 = vunpack.c.l.b16 %v369
        %v504 = vunpack.c.l.b16 %v370
        %v505 = vpack.c.b16 %v442, %v441
        %v506 = vpack.c.b16 %v444, %v443
        %v507 = vpack.c.b16 %v446, %v445
        %v508 = vpack.c.b16 %v448, %v447
        %v509 = vpack.c.b16 %v450, %v449
        %v510 = vpack.c.b16 %v452, %v451
        %v511 = vpack.c.b16 %v454, %v453
        %v512 = vpack.c.b16 %v456, %v455
        %v513 = vpack.c.b16 %v458, %v457
        %v514 = vpack.c.b16 %v460, %v459
        %v515 = vpack.c.b16 %v462, %v461
        %v516 = vpack.c.b16 %v464, %v463
        %v517 = vpack.c.b16 %v466, %v465
        %v518 = vpack.c.b16 %v468, %v467
        %v519 = vpack.c.b16 %v470, %v469
        %v520 = vpack.c.b16 %v472, %v471
        %v521 = vpack.c.b16 %v474, %v473
        %v522 = vpack.c.b16 %v476, %v475
        %v523 = vpack.c.b16 %v478, %v477
        %v524 = vpack.c.b16 %v480, %v479
        %v525 = vpack.c.b16 %v482, %v481
        %v526 = vpack.c.b16 %v484, %v483
        %v527 = vpack.c.b16 %v486, %v485
        %v528 = vpack.c.b16 %v488, %v487
        %v529 = vpack.c.b16 %v490, %v489
        %v530 = vpack.c.b16 %v492, %v491
        %v531 = vpack.c.b16 %v494, %v493
        %v532 = vpack.c.b16 %v496, %v495
        %v533 = vpack.c.b16 %v498, %v497
        %v534 = vpack.c.b16 %v500, %v499
        %v535 = vpack.c.b16 %v502, %v501
        %v536 = vpack.c.b16 %v504, %v503
        %v575 = vunpack.c.l.b16 %v371
        %v576 = vunpack.c.l.b16 %v372
        %v577 = vunpack.c.l.b16 %v373
        %v578 = vunpack.c.l.b16 %v374
        %v579 = vunpack.c.l.b16 %v375
        %v580 = vunpack.c.l.b16 %v376
        %v581 = vpack.c.b16 %v576, %v575
        %v582 = vpack.c.b16 %v578, %v577
        %v583 = vpack.c.b16 %v580, %v579
        %vm584 = vsmask.f32 7424
        %v586 = vshrl.u32 %v505, 16
        %v588 = vshll.u32 %v505, 16
        %v590 = vrot.slane %v588, 1
        %v591 = vor.u32 %v586, %v590
        %v593 = vshll.u32 %v506, 16
        %v595 = vrot.slane %v593, 1
        %v596 = vsel %vm584, %v591, %v595
        %v597 = vshrl.u32 %v506, 16
        %v599 = vor.u32 %v597, %v595
        %v601 = vshll.u32 %v507, 16
        %v603 = vrot.slane %v601, 1
        %v604 = vsel %vm584, %v599, %v603
        %v605 = vshrl.u32 %v507, 16
        %v607 = vor.u32 %v605, %v603
        %v609 = vshll.u32 %v508, 16
        %v611 = vrot.slane %v609, 1
        %v612 = vsel %vm584, %v607, %v611
        %v613 = vshrl.u32 %v508, 16
        %v615 = vor.u32 %v613, %v611
        %v617 = vshll.u32 %v509, 16
        %v619 = vrot.slane %v617, 1
        %v620 = vsel %vm584, %v615, %v619
        %v621 = vshrl.u32 %v509, 16
        %v623 = vor.u32 %v621, %v619
        %v625 = vshll.u32 %v510, 16
        %v627 = vrot.slane %v625, 1
        %v628 = vsel %vm584, %v623, %v627
        %v629 = vshrl.u32 %v510, 16
        %v631 = vor.u32 %v629, %v627
        %v633 = vshll.u32 %v511, 16
        %v635 = vrot.slane %v633, 1
        %v636 = vsel %vm584, %v631, %v635
        %v637 = vshrl.u32 %v511, 16
        %v639 = vor.u32 %v637, %v635
        %v641 = vshll.u32 %v512, 16
        %v643 = vrot.slane %v641, 1
        %v644 = vsel %vm584, %v639, %v643
        %v645 = vshrl.u32 %v512, 16
        %v647 = vor.u32 %v645, %v643
        %v649 = vshll.u32 %v513, 16
        %v651 = vrot.slane %v649, 1
        %v652 = vsel %vm584, %v647, %v651
        %v653 = vshrl.u32 %v513, 16
        %v655 = vor.u32 %v653, %v651
        %v657 = vshll.u32 %v514, 16
        %v659 = vrot.slane %v657, 1
        %v660 = vsel %vm584, %v655, %v659
        %v661 = vshrl.u32 %v514, 16
        %v663 = vor.u32 %v661, %v659
        %v665 = vshll.u32 %v515, 16
        %v667 = vrot.slane %v665, 1
        %v668 = vsel %vm584, %v663, %v667
        %v669 = vshrl.u32 %v515, 16
        %v671 = vor.u32 %v669, %v667
        %v673 = vshll.u32 %v516, 16
        %v675 = vrot.slane %v673, 1
        %v676 = vsel %vm584, %v671, %v675
        %v677 = vshrl.u32 %v516, 16
        %v679 = vor.u32 %v677, %v675
        %v681 = vshll.u32 %v517, 16
        %v683 = vrot.slane %v681, 1
        %v684 = vsel %vm584, %v679, %v683
        %v685 = vshrl.u32 %v517, 16
        %v687 = vor.u32 %v685, %v683
        %v689 = vshll.u32 %v518, 16
        %v691 = vrot.slane %v689, 1
        %v692 = vsel %vm584, %v687, %v691
        %v693 = vshrl.u32 %v518, 16
        %v695 = vor.u32 %v693, %v691
        %v697 = vshll.u32 %v519, 16
        %v699 = vrot.slane %v697, 1
        %v700 = vsel %vm584, %v695, %v699
        %v701 = vshrl.u32 %v519, 16
        %v703 = vor.u32 %v701, %v699
        %v705 = vshll.u32 %v520, 16
        %v707 = vrot.slane %v705, 1
        %v708 = vsel %vm584, %v703, %v707
        %v709 = vshrl.u32 %v520, 16
        %v711 = vor.u32 %v709, %v707
        %v713 = vshll.u32 %v521, 16
        %v715 = vrot.slane %v713, 1
        %v716 = vsel %vm584, %v711, %v715
        %v717 = vshrl.u32 %v521, 16
        %v719 = vor.u32 %v717, %v715
        %v721 = vshll.u32 %v522, 16
        %v723 = vrot.slane %v721, 1
        %v724 = vsel %vm584, %v719, %v723
        %v725 = vshrl.u32 %v522, 16
        %v727 = vor.u32 %v725, %v723
        %v729 = vshll.u32 %v523, 16
        %v731 = vrot.slane %v729, 1
        %v732 = vsel %vm584, %v727, %v731
        %v733 = vshrl.u32 %v523, 16
        %v735 = vor.u32 %v733, %v731
        %v737 = vshll.u32 %v524, 16
        %v739 = vrot.slane %v737, 1
        %v740 = vsel %vm584, %v735, %v739
        %v741 = vshrl.u32 %v524, 16
        %v743 = vor.u32 %v741, %v739
        %v745 = vshll.u32 %v525, 16
        %v747 = vrot.slane %v745, 1
        %v748 = vsel %vm584, %v743, %v747
        %v749 = vshrl.u32 %v525, 16
        %v751 = vor.u32 %v749, %v747
        %v753 = vshll.u32 %v526, 16
        %v755 = vrot.slane %v753, 1
        %v756 = vsel %vm584, %v751, %v755
        %v757 = vshrl.u32 %v526, 16
        %v759 = vor.u32 %v757, %v755
        %v761 = vshll.u32 %v527, 16
        %v763 = vrot.slane %v761, 1
        %v764 = vsel %vm584, %v759, %v763
        %v765 = vshrl.u32 %v527, 16
        %v767 = vor.u32 %v765, %v763
        %v769 = vshll.u32 %v528, 16
        %v771 = vrot.slane %v769, 1
        %v772 = vsel %vm584, %v767, %v771
        %v773 = vshrl.u32 %v528, 16
        %v775 = vor.u32 %v773, %v771
        %v777 = vshll.u32 %v529, 16
        %v779 = vrot.slane %v777, 1
        %v780 = vsel %vm584, %v775, %v779
        %v781 = vshrl.u32 %v529, 16
        %v783 = vor.u32 %v781, %v779
        %v785 = vshll.u32 %v530, 16
        %v787 = vrot.slane %v785, 1
        %v788 = vsel %vm584, %v783, %v787
        %v789 = vshrl.u32 %v530, 16
        %v791 = vor.u32 %v789, %v787
        %v793 = vshll.u32 %v531, 16
        %v795 = vrot.slane %v793, 1
        %v796 = vsel %vm584, %v791, %v795
        %v797 = vshrl.u32 %v531, 16
        %v799 = vor.u32 %v797, %v795
        %v801 = vshll.u32 %v532, 16
        %v803 = vrot.slane %v801, 1
        %v804 = vsel %vm584, %v799, %v803
        %v805 = vshrl.u32 %v532, 16
        %v807 = vor.u32 %v805, %v803
        %v809 = vshll.u32 %v533, 16
        %v811 = vrot.slane %v809, 1
        %v812 = vsel %vm584, %v807, %v811
        %v813 = vshrl.u32 %v533, 16
        %v815 = vor.u32 %v813, %v811
        %v817 = vshll.u32 %v534, 16
        %v819 = vrot.slane %v817, 1
        %v820 = vsel %vm584, %v815, %v819
        %v821 = vshrl.u32 %v534, 16
        %v823 = vor.u32 %v821, %v819
        %v825 = vshll.u32 %v535, 16
        %v827 = vrot.slane %v825, 1
        %v828 = vsel %vm584, %v823, %v827
        %v829 = vshrl.u32 %v535, 16
        %v831 = vor.u32 %v829, %v827
        %v833 = vshll.u32 %v536, 16
        %v835 = vrot.slane %v833, 1
        %v836 = vsel %vm584, %v831, %v835
        %v837 = vshrl.u32 %v536, 16
        %v839 = vor.u32 %v837, %v835
        %v841 = vshll.u32 %v581, 16
        %v843 = vrot.slane %v841, 1
        %v844 = vsel %vm584, %v839, %v843
        %vm877 = vcmask 1046528
        %v878 = vrot.slane %v505, 1
        %v879 = vrot.slane %v506, 1
        %v880 = vsel %vm877, %v878, %v879
        %v881 = vrot.slane %v507, 1
        %v882 = vsel %vm877, %v879, %v881
        %v883 = vrot.slane %v508, 1
        %v884 = vsel %vm877, %v881, %v883
        %v885 = vrot.slane %v509, 1
        %v886 = vsel %vm877, %v883, %v885
        %v887 = vrot.slane %v510, 1
        %v888 = vsel %vm877, %v885, %v887
        %v889 = vrot.slane %v511, 1
        %v890 = vsel %vm877, %v887, %v889
        %v891 = vrot.slane %v512, 1
        %v892 = vsel %vm877, %v889, %v891
        %v893 = vrot.slane %v513, 1
        %v894 = vsel %vm877, %v891, %v893
        %v895 = vrot.slane %v514, 1
        %v896 = vsel %vm877, %v893, %v895
        %v897 = vrot.slane %v515, 1
        %v898 = vsel %vm877, %v895, %v897
        %v899 = vrot.slane %v516, 1
        %v900 = vsel %vm877, %v897, %v899
        %v901 = vrot.slane %v517, 1
        %v902 = vsel %vm877, %v899, %v901
        %v903 = vrot.slane %v518, 1
        %v904 = vsel %vm877, %v901, %v903
        %v905 = vrot.slane %v519, 1
        %v906 = vsel %vm877, %v903, %v905
        %v907 = vrot.slane %v520, 1
        %v908 = vsel %vm877, %v905, %v907
        %v909 = vrot.slane %v521, 1
        %v910 = vsel %vm877, %v907, %v909
        %v911 = vrot.slane %v522, 1
        %v912 = vsel %vm877, %v909, %v911
        %v913 = vrot.slane %v523, 1
        %v914 = vsel %vm877, %v911, %v913
        %v915 = vrot.slane %v524, 1
        %v916 = vsel %vm877, %v913, %v915
        %v917 = vrot.slane %v525, 1
        %v918 = vsel %vm877, %v915, %v917
        %v919 = vrot.slane %v526, 1
        %v920 = vsel %vm877, %v917, %v919
        %v921 = vrot.slane %v527, 1
        %v922 = vsel %vm877, %v919, %v921
        %v923 = vrot.slane %v528, 1
        %v924 = vsel %vm877, %v921, %v923
        %v925 = vrot.slane %v529, 1
        %v926 = vsel %vm877, %v923, %v925
        %v927 = vrot.slane %v530, 1
        %v928 = vsel %vm877, %v925, %v927
        %v929 = vrot.slane %v531, 1
        %v930 = vsel %vm877, %v927, %v929
        %v931 = vrot.slane %v532, 1
        %v932 = vsel %vm877, %v929, %v931
        %v933 = vrot.slane %v533, 1
        %v934 = vsel %vm877, %v931, %v933
        %v935 = vrot.slane %v534, 1
        %v936 = vsel %vm877, %v933, %v935
        %v937 = vrot.slane %v535, 1
        %v938 = vsel %vm877, %v935, %v937
        %v939 = vrot.slane %v536, 1
        %v940 = vsel %vm877, %v937, %v939
        %v941 = vrot.slane %v581, 1
        %v942 = vsel %vm877, %v939, %v941
        %v975 = vrot.slane %v582, 1
        %v976 = vsel %vm877, %v941, %v975
        %vm978 = vsmask.f32 6400
        %v979 = vrot.slane %v597, 1
        %v980 = vrot.slane %v593, 2
        %v981 = vor.u32 %v979, %v980
        %v982 = vrot.slane %v605, 1
        %v983 = vrot.slane %v601, 2
        %v984 = vor.u32 %v982, %v983
        %v985 = vsel %vm978, %v981, %v984
        %v986 = vrot.slane %v613, 1
        %v987 = vrot.slane %v609, 2
        %v988 = vor.u32 %v986, %v987
        %v989 = vsel %vm978, %v984, %v988
        %v990 = vrot.slane %v621, 1
        %v991 = vrot.slane %v617, 2
        %v992 = vor.u32 %v990, %v991
        %v993 = vsel %vm978, %v988, %v992
        %v994 = vrot.slane %v629, 1
        %v995 = vrot.slane %v625, 2
        %v996 = vor.u32 %v994, %v995
        %v997 = vsel %vm978, %v992, %v996
        %v998 = vrot.slane %v637, 1
        %v999 = vrot.slane %v633, 2
        %v1000 = vor.u32 %v998, %v999
        %v1001 = vsel %vm978, %v996, %v1000
        %v1002 = vrot.slane %v645, 1
        %v1003 = vrot.slane %v641, 2
        %v1004 = vor.u32 %v1002, %v1003
        %v1005 = vsel %vm978, %v1000, %v1004
        %v1006 = vrot.slane %v653, 1
        %v1007 = vrot.slane %v649, 2
        %v1008 = vor.u32 %v1006, %v1007
        %v1009 = vsel %vm978, %v1004, %v1008
        %v1010 = vrot.slane %v661, 1
        %v1011 = vrot.slane %v657, 2
        %v1012 = vor.u32 %v1010, %v1011
        %v1013 = vsel %vm978, %v1008, %v1012
        %v1014 = vrot.slane %v669, 1
        %v1015 = vrot.slane %v665, 2
        %v1016 = vor.u32 %v1014, %v1015
        %v1017 = vsel %vm978, %v1012, %v1016
        %v1018 = vrot.slane %v677, 1
        %v1019 = vrot.slane %v673, 2
        %v1020 = vor.u32 %v1018, %v1019
        %v1021 = vsel %vm978, %v1016, %v1020
        %v1022 = vrot.slane %v685, 1
        %v1023 = vrot.slane %v681, 2
        %v1024 = vor.u32 %v1022, %v1023
        %v1025 = vsel %vm978, %v1020, %v1024
        %v1026 = vrot.slane %v693, 1
        %v1027 = vrot.slane %v689, 2
        %v1028 = vor.u32 %v1026, %v1027
        %v1029 = vsel %vm978, %v1024, %v1028
        %v1030 = vrot.slane %v701, 1
        %v1031 = vrot.slane %v697, 2
        %v1032 = vor.u32 %v1030, %v1031
        %v1033 = vsel %vm978, %v1028, %v1032
        %v1034 = vrot.slane %v709, 1
        %v1035 = vrot.slane %v705, 2
        %v1036 = vor.u32 %v1034, %v1035
        %v1037 = vsel %vm978, %v1032, %v1036
        %v1038 = vrot.slane %v717, 1
        %v1039 = vrot.slane %v713, 2
        %v1040 = vor.u32 %v1038, %v1039
        %v1041 = vsel %vm978, %v1036, %v1040
        %v1042 = vrot.slane %v725, 1
        %v1043 = vrot.slane %v721, 2
        %v1044 = vor.u32 %v1042, %v1043
        %v1045 = vsel %vm978, %v1040, %v1044
        %v1046 = vrot.slane %v733, 1
        %v1047 = vrot.slane %v729, 2
        %v1048 = vor.u32 %v1046, %v1047
        %v1049 = vsel %vm978, %v1044, %v1048
        %v1050 = vrot.slane %v741, 1
        %v1051 = vrot.slane %v737, 2
        %v1052 = vor.u32 %v1050, %v1051
        %v1053 = vsel %vm978, %v1048, %v1052
        %v1054 = vrot.slane %v749, 1
        %v1055 = vrot.slane %v745, 2
        %v1056 = vor.u32 %v1054, %v1055
        %v1057 = vsel %vm978, %v1052, %v1056
        %v1058 = vrot.slane %v757, 1
        %v1059 = vrot.slane %v753, 2
        %v1060 = vor.u32 %v1058, %v1059
        %v1061 = vsel %vm978, %v1056, %v1060
        %v1062 = vrot.slane %v765, 1
        %v1063 = vrot.slane %v761, 2
        %v1064 = vor.u32 %v1062, %v1063
        %v1065 = vsel %vm978, %v1060, %v1064
        %v1066 = vrot.slane %v773, 1
        %v1067 = vrot.slane %v769, 2
        %v1068 = vor.u32 %v1066, %v1067
        %v1069 = vsel %vm978, %v1064, %v1068
        %v1070 = vrot.slane %v781, 1
        %v1071 = vrot.slane %v777, 2
        %v1072 = vor.u32 %v1070, %v1071
        %v1073 = vsel %vm978, %v1068, %v1072
        %v1074 = vrot.slane %v789, 1
        %v1075 = vrot.slane %v785, 2
        %v1076 = vor.u32 %v1074, %v1075
        %v1077 = vsel %vm978, %v1072, %v1076
        %v1078 = vrot.slane %v797, 1
        %v1079 = vrot.slane %v793, 2
        %v1080 = vor.u32 %v1078, %v1079
        %v1081 = vsel %vm978, %v1076, %v1080
        %v1082 = vrot.slane %v805, 1
        %v1083 = vrot.slane %v801, 2
        %v1084 = vor.u32 %v1082, %v1083
        %v1085 = vsel %vm978, %v1080, %v1084
        %v1086 = vrot.slane %v813, 1
        %v1087 = vrot.slane %v809, 2
        %v1088 = vor.u32 %v1086, %v1087
        %v1089 = vsel %vm978, %v1084, %v1088
        %v1090 = vrot.slane %v821, 1
        %v1091 = vrot.slane %v817, 2
        %v1092 = vor.u32 %v1090, %v1091
        %v1093 = vsel %vm978, %v1088, %v1092
        %v1094 = vrot.slane %v829, 1
        %v1095 = vrot.slane %v825, 2
        %v1096 = vor.u32 %v1094, %v1095
        %v1097 = vsel %vm978, %v1092, %v1096
        %v1098 = vrot.slane %v837, 1
        %v1099 = vrot.slane %v833, 2
        %v1100 = vor.u32 %v1098, %v1099
        %v1101 = vsel %vm978, %v1096, %v1100
        %v1102 = vshrl.u32 %v581, 16
        %v1104 = vrot.slane %v1102, 1
        %v1105 = vrot.slane %v841, 2
        %v1106 = vor.u32 %v1104, %v1105
        %v1107 = vsel %vm978, %v1100, %v1106
        %v1109 = vshrl.u32 %v582, 16
        %v1111 = vrot.slane %v1109, 1
        %v1112 = vshll.u32 %v582, 16
        %v1114 = vrot.slane %v1112, 2
        %v1115 = vor.u32 %v1111, %v1114
        %v1116 = vsel %vm978, %v1106, %v1115
        %vm1149 = vcmask 1045504
        %v1150 = vrot.slane %v506, 2
        %v1151 = vrot.slane %v507, 2
        %v1152 = vsel %vm1149, %v1150, %v1151
        %v1153 = vrot.slane %v508, 2
        %v1154 = vsel %vm1149, %v1151, %v1153
        %v1155 = vrot.slane %v509, 2
        %v1156 = vsel %vm1149, %v1153, %v1155
        %v1157 = vrot.slane %v510, 2
        %v1158 = vsel %vm1149, %v1155, %v1157
        %v1159 = vrot.slane %v511, 2
        %v1160 = vsel %vm1149, %v1157, %v1159
        %v1161 = vrot.slane %v512, 2
        %v1162 = vsel %vm1149, %v1159, %v1161
        %v1163 = vrot.slane %v513, 2
        %v1164 = vsel %vm1149, %v1161, %v1163
        %v1165 = vrot.slane %v514, 2
        %v1166 = vsel %vm1149, %v1163, %v1165
        %v1167 = vrot.slane %v515, 2
        %v1168 = vsel %vm1149, %v1165, %v1167
        %v1169 = vrot.slane %v516, 2
        %v1170 = vsel %vm1149, %v1167, %v1169
        %v1171 = vrot.slane %v517, 2
        %v1172 = vsel %vm1149, %v1169, %v1171
        %v1173 = vrot.slane %v518, 2
        %v1174 = vsel %vm1149, %v1171, %v1173
        %v1175 = vrot.slane %v519, 2
        %v1176 = vsel %vm1149, %v1173, %v1175
        %v1177 = vrot.slane %v520, 2
        %v1178 = vsel %vm1149, %v1175, %v1177
        %v1179 = vrot.slane %v521, 2
        %v1180 = vsel %vm1149, %v1177, %v1179
        %v1181 = vrot.slane %v522, 2
        %v1182 = vsel %vm1149, %v1179, %v1181
        %v1183 = vrot.slane %v523, 2
        %v1184 = vsel %vm1149, %v1181, %v1183
        %v1185 = vrot.slane %v524, 2
        %v1186 = vsel %vm1149, %v1183, %v1185
        %v1187 = vrot.slane %v525, 2
        %v1188 = vsel %vm1149, %v1185, %v1187
        %v1189 = vrot.slane %v526, 2
        %v1190 = vsel %vm1149, %v1187, %v1189
        %v1191 = vrot.slane %v527, 2
        %v1192 = vsel %vm1149, %v1189, %v1191
        %v1193 = vrot.slane %v528, 2
        %v1194 = vsel %vm1149, %v1191, %v1193
        %v1195 = vrot.slane %v529, 2
        %v1196 = vsel %vm1149, %v1193, %v1195
        %v1197 = vrot.slane %v530, 2
        %v1198 = vsel %vm1149, %v1195, %v1197
        %v1199 = vrot.slane %v531, 2
        %v1200 = vsel %vm1149, %v1197, %v1199
        %v1201 = vrot.slane %v532, 2
        %v1202 = vsel %vm1149, %v1199, %v1201
        %v1203 = vrot.slane %v533, 2
        %v1204 = vsel %vm1149, %v1201, %v1203
        %v1205 = vrot.slane %v534, 2
        %v1206 = vsel %vm1149, %v1203, %v1205
        %v1207 = vrot.slane %v535, 2
        %v1208 = vsel %vm1149, %v1205, %v1207
        %v1209 = vrot.slane %v536, 2
        %v1210 = vsel %vm1149, %v1207, %v1209
        %v1211 = vrot.slane %v581, 2
        %v1212 = vsel %vm1149, %v1209, %v1211
        %v1213 = vrot.slane %v582, 2
        %v1214 = vsel %vm1149, %v1211, %v1213
        %v1247 = vrot.slane %v583, 2
        %v1248 = vsel %vm1149, %v1213, %v1247
        %vm1250 = vsmask.f32 5376
        %v1251 = vrot.slane %v605, 2
        %v1252 = vrot.slane %v601, 3
        %v1253 = vor.u32 %v1251, %v1252
        %v1254 = vrot.slane %v613, 2
        %v1255 = vrot.slane %v609, 3
        %v1256 = vor.u32 %v1254, %v1255
        %v1257 = vsel %vm1250, %v1253, %v1256
        %v1258 = vrot.slane %v621, 2
        %v1259 = vrot.slane %v617, 3
        %v1260 = vor.u32 %v1258, %v1259
        %v1261 = vsel %vm1250, %v1256, %v1260
        %v1262 = vrot.slane %v629, 2
        %v1263 = vrot.slane %v625, 3
        %v1264 = vor.u32 %v1262, %v1263
        %v1265 = vsel %vm1250, %v1260, %v1264
        %v1266 = vrot.slane %v637, 2
        %v1267 = vrot.slane %v633, 3
        %v1268 = vor.u32 %v1266, %v1267
        %v1269 = vsel %vm1250, %v1264, %v1268
        %v1270 = vrot.slane %v645, 2
        %v1271 = vrot.slane %v641, 3
        %v1272 = vor.u32 %v1270, %v1271
        %v1273 = vsel %vm1250, %v1268, %v1272
        %v1274 = vrot.slane %v653, 2
        %v1275 = vrot.slane %v649, 3
        %v1276 = vor.u32 %v1274, %v1275
        %v1277 = vsel %vm1250, %v1272, %v1276
        %v1278 = vrot.slane %v661, 2
        %v1279 = vrot.slane %v657, 3
        %v1280 = vor.u32 %v1278, %v1279
        %v1281 = vsel %vm1250, %v1276, %v1280
        %v1282 = vrot.slane %v669, 2
        %v1283 = vrot.slane %v665, 3
        %v1284 = vor.u32 %v1282, %v1283
        %v1285 = vsel %vm1250, %v1280, %v1284
        %v1286 = vrot.slane %v677, 2
        %v1287 = vrot.slane %v673, 3
        %v1288 = vor.u32 %v1286, %v1287
        %v1289 = vsel %vm1250, %v1284, %v1288
        %v1290 = vrot.slane %v685, 2
        %v1291 = vrot.slane %v681, 3
        %v1292 = vor.u32 %v1290, %v1291
        %v1293 = vsel %vm1250, %v1288, %v1292
        %v1294 = vrot.slane %v693, 2
        %v1295 = vrot.slane %v689, 3
        %v1296 = vor.u32 %v1294, %v1295
        %v1297 = vsel %vm1250, %v1292, %v1296
        %v1298 = vrot.slane %v701, 2
        %v1299 = vrot.slane %v697, 3
        %v1300 = vor.u32 %v1298, %v1299
        %v1301 = vsel %vm1250, %v1296, %v1300
        %v1302 = vrot.slane %v709, 2
        %v1303 = vrot.slane %v705, 3
        %v1304 = vor.u32 %v1302, %v1303
        %v1305 = vsel %vm1250, %v1300, %v1304
        %v1306 = vrot.slane %v717, 2
        %v1307 = vrot.slane %v713, 3
        %v1308 = vor.u32 %v1306, %v1307
        %v1309 = vsel %vm1250, %v1304, %v1308
        %v1310 = vrot.slane %v725, 2
        %v1311 = vrot.slane %v721, 3
        %v1312 = vor.u32 %v1310, %v1311
        %v1313 = vsel %vm1250, %v1308, %v1312
        %v1314 = vrot.slane %v733, 2
        %v1315 = vrot.slane %v729, 3
        %v1316 = vor.u32 %v1314, %v1315
        %v1317 = vsel %vm1250, %v1312, %v1316
        %v1318 = vrot.slane %v741, 2
        %v1319 = vrot.slane %v737, 3
        %v1320 = vor.u32 %v1318, %v1319
        %v1321 = vsel %vm1250, %v1316, %v1320
        %v1322 = vrot.slane %v749, 2
        %v1323 = vrot.slane %v745, 3
        %v1324 = vor.u32 %v1322, %v1323
        %v1325 = vsel %vm1250, %v1320, %v1324
        %v1326 = vrot.slane %v757, 2
        %v1327 = vrot.slane %v753, 3
        %v1328 = vor.u32 %v1326, %v1327
        %v1329 = vsel %vm1250, %v1324, %v1328
        %v1330 = vrot.slane %v765, 2
        %v1331 = vrot.slane %v761, 3
        %v1332 = vor.u32 %v1330, %v1331
        %v1333 = vsel %vm1250, %v1328, %v1332
        %v1334 = vrot.slane %v773, 2
        %v1335 = vrot.slane %v769, 3
        %v1336 = vor.u32 %v1334, %v1335
        %v1337 = vsel %vm1250, %v1332, %v1336
        %v1338 = vrot.slane %v781, 2
        %v1339 = vrot.slane %v777, 3
        %v1340 = vor.u32 %v1338, %v1339
        %v1341 = vsel %vm1250, %v1336, %v1340
        %v1342 = vrot.slane %v789, 2
        %v1343 = vrot.slane %v785, 3
        %v1344 = vor.u32 %v1342, %v1343
        %v1345 = vsel %vm1250, %v1340, %v1344
        %v1346 = vrot.slane %v797, 2
        %v1347 = vrot.slane %v793, 3
        %v1348 = vor.u32 %v1346, %v1347
        %v1349 = vsel %vm1250, %v1344, %v1348
        %v1350 = vrot.slane %v805, 2
        %v1351 = vrot.slane %v801, 3
        %v1352 = vor.u32 %v1350, %v1351
        %v1353 = vsel %vm1250, %v1348, %v1352
        %v1354 = vrot.slane %v813, 2
        %v1355 = vrot.slane %v809, 3
        %v1356 = vor.u32 %v1354, %v1355
        %v1357 = vsel %vm1250, %v1352, %v1356
        %v1358 = vrot.slane %v821, 2
        %v1359 = vrot.slane %v817, 3
        %v1360 = vor.u32 %v1358, %v1359
        %v1361 = vsel %vm1250, %v1356, %v1360
        %v1362 = vrot.slane %v829, 2
        %v1363 = vrot.slane %v825, 3
        %v1364 = vor.u32 %v1362, %v1363
        %v1365 = vsel %vm1250, %v1360, %v1364
        %v1366 = vrot.slane %v837, 2
        %v1367 = vrot.slane %v833, 3
        %v1368 = vor.u32 %v1366, %v1367
        %v1369 = vsel %vm1250, %v1364, %v1368
        %v1370 = vrot.slane %v1102, 2
        %v1371 = vrot.slane %v841, 3
        %v1372 = vor.u32 %v1370, %v1371
        %v1373 = vsel %vm1250, %v1368, %v1372
        %v1374 = vrot.slane %v1109, 2
        %v1375 = vrot.slane %v1112, 3
        %v1376 = vor.u32 %v1374, %v1375
        %v1377 = vsel %vm1250, %v1372, %v1376
        %v1379 = vshrl.u32 %v583, 16
        %v1381 = vrot.slane %v1379, 2
        %v1382 = vshll.u32 %v583, 16
        %v1384 = vrot.slane %v1382, 3
        %v1385 = vor.u32 %v1381, %v1384
        %v1386 = vsel %vm1250, %v1376, %v1385
        %vm1419 = vcmask 1044480
        %v1420 = vrot.slane %v507, 3
        %v1421 = vrot.slane %v508, 3
        %v1422 = vsel %vm1419, %v1420, %v1421
        %v1423 = vrot.slane %v509, 3
        %v1424 = vsel %vm1419, %v1421, %v1423
        %v1425 = vrot.slane %v510, 3
        %v1426 = vsel %vm1419, %v1423, %v1425
        %v1427 = vrot.slane %v511, 3
        %v1428 = vsel %vm1419, %v1425, %v1427
        %v1429 = vrot.slane %v512, 3
        %v1430 = vsel %vm1419, %v1427, %v1429
        %v1431 = vrot.slane %v513, 3
        %v1432 = vsel %vm1419, %v1429, %v1431
        %v1433 = vrot.slane %v514, 3
        %v1434 = vsel %vm1419, %v1431, %v1433
        %v1435 = vrot.slane %v515, 3
        %v1436 = vsel %vm1419, %v1433, %v1435
        %v1437 = vrot.slane %v516, 3
        %v1438 = vsel %vm1419, %v1435, %v1437
        %v1439 = vrot.slane %v517, 3
        %v1440 = vsel %vm1419, %v1437, %v1439
        %v1441 = vrot.slane %v518, 3
        %v1442 = vsel %vm1419, %v1439, %v1441
        %v1443 = vrot.slane %v519, 3
        %v1444 = vsel %vm1419, %v1441, %v1443
        %v1445 = vrot.slane %v520, 3
        %v1446 = vsel %vm1419, %v1443, %v1445
        %v1447 = vrot.slane %v521, 3
        %v1448 = vsel %vm1419, %v1445, %v1447
        %v1449 = vrot.slane %v522, 3
        %v1450 = vsel %vm1419, %v1447, %v1449
        %v1451 = vrot.slane %v523, 3
        %v1452 = vsel %vm1419, %v1449, %v1451
        %v1453 = vrot.slane %v524, 3
        %v1454 = vsel %vm1419, %v1451, %v1453
        %v1455 = vrot.slane %v525, 3
        %v1456 = vsel %vm1419, %v1453, %v1455
        %v1457 = vrot.slane %v526, 3
        %v1458 = vsel %vm1419, %v1455, %v1457
        %v1459 = vrot.slane %v527, 3
        %v1460 = vsel %vm1419, %v1457, %v1459
        %v1461 = vrot.slane %v528, 3
        %v1462 = vsel %vm1419, %v1459, %v1461
        %v1463 = vrot.slane %v529, 3
        %v1464 = vsel %vm1419, %v1461, %v1463
        %v1465 = vrot.slane %v530, 3
        %v1466 = vsel %vm1419, %v1463, %v1465
        %v1467 = vrot.slane %v531, 3
        %v1468 = vsel %vm1419, %v1465, %v1467
        %v1469 = vrot.slane %v532, 3
        %v1470 = vsel %vm1419, %v1467, %v1469
        %v1471 = vrot.slane %v533, 3
        %v1472 = vsel %vm1419, %v1469, %v1471
        %v1473 = vrot.slane %v534, 3
        %v1474 = vsel %vm1419, %v1471, %v1473
        %v1475 = vrot.slane %v535, 3
        %v1476 = vsel %vm1419, %v1473, %v1475
        %v1477 = vrot.slane %v536, 3
        %v1478 = vsel %vm1419, %v1475, %v1477
        %v1479 = vrot.slane %v581, 3
        %v1480 = vsel %vm1419, %v1477, %v1479
        %v1481 = vrot.slane %v582, 3
        %v1482 = vsel %vm1419, %v1479, %v1481
        %v1483 = vrot.slane %v583, 3
        %v1484 = vsel %vm1419, %v1481, %v1483
        %v1517 = vld [vmem:[#allocation7] sm:$0xf]
        %v1518 = vld [vmem:[#allocation7 + $0x4] sm:$0xf]
        %v1519 = vld [vmem:[#allocation7 + $0x8] sm:$0xf]
        %v1520 = vld [vmem:[#allocation7 + $0xc] sm:$0xf]
        %v1521 = vld [vmem:[#allocation7 + $0x10] sm:$0xf]
        %v1522 = vld [vmem:[#allocation7 + $0x14] sm:$0xf]
        %v1523 = vld [vmem:[#allocation7 + $0x18] sm:$0xf]
        %v1524 = vld [vmem:[#allocation7 + $0x1c] sm:$0xf]
        %v1525 = vld [vmem:[#allocation7 + $0x20] sm:$0xf]
        %v1526 = vld [vmem:[#allocation7 + $0x24] sm:$0xf]
        %v1527 = vld [vmem:[#allocation7 + $0x28] sm:$0xf]
        %v1528 = vld [vmem:[#allocation7 + $0x2c] sm:$0xf]
        %v1529 = vld [vmem:[#allocation7 + $0x30] sm:$0xf]
        %v1530 = vld [vmem:[#allocation7 + $0x34] sm:$0xf]
        %v1531 = vld [vmem:[#allocation7 + $0x38] sm:$0xf]
        %v1532 = vld [vmem:[#allocation7 + $0x3c] sm:$0xf]
        %v1533 = vld [vmem:[#allocation7 + $0x40] sm:$0xf]
        %v1534 = vld [vmem:[#allocation7 + $0x44] sm:$0xf]
        %v1535 = vld [vmem:[#allocation7 + $0x48] sm:$0xf]
        %v1536 = vld [vmem:[#allocation7 + $0x4c] sm:$0xf]
        %v1537 = vld [vmem:[#allocation7 + $0x50] sm:$0xf]
        %v1538 = vld [vmem:[#allocation7 + $0x54] sm:$0xf]
        %v1539 = vld [vmem:[#allocation7 + $0x58] sm:$0xf]
        %v1540 = vld [vmem:[#allocation7 + $0x5c] sm:$0xf]
        %v1541 = vld [vmem:[#allocation7 + $0x60] sm:$0xf]
        %v1542 = vld [vmem:[#allocation7 + $0x64] sm:$0xf]
        %v1543 = vld [vmem:[#allocation7 + $0x68] sm:$0xf]
        %v1544 = vld [vmem:[#allocation7 + $0x6c] sm:$0xf]
        %v1545 = vld [vmem:[#allocation7 + $0x70] sm:$0xf]
        %v1546 = vld [vmem:[#allocation7 + $0x74] sm:$0xf]
        %v1547 = vld [vmem:[#allocation7 + $0x78] sm:$0xf]
        %v1548 = vld [vmem:[#allocation7 + $0x7c] sm:$0xf]
        %v1549 = vld [vmem:[#allocation7 + $0x80] sm:$0xf]
        %v1550 = vld [vmem:[#allocation7 + $0x84] sm:$0xf]
        %v1551 = vld [vmem:[#allocation7 + $0x88] sm:$0xf]
        %v1552 = vld [vmem:[#allocation7 + $0x8c] sm:$0xf]
        %v1553 = vld [vmem:[#allocation7 + $0x90] sm:$0xf]
        %v1554 = vld [vmem:[#allocation7 + $0x94] sm:$0xf]
        %v1555 = vld [vmem:[#allocation7 + $0x98] sm:$0xf]
        %v1556 = vld [vmem:[#allocation7 + $0x9c] sm:$0xf]
        %v1557 = vld [vmem:[#allocation7 + $0xa0] sm:$0xf]
        %v1558 = vld [vmem:[#allocation7 + $0xa4] sm:$0xf]
        %v1559 = vld [vmem:[#allocation7 + $0xa8] sm:$0xf]
        %v1560 = vld [vmem:[#allocation7 + $0xac] sm:$0xf]
        %v1561 = vld [vmem:[#allocation7 + $0xb0] sm:$0xf]
        %v1562 = vld [vmem:[#allocation7 + $0xb4] sm:$0xf]
        %v1563 = vld [vmem:[#allocation7 + $0xb8] sm:$0xf]
        %v1564 = vld [vmem:[#allocation7 + $0xbc] sm:$0xf]
        %v1565 = vld [vmem:[#allocation7 + $0xc0] sm:$0xf]
        %v1566 = vld [vmem:[#allocation7 + $0xc4] sm:$0xf]
        %v1567 = vld [vmem:[#allocation7 + $0xc8] sm:$0xf]
        %v1568 = vld [vmem:[#allocation7 + $0xcc] sm:$0xf]
        %v1569 = vld [vmem:[#allocation7 + $0xd0] sm:$0xf]
        %v1570 = vld [vmem:[#allocation7 + $0xd4] sm:$0xf]
        %v1571 = vld [vmem:[#allocation7 + $0xd8] sm:$0xf]
        %v1572 = vld [vmem:[#allocation7 + $0xdc] sm:$0xf]
        %v1573 = vld [vmem:[#allocation7 + $0xe0] sm:$0xf]
        %v1574 = vld [vmem:[#allocation7 + $0xe4] sm:$0xf]
        %v1575 = vld [vmem:[#allocation7 + $0xe8] sm:$0xf]
        %v1576 = vld [vmem:[#allocation7 + $0xec] sm:$0xf]
        %v1577 = vld [vmem:[#allocation7 + $0xf0] sm:$0xf]
        %v1578 = vld [vmem:[#allocation7 + $0xf4] sm:$0xf]
        %v1579 = vld [vmem:[#allocation7 + $0xf8] sm:$0xf]
        %v1580 = vld [vmem:[#allocation7 + $0xfc] sm:$0xf]
        %v1581 = vld [vmem:[#allocation7 + $0x100] sm:$0xf]
        %v1582 = vld [vmem:[#allocation7 + $0x104] sm:$0xf]
        %v1583 = vld [vmem:[#allocation7 + $0x108] sm:$0xf]
        %v1584 = vld [vmem:[#allocation7 + $0x10c] sm:$0xf]
        %v1585 = vld [vmem:[#allocation7 + $0x110] sm:$0xf]
        %v1586 = vld [vmem:[#allocation7 + $0x114] sm:$0xf]
        %v1587 = vld [vmem:[#allocation7 + $0x118] sm:$0xf]
        %v1588 = vld [vmem:[#allocation7 + $0x11c] sm:$0xf]
        %v1589 = vld [vmem:[#allocation7 + $0x120] sm:$0xf]
        %v1590 = vld [vmem:[#allocation7 + $0x124] sm:$0xf]
        %v1591 = vld [vmem:[#allocation7 + $0x128] sm:$0xf]
        %v1592 = vld [vmem:[#allocation7 + $0x12c] sm:$0xf]
        %v1593 = vld [vmem:[#allocation7 + $0x130] sm:$0xf]
        %v1594 = vld [vmem:[#allocation7 + $0x134] sm:$0xf]
        %v1595 = vld [vmem:[#allocation7 + $0x138] sm:$0xf]
        %v1596 = vld [vmem:[#allocation7 + $0x13c] sm:$0xf]
        %v1597 = vld [vmem:[#allocation7 + $0x140] sm:$0xf]
        %v1598 = vld [vmem:[#allocation7 + $0x144] sm:$0xf]
        %v1599 = vld [vmem:[#allocation7 + $0x148] sm:$0xf]
        %v1600 = vld [vmem:[#allocation7 + $0x14c] sm:$0xf]
        %v1601 = vld [vmem:[#allocation7 + $0x150] sm:$0xf]
        %v1602 = vld [vmem:[#allocation7 + $0x154] sm:$0xf]
        %v1603 = vld [vmem:[#allocation7 + $0x158] sm:$0xf]
        %v1604 = vld [vmem:[#allocation7 + $0x15c] sm:$0xf]
        %v1605 = vld [vmem:[#allocation7 + $0x160] sm:$0xf]
        %v1606 = vld [vmem:[#allocation7 + $0x164] sm:$0xf]
        %v1607 = vld [vmem:[#allocation7 + $0x168] sm:$0xf]
        %v1608 = vld [vmem:[#allocation7 + $0x16c] sm:$0xf]
        %v1609 = vld [vmem:[#allocation7 + $0x170] sm:$0xf]
        %v1610 = vld [vmem:[#allocation7 + $0x174] sm:$0xf]
        %v1611 = vld [vmem:[#allocation7 + $0x178] sm:$0xf]
        %v1612 = vld [vmem:[#allocation7 + $0x17c] sm:$0xf]
        %v1613 = vld [vmem:[#allocation7 + $0x180] sm:$0xf]
        %v1614 = vld [vmem:[#allocation7 + $0x184] sm:$0xf]
        %v1615 = vld [vmem:[#allocation7 + $0x188] sm:$0xf]
        %v1616 = vld [vmem:[#allocation7 + $0x18c] sm:$0xf]
        %v1617 = vld [vmem:[#allocation7 + $0x190] sm:$0xf]
        %v1618 = vld [vmem:[#allocation7 + $0x194] sm:$0xf]
        %v1619 = vld [vmem:[#allocation7 + $0x198] sm:$0xf]
        %v1620 = vld [vmem:[#allocation7 + $0x19c] sm:$0xf]
        %v1621 = vld [vmem:[#allocation7 + $0x1a0] sm:$0xf]
        %v1622 = vld [vmem:[#allocation7 + $0x1a4] sm:$0xf]
        %v1623 = vld [vmem:[#allocation7 + $0x1a8] sm:$0xf]
        %v1624 = vld [vmem:[#allocation7 + $0x1ac] sm:$0xf]
        %v1625 = vld [vmem:[#allocation7 + $0x1b0] sm:$0xf]
        %v1626 = vld [vmem:[#allocation7 + $0x1b4] sm:$0xf]
        %v1627 = vld [vmem:[#allocation7 + $0x1b8] sm:$0xf]
        %v1628 = vld [vmem:[#allocation7 + $0x1bc] sm:$0xf]
        %v1629 = vld [vmem:[#allocation7 + $0x1c0] sm:$0xf]
        %v1630 = vld [vmem:[#allocation7 + $0x1c4] sm:$0xf]
        %v1631 = vld [vmem:[#allocation7 + $0x1c8] sm:$0xf]
        %v1632 = vld [vmem:[#allocation7 + $0x1cc] sm:$0xf]
        %v1633 = vld [vmem:[#allocation7 + $0x1d0] sm:$0xf]
        %v1634 = vld [vmem:[#allocation7 + $0x1d4] sm:$0xf]
        %v1635 = vld [vmem:[#allocation7 + $0x1d8] sm:$0xf]
        %v1636 = vld [vmem:[#allocation7 + $0x1dc] sm:$0xf]
        %v1637 = vld [vmem:[#allocation7 + $0x1e0] sm:$0xf]
        %v1638 = vld [vmem:[#allocation7 + $0x1e4] sm:$0xf]
        %v1639 = vld [vmem:[#allocation7 + $0x1e8] sm:$0xf]
        %v1640 = vld [vmem:[#allocation7 + $0x1ec] sm:$0xf]
        %v1641 = vld [vmem:[#allocation7 + $0x1f0] sm:$0xf]
        %v1642 = vld [vmem:[#allocation7 + $0x1f4] sm:$0xf]
        %v1643 = vld [vmem:[#allocation7 + $0x1f8] sm:$0xf]
        %v1644 = vld [vmem:[#allocation7 + $0x1fc] sm:$0xf]
        %v1645 = vld [vmem:[#allocation7 + $0x200] sm:$0xf]
        %v1646 = vld [vmem:[#allocation7 + $0x204] sm:$0xf]
        %v1647 = vld [vmem:[#allocation7 + $0x208] sm:$0xf]
        %v1648 = vld [vmem:[#allocation7 + $0x20c] sm:$0xf]
        %v1649 = vld [vmem:[#allocation7 + $0x210] sm:$0xf]
        %v1650 = vld [vmem:[#allocation7 + $0x214] sm:$0xf]
        %v1651 = vld [vmem:[#allocation7 + $0x218] sm:$0xf]
        %v1652 = vld [vmem:[#allocation7 + $0x21c] sm:$0xf]
        %v1653 = vld [vmem:[#allocation7 + $0x220] sm:$0xf]
        %v1654 = vld [vmem:[#allocation7 + $0x224] sm:$0xf]
        %v1655 = vld [vmem:[#allocation7 + $0x228] sm:$0xf]
        %v1656 = vld [vmem:[#allocation7 + $0x22c] sm:$0xf]
        %v1657 = vld [vmem:[#allocation7 + $0x230] sm:$0xf]
        %v1658 = vld [vmem:[#allocation7 + $0x234] sm:$0xf]
        %v1659 = vld [vmem:[#allocation7 + $0x238] sm:$0xf]
        %v1660 = vld [vmem:[#allocation7 + $0x23c] sm:$0xf]
        %v1805 = vunpack.c.l.b16 %v1517
        %v1806 = vunpack.c.l.b16 %v1518
        %v1807 = vunpack.c.l.b16 %v1519
        %v1808 = vunpack.c.l.b16 %v1520
        %v1809 = vunpack.c.l.b16 %v1521
        %v1810 = vunpack.c.l.b16 %v1522
        %v1811 = vunpack.c.l.b16 %v1523
        %v1812 = vunpack.c.l.b16 %v1524
        %v1813 = vunpack.c.l.b16 %v1525
        %v1814 = vunpack.c.l.b16 %v1526
        %v1815 = vunpack.c.l.b16 %v1527
        %v1816 = vunpack.c.l.b16 %v1528
        %v1817 = vunpack.c.l.b16 %v1529
        %v1818 = vunpack.c.l.b16 %v1530
        %v1819 = vunpack.c.l.b16 %v1531
        %v1820 = vunpack.c.l.b16 %v1532
        %v1821 = vunpack.c.l.b16 %v1533
        %v1822 = vunpack.c.l.b16 %v1534
        %v1823 = vunpack.c.l.b16 %v1535
        %v1824 = vunpack.c.l.b16 %v1536
        %v1825 = vunpack.c.l.b16 %v1537
        %v1826 = vunpack.c.l.b16 %v1538
        %v1827 = vunpack.c.l.b16 %v1539
        %v1828 = vunpack.c.l.b16 %v1540
        %v1829 = vunpack.c.l.b16 %v1541
        %v1830 = vunpack.c.l.b16 %v1542
        %v1831 = vunpack.c.l.b16 %v1543
        %v1832 = vunpack.c.l.b16 %v1544
        %v1833 = vunpack.c.l.b16 %v1545
        %v1834 = vunpack.c.l.b16 %v1546
        %v1835 = vunpack.c.l.b16 %v1547
        %v1836 = vunpack.c.l.b16 %v1548
        %v1837 = vunpack.c.l.b16 %v1549
        %v1838 = vunpack.c.l.b16 %v1550
        %v1839 = vunpack.c.l.b16 %v1551
        %v1840 = vunpack.c.l.b16 %v1552
        %v1841 = vunpack.c.l.b16 %v1553
        %v1842 = vunpack.c.l.b16 %v1554
        %v1843 = vunpack.c.l.b16 %v1555
        %v1844 = vunpack.c.l.b16 %v1556
        %v1845 = vunpack.c.l.b16 %v1557
        %v1846 = vunpack.c.l.b16 %v1558
        %v1847 = vunpack.c.l.b16 %v1559
        %v1848 = vunpack.c.l.b16 %v1560
        %v1849 = vunpack.c.l.b16 %v1561
        %v1850 = vunpack.c.l.b16 %v1562
        %v1851 = vunpack.c.l.b16 %v1563
        %v1852 = vunpack.c.l.b16 %v1564
        %v1853 = vunpack.c.l.b16 %v1565
        %v1854 = vunpack.c.l.b16 %v1566
        %v1855 = vunpack.c.l.b16 %v1567
        %v1856 = vunpack.c.l.b16 %v1568
        %v1857 = vunpack.c.l.b16 %v1569
        %v1858 = vunpack.c.l.b16 %v1570
        %v1859 = vunpack.c.l.b16 %v1571
        %v1860 = vunpack.c.l.b16 %v1572
        %v1861 = vunpack.c.l.b16 %v1573
        %v1862 = vunpack.c.l.b16 %v1574
        %v1863 = vunpack.c.l.b16 %v1575
        %v1864 = vunpack.c.l.b16 %v1576
        %v1865 = vunpack.c.l.b16 %v1577
        %v1866 = vunpack.c.l.b16 %v1578
        %v1867 = vunpack.c.l.b16 %v1579
        %v1868 = vunpack.c.l.b16 %v1580
        %v1869 = vunpack.c.l.b16 %v1581
        %v1870 = vunpack.c.l.b16 %v1582
        %v1871 = vunpack.c.l.b16 %v1583
        %v1872 = vunpack.c.l.b16 %v1584
        %v1873 = vunpack.c.l.b16 %v1585
        %v1874 = vunpack.c.l.b16 %v1586
        %v1875 = vunpack.c.l.b16 %v1587
        %v1876 = vunpack.c.l.b16 %v1588
        %v1877 = vunpack.c.l.b16 %v1589
        %v1878 = vunpack.c.l.b16 %v1590
        %v1879 = vunpack.c.l.b16 %v1591
        %v1880 = vunpack.c.l.b16 %v1592
        %v1881 = vunpack.c.l.b16 %v1593
        %v1882 = vunpack.c.l.b16 %v1594
        %v1883 = vunpack.c.l.b16 %v1595
        %v1884 = vunpack.c.l.b16 %v1596
        %v1885 = vunpack.c.l.b16 %v1597
        %v1886 = vunpack.c.l.b16 %v1598
        %v1887 = vunpack.c.l.b16 %v1599
        %v1888 = vunpack.c.l.b16 %v1600
        %v1889 = vunpack.c.l.b16 %v1601
        %v1890 = vunpack.c.l.b16 %v1602
        %v1891 = vunpack.c.l.b16 %v1603
        %v1892 = vunpack.c.l.b16 %v1604
        %v1893 = vunpack.c.l.b16 %v1605
        %v1894 = vunpack.c.l.b16 %v1606
        %v1895 = vunpack.c.l.b16 %v1607
        %v1896 = vunpack.c.l.b16 %v1608
        %v1897 = vunpack.c.l.b16 %v1609
        %v1898 = vunpack.c.l.b16 %v1610
        %v1899 = vunpack.c.l.b16 %v1611
        %v1900 = vunpack.c.l.b16 %v1612
        %v1901 = vunpack.c.l.b16 %v1613
        %v1902 = vunpack.c.l.b16 %v1614
        %v1903 = vunpack.c.l.b16 %v1615
        %v1904 = vunpack.c.l.b16 %v1616
        %v1905 = vunpack.c.l.b16 %v1617
        %v1906 = vunpack.c.l.b16 %v1618
        %v1907 = vunpack.c.l.b16 %v1619
        %v1908 = vunpack.c.l.b16 %v1620
        %v1909 = vunpack.c.l.b16 %v1621
        %v1910 = vunpack.c.l.b16 %v1622
        %v1911 = vunpack.c.l.b16 %v1623
        %v1912 = vunpack.c.l.b16 %v1624
        %v1913 = vunpack.c.l.b16 %v1625
        %v1914 = vunpack.c.l.b16 %v1626
        %v1915 = vunpack.c.l.b16 %v1627
        %v1916 = vunpack.c.l.b16 %v1628
        %v1917 = vunpack.c.l.b16 %v1629
        %v1918 = vunpack.c.l.b16 %v1630
        %v1919 = vunpack.c.l.b16 %v1631
        %v1920 = vunpack.c.l.b16 %v1632
        %v1921 = vunpack.c.l.b16 %v1633
        %v1922 = vunpack.c.l.b16 %v1634
        %v1923 = vunpack.c.l.b16 %v1635
        %v1924 = vunpack.c.l.b16 %v1636
        %v1925 = vunpack.c.l.b16 %v1637
        %v1926 = vunpack.c.l.b16 %v1638
        %v1927 = vunpack.c.l.b16 %v1639
        %v1928 = vunpack.c.l.b16 %v1640
        %v1929 = vunpack.c.l.b16 %v1641
        %v1930 = vunpack.c.l.b16 %v1642
        %v1931 = vunpack.c.l.b16 %v1643
        %v1932 = vunpack.c.l.b16 %v1644
        %v1933 = vunpack.c.l.b16 %v1645
        %v1934 = vunpack.c.l.b16 %v1646
        %v1935 = vunpack.c.l.b16 %v1647
        %v1936 = vunpack.c.l.b16 %v1648
        %v1937 = vunpack.c.l.b16 %v1649
        %v1938 = vunpack.c.l.b16 %v1650
        %v1939 = vunpack.c.l.b16 %v1651
        %v1940 = vunpack.c.l.b16 %v1652
        %v1941 = vunpack.c.l.b16 %v1653
        %v1942 = vunpack.c.l.b16 %v1654
        %v1943 = vunpack.c.l.b16 %v1655
        %v1944 = vunpack.c.l.b16 %v1656
        %v1945 = vunpack.c.l.b16 %v1657
        %v1946 = vunpack.c.l.b16 %v1658
        %v1947 = vunpack.c.l.b16 %v1659
        %v1948 = vunpack.c.l.b16 %v1660
        %v1949 = vpack.c.b16 %v1806, %v1805
        %v1950 = vpack.c.b16 %v1808, %v1807
        %v1951 = vpack.c.b16 %v1810, %v1809
        %v1952 = vpack.c.b16 %v1812, %v1811
        %v1953 = vpack.c.b16 %v1814, %v1813
        %v1954 = vpack.c.b16 %v1816, %v1815
        %v1955 = vpack.c.b16 %v1818, %v1817
        %v1956 = vpack.c.b16 %v1820, %v1819
        %v1957 = vpack.c.b16 %v1822, %v1821
        %v1958 = vpack.c.b16 %v1824, %v1823
        %v1959 = vpack.c.b16 %v1826, %v1825
        %v1960 = vpack.c.b16 %v1828, %v1827
        %v1961 = vpack.c.b16 %v1830, %v1829
        %v1962 = vpack.c.b16 %v1832, %v1831
        %v1963 = vpack.c.b16 %v1834, %v1833
        %v1964 = vpack.c.b16 %v1836, %v1835
        %v1965 = vpack.c.b16 %v1838, %v1837
        %v1966 = vpack.c.b16 %v1840, %v1839
        %v1967 = vpack.c.b16 %v1842, %v1841
        %v1968 = vpack.c.b16 %v1844, %v1843
        %v1969 = vpack.c.b16 %v1846, %v1845
        %v1970 = vpack.c.b16 %v1848, %v1847
        %v1971 = vpack.c.b16 %v1850, %v1849
        %v1972 = vpack.c.b16 %v1852, %v1851
        %v1973 = vpack.c.b16 %v1854, %v1853
        %v1974 = vpack.c.b16 %v1856, %v1855
        %v1975 = vpack.c.b16 %v1858, %v1857
        %v1976 = vpack.c.b16 %v1860, %v1859
        %v1977 = vpack.c.b16 %v1862, %v1861
        %v1978 = vpack.c.b16 %v1864, %v1863
        %v1979 = vpack.c.b16 %v1866, %v1865
        %v1980 = vpack.c.b16 %v1868, %v1867
        %v1981 = vpack.c.b16 %v1870, %v1869
        %v1982 = vpack.c.b16 %v1872, %v1871
        %v1983 = vpack.c.b16 %v1874, %v1873
        %v1984 = vpack.c.b16 %v1876, %v1875
        %v1985 = vpack.c.b16 %v1878, %v1877
        %v1986 = vpack.c.b16 %v1880, %v1879
        %v1987 = vpack.c.b16 %v1882, %v1881
        %v1988 = vpack.c.b16 %v1884, %v1883
        %v1989 = vpack.c.b16 %v1886, %v1885
        %v1990 = vpack.c.b16 %v1888, %v1887
        %v1991 = vpack.c.b16 %v1890, %v1889
        %v1992 = vpack.c.b16 %v1892, %v1891
        %v1993 = vpack.c.b16 %v1894, %v1893
        %v1994 = vpack.c.b16 %v1896, %v1895
        %v1995 = vpack.c.b16 %v1898, %v1897
        %v1996 = vpack.c.b16 %v1900, %v1899
        %v1997 = vpack.c.b16 %v1902, %v1901
        %v1998 = vpack.c.b16 %v1904, %v1903
        %v1999 = vpack.c.b16 %v1906, %v1905
        %v2000 = vpack.c.b16 %v1908, %v1907
        %v2001 = vpack.c.b16 %v1910, %v1909
        %v2002 = vpack.c.b16 %v1912, %v1911
        %v2003 = vpack.c.b16 %v1914, %v1913
        %v2004 = vpack.c.b16 %v1916, %v1915
        %v2005 = vpack.c.b16 %v1918, %v1917
        %v2006 = vpack.c.b16 %v1920, %v1919
        %v2007 = vpack.c.b16 %v1922, %v1921
        %v2008 = vpack.c.b16 %v1924, %v1923
        %v2009 = vpack.c.b16 %v1926, %v1925
        %v2010 = vpack.c.b16 %v1928, %v1927
        %v2011 = vpack.c.b16 %v1930, %v1929
        %v2012 = vpack.c.b16 %v1932, %v1931
        %v2013 = vpack.c.b16 %v1934, %v1933
        %v2014 = vpack.c.b16 %v1936, %v1935
        %v2015 = vpack.c.b16 %v1938, %v1937
        %v2016 = vpack.c.b16 %v1940, %v1939
        %v2017 = vpack.c.b16 %v1942, %v1941
        %v2018 = vpack.c.b16 %v1944, %v1943
        %v2019 = vpack.c.b16 %v1946, %v1945
        %v2020 = vpack.c.b16 %v1948, %v1947
        %2093 = vmatprep.subr.bf16.mxu0 0
        %2094 = vmatpush1.bf16.msra.mxu0 %v1949
        %2095 = vmatprep.subr.bf16.mxu0 0
        %2096 = vmatpush1.bf16.msra.mxu0 %v1950
        %2097 = vmatprep.subr.bf16.mxu0 0
        %2098 = vmatpush1.bf16.msra.mxu0 %v1951
        %2099 = vmatprep.subr.bf16.mxu0 0
        %2100 = vmatpush1.bf16.msra.mxu0 %v1952
        %2101 = vmatprep.subr.bf16.mxu0 0
        %2102 = vmatpush1.bf16.msra.mxu0 %v1953
        %2103 = vmatprep.subr.bf16.mxu0 0
        %2104 = vmatpush1.bf16.msra.mxu0 %v1954
        %2105 = vmatprep.subr.bf16.mxu0 0
        %2106 = vmatpush1.bf16.msra.mxu0 %v1955
        %2107 = vmatprep.subr.bf16.mxu0 0
        %2108 = vmatpush1.bf16.msra.mxu0 %v1956
        %2109 = vmatprep.subr.bf16.mxu0 0
        %2110 = vmatpush1.bf16.msra.mxu0 %v1957
        %2111 = vmatprep.subr.bf16.mxu0 0
        %2112 = vmatpush1.bf16.msra.mxu0 %v1958
        %2113 = vmatprep.subr.bf16.mxu0 0
        %2114 = vmatpush1.bf16.msra.mxu0 %v1959
        %2115 = vmatprep.subr.bf16.mxu0 0
        %2116 = vmatpush1.bf16.msra.mxu0 %v1960
        %2117 = vmatprep.subr.bf16.mxu0 0
        %2118 = vmatpush1.bf16.msra.mxu0 %v1961
        %2119 = vmatprep.subr.bf16.mxu0 0
        %2120 = vmatpush1.bf16.msra.mxu0 %v1962
        %2121 = vmatprep.subr.bf16.mxu0 0
        %2122 = vmatpush1.bf16.msra.mxu0 %v1963
        %2123 = vmatprep.subr.bf16.mxu0 0
        %2124 = vmatpush1.bf16.msra.mxu0 %v1964
        %2125 = vmatprep.mubr.bf16.mxu0 %v596
        %2126 = vmatmul.mubr.bf16.gmra.mrb[0].mxu0 %v505
        %v2127 = vpop.f32.mrb[0].mxu0
        %v2128 = vadd.f32 0.0, %v2127
        %v2129 = vpop.f32.mrb[0].mxu0
        %v2130 = vpop.f32.mrb[0].mxu0
        %v2131 = vadd.f32 0.0, %v2130
        %v2132 = vpop.f32.mrb[0].mxu0
        %2133 = vmatprep.mubr.bf16.mxu0 %v604
        %2134 = vmatmul.mubr.bf16.gmra.mrb[0].mxu0 %v506
        %v2135 = vpop.f32.mrb[0].mxu0
        %v2136 = vadd.f32 0.0, %v2135
        %v2137 = vpop.f32.mrb[0].mxu0
        %v2138 = vpop.f32.mrb[0].mxu0
        %v2139 = vadd.f32 0.0, %v2138
        %v2140 = vpop.f32.mrb[0].mxu0
        %2141 = vmatprep.mubr.bf16.mxu0 %v612
        %2142 = vmatmul.mubr.bf16.gmra.mrb[0].mxu0 %v507
        %v2143 = vpop.f32.mrb[0].mxu0
        %v2144 = vadd.f32 0.0, %v2143
        %v2145 = vpop.f32.mrb[0].mxu0
        %v2146 = vpop.f32.mrb[0].mxu0
        %v2147 = vadd.f32 0.0, %v2146
        %v2148 = vpop.f32.mrb[0].mxu0
        %2149 = vmatprep.mubr.bf16.mxu0 %v620
        %2150 = vmatmul.mubr.bf16.gmra.mrb[0].mxu0 %v508
        %v2151 = vpop.f32.mrb[0].mxu0
        %v2152 = vadd.f32 0.0, %v2151
        %v2153 = vpop.f32.mrb[0].mxu0
        %v2154 = vpop.f32.mrb[0].mxu0
        %v2155 = vadd.f32 0.0, %v2154
        %v2156 = vpop.f32.mrb[0].mxu0
        %2157 = vmatprep.mubr.bf16.mxu0 %v628
        %2158 = vmatmul.mubr.bf16.gmra.mrb[0].mxu0 %v509
        %v2159 = vpop.f32.mrb[0].mxu0
        %v2160 = vadd.f32 0.0, %v2159
        %v2161 = vpop.f32.mrb[0].mxu0
        %v2162 = vpop.f32.mrb[0].mxu0
        %v2163 = vadd.f32 0.0, %v2162
        %v2164 = vpop.f32.mrb[0].mxu0
        %2165 = vmatprep.mubr.bf16.mxu0 %v636
        %2166 = vmatmul.mubr.bf16.gmra.mrb[0].mxu0 %v510
        %v2167 = vpop.f32.mrb[0].mxu0
        %v2168 = vadd.f32 0.0, %v2167
        %v2169 = vpop.f32.mrb[0].mxu0
        %v2170 = vpop.f32.mrb[0].mxu0
        %v2171 = vadd.f32 0.0, %v2170
        %v2172 = vpop.f32.mrb[0].mxu0
        %2173 = vmatprep.mubr.bf16.mxu0 %v644
        %2174 = vmatmul.mubr.bf16.gmra.mrb[0].mxu0 %v511
        %v2175 = vpop.f32.mrb[0].mxu0
        %v2176 = vadd.f32 0.0, %v2175
        %v2177 = vpop.f32.mrb[0].mxu0
        %v2178 = vpop.f32.mrb[0].mxu0
        %v2179 = vadd.f32 0.0, %v2178
        %v2180 = vpop.f32.mrb[0].mxu0
        %2181 = vmatprep.mubr.bf16.mxu0 %v652
        %2182 = vmatmul.mubr.bf16.gmra.mrb[0].mxu0 %v512
        %v2183 = vpop.f32.mrb[0].mxu0
        %v2184 = vadd.f32 0.0, %v2183
        %v2185 = vpop.f32.mrb[0].mxu0
        %v2186 = vpop.f32.mrb[0].mxu0
        %v2187 = vadd.f32 0.0, %v2186
        %v2188 = vpop.f32.mrb[0].mxu0
        %2189 = vmatprep.mubr.bf16.mxu0 %v660
        %2190 = vmatmul.mubr.bf16.gmra.mrb[0].mxu0 %v513
        %v2191 = vpop.f32.mrb[0].mxu0
        %v2192 = vadd.f32 0.0, %v2191
        %v2193 = vpop.f32.mrb[0].mxu0
        %v2194 = vpop.f32.mrb[0].mxu0
        %v2195 = vadd.f32 0.0, %v2194
        %v2196 = vpop.f32.mrb[0].mxu0
        %2197 = vmatprep.mubr.bf16.mxu0 %v668
        %2198 = vmatmul.mubr.bf16.gmra.mrb[0].mxu0 %v514
        %v2199 = vpop.f32.mrb[0].mxu0
        %v2200 = vadd.f32 0.0, %v2199
        %v2201 = vpop.f32.mrb[0].mxu0
        %v2202 = vpop.f32.mrb[0].mxu0
        %v2203 = vadd.f32 0.0, %v2202
        %v2204 = vpop.f32.mrb[0].mxu0
        %2205 = vmatprep.mubr.bf16.mxu0 %v676
        %2206 = vmatmul.mubr.bf16.gmra.mrb[0].mxu0 %v515
        %v2207 = vpop.f32.mrb[0].mxu0
        %v2208 = vadd.f32 0.0, %v2207
        %v2209 = vpop.f32.mrb[0].mxu0
        %v2210 = vpop.f32.mrb[0].mxu0
        %v2211 = vadd.f32 0.0, %v2210
        %v2212 = vpop.f32.mrb[0].mxu0
        %2213 = vmatprep.mubr.bf16.mxu0 %v684
        %2214 = vmatmul.mubr.bf16.gmra.mrb[0].mxu0 %v516
        %v2215 = vpop.f32.mrb[0].mxu0
        %v2216 = vadd.f32 0.0, %v2215
        %v2217 = vpop.f32.mrb[0].mxu0
        %v2218 = vpop.f32.mrb[0].mxu0
        %v2219 = vadd.f32 0.0, %v2218
        %v2220 = vpop.f32.mrb[0].mxu0
        %2221 = vmatprep.mubr.bf16.mxu0 %v692
        %2222 = vmatmul.mubr.bf16.gmra.mrb[0].mxu0 %v517
        %v2223 = vpop.f32.mrb[0].mxu0
        %v2224 = vadd.f32 0.0, %v2223
        %v2225 = vpop.f32.mrb[0].mxu0
        %v2226 = vpop.f32.mrb[0].mxu0
        %v2227 = vadd.f32 0.0, %v2226
        %v2228 = vpop.f32.mrb[0].mxu0
        %2229 = vmatprep.mubr.bf16.mxu0 %v700
        %2230 = vmatmul.mubr.bf16.gmra.mrb[0].mxu0 %v518
        %v2231 = vpop.f32.mrb[0].mxu0
        %v2232 = vadd.f32 0.0, %v2231
        %v2233 = vpop.f32.mrb[0].mxu0
        %v2234 = vpop.f32.mrb[0].mxu0
        %v2235 = vadd.f32 0.0, %v2234
        %v2236 = vpop.f32.mrb[0].mxu0
        %2237 = vmatprep.mubr.bf16.mxu0 %v708
        %2238 = vmatmul.mubr.bf16.gmra.mrb[0].mxu0 %v519
        %v2239 = vpop.f32.mrb[0].mxu0
        %v2240 = vadd.f32 0.0, %v2239
        %v2241 = vpop.f32.mrb[0].mxu0
        %v2242 = vpop.f32.mrb[0].mxu0
        %v2243 = vadd.f32 0.0, %v2242
        %v2244 = vpop.f32.mrb[0].mxu0
        %2245 = vmatprep.mubr.bf16.mxu0 %v716
        %2246 = vmatmul.mubr.bf16.gmra.mrb[0].mxu0 %v520
        %v2247 = vpop.f32.mrb[0].mxu0
        %v2248 = vadd.f32 0.0, %v2247
        %v2249 = vpop.f32.mrb[0].mxu0
        %v2250 = vpop.f32.mrb[0].mxu0
        %v2251 = vadd.f32 0.0, %v2250
        %v2252 = vpop.f32.mrb[0].mxu0
        %2253 = vmatprep.mubr.bf16.mxu0 %v724
        %2254 = vmatmul.mubr.bf16.gmra.mrb[0].mxu0 %v521
        %v2255 = vpop.f32.mrb[0].mxu0
        %v2256 = vadd.f32 0.0, %v2255
        %v2257 = vpop.f32.mrb[0].mxu0
        %v2258 = vpop.f32.mrb[0].mxu0
        %v2259 = vadd.f32 0.0, %v2258
        %v2260 = vpop.f32.mrb[0].mxu0
        %2261 = vmatprep.mubr.bf16.mxu0 %v732
        %2262 = vmatmul.mubr.bf16.gmra.mrb[0].mxu0 %v522
        %v2263 = vpop.f32.mrb[0].mxu0
        %v2264 = vadd.f32 0.0, %v2263
        %v2265 = vpop.f32.mrb[0].mxu0
        %v2266 = vpop.f32.mrb[0].mxu0
        %v2267 = vadd.f32 0.0, %v2266
        %v2268 = vpop.f32.mrb[0].mxu0
        %2269 = vmatprep.mubr.bf16.mxu0 %v740
        %2270 = vmatmul.mubr.bf16.gmra.mrb[0].mxu0 %v523
        %v2271 = vpop.f32.mrb[0].mxu0
        %v2272 = vadd.f32 0.0, %v2271
        %v2273 = vpop.f32.mrb[0].mxu0
        %v2274 = vpop.f32.mrb[0].mxu0
        %v2275 = vadd.f32 0.0, %v2274
        %v2276 = vpop.f32.mrb[0].mxu0
        %2277 = vmatprep.mubr.bf16.mxu0 %v748
        %2278 = vmatmul.mubr.bf16.gmra.mrb[0].mxu0 %v524
        %v2279 = vpop.f32.mrb[0].mxu0
        %v2280 = vadd.f32 0.0, %v2279
        %v2281 = vpop.f32.mrb[0].mxu0
        %v2282 = vpop.f32.mrb[0].mxu0
        %v2283 = vadd.f32 0.0, %v2282
        %v2284 = vpop.f32.mrb[0].mxu0
        %2285 = vmatprep.mubr.bf16.mxu0 %v756
        %2286 = vmatmul.mubr.bf16.gmra.mrb[0].mxu0 %v525
        %v2287 = vpop.f32.mrb[0].mxu0
        %v2288 = vadd.f32 0.0, %v2287
        %v2289 = vpop.f32.mrb[0].mxu0
        %v2290 = vpop.f32.mrb[0].mxu0
        %v2291 = vadd.f32 0.0, %v2290
        %v2292 = vpop.f32.mrb[0].mxu0
        %2293 = vmatprep.mubr.bf16.mxu0 %v764
        %2294 = vmatmul.mubr.bf16.gmra.mrb[0].mxu0 %v526
        %v2295 = vpop.f32.mrb[0].mxu0
        %v2296 = vadd.f32 0.0, %v2295
        %v2297 = vpop.f32.mrb[0].mxu0
        %v2298 = vpop.f32.mrb[0].mxu0
        %v2299 = vadd.f32 0.0, %v2298
        %v2300 = vpop.f32.mrb[0].mxu0
        %2301 = vmatprep.mubr.bf16.mxu0 %v772
        %2302 = vmatmul.mubr.bf16.gmra.mrb[0].mxu0 %v527
        %v2303 = vpop.f32.mrb[0].mxu0
        %v2304 = vadd.f32 0.0, %v2303
        %v2305 = vpop.f32.mrb[0].mxu0
        %v2306 = vpop.f32.mrb[0].mxu0
        %v2307 = vadd.f32 0.0, %v2306
        %v2308 = vpop.f32.mrb[0].mxu0
        %2309 = vmatprep.mubr.bf16.mxu0 %v780
        %2310 = vmatmul.mubr.bf16.gmra.mrb[0].mxu0 %v528
        %v2311 = vpop.f32.mrb[0].mxu0
        %v2312 = vadd.f32 0.0, %v2311
        %v2313 = vpop.f32.mrb[0].mxu0
        %v2314 = vpop.f32.mrb[0].mxu0
        %v2315 = vadd.f32 0.0, %v2314
        %v2316 = vpop.f32.mrb[0].mxu0
        %2317 = vmatprep.mubr.bf16.mxu0 %v788
        %2318 = vmatmul.mubr.bf16.gmra.mrb[0].mxu0 %v529
        %v2319 = vpop.f32.mrb[0].mxu0
        %v2320 = vadd.f32 0.0, %v2319
        %v2321 = vpop.f32.mrb[0].mxu0
        %v2322 = vpop.f32.mrb[0].mxu0
        %v2323 = vadd.f32 0.0, %v2322
        %v2324 = vpop.f32.mrb[0].mxu0
        %2325 = vmatprep.mubr.bf16.mxu0 %v796
        %2326 = vmatmul.mubr.bf16.gmra.mrb[0].mxu0 %v530
        %v2327 = vpop.f32.mrb[0].mxu0
        %v2328 = vadd.f32 0.0, %v2327
        %v2329 = vpop.f32.mrb[0].mxu0
        %v2330 = vpop.f32.mrb[0].mxu0
        %v2331 = vadd.f32 0.0, %v2330
        %v2332 = vpop.f32.mrb[0].mxu0
        %2333 = vmatprep.mubr.bf16.mxu0 %v804
        %2334 = vmatmul.mubr.bf16.gmra.mrb[0].mxu0 %v531
        %v2335 = vpop.f32.mrb[0].mxu0
        %v2336 = vadd.f32 0.0, %v2335
        %v2337 = vpop.f32.mrb[0].mxu0
        %v2338 = vpop.f32.mrb[0].mxu0
        %v2339 = vadd.f32 0.0, %v2338
        %v2340 = vpop.f32.mrb[0].mxu0
        %2341 = vmatprep.mubr.bf16.mxu0 %v812
        %2342 = vmatmul.mubr.bf16.gmra.mrb[0].mxu0 %v532
        %v2343 = vpop.f32.mrb[0].mxu0
        %v2344 = vadd.f32 0.0, %v2343
        %v2345 = vpop.f32.mrb[0].mxu0
        %v2346 = vpop.f32.mrb[0].mxu0
        %v2347 = vadd.f32 0.0, %v2346
        %v2348 = vpop.f32.mrb[0].mxu0
        %2349 = vmatprep.mubr.bf16.mxu0 %v820
        %2350 = vmatmul.mubr.bf16.gmra.mrb[0].mxu0 %v533
        %v2351 = vpop.f32.mrb[0].mxu0
        %v2352 = vadd.f32 0.0, %v2351
        %v2353 = vpop.f32.mrb[0].mxu0
        %v2354 = vpop.f32.mrb[0].mxu0
        %v2355 = vadd.f32 0.0, %v2354
        %v2356 = vpop.f32.mrb[0].mxu0
        %2357 = vmatprep.mubr.bf16.mxu0 %v828
        %2358 = vmatmul.mubr.bf16.gmra.mrb[0].mxu0 %v534
        %v2359 = vpop.f32.mrb[0].mxu0
        %v2360 = vadd.f32 0.0, %v2359
        %v2361 = vpop.f32.mrb[0].mxu0
        %v2362 = vpop.f32.mrb[0].mxu0
        %v2363 = vadd.f32 0.0, %v2362
        %v2364 = vpop.f32.mrb[0].mxu0
        %2365 = vmatprep.mubr.bf16.mxu0 %v836
        %2366 = vmatmul.mubr.bf16.gmra.mrb[0].mxu0 %v535
        %v2367 = vpop.f32.mrb[0].mxu0
        %v2368 = vadd.f32 0.0, %v2367
        %v2369 = vpop.f32.mrb[0].mxu0
        %v2370 = vpop.f32.mrb[0].mxu0
        %v2371 = vadd.f32 0.0, %v2370
        %v2372 = vpop.f32.mrb[0].mxu0
        %2373 = vmatprep.mubr.bf16.mxu0 %v844
        %2374 = vmatmul.mubr.bf16.gmra.mrb[0].mxu0 %v536
        %v2375 = vpop.f32.mrb[0].mxu0
        %v2376 = vadd.f32 0.0, %v2375
        %v2377 = vpop.f32.mrb[0].mxu0
        %v2378 = vpop.f32.mrb[0].mxu0
        %v2379 = vadd.f32 0.0, %v2378
        %v2380 = vpop.f32.mrb[0].mxu0
        %2381 = vdwg.mxu0
        %2382 = vmatprep.subr.bf16.mxu0 0
        %2383 = vmatpush1.bf16.msra.mxu0 %v1965
        %2384 = vmatprep.subr.bf16.mxu0 0
        %2385 = vmatpush1.bf16.msra.mxu0 %v1966
        %2386 = vmatprep.subr.bf16.mxu0 0
        %2387 = vmatpush1.bf16.msra.mxu0 %v1967
        %2388 = vmatprep.subr.bf16.mxu0 0
        %2389 = vmatpush1.bf16.msra.mxu0 %v1968
        %2390 = vmatprep.subr.bf16.mxu0 0
        %2391 = vmatpush1.bf16.msra.mxu0 %v1969
        %2392 = vmatprep.subr.bf16.mxu0 0
        %2393 = vmatpush1.bf16.msra.mxu0 %v1970
        %2394 = vmatprep.subr.bf16.mxu0 0
        %2395 = vmatpush1.bf16.msra.mxu0 %v1971
        %2396 = vmatprep.subr.bf16.mxu0 0
        %2397 = vmatpush1.bf16.msra.mxu0 %v1972
        %2398 = vmatprep.subr.bf16.mxu0 0
        %2399 = vmatpush1.bf16.msra.mxu0 %v1973
        %2400 = vmatprep.subr.bf16.mxu0 0
        %2401 = vmatpush1.bf16.msra.mxu0 %v1974
        %2402 = vmatprep.subr.bf16.mxu0 0
        %2403 = vmatpush1.bf16.msra.mxu0 %v1975
        %2404 = vmatprep.subr.bf16.mxu0 0
        %2405 = vmatpush1.bf16.msra.mxu0 %v1976
        %2406 = vmatprep.subr.bf16.mxu0 0
        %2407 = vmatpush1.bf16.msra.mxu0 %v1977
        %2408 = vmatprep.subr.bf16.mxu0 0
        %2409 = vmatpush1.bf16.msra.mxu0 %v1978
        %2410 = vmatprep.subr.bf16.mxu0 0
        %2411 = vmatpush1.bf16.msra.mxu0 %v1979
        %2412 = vmatprep.subr.bf16.mxu0 0
        %2413 = vmatpush1.bf16.msra.mxu0 %v1980
        %2414 = vmatprep.mubr.bf16.mxu0 %v882
        %2415 = vmatmul.mubr.bf16.gmra.mrb[0].mxu0 %v880
        %v2416 = vpop.f32.mrb[0].mxu0
        %v2417 = vadd.f32 %v2128, %v2416
        %v2418 = vpop.f32.mrb[0].mxu0
        %v2419 = vpop.f32.mrb[0].mxu0
        %v2420 = vadd.f32 %v2131, %v2419
        %v2421 = vpop.f32.mrb[0].mxu0
        %2422 = vmatprep.mubr.bf16.mxu0 %v884
        %2423 = vmatmul.mubr.bf16.gmra.mrb[0].mxu0 %v882
        %v2424 = vpop.f32.mrb[0].mxu0
        %v2425 = vadd.f32 %v2136, %v2424
        %v2426 = vpop.f32.mrb[0].mxu0
        %v2427 = vpop.f32.mrb[0].mxu0
        %v2428 = vadd.f32 %v2139, %v2427
        %v2429 = vpop.f32.mrb[0].mxu0
        %2430 = vmatprep.mubr.bf16.mxu0 %v886
        %2431 = vmatmul.mubr.bf16.gmra.mrb[0].mxu0 %v884
        %v2432 = vpop.f32.mrb[0].mxu0
        %v2433 = vadd.f32 %v2144, %v2432
        %v2434 = vpop.f32.mrb[0].mxu0
        %v2435 = vpop.f32.mrb[0].mxu0
        %v2436 = vadd.f32 %v2147, %v2435
        %v2437 = vpop.f32.mrb[0].mxu0
        %2438 = vmatprep.mubr.bf16.mxu0 %v888
        %2439 = vmatmul.mubr.bf16.gmra.mrb[0].mxu0 %v886
        %v2440 = vpop.f32.mrb[0].mxu0
        %v2441 = vadd.f32 %v2152, %v2440
        %v2442 = vpop.f32.mrb[0].mxu0
        %v2443 = vpop.f32.mrb[0].mxu0
        %v2444 = vadd.f32 %v2155, %v2443
        %v2445 = vpop.f32.mrb[0].mxu0
        %2446 = vmatprep.mubr.bf16.mxu0 %v890
        %2447 = vmatmul.mubr.bf16.gmra.mrb[0].mxu0 %v888
        %v2448 = vpop.f32.mrb[0].mxu0
        %v2449 = vadd.f32 %v2160, %v2448
        %v2450 = vpop.f32.mrb[0].mxu0
        %v2451 = vpop.f32.mrb[0].mxu0
        %v2452 = vadd.f32 %v2163, %v2451
        %v2453 = vpop.f32.mrb[0].mxu0
        %2454 = vmatprep.mubr.bf16.mxu0 %v892
        %2455 = vmatmul.mubr.bf16.gmra.mrb[0].mxu0 %v890
        %v2456 = vpop.f32.mrb[0].mxu0
        %v2457 = vadd.f32 %v2168, %v2456
        %v2458 = vpop.f32.mrb[0].mxu0
        %v2459 = vpop.f32.mrb[0].mxu0
        %v2460 = vadd.f32 %v2171, %v2459
        %v2461 = vpop.f32.mrb[0].mxu0
        %2462 = vmatprep.mubr.bf16.mxu0 %v894
        %2463 = vmatmul.mubr.bf16.gmra.mrb[0].mxu0 %v892
        %v2464 = vpop.f32.mrb[0].mxu0
        %v2465 = vadd.f32 %v2176, %v2464
        %v2466 = vpop.f32.mrb[0].mxu0
        %v2467 = vpop.f32.mrb[0].mxu0
        %v2468 = vadd.f32 %v2179, %v2467
        %v2469 = vpop.f32.mrb[0].mxu0
        %2470 = vmatprep.mubr.bf16.mxu0 %v896
        %2471 = vmatmul.mubr.bf16.gmra.mrb[0].mxu0 %v894
        %v2472 = vpop.f32.mrb[0].mxu0
        %v2473 = vadd.f32 %v2184, %v2472
        %v2474 = vpop.f32.mrb[0].mxu0
        %v2475 = vpop.f32.mrb[0].mxu0
        %v2476 = vadd.f32 %v2187, %v2475
        %v2477 = vpop.f32.mrb[0].mxu0
        %2478 = vmatprep.mubr.bf16.mxu0 %v898
        %2479 = vmatmul.mubr.bf16.gmra.mrb[0].mxu0 %v896
        %v2480 = vpop.f32.mrb[0].mxu0
        %v2481 = vadd.f32 %v2192, %v2480
        %v2482 = vpop.f32.mrb[0].mxu0
        %v2483 = vpop.f32.mrb[0].mxu0
        %v2484 = vadd.f32 %v2195, %v2483
        %v2485 = vpop.f32.mrb[0].mxu0
        %2486 = vmatprep.mubr.bf16.mxu0 %v900
        %2487 = vmatmul.mubr.bf16.gmra.mrb[0].mxu0 %v898
        %v2488 = vpop.f32.mrb[0].mxu0
        %v2489 = vadd.f32 %v2200, %v2488
        %v2490 = vpop.f32.mrb[0].mxu0
        %v2491 = vpop.f32.mrb[0].mxu0
        %v2492 = vadd.f32 %v2203, %v2491
        %v2493 = vpop.f32.mrb[0].mxu0
        %2494 = vmatprep.mubr.bf16.mxu0 %v902
        %2495 = vmatmul.mubr.bf16.gmra.mrb[0].mxu0 %v900
        %v2496 = vpop.f32.mrb[0].mxu0
        %v2497 = vadd.f32 %v2208, %v2496
        %v2498 = vpop.f32.mrb[0].mxu0
        %v2499 = vpop.f32.mrb[0].mxu0
        %v2500 = vadd.f32 %v2211, %v2499
        %v2501 = vpop.f32.mrb[0].mxu0
        %2502 = vmatprep.mubr.bf16.mxu0 %v904
        %2503 = vmatmul.mubr.bf16.gmra.mrb[0].mxu0 %v902
        %v2504 = vpop.f32.mrb[0].mxu0
        %v2505 = vadd.f32 %v2216, %v2504
        %v2506 = vpop.f32.mrb[0].mxu0
        %v2507 = vpop.f32.mrb[0].mxu0
        %v2508 = vadd.f32 %v2219, %v2507
        %v2509 = vpop.f32.mrb[0].mxu0
        %2510 = vmatprep.mubr.bf16.mxu0 %v906
        %2511 = vmatmul.mubr.bf16.gmra.mrb[0].mxu0 %v904
        %v2512 = vpop.f32.mrb[0].mxu0
        %v2513 = vadd.f32 %v2224, %v2512
        %v2514 = vpop.f32.mrb[0].mxu0
        %v2515 = vpop.f32.mrb[0].mxu0
        %v2516 = vadd.f32 %v2227, %v2515
        %v2517 = vpop.f32.mrb[0].mxu0
        %2518 = vmatprep.mubr.bf16.mxu0 %v908
        %2519 = vmatmul.mubr.bf16.gmra.mrb[0].mxu0 %v906
        %v2520 = vpop.f32.mrb[0].mxu0
        %v2521 = vadd.f32 %v2232, %v2520
        %v2522 = vpop.f32.mrb[0].mxu0
        %v2523 = vpop.f32.mrb[0].mxu0
        %v2524 = vadd.f32 %v2235, %v2523
        %v2525 = vpop.f32.mrb[0].mxu0
        %2526 = vmatprep.mubr.bf16.mxu0 %v910
        %2527 = vmatmul.mubr.bf16.gmra.mrb[0].mxu0 %v908
        %v2528 = vpop.f32.mrb[0].mxu0
        %v2529 = vadd.f32 %v2240, %v2528
        %v2530 = vpop.f32.mrb[0].mxu0
        %v2531 = vpop.f32.mrb[0].mxu0
        %v2532 = vadd.f32 %v2243, %v2531
        %v2533 = vpop.f32.mrb[0].mxu0
        %2534 = vmatprep.mubr.bf16.mxu0 %v912
        %2535 = vmatmul.mubr.bf16.gmra.mrb[0].mxu0 %v910
        %v2536 = vpop.f32.mrb[0].mxu0
        %v2537 = vadd.f32 %v2248, %v2536
        %v2538 = vpop.f32.mrb[0].mxu0
        %v2539 = vpop.f32.mrb[0].mxu0
        %v2540 = vadd.f32 %v2251, %v2539
        %v2541 = vpop.f32.mrb[0].mxu0
        %2542 = vmatprep.mubr.bf16.mxu0 %v914
        %2543 = vmatmul.mubr.bf16.gmra.mrb[0].mxu0 %v912
        %v2544 = vpop.f32.mrb[0].mxu0
        %v2545 = vadd.f32 %v2256, %v2544
        %v2546 = vpop.f32.mrb[0].mxu0
        %v2547 = vpop.f32.mrb[0].mxu0
        %v2548 = vadd.f32 %v2259, %v2547
        %v2549 = vpop.f32.mrb[0].mxu0
        %2550 = vmatprep.mubr.bf16.mxu0 %v916
        %2551 = vmatmul.mubr.bf16.gmra.mrb[0].mxu0 %v914
        %v2552 = vpop.f32.mrb[0].mxu0
        %v2553 = vadd.f32 %v2264, %v2552
        %v2554 = vpop.f32.mrb[0].mxu0
        %v2555 = vpop.f32.mrb[0].mxu0
        %v2556 = vadd.f32 %v2267, %v2555
        %v2557 = vpop.f32.mrb[0].mxu0
        %2558 = vmatprep.mubr.bf16.mxu0 %v918
        %2559 = vmatmul.mubr.bf16.gmra.mrb[0].mxu0 %v916
        %v2560 = vpop.f32.mrb[0].mxu0
        %v2561 = vadd.f32 %v2272, %v2560
        %v2562 = vpop.f32.mrb[0].mxu0
        %v2563 = vpop.f32.mrb[0].mxu0
        %v2564 = vadd.f32 %v2275, %v2563
        %v2565 = vpop.f32.mrb[0].mxu0
        %2566 = vmatprep.mubr.bf16.mxu0 %v920
        %2567 = vmatmul.mubr.bf16.gmra.mrb[0].mxu0 %v918
        %v2568 = vpop.f32.mrb[0].mxu0
        %v2569 = vadd.f32 %v2280, %v2568
        %v2570 = vpop.f32.mrb[0].mxu0
        %v2571 = vpop.f32.mrb[0].mxu0
        %v2572 = vadd.f32 %v2283, %v2571
        %v2573 = vpop.f32.mrb[0].mxu0
        %2574 = vmatprep.mubr.bf16.mxu0 %v922
        %2575 = vmatmul.mubr.bf16.gmra.mrb[0].mxu0 %v920
        %v2576 = vpop.f32.mrb[0].mxu0
        %v2577 = vadd.f32 %v2288, %v2576
        %v2578 = vpop.f32.mrb[0].mxu0
        %v2579 = vpop.f32.mrb[0].mxu0
        %v2580 = vadd.f32 %v2291, %v2579
        %v2581 = vpop.f32.mrb[0].mxu0
        %2582 = vmatprep.mubr.bf16.mxu0 %v924
        %2583 = vmatmul.mubr.bf16.gmra.mrb[0].mxu0 %v922
        %v2584 = vpop.f32.mrb[0].mxu0
        %v2585 = vadd.f32 %v2296, %v2584
        %v2586 = vpop.f32.mrb[0].mxu0
        %v2587 = vpop.f32.mrb[0].mxu0
        %v2588 = vadd.f32 %v2299, %v2587
        %v2589 = vpop.f32.mrb[0].mxu0
        %2590 = vmatprep.mubr.bf16.mxu0 %v926
        %2591 = vmatmul.mubr.bf16.gmra.mrb[0].mxu0 %v924
        %v2592 = vpop.f32.mrb[0].mxu0
        %v2593 = vadd.f32 %v2304, %v2592
        %v2594 = vpop.f32.mrb[0].mxu0
        %v2595 = vpop.f32.mrb[0].mxu0
        %v2596 = vadd.f32 %v2307, %v2595
        %v2597 = vpop.f32.mrb[0].mxu0
        %2598 = vmatprep.mubr.bf16.mxu0 %v928
        %2599 = vmatmul.mubr.bf16.gmra.mrb[0].mxu0 %v926
        %v2600 = vpop.f32.mrb[0].mxu0
        %v2601 = vadd.f32 %v2312, %v2600
        %v2602 = vpop.f32.mrb[0].mxu0
        %v2603 = vpop.f32.mrb[0].mxu0
        %v2604 = vadd.f32 %v2315, %v2603
        %v2605 = vpop.f32.mrb[0].mxu0
        %2606 = vmatprep.mubr.bf16.mxu0 %v930
        %2607 = vmatmul.mubr.bf16.gmra.mrb[0].mxu0 %v928
        %v2608 = vpop.f32.mrb[0].mxu0
        %v2609 = vadd.f32 %v2320, %v2608
        %v2610 = vpop.f32.mrb[0].mxu0
        %v2611 = vpop.f32.mrb[0].mxu0
        %v2612 = vadd.f32 %v2323, %v2611
        %v2613 = vpop.f32.mrb[0].mxu0
        %2614 = vmatprep.mubr.bf16.mxu0 %v932
        %2615 = vmatmul.mubr.bf16.gmra.mrb[0].mxu0 %v930
        %v2616 = vpop.f32.mrb[0].mxu0
        %v2617 = vadd.f32 %v2328, %v2616
        %v2618 = vpop.f32.mrb[0].mxu0
        %v2619 = vpop.f32.mrb[0].mxu0
        %v2620 = vadd.f32 %v2331, %v2619
        %v2621 = vpop.f32.mrb[0].mxu0
        %2622 = vmatprep.mubr.bf16.mxu0 %v934
        %2623 = vmatmul.mubr.bf16.gmra.mrb[0].mxu0 %v932
        %v2624 = vpop.f32.mrb[0].mxu0
        %v2625 = vadd.f32 %v2336, %v2624
        %v2626 = vpop.f32.mrb[0].mxu0
        %v2627 = vpop.f32.mrb[0].mxu0
        %v2628 = vadd.f32 %v2339, %v2627
        %v2629 = vpop.f32.mrb[0].mxu0
        %2630 = vmatprep.mubr.bf16.mxu0 %v936
        %2631 = vmatmul.mubr.bf16.gmra.mrb[0].mxu0 %v934
        %v2632 = vpop.f32.mrb[0].mxu0
        %v2633 = vadd.f32 %v2344, %v2632
        %v2634 = vpop.f32.mrb[0].mxu0
        %v2635 = vpop.f32.mrb[0].mxu0
        %v2636 = vadd.f32 %v2347, %v2635
        %v2637 = vpop.f32.mrb[0].mxu0
        %2638 = vmatprep.mubr.bf16.mxu0 %v938
        %2639 = vmatmul.mubr.bf16.gmra.mrb[0].mxu0 %v936
        %v2640 = vpop.f32.mrb[0].mxu0
        %v2641 = vadd.f32 %v2352, %v2640
        %v2642 = vpop.f32.mrb[0].mxu0
        %v2643 = vpop.f32.mrb[0].mxu0
        %v2644 = vadd.f32 %v2355, %v2643
        %v2645 = vpop.f32.mrb[0].mxu0
        %2646 = vmatprep.mubr.bf16.mxu0 %v940
        %2647 = vmatmul.mubr.bf16.gmra.mrb[0].mxu0 %v938
        %v2648 = vpop.f32.mrb[0].mxu0
        %v2649 = vadd.f32 %v2360, %v2648
        %v2650 = vpop.f32.mrb[0].mxu0
        %v2651 = vpop.f32.mrb[0].mxu0
        %v2652 = vadd.f32 %v2363, %v2651
        %v2653 = vpop.f32.mrb[0].mxu0
        %2654 = vmatprep.mubr.bf16.mxu0 %v942
        %2655 = vmatmul.mubr.bf16.gmra.mrb[0].mxu0 %v940
        %v2656 = vpop.f32.mrb[0].mxu0
        %v2657 = vadd.f32 %v2368, %v2656
        %v2658 = vpop.f32.mrb[0].mxu0
        %v2659 = vpop.f32.mrb[0].mxu0
        %v2660 = vadd.f32 %v2371, %v2659
        %v2661 = vpop.f32.mrb[0].mxu0
        %2662 = vmatprep.mubr.bf16.mxu0 %v976
        %2663 = vmatmul.mubr.bf16.gmra.mrb[0].mxu0 %v942
        %v2664 = vpop.f32.mrb[0].mxu0
        %v2665 = vadd.f32 %v2376, %v2664
        %v2666 = vpop.f32.mrb[0].mxu0
        %v2667 = vpop.f32.mrb[0].mxu0
        %v2668 = vadd.f32 %v2379, %v2667
        %v2669 = vpop.f32.mrb[0].mxu0
        %2670 = vdwg.mxu0
        %2671 = vmatprep.subr.bf16.mxu0 0
        %2672 = vmatpush1.bf16.msra.mxu0 %v1981
        %2673 = vmatprep.subr.bf16.mxu0 0
        %2674 = vmatpush1.bf16.msra.mxu0 %v1982
        %2675 = vmatprep.subr.bf16.mxu0 0
        %2676 = vmatpush1.bf16.msra.mxu0 %v1983
        %2677 = vmatprep.subr.bf16.mxu0 0
        %2678 = vmatpush1.bf16.msra.mxu0 %v1984
        %2679 = vmatprep.subr.bf16.mxu0 0
        %2680 = vmatpush1.bf16.msra.mxu0 %v1985
        %2681 = vmatprep.subr.bf16.mxu0 0
        %2682 = vmatpush1.bf16.msra.mxu0 %v1986
        %2683 = vmatprep.subr.bf16.mxu0 0
        %2684 = vmatpush1.bf16.msra.mxu0 %v1987
        %2685 = vmatprep.subr.bf16.mxu0 0
        %2686 = vmatpush1.bf16.msra.mxu0 %v1988
        %2687 = vmatprep.subr.bf16.mxu0 0
        %2688 = vmatpush1.bf16.msra.mxu0 %v1989
        %2689 = vmatprep.subr.bf16.mxu0 0
        %2690 = vmatpush1.bf16.msra.mxu0 %v1990
        %2691 = vmatprep.subr.bf16.mxu0 0
        %2692 = vmatpush1.bf16.msra.mxu0 %v1991
        %2693 = vmatprep.subr.bf16.mxu0 0
        %2694 = vmatpush1.bf16.msra.mxu0 %v1992
        %2695 = vmatprep.subr.bf16.mxu0 0
        %2696 = vmatpush1.bf16.msra.mxu0 %v1993
        %2697 = vmatprep.subr.bf16.mxu0 0
        %2698 = vmatpush1.bf16.msra.mxu0 %v1994
        %2699 = vmatprep.subr.bf16.mxu0 0
        %2700 = vmatpush1.bf16.msra.mxu0 %v1995
        %2701 = vmatprep.subr.bf16.mxu0 0
        %2702 = vmatpush1.bf16.msra.mxu0 %v1996
        %2703 = vmatprep.mubr.bf16.mxu0 %v1152
        %2704 = vmatmul.mubr.bf16.gmra.mrb[0].mxu0 %v985
        %v2705 = vpop.f32.mrb[0].mxu0
        %v2706 = vadd.f32 %v2417, %v2705
        %v2707 = vpop.f32.mrb[0].mxu0
        %v2708 = vpop.f32.mrb[0].mxu0
        %v2709 = vadd.f32 %v2420, %v2708
        %v2710 = vpop.f32.mrb[0].mxu0
        %2711 = vmatprep.mubr.bf16.mxu0 %v1154
        %2712 = vmatmul.mubr.bf16.gmra.mrb[0].mxu0 %v989
        %v2713 = vpop.f32.mrb[0].mxu0
        %v2714 = vadd.f32 %v2425, %v2713
        %v2715 = vpop.f32.mrb[0].mxu0
        %v2716 = vpop.f32.mrb[0].mxu0
        %v2717 = vadd.f32 %v2428, %v2716
        %v2718 = vpop.f32.mrb[0].mxu0
        %2719 = vmatprep.mubr.bf16.mxu0 %v1156
        %2720 = vmatmul.mubr.bf16.gmra.mrb[0].mxu0 %v993
        %v2721 = vpop.f32.mrb[0].mxu0
        %v2722 = vadd.f32 %v2433, %v2721
        %v2723 = vpop.f32.mrb[0].mxu0
        %v2724 = vpop.f32.mrb[0].mxu0
        %v2725 = vadd.f32 %v2436, %v2724
        %v2726 = vpop.f32.mrb[0].mxu0
        %2727 = vmatprep.mubr.bf16.mxu0 %v1158
        %2728 = vmatmul.mubr.bf16.gmra.mrb[0].mxu0 %v997
        %v2729 = vpop.f32.mrb[0].mxu0
        %v2730 = vadd.f32 %v2441, %v2729
        %v2731 = vpop.f32.mrb[0].mxu0
        %v2732 = vpop.f32.mrb[0].mxu0
        %v2733 = vadd.f32 %v2444, %v2732
        %v2734 = vpop.f32.mrb[0].mxu0
        %2735 = vmatprep.mubr.bf16.mxu0 %v1160
        %2736 = vmatmul.mubr.bf16.gmra.mrb[0].mxu0 %v1001
        %v2737 = vpop.f32.mrb[0].mxu0
        %v2738 = vadd.f32 %v2449, %v2737
        %v2739 = vpop.f32.mrb[0].mxu0
        %v2740 = vpop.f32.mrb[0].mxu0
        %v2741 = vadd.f32 %v2452, %v2740
        %v2742 = vpop.f32.mrb[0].mxu0
        %2743 = vmatprep.mubr.bf16.mxu0 %v1162
        %2744 = vmatmul.mubr.bf16.gmra.mrb[0].mxu0 %v1005
        %v2745 = vpop.f32.mrb[0].mxu0
        %v2746 = vadd.f32 %v2457, %v2745
        %v2747 = vpop.f32.mrb[0].mxu0
        %v2748 = vpop.f32.mrb[0].mxu0
        %v2749 = vadd.f32 %v2460, %v2748
        %v2750 = vpop.f32.mrb[0].mxu0
        %2751 = vmatprep.mubr.bf16.mxu0 %v1164
        %2752 = vmatmul.mubr.bf16.gmra.mrb[0].mxu0 %v1009
        %v2753 = vpop.f32.mrb[0].mxu0
        %v2754 = vadd.f32 %v2465, %v2753
        %v2755 = vpop.f32.mrb[0].mxu0
        %v2756 = vpop.f32.mrb[0].mxu0
        %v2757 = vadd.f32 %v2468, %v2756
        %v2758 = vpop.f32.mrb[0].mxu0
        %2759 = vmatprep.mubr.bf16.mxu0 %v1166
        %2760 = vmatmul.mubr.bf16.gmra.mrb[0].mxu0 %v1013
        %v2761 = vpop.f32.mrb[0].mxu0
        %v2762 = vadd.f32 %v2473, %v2761
        %v2763 = vpop.f32.mrb[0].mxu0
        %v2764 = vpop.f32.mrb[0].mxu0
        %v2765 = vadd.f32 %v2476, %v2764
        %v2766 = vpop.f32.mrb[0].mxu0
        %2767 = vmatprep.mubr.bf16.mxu0 %v1168
        %2768 = vmatmul.mubr.bf16.gmra.mrb[0].mxu0 %v1017
        %v2769 = vpop.f32.mrb[0].mxu0
        %v2770 = vadd.f32 %v2481, %v2769
        %v2771 = vpop.f32.mrb[0].mxu0
        %v2772 = vpop.f32.mrb[0].mxu0
        %v2773 = vadd.f32 %v2484, %v2772
        %v2774 = vpop.f32.mrb[0].mxu0
        %2775 = vmatprep.mubr.bf16.mxu0 %v1170
        %2776 = vmatmul.mubr.bf16.gmra.mrb[0].mxu0 %v1021
        %v2777 = vpop.f32.mrb[0].mxu0
        %v2778 = vadd.f32 %v2489, %v2777
        %v2779 = vpop.f32.mrb[0].mxu0
        %v2780 = vpop.f32.mrb[0].mxu0
        %v2781 = vadd.f32 %v2492, %v2780
        %v2782 = vpop.f32.mrb[0].mxu0
        %2783 = vmatprep.mubr.bf16.mxu0 %v1172
        %2784 = vmatmul.mubr.bf16.gmra.mrb[0].mxu0 %v1025
        %v2785 = vpop.f32.mrb[0].mxu0
        %v2786 = vadd.f32 %v2497, %v2785
        %v2787 = vpop.f32.mrb[0].mxu0
        %v2788 = vpop.f32.mrb[0].mxu0
        %v2789 = vadd.f32 %v2500, %v2788
        %v2790 = vpop.f32.mrb[0].mxu0
        %2791 = vmatprep.mubr.bf16.mxu0 %v1174
        %2792 = vmatmul.mubr.bf16.gmra.mrb[0].mxu0 %v1029
        %v2793 = vpop.f32.mrb[0].mxu0
        %v2794 = vadd.f32 %v2505, %v2793
        %v2795 = vpop.f32.mrb[0].mxu0
        %v2796 = vpop.f32.mrb[0].mxu0
        %v2797 = vadd.f32 %v2508, %v2796
        %v2798 = vpop.f32.mrb[0].mxu0
        %2799 = vmatprep.mubr.bf16.mxu0 %v1176
        %2800 = vmatmul.mubr.bf16.gmra.mrb[0].mxu0 %v1033
        %v2801 = vpop.f32.mrb[0].mxu0
        %v2802 = vadd.f32 %v2513, %v2801
        %v2803 = vpop.f32.mrb[0].mxu0
        %v2804 = vpop.f32.mrb[0].mxu0
        %v2805 = vadd.f32 %v2516, %v2804
        %v2806 = vpop.f32.mrb[0].mxu0
        %2807 = vmatprep.mubr.bf16.mxu0 %v1178
        %2808 = vmatmul.mubr.bf16.gmra.mrb[0].mxu0 %v1037
        %v2809 = vpop.f32.mrb[0].mxu0
        %v2810 = vadd.f32 %v2521, %v2809
        %v2811 = vpop.f32.mrb[0].mxu0
        %v2812 = vpop.f32.mrb[0].mxu0
        %v2813 = vadd.f32 %v2524, %v2812
        %v2814 = vpop.f32.mrb[0].mxu0
        %2815 = vmatprep.mubr.bf16.mxu0 %v1180
        %2816 = vmatmul.mubr.bf16.gmra.mrb[0].mxu0 %v1041
        %v2817 = vpop.f32.mrb[0].mxu0
        %v2818 = vadd.f32 %v2529, %v2817
        %v2819 = vpop.f32.mrb[0].mxu0
        %v2820 = vpop.f32.mrb[0].mxu0
        %v2821 = vadd.f32 %v2532, %v2820
        %v2822 = vpop.f32.mrb[0].mxu0
        %2823 = vmatprep.mubr.bf16.mxu0 %v1182
        %2824 = vmatmul.mubr.bf16.gmra.mrb[0].mxu0 %v1045
        %v2825 = vpop.f32.mrb[0].mxu0
        %v2826 = vadd.f32 %v2537, %v2825
        %v2827 = vpop.f32.mrb[0].mxu0
        %v2828 = vpop.f32.mrb[0].mxu0
        %v2829 = vadd.f32 %v2540, %v2828
        %v2830 = vpop.f32.mrb[0].mxu0
        %2831 = vmatprep.mubr.bf16.mxu0 %v1184
        %2832 = vmatmul.mubr.bf16.gmra.mrb[0].mxu0 %v1049
        %v2833 = vpop.f32.mrb[0].mxu0
        %v2834 = vadd.f32 %v2545, %v2833
        %v2835 = vpop.f32.mrb[0].mxu0
        %v2836 = vpop.f32.mrb[0].mxu0
        %v2837 = vadd.f32 %v2548, %v2836
        %v2838 = vpop.f32.mrb[0].mxu0
        %2839 = vmatprep.mubr.bf16.mxu0 %v1186
        %2840 = vmatmul.mubr.bf16.gmra.mrb[0].mxu0 %v1053
        %v2841 = vpop.f32.mrb[0].mxu0
        %v2842 = vadd.f32 %v2553, %v2841
        %v2843 = vpop.f32.mrb[0].mxu0
        %v2844 = vpop.f32.mrb[0].mxu0
        %v2845 = vadd.f32 %v2556, %v2844
        %v2846 = vpop.f32.mrb[0].mxu0
        %2847 = vmatprep.mubr.bf16.mxu0 %v1188
        %2848 = vmatmul.mubr.bf16.gmra.mrb[0].mxu0 %v1057
        %v2849 = vpop.f32.mrb[0].mxu0
        %v2850 = vadd.f32 %v2561, %v2849
        %v2851 = vpop.f32.mrb[0].mxu0
        %v2852 = vpop.f32.mrb[0].mxu0
        %v2853 = vadd.f32 %v2564, %v2852
        %v2854 = vpop.f32.mrb[0].mxu0
        %2855 = vmatprep.mubr.bf16.mxu0 %v1190
        %2856 = vmatmul.mubr.bf16.gmra.mrb[0].mxu0 %v1061
        %v2857 = vpop.f32.mrb[0].mxu0
        %v2858 = vadd.f32 %v2569, %v2857
        %v2859 = vpop.f32.mrb[0].mxu0
        %v2860 = vpop.f32.mrb[0].mxu0
        %v2861 = vadd.f32 %v2572, %v2860
        %v2862 = vpop.f32.mrb[0].mxu0
        %2863 = vmatprep.mubr.bf16.mxu0 %v1192
        %2864 = vmatmul.mubr.bf16.gmra.mrb[0].mxu0 %v1065
        %v2865 = vpop.f32.mrb[0].mxu0
        %v2866 = vadd.f32 %v2577, %v2865
        %v2867 = vpop.f32.mrb[0].mxu0
        %v2868 = vpop.f32.mrb[0].mxu0
        %v2869 = vadd.f32 %v2580, %v2868
        %v2870 = vpop.f32.mrb[0].mxu0
        %2871 = vmatprep.mubr.bf16.mxu0 %v1194
        %2872 = vmatmul.mubr.bf16.gmra.mrb[0].mxu0 %v1069
        %v2873 = vpop.f32.mrb[0].mxu0
        %v2874 = vadd.f32 %v2585, %v2873
        %v2875 = vpop.f32.mrb[0].mxu0
        %v2876 = vpop.f32.mrb[0].mxu0
        %v2877 = vadd.f32 %v2588, %v2876
        %v2878 = vpop.f32.mrb[0].mxu0
        %2879 = vmatprep.mubr.bf16.mxu0 %v1196
        %2880 = vmatmul.mubr.bf16.gmra.mrb[0].mxu0 %v1073
        %v2881 = vpop.f32.mrb[0].mxu0
        %v2882 = vadd.f32 %v2593, %v2881
        %v2883 = vpop.f32.mrb[0].mxu0
        %v2884 = vpop.f32.mrb[0].mxu0
        %v2885 = vadd.f32 %v2596, %v2884
        %v2886 = vpop.f32.mrb[0].mxu0
        %2887 = vmatprep.mubr.bf16.mxu0 %v1198
        %2888 = vmatmul.mubr.bf16.gmra.mrb[0].mxu0 %v1077
        %v2889 = vpop.f32.mrb[0].mxu0
        %v2890 = vadd.f32 %v2601, %v2889
        %v2891 = vpop.f32.mrb[0].mxu0
        %v2892 = vpop.f32.mrb[0].mxu0
        %v2893 = vadd.f32 %v2604, %v2892
        %v2894 = vpop.f32.mrb[0].mxu0
        %2895 = vmatprep.mubr.bf16.mxu0 %v1200
        %2896 = vmatmul.mubr.bf16.gmra.mrb[0].mxu0 %v1081
        %v2897 = vpop.f32.mrb[0].mxu0
        %v2898 = vadd.f32 %v2609, %v2897
        %v2899 = vpop.f32.mrb[0].mxu0
        %v2900 = vpop.f32.mrb[0].mxu0
        %v2901 = vadd.f32 %v2612, %v2900
        %v2902 = vpop.f32.mrb[0].mxu0
        %2903 = vmatprep.mubr.bf16.mxu0 %v1202
        %2904 = vmatmul.mubr.bf16.gmra.mrb[0].mxu0 %v1085
        %v2905 = vpop.f32.mrb[0].mxu0
        %v2906 = vadd.f32 %v2617, %v2905
        %v2907 = vpop.f32.mrb[0].mxu0
        %v2908 = vpop.f32.mrb[0].mxu0
        %v2909 = vadd.f32 %v2620, %v2908
        %v2910 = vpop.f32.mrb[0].mxu0
        %2911 = vmatprep.mubr.bf16.mxu0 %v1204
        %2912 = vmatmul.mubr.bf16.gmra.mrb[0].mxu0 %v1089
        %v2913 = vpop.f32.mrb[0].mxu0
        %v2914 = vadd.f32 %v2625, %v2913
        %v2915 = vpop.f32.mrb[0].mxu0
        %v2916 = vpop.f32.mrb[0].mxu0
        %v2917 = vadd.f32 %v2628, %v2916
        %v2918 = vpop.f32.mrb[0].mxu0
        %2919 = vmatprep.mubr.bf16.mxu0 %v1206
        %2920 = vmatmul.mubr.bf16.gmra.mrb[0].mxu0 %v1093
        %v2921 = vpop.f32.mrb[0].mxu0
        %v2922 = vadd.f32 %v2633, %v2921
        %v2923 = vpop.f32.mrb[0].mxu0
        %v2924 = vpop.f32.mrb[0].mxu0
        %v2925 = vadd.f32 %v2636, %v2924
        %v2926 = vpop.f32.mrb[0].mxu0
        %2927 = vmatprep.mubr.bf16.mxu0 %v1208
        %2928 = vmatmul.mubr.bf16.gmra.mrb[0].mxu0 %v1097
        %v2929 = vpop.f32.mrb[0].mxu0
        %v2930 = vadd.f32 %v2641, %v2929
        %v2931 = vpop.f32.mrb[0].mxu0
        %v2932 = vpop.f32.mrb[0].mxu0
        %v2933 = vadd.f32 %v2644, %v2932
        %v2934 = vpop.f32.mrb[0].mxu0
        %2935 = vmatprep.mubr.bf16.mxu0 %v1210
        %2936 = vmatmul.mubr.bf16.gmra.mrb[0].mxu0 %v1101
        %v2937 = vpop.f32.mrb[0].mxu0
        %v2938 = vadd.f32 %v2649, %v2937
        %v2939 = vpop.f32.mrb[0].mxu0
        %v2940 = vpop.f32.mrb[0].mxu0
        %v2941 = vadd.f32 %v2652, %v2940
        %v2942 = vpop.f32.mrb[0].mxu0
        %2943 = vmatprep.mubr.bf16.mxu0 %v1212
        %2944 = vmatmul.mubr.bf16.gmra.mrb[0].mxu0 %v1107
        %v2945 = vpop.f32.mrb[0].mxu0
        %v2946 = vadd.f32 %v2657, %v2945
        %v2947 = vpop.f32.mrb[0].mxu0
        %v2948 = vpop.f32.mrb[0].mxu0
        %v2949 = vadd.f32 %v2660, %v2948
        %v2950 = vpop.f32.mrb[0].mxu0
        %2951 = vmatprep.mubr.bf16.mxu0 %v1214
        %2952 = vmatmul.mubr.bf16.gmra.mrb[0].mxu0 %v1116
        %v2953 = vpop.f32.mrb[0].mxu0
        %v2954 = vadd.f32 %v2665, %v2953
        %v2955 = vpop.f32.mrb[0].mxu0
        %v2956 = vpop.f32.mrb[0].mxu0
        %v2957 = vadd.f32 %v2668, %v2956
        %v2958 = vpop.f32.mrb[0].mxu0
        %2959 = vdwg.mxu0
        %2960 = vmatprep.subr.bf16.mxu0 0
        %2961 = vmatpush1.bf16.msra.mxu0 %v1997
        %2962 = vmatprep.subr.bf16.mxu0 0
        %2963 = vmatpush1.bf16.msra.mxu0 %v1998
        %2964 = vmatprep.subr.bf16.mxu0 0
        %2965 = vmatpush1.bf16.msra.mxu0 %v1999
        %2966 = vmatprep.subr.bf16.mxu0 0
        %2967 = vmatpush1.bf16.msra.mxu0 %v2000
        %2968 = vmatprep.subr.bf16.mxu0 0
        %2969 = vmatpush1.bf16.msra.mxu0 %v2001
        %2970 = vmatprep.subr.bf16.mxu0 0
        %2971 = vmatpush1.bf16.msra.mxu0 %v2002
        %2972 = vmatprep.subr.bf16.mxu0 0
        %2973 = vmatpush1.bf16.msra.mxu0 %v2003
        %2974 = vmatprep.subr.bf16.mxu0 0
        %2975 = vmatpush1.bf16.msra.mxu0 %v2004
        %2976 = vmatprep.subr.bf16.mxu0 0
        %2977 = vmatpush1.bf16.msra.mxu0 %v2005
        %2978 = vmatprep.subr.bf16.mxu0 0
        %2979 = vmatpush1.bf16.msra.mxu0 %v2006
        %2980 = vmatprep.subr.bf16.mxu0 0
        %2981 = vmatpush1.bf16.msra.mxu0 %v2007
        %2982 = vmatprep.subr.bf16.mxu0 0
        %2983 = vmatpush1.bf16.msra.mxu0 %v2008
        %2984 = vmatprep.subr.bf16.mxu0 0
        %2985 = vmatpush1.bf16.msra.mxu0 %v2009
        %2986 = vmatprep.subr.bf16.mxu0 0
        %2987 = vmatpush1.bf16.msra.mxu0 %v2010
        %2988 = vmatprep.subr.bf16.mxu0 0
        %2989 = vmatpush1.bf16.msra.mxu0 %v2011
        %2990 = vmatprep.subr.bf16.mxu0 0
        %2991 = vmatpush1.bf16.msra.mxu0 %v2012
        %2992 = vmatprep.mubr.bf16.mxu0 %v1257
        %2993 = vmatmul.mubr.bf16.gmra.mrb[0].mxu0 %v1154
        %v2994 = vpop.f32.mrb[0].mxu0
        %v2995 = vadd.f32 %v2706, %v2994
        %v2996 = vpop.f32.mrb[0].mxu0
        %v2997 = vpop.f32.mrb[0].mxu0
        %v2998 = vadd.f32 %v2709, %v2997
        %v2999 = vpop.f32.mrb[0].mxu0
        %3000 = vmatprep.mubr.bf16.mxu0 %v1261
        %3001 = vmatmul.mubr.bf16.gmra.mrb[0].mxu0 %v1156
        %v3002 = vpop.f32.mrb[0].mxu0
        %v3003 = vadd.f32 %v2714, %v3002
        %v3004 = vpop.f32.mrb[0].mxu0
        %v3005 = vpop.f32.mrb[0].mxu0
        %v3006 = vadd.f32 %v2717, %v3005
        %v3007 = vpop.f32.mrb[0].mxu0
        %3008 = vmatprep.mubr.bf16.mxu0 %v1265
        %3009 = vmatmul.mubr.bf16.gmra.mrb[0].mxu0 %v1158
        %v3010 = vpop.f32.mrb[0].mxu0
        %v3011 = vadd.f32 %v2722, %v3010
        %v3012 = vpop.f32.mrb[0].mxu0
        %v3013 = vpop.f32.mrb[0].mxu0
        %v3014 = vadd.f32 %v2725, %v3013
        %v3015 = vpop.f32.mrb[0].mxu0
        %3016 = vmatprep.mubr.bf16.mxu0 %v1269
        %3017 = vmatmul.mubr.bf16.gmra.mrb[0].mxu0 %v1160
        %v3018 = vpop.f32.mrb[0].mxu0
        %v3019 = vadd.f32 %v2730, %v3018
        %v3020 = vpop.f32.mrb[0].mxu0
        %v3021 = vpop.f32.mrb[0].mxu0
        %v3022 = vadd.f32 %v2733, %v3021
        %v3023 = vpop.f32.mrb[0].mxu0
        %3024 = vmatprep.mubr.bf16.mxu0 %v1273
        %3025 = vmatmul.mubr.bf16.gmra.mrb[0].mxu0 %v1162
        %v3026 = vpop.f32.mrb[0].mxu0
        %v3027 = vadd.f32 %v2738, %v3026
        %v3028 = vpop.f32.mrb[0].mxu0
        %v3029 = vpop.f32.mrb[0].mxu0
        %v3030 = vadd.f32 %v2741, %v3029
        %v3031 = vpop.f32.mrb[0].mxu0
        %3032 = vmatprep.mubr.bf16.mxu0 %v1277
        %3033 = vmatmul.mubr.bf16.gmra.mrb[0].mxu0 %v1164
        %v3034 = vpop.f32.mrb[0].mxu0
        %v3035 = vadd.f32 %v2746, %v3034
        %v3036 = vpop.f32.mrb[0].mxu0
        %v3037 = vpop.f32.mrb[0].mxu0
        %v3038 = vadd.f32 %v2749, %v3037
        %v3039 = vpop.f32.mrb[0].mxu0
        %3040 = vmatprep.mubr.bf16.mxu0 %v1281
        %3041 = vmatmul.mubr.bf16.gmra.mrb[0].mxu0 %v1166
        %v3042 = vpop.f32.mrb[0].mxu0
        %v3043 = vadd.f32 %v2754, %v3042
        %v3044 = vpop.f32.mrb[0].mxu0
        %v3045 = vpop.f32.mrb[0].mxu0
        %v3046 = vadd.f32 %v2757, %v3045
        %v3047 = vpop.f32.mrb[0].mxu0
        %3048 = vmatprep.mubr.bf16.mxu0 %v1285
        %3049 = vmatmul.mubr.bf16.gmra.mrb[0].mxu0 %v1168
        %v3050 = vpop.f32.mrb[0].mxu0
        %v3051 = vadd.f32 %v2762, %v3050
        %v3052 = vpop.f32.mrb[0].mxu0
        %v3053 = vpop.f32.mrb[0].mxu0
        %v3054 = vadd.f32 %v2765, %v3053
        %v3055 = vpop.f32.mrb[0].mxu0
        %3056 = vmatprep.mubr.bf16.mxu0 %v1289
        %3057 = vmatmul.mubr.bf16.gmra.mrb[0].mxu0 %v1170
        %v3058 = vpop.f32.mrb[0].mxu0
        %v3059 = vadd.f32 %v2770, %v3058
        %v3060 = vpop.f32.mrb[0].mxu0
        %v3061 = vpop.f32.mrb[0].mxu0
        %v3062 = vadd.f32 %v2773, %v3061
        %v3063 = vpop.f32.mrb[0].mxu0
        %3064 = vmatprep.mubr.bf16.mxu0 %v1293
        %3065 = vmatmul.mubr.bf16.gmra.mrb[0].mxu0 %v1172
        %v3066 = vpop.f32.mrb[0].mxu0
        %v3067 = vadd.f32 %v2778, %v3066
        %v3068 = vpop.f32.mrb[0].mxu0
        %v3069 = vpop.f32.mrb[0].mxu0
        %v3070 = vadd.f32 %v2781, %v3069
        %v3071 = vpop.f32.mrb[0].mxu0
        %3072 = vmatprep.mubr.bf16.mxu0 %v1297
        %3073 = vmatmul.mubr.bf16.gmra.mrb[0].mxu0 %v1174
        %v3074 = vpop.f32.mrb[0].mxu0
        %v3075 = vadd.f32 %v2786, %v3074
        %v3076 = vpop.f32.mrb[0].mxu0
        %v3077 = vpop.f32.mrb[0].mxu0
        %v3078 = vadd.f32 %v2789, %v3077
        %v3079 = vpop.f32.mrb[0].mxu0
        %3080 = vmatprep.mubr.bf16.mxu0 %v1301
        %3081 = vmatmul.mubr.bf16.gmra.mrb[0].mxu0 %v1176
        %v3082 = vpop.f32.mrb[0].mxu0
        %v3083 = vadd.f32 %v2794, %v3082
        %v3084 = vpop.f32.mrb[0].mxu0
        %v3085 = vpop.f32.mrb[0].mxu0
        %v3086 = vadd.f32 %v2797, %v3085
        %v3087 = vpop.f32.mrb[0].mxu0
        %3088 = vmatprep.mubr.bf16.mxu0 %v1305
        %3089 = vmatmul.mubr.bf16.gmra.mrb[0].mxu0 %v1178
        %v3090 = vpop.f32.mrb[0].mxu0
        %v3091 = vadd.f32 %v2802, %v3090
        %v3092 = vpop.f32.mrb[0].mxu0
        %v3093 = vpop.f32.mrb[0].mxu0
        %v3094 = vadd.f32 %v2805, %v3093
        %v3095 = vpop.f32.mrb[0].mxu0
        %3096 = vmatprep.mubr.bf16.mxu0 %v1309
        %3097 = vmatmul.mubr.bf16.gmra.mrb[0].mxu0 %v1180
        %v3098 = vpop.f32.mrb[0].mxu0
        %v3099 = vadd.f32 %v2810, %v3098
        %v3100 = vpop.f32.mrb[0].mxu0
        %v3101 = vpop.f32.mrb[0].mxu0
        %v3102 = vadd.f32 %v2813, %v3101
        %v3103 = vpop.f32.mrb[0].mxu0
        %3104 = vmatprep.mubr.bf16.mxu0 %v1313
        %3105 = vmatmul.mubr.bf16.gmra.mrb[0].mxu0 %v1182
        %v3106 = vpop.f32.mrb[0].mxu0
        %v3107 = vadd.f32 %v2818, %v3106
        %v3108 = vpop.f32.mrb[0].mxu0
        %v3109 = vpop.f32.mrb[0].mxu0
        %v3110 = vadd.f32 %v2821, %v3109
        %v3111 = vpop.f32.mrb[0].mxu0
        %3112 = vmatprep.mubr.bf16.mxu0 %v1317
        %3113 = vmatmul.mubr.bf16.gmra.mrb[0].mxu0 %v1184
        %v3114 = vpop.f32.mrb[0].mxu0
        %v3115 = vadd.f32 %v2826, %v3114
        %v3116 = vpop.f32.mrb[0].mxu0
        %v3117 = vpop.f32.mrb[0].mxu0
        %v3118 = vadd.f32 %v2829, %v3117
        %v3119 = vpop.f32.mrb[0].mxu0
        %3120 = vmatprep.mubr.bf16.mxu0 %v1321
        %3121 = vmatmul.mubr.bf16.gmra.mrb[0].mxu0 %v1186
        %v3122 = vpop.f32.mrb[0].mxu0
        %v3123 = vadd.f32 %v2834, %v3122
        %v3124 = vpop.f32.mrb[0].mxu0
        %v3125 = vpop.f32.mrb[0].mxu0
        %v3126 = vadd.f32 %v2837, %v3125
        %v3127 = vpop.f32.mrb[0].mxu0
        %3128 = vmatprep.mubr.bf16.mxu0 %v1325
        %3129 = vmatmul.mubr.bf16.gmra.mrb[0].mxu0 %v1188
        %v3130 = vpop.f32.mrb[0].mxu0
        %v3131 = vadd.f32 %v2842, %v3130
        %v3132 = vpop.f32.mrb[0].mxu0
        %v3133 = vpop.f32.mrb[0].mxu0
        %v3134 = vadd.f32 %v2845, %v3133
        %v3135 = vpop.f32.mrb[0].mxu0
        %3136 = vmatprep.mubr.bf16.mxu0 %v1329
        %3137 = vmatmul.mubr.bf16.gmra.mrb[0].mxu0 %v1190
        %v3138 = vpop.f32.mrb[0].mxu0
        %v3139 = vadd.f32 %v2850, %v3138
        %v3140 = vpop.f32.mrb[0].mxu0
        %v3141 = vpop.f32.mrb[0].mxu0
        %v3142 = vadd.f32 %v2853, %v3141
        %v3143 = vpop.f32.mrb[0].mxu0
        %3144 = vmatprep.mubr.bf16.mxu0 %v1333
        %3145 = vmatmul.mubr.bf16.gmra.mrb[0].mxu0 %v1192
        %v3146 = vpop.f32.mrb[0].mxu0
        %v3147 = vadd.f32 %v2858, %v3146
        %v3148 = vpop.f32.mrb[0].mxu0
        %v3149 = vpop.f32.mrb[0].mxu0
        %v3150 = vadd.f32 %v2861, %v3149
        %v3151 = vpop.f32.mrb[0].mxu0
        %3152 = vmatprep.mubr.bf16.mxu0 %v1337
        %3153 = vmatmul.mubr.bf16.gmra.mrb[0].mxu0 %v1194
        %v3154 = vpop.f32.mrb[0].mxu0
        %v3155 = vadd.f32 %v2866, %v3154
        %v3156 = vpop.f32.mrb[0].mxu0
        %v3157 = vpop.f32.mrb[0].mxu0
        %v3158 = vadd.f32 %v2869, %v3157
        %v3159 = vpop.f32.mrb[0].mxu0
        %3160 = vmatprep.mubr.bf16.mxu0 %v1341
        %3161 = vmatmul.mubr.bf16.gmra.mrb[0].mxu0 %v1196
        %v3162 = vpop.f32.mrb[0].mxu0
        %v3163 = vadd.f32 %v2874, %v3162
        %v3164 = vpop.f32.mrb[0].mxu0
        %v3165 = vpop.f32.mrb[0].mxu0
        %v3166 = vadd.f32 %v2877, %v3165
        %v3167 = vpop.f32.mrb[0].mxu0
        %3168 = vmatprep.mubr.bf16.mxu0 %v1345
        %3169 = vmatmul.mubr.bf16.gmra.mrb[0].mxu0 %v1198
        %v3170 = vpop.f32.mrb[0].mxu0
        %v3171 = vadd.f32 %v2882, %v3170
        %v3172 = vpop.f32.mrb[0].mxu0
        %v3173 = vpop.f32.mrb[0].mxu0
        %v3174 = vadd.f32 %v2885, %v3173
        %v3175 = vpop.f32.mrb[0].mxu0
        %3176 = vmatprep.mubr.bf16.mxu0 %v1349
        %3177 = vmatmul.mubr.bf16.gmra.mrb[0].mxu0 %v1200
        %v3178 = vpop.f32.mrb[0].mxu0
        %v3179 = vadd.f32 %v2890, %v3178
        %v3180 = vpop.f32.mrb[0].mxu0
        %v3181 = vpop.f32.mrb[0].mxu0
        %v3182 = vadd.f32 %v2893, %v3181
        %v3183 = vpop.f32.mrb[0].mxu0
        %3184 = vmatprep.mubr.bf16.mxu0 %v1353
        %3185 = vmatmul.mubr.bf16.gmra.mrb[0].mxu0 %v1202
        %v3186 = vpop.f32.mrb[0].mxu0
        %v3187 = vadd.f32 %v2898, %v3186
        %v3188 = vpop.f32.mrb[0].mxu0
        %v3189 = vpop.f32.mrb[0].mxu0
        %v3190 = vadd.f32 %v2901, %v3189
        %v3191 = vpop.f32.mrb[0].mxu0
        %3192 = vmatprep.mubr.bf16.mxu0 %v1357
        %3193 = vmatmul.mubr.bf16.gmra.mrb[0].mxu0 %v1204
        %v3194 = vpop.f32.mrb[0].mxu0
        %v3195 = vadd.f32 %v2906, %v3194
        %v3196 = vpop.f32.mrb[0].mxu0
        %v3197 = vpop.f32.mrb[0].mxu0
        %v3198 = vadd.f32 %v2909, %v3197
        %v3199 = vpop.f32.mrb[0].mxu0
        %3200 = vmatprep.mubr.bf16.mxu0 %v1361
        %3201 = vmatmul.mubr.bf16.gmra.mrb[0].mxu0 %v1206
        %v3202 = vpop.f32.mrb[0].mxu0
        %v3203 = vadd.f32 %v2914, %v3202
        %v3204 = vpop.f32.mrb[0].mxu0
        %v3205 = vpop.f32.mrb[0].mxu0
        %v3206 = vadd.f32 %v2917, %v3205
        %v3207 = vpop.f32.mrb[0].mxu0
        %3208 = vmatprep.mubr.bf16.mxu0 %v1365
        %3209 = vmatmul.mubr.bf16.gmra.mrb[0].mxu0 %v1208
        %v3210 = vpop.f32.mrb[0].mxu0
        %v3211 = vadd.f32 %v2922, %v3210
        %v3212 = vpop.f32.mrb[0].mxu0
        %v3213 = vpop.f32.mrb[0].mxu0
        %v3214 = vadd.f32 %v2925, %v3213
        %v3215 = vpop.f32.mrb[0].mxu0
        %3216 = vmatprep.mubr.bf16.mxu0 %v1369
        %3217 = vmatmul.mubr.bf16.gmra.mrb[0].mxu0 %v1210
        %v3218 = vpop.f32.mrb[0].mxu0
        %v3219 = vadd.f32 %v2930, %v3218
        %v3220 = vpop.f32.mrb[0].mxu0
        %v3221 = vpop.f32.mrb[0].mxu0
        %v3222 = vadd.f32 %v2933, %v3221
        %v3223 = vpop.f32.mrb[0].mxu0
        %3224 = vmatprep.mubr.bf16.mxu0 %v1373
        %3225 = vmatmul.mubr.bf16.gmra.mrb[0].mxu0 %v1212
        %v3226 = vpop.f32.mrb[0].mxu0
        %v3227 = vadd.f32 %v2938, %v3226
        %v3228 = vpop.f32.mrb[0].mxu0
        %v3229 = vpop.f32.mrb[0].mxu0
        %v3230 = vadd.f32 %v2941, %v3229
        %v3231 = vpop.f32.mrb[0].mxu0
        %3232 = vmatprep.mubr.bf16.mxu0 %v1377
        %3233 = vmatmul.mubr.bf16.gmra.mrb[0].mxu0 %v1214
        %v3234 = vpop.f32.mrb[0].mxu0
        %v3235 = vadd.f32 %v2946, %v3234
        %v3236 = vpop.f32.mrb[0].mxu0
        %v3237 = vpop.f32.mrb[0].mxu0
        %v3238 = vadd.f32 %v2949, %v3237
        %v3239 = vpop.f32.mrb[0].mxu0
        %3240 = vmatprep.mubr.bf16.mxu0 %v1386
        %3241 = vmatmul.mubr.bf16.gmra.mrb[0].mxu0 %v1248
        %v3242 = vpop.f32.mrb[0].mxu0
        %v3243 = vadd.f32 %v2954, %v3242
        %v3244 = vpop.f32.mrb[0].mxu0
        %v3245 = vpop.f32.mrb[0].mxu0
        %v3246 = vadd.f32 %v2957, %v3245
        %v3247 = vpop.f32.mrb[0].mxu0
        %3248 = vdwg.mxu0
        %3249 = vmatprep.subr.bf16.mxu0 0
        %3250 = vmatpush1.bf16.msra.mxu0 %v2013
        %3251 = vmatprep.subr.bf16.mxu0 0
        %3252 = vmatpush1.bf16.msra.mxu0 %v2014
        %3253 = vmatprep.subr.bf16.mxu0 0
        %3254 = vmatpush1.bf16.msra.mxu0 %v2015
        %3255 = vmatprep.subr.bf16.mxu0 0
        %3256 = vmatpush1.bf16.msra.mxu0 %v2016
        %3257 = vmatprep.subr.bf16.mxu0 0
        %3258 = vmatpush1.bf16.msra.mxu0 %v2017
        %3259 = vmatprep.subr.bf16.mxu0 0
        %3260 = vmatpush1.bf16.msra.mxu0 %v2018
        %3261 = vmatprep.subr.bf16.mxu0 0
        %3262 = vmatpush1.bf16.msra.mxu0 %v2019
        %3263 = vmatprep.subr.bf16.mxu0 0
        %3264 = vmatpush1.bf16.msra.mxu0 %v2020
        %3265 = vmatprep.subr.bf16.mxu0 0
        %3266 = vmatpush1.bf16.msra.mxu0 0
        %3267 = vmatprep.subr.bf16.mxu0 0
        %3268 = vmatpush1.bf16.msra.mxu0 0
        %3269 = vmatprep.subr.bf16.mxu0 0
        %3270 = vmatpush1.bf16.msra.mxu0 0
        %3271 = vmatprep.subr.bf16.mxu0 0
        %3272 = vmatpush1.bf16.msra.mxu0 0
        %3273 = vmatprep.subr.bf16.mxu0 0
        %3274 = vmatpush1.bf16.msra.mxu0 0
        %3275 = vmatprep.subr.bf16.mxu0 0
        %3276 = vmatpush1.bf16.msra.mxu0 0
        %3277 = vmatprep.subr.bf16.mxu0 0
        %3278 = vmatpush1.bf16.msra.mxu0 0
        %3279 = vmatprep.subr.bf16.mxu0 0
        %3280 = vmatpush1.bf16.msra.mxu0 0
        %3281 = vmatprep.mubr.bf16.mxu0 0
        %3282 = vmatmul.mubr.bf16.gmra.mrb[0].mxu0 %v1422
        %v3283 = vpop.f32.mrb[0].mxu0
        %v3284 = vadd.f32 %v2995, %v3283
        %v3285 = vpop.f32.mrb[0].mxu0
        %v3286 = vpop.f32.mrb[0].mxu0
        %v3287 = vadd.f32 %v2998, %v3286
        %v3288 = vpop.f32.mrb[0].mxu0
        %3289 = vmatprep.mubr.bf16.mxu0 0
        %3290 = vmatmul.mubr.bf16.gmra.mrb[0].mxu0 %v1424
        %v3291 = vpop.f32.mrb[0].mxu0
        %v3292 = vadd.f32 %v3003, %v3291
        %v3293 = vpop.f32.mrb[0].mxu0
        %v3294 = vpop.f32.mrb[0].mxu0
        %v3295 = vadd.f32 %v3006, %v3294
        %v3296 = vpop.f32.mrb[0].mxu0
        %3297 = vmatprep.mubr.bf16.mxu0 0
        %3298 = vmatmul.mubr.bf16.gmra.mrb[0].mxu0 %v1426
        %v3299 = vpop.f32.mrb[0].mxu0
        %v3300 = vadd.f32 %v3011, %v3299
        %v3301 = vpop.f32.mrb[0].mxu0
        %v3302 = vpop.f32.mrb[0].mxu0
        %v3303 = vadd.f32 %v3014, %v3302
        %v3304 = vpop.f32.mrb[0].mxu0
        %3305 = vmatprep.mubr.bf16.mxu0 0
        %3306 = vmatmul.mubr.bf16.gmra.mrb[0].mxu0 %v1428
        %v3307 = vpop.f32.mrb[0].mxu0
        %v3308 = vadd.f32 %v3019, %v3307
        %v3309 = vpop.f32.mrb[0].mxu0
        %v3310 = vpop.f32.mrb[0].mxu0
        %v3311 = vadd.f32 %v3022, %v3310
        %v3312 = vpop.f32.mrb[0].mxu0
        %3313 = vmatprep.mubr.bf16.mxu0 0
        %3314 = vmatmul.mubr.bf16.gmra.mrb[0].mxu0 %v1430
        %v3315 = vpop.f32.mrb[0].mxu0
        %v3316 = vadd.f32 %v3027, %v3315
        %v3317 = vpop.f32.mrb[0].mxu0
        %v3318 = vpop.f32.mrb[0].mxu0
        %v3319 = vadd.f32 %v3030, %v3318
        %v3320 = vpop.f32.mrb[0].mxu0
        %3321 = vmatprep.mubr.bf16.mxu0 0
        %3322 = vmatmul.mubr.bf16.gmra.mrb[0].mxu0 %v1432
        %v3323 = vpop.f32.mrb[0].mxu0
        %v3324 = vadd.f32 %v3035, %v3323
        %v3325 = vpop.f32.mrb[0].mxu0
        %v3326 = vpop.f32.mrb[0].mxu0
        %v3327 = vadd.f32 %v3038, %v3326
        %v3328 = vpop.f32.mrb[0].mxu0
        %3329 = vmatprep.mubr.bf16.mxu0 0
        %3330 = vmatmul.mubr.bf16.gmra.mrb[0].mxu0 %v1434
        %v3331 = vpop.f32.mrb[0].mxu0
        %v3332 = vadd.f32 %v3043, %v3331
        %v3333 = vpop.f32.mrb[0].mxu0
        %v3334 = vpop.f32.mrb[0].mxu0
        %v3335 = vadd.f32 %v3046, %v3334
        %v3336 = vpop.f32.mrb[0].mxu0
        %3337 = vmatprep.mubr.bf16.mxu0 0
        %3338 = vmatmul.mubr.bf16.gmra.mrb[0].mxu0 %v1436
        %v3339 = vpop.f32.mrb[0].mxu0
        %v3340 = vadd.f32 %v3051, %v3339
        %v3341 = vpop.f32.mrb[0].mxu0
        %v3342 = vpop.f32.mrb[0].mxu0
        %v3343 = vadd.f32 %v3054, %v3342
        %v3344 = vpop.f32.mrb[0].mxu0
        %3345 = vmatprep.mubr.bf16.mxu0 0
        %3346 = vmatmul.mubr.bf16.gmra.mrb[0].mxu0 %v1438
        %v3347 = vpop.f32.mrb[0].mxu0
        %v3348 = vadd.f32 %v3059, %v3347
        %v3349 = vpop.f32.mrb[0].mxu0
        %v3350 = vpop.f32.mrb[0].mxu0
        %v3351 = vadd.f32 %v3062, %v3350
        %v3352 = vpop.f32.mrb[0].mxu0
        %3353 = vmatprep.mubr.bf16.mxu0 0
        %3354 = vmatmul.mubr.bf16.gmra.mrb[0].mxu0 %v1440
        %v3355 = vpop.f32.mrb[0].mxu0
        %v3356 = vadd.f32 %v3067, %v3355
        %v3357 = vpop.f32.mrb[0].mxu0
        %v3358 = vpop.f32.mrb[0].mxu0
        %v3359 = vadd.f32 %v3070, %v3358
        %v3360 = vpop.f32.mrb[0].mxu0
        %3361 = vmatprep.mubr.bf16.mxu0 0
        %3362 = vmatmul.mubr.bf16.gmra.mrb[0].mxu0 %v1442
        %v3363 = vpop.f32.mrb[0].mxu0
        %v3364 = vadd.f32 %v3075, %v3363
        %v3365 = vpop.f32.mrb[0].mxu0
        %v3366 = vpop.f32.mrb[0].mxu0
        %v3367 = vadd.f32 %v3078, %v3366
        %v3368 = vpop.f32.mrb[0].mxu0
        %3369 = vmatprep.mubr.bf16.mxu0 0
        %3370 = vmatmul.mubr.bf16.gmra.mrb[0].mxu0 %v1444
        %v3371 = vpop.f32.mrb[0].mxu0
        %v3372 = vadd.f32 %v3083, %v3371
        %v3373 = vpop.f32.mrb[0].mxu0
        %v3374 = vpop.f32.mrb[0].mxu0
        %v3375 = vadd.f32 %v3086, %v3374
        %v3376 = vpop.f32.mrb[0].mxu0
        %3377 = vmatprep.mubr.bf16.mxu0 0
        %3378 = vmatmul.mubr.bf16.gmra.mrb[0].mxu0 %v1446
        %v3379 = vpop.f32.mrb[0].mxu0
        %v3380 = vadd.f32 %v3091, %v3379
        %v3381 = vpop.f32.mrb[0].mxu0
        %v3382 = vpop.f32.mrb[0].mxu0
        %v3383 = vadd.f32 %v3094, %v3382
        %v3384 = vpop.f32.mrb[0].mxu0
        %3385 = vmatprep.mubr.bf16.mxu0 0
        %3386 = vmatmul.mubr.bf16.gmra.mrb[0].mxu0 %v1448
        %v3387 = vpop.f32.mrb[0].mxu0
        %v3388 = vadd.f32 %v3099, %v3387
        %v3389 = vpop.f32.mrb[0].mxu0
        %v3390 = vpop.f32.mrb[0].mxu0
        %v3391 = vadd.f32 %v3102, %v3390
        %v3392 = vpop.f32.mrb[0].mxu0
        %3393 = vmatprep.mubr.bf16.mxu0 0
        %3394 = vmatmul.mubr.bf16.gmra.mrb[0].mxu0 %v1450
        %v3395 = vpop.f32.mrb[0].mxu0
        %v3396 = vadd.f32 %v3107, %v3395
        %v3397 = vpop.f32.mrb[0].mxu0
        %v3398 = vpop.f32.mrb[0].mxu0
        %v3399 = vadd.f32 %v3110, %v3398
        %v3400 = vpop.f32.mrb[0].mxu0
        %3401 = vmatprep.mubr.bf16.mxu0 0
        %3402 = vmatmul.mubr.bf16.gmra.mrb[0].mxu0 %v1452
        %v3403 = vpop.f32.mrb[0].mxu0
        %v3404 = vadd.f32 %v3115, %v3403
        %v3405 = vpop.f32.mrb[0].mxu0
        %v3406 = vpop.f32.mrb[0].mxu0
        %v3407 = vadd.f32 %v3118, %v3406
        %v3408 = vpop.f32.mrb[0].mxu0
        %3409 = vmatprep.mubr.bf16.mxu0 0
        %3410 = vmatmul.mubr.bf16.gmra.mrb[0].mxu0 %v1454
        %v3411 = vpop.f32.mrb[0].mxu0
        %v3412 = vadd.f32 %v3123, %v3411
        %v3413 = vpop.f32.mrb[0].mxu0
        %v3414 = vpop.f32.mrb[0].mxu0
        %v3415 = vadd.f32 %v3126, %v3414
        %v3416 = vpop.f32.mrb[0].mxu0
        %3417 = vmatprep.mubr.bf16.mxu0 0
        %3418 = vmatmul.mubr.bf16.gmra.mrb[0].mxu0 %v1456
        %v3419 = vpop.f32.mrb[0].mxu0
        %v3420 = vadd.f32 %v3131, %v3419
        %v3421 = vpop.f32.mrb[0].mxu0
        %v3422 = vpop.f32.mrb[0].mxu0
        %v3423 = vadd.f32 %v3134, %v3422
        %v3424 = vpop.f32.mrb[0].mxu0
        %3425 = vmatprep.mubr.bf16.mxu0 0
        %3426 = vmatmul.mubr.bf16.gmra.mrb[0].mxu0 %v1458
        %v3427 = vpop.f32.mrb[0].mxu0
        %v3428 = vadd.f32 %v3139, %v3427
        %v3429 = vpop.f32.mrb[0].mxu0
        %v3430 = vpop.f32.mrb[0].mxu0
        %v3431 = vadd.f32 %v3142, %v3430
        %v3432 = vpop.f32.mrb[0].mxu0
        %3433 = vmatprep.mubr.bf16.mxu0 0
        %3434 = vmatmul.mubr.bf16.gmra.mrb[0].mxu0 %v1460
        %v3435 = vpop.f32.mrb[0].mxu0
        %v3436 = vadd.f32 %v3147, %v3435
        %v3437 = vpop.f32.mrb[0].mxu0
        %v3438 = vpop.f32.mrb[0].mxu0
        %v3439 = vadd.f32 %v3150, %v3438
        %v3440 = vpop.f32.mrb[0].mxu0
        %3441 = vmatprep.mubr.bf16.mxu0 0
        %3442 = vmatmul.mubr.bf16.gmra.mrb[0].mxu0 %v1462
        %v3443 = vpop.f32.mrb[0].mxu0
        %v3444 = vadd.f32 %v3155, %v3443
        %v3445 = vpop.f32.mrb[0].mxu0
        %v3446 = vpop.f32.mrb[0].mxu0
        %v3447 = vadd.f32 %v3158, %v3446
        %v3448 = vpop.f32.mrb[0].mxu0
        %3449 = vmatprep.mubr.bf16.mxu0 0
        %3450 = vmatmul.mubr.bf16.gmra.mrb[0].mxu0 %v1464
        %v3451 = vpop.f32.mrb[0].mxu0
        %v3452 = vadd.f32 %v3163, %v3451
        %v3453 = vpop.f32.mrb[0].mxu0
        %v3454 = vpop.f32.mrb[0].mxu0
        %v3455 = vadd.f32 %v3166, %v3454
        %v3456 = vpop.f32.mrb[0].mxu0
        %3457 = vmatprep.mubr.bf16.mxu0 0
        %3458 = vmatmul.mubr.bf16.gmra.mrb[0].mxu0 %v1466
        %v3459 = vpop.f32.mrb[0].mxu0
        %v3460 = vadd.f32 %v3171, %v3459
        %v3461 = vpop.f32.mrb[0].mxu0
        %v3462 = vpop.f32.mrb[0].mxu0
        %v3463 = vadd.f32 %v3174, %v3462
        %v3464 = vpop.f32.mrb[0].mxu0
        %3465 = vmatprep.mubr.bf16.mxu0 0
        %3466 = vmatmul.mubr.bf16.gmra.mrb[0].mxu0 %v1468
        %v3467 = vpop.f32.mrb[0].mxu0
        %v3468 = vadd.f32 %v3179, %v3467
        %v3469 = vpop.f32.mrb[0].mxu0
        %v3470 = vpop.f32.mrb[0].mxu0
        %v3471 = vadd.f32 %v3182, %v3470
        %v3472 = vpop.f32.mrb[0].mxu0
        %3473 = vmatprep.mubr.bf16.mxu0 0
        %3474 = vmatmul.mubr.bf16.gmra.mrb[0].mxu0 %v1470
        %v3475 = vpop.f32.mrb[0].mxu0
        %v3476 = vadd.f32 %v3187, %v3475
        %v3477 = vpop.f32.mrb[0].mxu0
        %v3478 = vpop.f32.mrb[0].mxu0
        %v3479 = vadd.f32 %v3190, %v3478
        %v3480 = vpop.f32.mrb[0].mxu0
        %3481 = vmatprep.mubr.bf16.mxu0 0
        %3482 = vmatmul.mubr.bf16.gmra.mrb[0].mxu0 %v1472
        %v3483 = vpop.f32.mrb[0].mxu0
        %v3484 = vadd.f32 %v3195, %v3483
        %v3485 = vpop.f32.mrb[0].mxu0
        %v3486 = vpop.f32.mrb[0].mxu0
        %v3487 = vadd.f32 %v3198, %v3486
        %v3488 = vpop.f32.mrb[0].mxu0
        %3489 = vmatprep.mubr.bf16.mxu0 0
        %3490 = vmatmul.mubr.bf16.gmra.mrb[0].mxu0 %v1474
        %v3491 = vpop.f32.mrb[0].mxu0
        %v3492 = vadd.f32 %v3203, %v3491
        %v3493 = vpop.f32.mrb[0].mxu0
        %v3494 = vpop.f32.mrb[0].mxu0
        %v3495 = vadd.f32 %v3206, %v3494
        %v3496 = vpop.f32.mrb[0].mxu0
        %3497 = vmatprep.mubr.bf16.mxu0 0
        %3498 = vmatmul.mubr.bf16.gmra.mrb[0].mxu0 %v1476
        %v3499 = vpop.f32.mrb[0].mxu0
        %v3500 = vadd.f32 %v3211, %v3499
        %v3501 = vpop.f32.mrb[0].mxu0
        %v3502 = vpop.f32.mrb[0].mxu0
        %v3503 = vadd.f32 %v3214, %v3502
        %v3504 = vpop.f32.mrb[0].mxu0
        %3505 = vmatprep.mubr.bf16.mxu0 0
        %3506 = vmatmul.mubr.bf16.gmra.mrb[0].mxu0 %v1478
        %v3507 = vpop.f32.mrb[0].mxu0
        %v3508 = vadd.f32 %v3219, %v3507
        %v3509 = vpop.f32.mrb[0].mxu0
        %v3510 = vpop.f32.mrb[0].mxu0
        %v3511 = vadd.f32 %v3222, %v3510
        %v3512 = vpop.f32.mrb[0].mxu0
        %3513 = vmatprep.mubr.bf16.mxu0 0
        %3514 = vmatmul.mubr.bf16.gmra.mrb[0].mxu0 %v1480
        %v3515 = vpop.f32.mrb[0].mxu0
        %v3516 = vadd.f32 %v3227, %v3515
        %v3517 = vpop.f32.mrb[0].mxu0
        %v3518 = vpop.f32.mrb[0].mxu0
        %v3519 = vadd.f32 %v3230, %v3518
        %v3520 = vpop.f32.mrb[0].mxu0
        %3521 = vmatprep.mubr.bf16.mxu0 0
        %3522 = vmatmul.mubr.bf16.gmra.mrb[0].mxu0 %v1482
        %v3523 = vpop.f32.mrb[0].mxu0
        %v3524 = vadd.f32 %v3235, %v3523
        %v3525 = vpop.f32.mrb[0].mxu0
        %v3526 = vpop.f32.mrb[0].mxu0
        %v3527 = vadd.f32 %v3238, %v3526
        %v3528 = vpop.f32.mrb[0].mxu0
        %3529 = vmatprep.mubr.bf16.mxu0 0
        %3530 = vmatmul.mubr.bf16.gmra.mrb[0].mxu0 %v1484
        %v3531 = vpop.f32.mrb[0].mxu0
        %v3532 = vadd.f32 %v3243, %v3531
        %v3533 = vpop.f32.mrb[0].mxu0
        %v3534 = vpop.f32.mrb[0].mxu0
        %v3535 = vadd.f32 %v3246, %v3534
        %v3536 = vpop.f32.mrb[0].mxu0
        %3537 = vdwg.mxu0
        %v3538 = vlaneseq
        %v3539 = vshrl.u32 %v3538, 7
        %v3540 = vsub.s32 0, %v3539
        %v3541 = vrot.slane %v305, %v3540
        %v3542 = vmul.f32 %v3284, %v3541
        %v3543 = vmul.f32 %v3287, %v3541
        %v3544 = vmul.f32 %v3292, %v3541
        %v3545 = vmul.f32 %v3295, %v3541
        %v3546 = vmul.f32 %v3300, %v3541
        %v3547 = vmul.f32 %v3303, %v3541
        %v3548 = vmul.f32 %v3308, %v3541
        %v3549 = vmul.f32 %v3311, %v3541
        %v3550 = vmul.f32 %v3316, %v3541
        %v3551 = vmul.f32 %v3319, %v3541
        %v3552 = vmul.f32 %v3324, %v3541
        %v3553 = vmul.f32 %v3327, %v3541
        %v3554 = vmul.f32 %v3332, %v3541
        %v3555 = vmul.f32 %v3335, %v3541
        %v3556 = vmul.f32 %v3340, %v3541
        %v3557 = vmul.f32 %v3343, %v3541
        %v3558 = vmul.f32 %v3348, %v3541
        %v3559 = vmul.f32 %v3351, %v3541
        %v3560 = vmul.f32 %v3356, %v3541
        %v3561 = vmul.f32 %v3359, %v3541
        %v3562 = vmul.f32 %v3364, %v3541
        %v3563 = vmul.f32 %v3367, %v3541
        %v3564 = vmul.f32 %v3372, %v3541
        %v3565 = vmul.f32 %v3375, %v3541
        %v3566 = vmul.f32 %v3380, %v3541
        %v3567 = vmul.f32 %v3383, %v3541
        %v3568 = vmul.f32 %v3388, %v3541
        %v3569 = vmul.f32 %v3391, %v3541
        %v3570 = vmul.f32 %v3396, %v3541
        %v3571 = vmul.f32 %v3399, %v3541
        %v3572 = vmul.f32 %v3404, %v3541
        %v3573 = vmul.f32 %v3407, %v3541
        %v3574 = vmul.f32 %v3412, %v3541
        %v3575 = vmul.f32 %v3415, %v3541
        %v3576 = vmul.f32 %v3420, %v3541
        %v3577 = vmul.f32 %v3423, %v3541
        %v3578 = vmul.f32 %v3428, %v3541
        %v3579 = vmul.f32 %v3431, %v3541
        %v3580 = vmul.f32 %v3436, %v3541
        %v3581 = vmul.f32 %v3439, %v3541
        %v3582 = vmul.f32 %v3444, %v3541
        %v3583 = vmul.f32 %v3447, %v3541
        %v3584 = vmul.f32 %v3452, %v3541
        %v3585 = vmul.f32 %v3455, %v3541
        %v3586 = vmul.f32 %v3460, %v3541
        %v3587 = vmul.f32 %v3463, %v3541
        %v3588 = vmul.f32 %v3468, %v3541
        %v3589 = vmul.f32 %v3471, %v3541
        %v3590 = vmul.f32 %v3476, %v3541
        %v3591 = vmul.f32 %v3479, %v3541
        %v3592 = vmul.f32 %v3484, %v3541
        %v3593 = vmul.f32 %v3487, %v3541
        %v3594 = vmul.f32 %v3492, %v3541
        %v3595 = vmul.f32 %v3495, %v3541
        %v3596 = vmul.f32 %v3500, %v3541
        %v3597 = vmul.f32 %v3503, %v3541
        %v3598 = vmul.f32 %v3508, %v3541
        %v3599 = vmul.f32 %v3511, %v3541
        %v3600 = vmul.f32 %v3516, %v3541
        %v3601 = vmul.f32 %v3519, %v3541
        %v3602 = vmul.f32 %v3524, %v3541
        %v3603 = vmul.f32 %v3527, %v3541
        %v3604 = vmul.f32 %v3532, %v3541
        %v3605 = vmul.f32 %v3535, %v3541
        %v3606 = vlaneseq
        %v3607 = vshrl.u32 %v3606, 7
        %v3608 = vsub.s32 0, %v3607
        %v3609 = vrot.slane %v306, %v3608
        %v3610 = vadd.f32 %v3542, %v3609
        %v3611 = vadd.f32 %v3543, %v3609
        %v3612 = vadd.f32 %v3544, %v3609
        %v3613 = vadd.f32 %v3545, %v3609
        %v3614 = vadd.f32 %v3546, %v3609
        %v3615 = vadd.f32 %v3547, %v3609
        %v3616 = vadd.f32 %v3548, %v3609
        %v3617 = vadd.f32 %v3549, %v3609
        %v3618 = vadd.f32 %v3550, %v3609
        %v3619 = vadd.f32 %v3551, %v3609
        %v3620 = vadd.f32 %v3552, %v3609
        %v3621 = vadd.f32 %v3553, %v3609
        %v3622 = vadd.f32 %v3554, %v3609
        %v3623 = vadd.f32 %v3555, %v3609
        %v3624 = vadd.f32 %v3556, %v3609
        %v3625 = vadd.f32 %v3557, %v3609
        %v3626 = vadd.f32 %v3558, %v3609
        %v3627 = vadd.f32 %v3559, %v3609
        %v3628 = vadd.f32 %v3560, %v3609
        %v3629 = vadd.f32 %v3561, %v3609
        %v3630 = vadd.f32 %v3562, %v3609
        %v3631 = vadd.f32 %v3563, %v3609
        %v3632 = vadd.f32 %v3564, %v3609
        %v3633 = vadd.f32 %v3565, %v3609
        %v3634 = vadd.f32 %v3566, %v3609
        %v3635 = vadd.f32 %v3567, %v3609
        %v3636 = vadd.f32 %v3568, %v3609
        %v3637 = vadd.f32 %v3569, %v3609
        %v3638 = vadd.f32 %v3570, %v3609
        %v3639 = vadd.f32 %v3571, %v3609
        %v3640 = vadd.f32 %v3572, %v3609
        %v3641 = vadd.f32 %v3573, %v3609
        %v3642 = vadd.f32 %v3574, %v3609
        %v3643 = vadd.f32 %v3575, %v3609
        %v3644 = vadd.f32 %v3576, %v3609
        %v3645 = vadd.f32 %v3577, %v3609
        %v3646 = vadd.f32 %v3578, %v3609
        %v3647 = vadd.f32 %v3579, %v3609
        %v3648 = vadd.f32 %v3580, %v3609
        %v3649 = vadd.f32 %v3581, %v3609
        %v3650 = vadd.f32 %v3582, %v3609
        %v3651 = vadd.f32 %v3583, %v3609
        %v3652 = vadd.f32 %v3584, %v3609
        %v3653 = vadd.f32 %v3585, %v3609
        %v3654 = vadd.f32 %v3586, %v3609
        %v3655 = vadd.f32 %v3587, %v3609
        %v3656 = vadd.f32 %v3588, %v3609
        %v3657 = vadd.f32 %v3589, %v3609
        %v3658 = vadd.f32 %v3590, %v3609
        %v3659 = vadd.f32 %v3591, %v3609
        %v3660 = vadd.f32 %v3592, %v3609
        %v3661 = vadd.f32 %v3593, %v3609
        %v3662 = vadd.f32 %v3594, %v3609
        %v3663 = vadd.f32 %v3595, %v3609
        %v3664 = vadd.f32 %v3596, %v3609
        %v3665 = vadd.f32 %v3597, %v3609
        %v3666 = vadd.f32 %v3598, %v3609
        %v3667 = vadd.f32 %v3599, %v3609
        %v3668 = vadd.f32 %v3600, %v3609
        %v3669 = vadd.f32 %v3601, %v3609
        %v3670 = vadd.f32 %v3602, %v3609
        %v3671 = vadd.f32 %v3603, %v3609
        %v3672 = vadd.f32 %v3604, %v3609
        %v3673 = vadd.f32 %v3605, %v3609
        %v3674 = vmax.f32 %v3610, 0.0
        %v3675 = vmax.f32 %v3611, 0.0
        %v3676 = vmax.f32 %v3612, 0.0
        %v3677 = vmax.f32 %v3613, 0.0
        %v3678 = vmax.f32 %v3614, 0.0
        %v3679 = vmax.f32 %v3615, 0.0
        %v3680 = vmax.f32 %v3616, 0.0
        %v3681 = vmax.f32 %v3617, 0.0
        %v3682 = vmax.f32 %v3618, 0.0
        %v3683 = vmax.f32 %v3619, 0.0
        %v3684 = vmax.f32 %v3620, 0.0
        %v3685 = vmax.f32 %v3621, 0.0
        %v3686 = vmax.f32 %v3622, 0.0
        %v3687 = vmax.f32 %v3623, 0.0
        %v3688 = vmax.f32 %v3624, 0.0
        %v3689 = vmax.f32 %v3625, 0.0
        %v3690 = vmax.f32 %v3626, 0.0
        %v3691 = vmax.f32 %v3627, 0.0
        %v3692 = vmax.f32 %v3628, 0.0
        %v3693 = vmax.f32 %v3629, 0.0
        %v3694 = vmax.f32 %v3630, 0.0
        %v3695 = vmax.f32 %v3631, 0.0
        %v3696 = vmax.f32 %v3632, 0.0
        %v3697 = vmax.f32 %v3633, 0.0
        %v3698 = vmax.f32 %v3634, 0.0
        %v3699 = vmax.f32 %v3635, 0.0
        %v3700 = vmax.f32 %v3636, 0.0
        %v3701 = vmax.f32 %v3637, 0.0
        %v3702 = vmax.f32 %v3638, 0.0
        %v3703 = vmax.f32 %v3639, 0.0
        %v3704 = vmax.f32 %v3640, 0.0
        %v3705 = vmax.f32 %v3641, 0.0
        %v3706 = vmax.f32 %v3642, 0.0
        %v3707 = vmax.f32 %v3643, 0.0
        %v3708 = vmax.f32 %v3644, 0.0
        %v3709 = vmax.f32 %v3645, 0.0
        %v3710 = vmax.f32 %v3646, 0.0
        %v3711 = vmax.f32 %v3647, 0.0
        %v3712 = vmax.f32 %v3648, 0.0
        %v3713 = vmax.f32 %v3649, 0.0
        %v3714 = vmax.f32 %v3650, 0.0
        %v3715 = vmax.f32 %v3651, 0.0
        %v3716 = vmax.f32 %v3652, 0.0
        %v3717 = vmax.f32 %v3653, 0.0
        %v3718 = vmax.f32 %v3654, 0.0
        %v3719 = vmax.f32 %v3655, 0.0
        %v3720 = vmax.f32 %v3656, 0.0
        %v3721 = vmax.f32 %v3657, 0.0
        %v3722 = vmax.f32 %v3658, 0.0
        %v3723 = vmax.f32 %v3659, 0.0
        %v3724 = vmax.f32 %v3660, 0.0
        %v3725 = vmax.f32 %v3661, 0.0
        %v3726 = vmax.f32 %v3662, 0.0
        %v3727 = vmax.f32 %v3663, 0.0
        %v3728 = vmax.f32 %v3664, 0.0
        %v3729 = vmax.f32 %v3665, 0.0
        %v3730 = vmax.f32 %v3666, 0.0
        %v3731 = vmax.f32 %v3667, 0.0
        %v3732 = vmax.f32 %v3668, 0.0
        %v3733 = vmax.f32 %v3669, 0.0
        %v3734 = vmax.f32 %v3670, 0.0
        %v3735 = vmax.f32 %v3671, 0.0
        %v3736 = vmax.f32 %v3672, 0.0
        %v3737 = vmax.f32 %v3673, 0.0
        %v3738 = vpack.c.bf16 %v3675, %v3674
        %v3739 = vpack.c.bf16 %v3677, %v3676
        %v3740 = vpack.c.bf16 %v3679, %v3678
        %v3741 = vpack.c.bf16 %v3681, %v3680
        %v3742 = vpack.c.bf16 %v3683, %v3682
        %v3743 = vpack.c.bf16 %v3685, %v3684
        %v3744 = vpack.c.bf16 %v3687, %v3686
        %v3745 = vpack.c.bf16 %v3689, %v3688
        %v3746 = vpack.c.bf16 %v3691, %v3690
        %v3747 = vpack.c.bf16 %v3693, %v3692
        %v3748 = vpack.c.bf16 %v3695, %v3694
        %v3749 = vpack.c.bf16 %v3697, %v3696
        %v3750 = vpack.c.bf16 %v3699, %v3698
        %v3751 = vpack.c.bf16 %v3701, %v3700
        %v3752 = vpack.c.bf16 %v3703, %v3702
        %v3753 = vpack.c.bf16 %v3705, %v3704
        %v3754 = vpack.c.bf16 %v3707, %v3706
        %v3755 = vpack.c.bf16 %v3709, %v3708
        %v3756 = vpack.c.bf16 %v3711, %v3710
        %v3757 = vpack.c.bf16 %v3713, %v3712
        %v3758 = vpack.c.bf16 %v3715, %v3714
        %v3759 = vpack.c.bf16 %v3717, %v3716
        %v3760 = vpack.c.bf16 %v3719, %v3718
        %v3761 = vpack.c.bf16 %v3721, %v3720
        %v3762 = vpack.c.bf16 %v3723, %v3722
        %v3763 = vpack.c.bf16 %v3725, %v3724
        %v3764 = vpack.c.bf16 %v3727, %v3726
        %v3765 = vpack.c.bf16 %v3729, %v3728
        %v3766 = vpack.c.bf16 %v3731, %v3730
        %v3767 = vpack.c.bf16 %v3733, %v3732
        %v3768 = vpack.c.bf16 %v3735, %v3734
        %v3769 = vpack.c.bf16 %v3737, %v3736
        %v3802 = vunpack.c.l.b16 %v3738
        %v3803 = vunpack.c.h.b16 %v3738
        %v3804 = vunpack.c.l.b16 %v3739
        %v3805 = vunpack.c.h.b16 %v3739
        %v3806 = vunpack.c.l.b16 %v3740
        %v3807 = vunpack.c.h.b16 %v3740
        %v3808 = vunpack.c.l.b16 %v3741
        %v3809 = vunpack.c.h.b16 %v3741
        %v3810 = vunpack.c.l.b16 %v3742
        %v3811 = vunpack.c.h.b16 %v3742
        %v3812 = vunpack.c.l.b16 %v3743
        %v3813 = vunpack.c.h.b16 %v3743
        %v3814 = vunpack.c.l.b16 %v3744
        %v3815 = vunpack.c.h.b16 %v3744
        %v3816 = vunpack.c.l.b16 %v3745
        %v3817 = vunpack.c.h.b16 %v3745
        %v3818 = vunpack.c.l.b16 %v3746
        %v3819 = vunpack.c.h.b16 %v3746
        %v3820 = vunpack.c.l.b16 %v3747
        %v3821 = vunpack.c.h.b16 %v3747
        %v3822 = vunpack.c.l.b16 %v3748
        %v3823 = vunpack.c.h.b16 %v3748
        %v3824 = vunpack.c.l.b16 %v3749
        %v3825 = vunpack.c.h.b16 %v3749
        %v3826 = vunpack.c.l.b16 %v3750
        %v3827 = vunpack.c.h.b16 %v3750
        %v3828 = vunpack.c.l.b16 %v3751
        %v3829 = vunpack.c.h.b16 %v3751
        %v3830 = vunpack.c.l.b16 %v3752
        %v3831 = vunpack.c.h.b16 %v3752
        %v3832 = vunpack.c.l.b16 %v3753
        %v3833 = vunpack.c.h.b16 %v3753
        %v3834 = vunpack.c.l.b16 %v3754
        %v3835 = vunpack.c.h.b16 %v3754
        %v3836 = vunpack.c.l.b16 %v3755
        %v3837 = vunpack.c.h.b16 %v3755
        %v3838 = vunpack.c.l.b16 %v3756
        %v3839 = vunpack.c.h.b16 %v3756
        %v3840 = vunpack.c.l.b16 %v3757
        %v3841 = vunpack.c.h.b16 %v3757
        %v3842 = vunpack.c.l.b16 %v3758
        %v3843 = vunpack.c.h.b16 %v3758
        %v3844 = vunpack.c.l.b16 %v3759
        %v3845 = vunpack.c.h.b16 %v3759
        %v3846 = vunpack.c.l.b16 %v3760
        %v3847 = vunpack.c.h.b16 %v3760
        %v3848 = vunpack.c.l.b16 %v3761
        %v3849 = vunpack.c.h.b16 %v3761
        %v3850 = vunpack.c.l.b16 %v3762
        %v3851 = vunpack.c.h.b16 %v3762
        %v3852 = vunpack.c.l.b16 %v3763
        %v3853 = vunpack.c.h.b16 %v3763
        %v3854 = vunpack.c.l.b16 %v3764
        %v3855 = vunpack.c.h.b16 %v3764
        %v3856 = vunpack.c.l.b16 %v3765
        %v3857 = vunpack.c.h.b16 %v3765
        %v3858 = vunpack.c.l.b16 %v3766
        %v3859 = vunpack.c.h.b16 %v3766
        %v3860 = vunpack.c.l.b16 %v3767
        %v3861 = vunpack.c.h.b16 %v3767
        %v3862 = vunpack.c.l.b16 %v3768
        %v3863 = vunpack.c.h.b16 %v3768
        %v3864 = vunpack.c.l.b16 %v3769
        %v3865 = vunpack.c.h.b16 %v3769
        %v3866 = vpack.c.b16 %v3802, %v3802
        %v3867 = vpack.c.b16 %v3803, %v3803
        %v3868 = vpack.c.b16 %v3804, %v3804
        %v3869 = vpack.c.b16 %v3805, %v3805
        %v3870 = vpack.c.b16 %v3806, %v3806
        %v3871 = vpack.c.b16 %v3807, %v3807
        %v3872 = vpack.c.b16 %v3808, %v3808
        %v3873 = vpack.c.b16 %v3809, %v3809
        %v3874 = vpack.c.b16 %v3810, %v3810
        %v3875 = vpack.c.b16 %v3811, %v3811
        %v3876 = vpack.c.b16 %v3812, %v3812
        %v3877 = vpack.c.b16 %v3813, %v3813
        %v3878 = vpack.c.b16 %v3814, %v3814
        %v3879 = vpack.c.b16 %v3815, %v3815
        %v3880 = vpack.c.b16 %v3816, %v3816
        %v3881 = vpack.c.b16 %v3817, %v3817
        %v3882 = vpack.c.b16 %v3818, %v3818
        %v3883 = vpack.c.b16 %v3819, %v3819
        %v3884 = vpack.c.b16 %v3820, %v3820
        %v3885 = vpack.c.b16 %v3821, %v3821
        %v3886 = vpack.c.b16 %v3822, %v3822
        %v3887 = vpack.c.b16 %v3823, %v3823
        %v3888 = vpack.c.b16 %v3824, %v3824
        %v3889 = vpack.c.b16 %v3825, %v3825
        %v3890 = vpack.c.b16 %v3826, %v3826
        %v3891 = vpack.c.b16 %v3827, %v3827
        %v3892 = vpack.c.b16 %v3828, %v3828
        %v3893 = vpack.c.b16 %v3829, %v3829
        %v3894 = vpack.c.b16 %v3830, %v3830
        %v3895 = vpack.c.b16 %v3831, %v3831
        %v3896 = vpack.c.b16 %v3832, %v3832
        %v3897 = vpack.c.b16 %v3833, %v3833
        %v3898 = vpack.c.b16 %v3834, %v3834
        %v3899 = vpack.c.b16 %v3835, %v3835
        %v3900 = vpack.c.b16 %v3836, %v3836
        %v3901 = vpack.c.b16 %v3837, %v3837
        %v3902 = vpack.c.b16 %v3838, %v3838
        %v3903 = vpack.c.b16 %v3839, %v3839
        %v3904 = vpack.c.b16 %v3840, %v3840
        %v3905 = vpack.c.b16 %v3841, %v3841
        %v3906 = vpack.c.b16 %v3842, %v3842
        %v3907 = vpack.c.b16 %v3843, %v3843
        %v3908 = vpack.c.b16 %v3844, %v3844
        %v3909 = vpack.c.b16 %v3845, %v3845
        %v3910 = vpack.c.b16 %v3846, %v3846
        %v3911 = vpack.c.b16 %v3847, %v3847
        %v3912 = vpack.c.b16 %v3848, %v3848
        %v3913 = vpack.c.b16 %v3849, %v3849
        %v3914 = vpack.c.b16 %v3850, %v3850
        %v3915 = vpack.c.b16 %v3851, %v3851
        %v3916 = vpack.c.b16 %v3852, %v3852
        %v3917 = vpack.c.b16 %v3853, %v3853
        %v3918 = vpack.c.b16 %v3854, %v3854
        %v3919 = vpack.c.b16 %v3855, %v3855
        %v3920 = vpack.c.b16 %v3856, %v3856
        %v3921 = vpack.c.b16 %v3857, %v3857
        %v3922 = vpack.c.b16 %v3858, %v3858
        %v3923 = vpack.c.b16 %v3859, %v3859
        %v3924 = vpack.c.b16 %v3860, %v3860
        %v3925 = vpack.c.b16 %v3861, %v3861
        %v3926 = vpack.c.b16 %v3862, %v3862
        %v3927 = vpack.c.b16 %v3863, %v3863
        %v3928 = vpack.c.b16 %v3864, %v3864
        %v3929 = vpack.c.b16 %v3865, %v3865
        %3994 = vst [vmem:[%s294] sm:$0xf] %v3866
        %3995 = vst [vmem:[%s294 + $0x4] sm:$0xf] %v3867
        %3996 = vst [vmem:[%s294 + $0x8] sm:$0xf] %v3868
        %3997 = vst [vmem:[%s294 + $0xc] sm:$0xf] %v3869
        %3998 = vst [vmem:[%s294 + $0x10] sm:$0xf] %v3870
        %3999 = vst [vmem:[%s294 + $0x14] sm:$0xf] %v3871
        %4000 = vst [vmem:[%s294 + $0x18] sm:$0xf] %v3872
        %4001 = vst [vmem:[%s294 + $0x1c] sm:$0xf] %v3873
        %4002 = vst [vmem:[%s294 + $0x20] sm:$0xf] %v3874
        %4003 = vst [vmem:[%s294 + $0x24] sm:$0xf] %v3875
        %4004 = vst [vmem:[%s294 + $0x28] sm:$0xf] %v3876
        %4005 = vst [vmem:[%s294 + $0x2c] sm:$0xf] %v3877
        %4006 = vst [vmem:[%s294 + $0x30] sm:$0xf] %v3878
        %4007 = vst [vmem:[%s294 + $0x34] sm:$0xf] %v3879
        %4008 = vst [vmem:[%s294 + $0x38] sm:$0xf] %v3880
        %4009 = vst [vmem:[%s294 + $0x3c] sm:$0xf] %v3881
        %4010 = vst [vmem:[%s294 + $0x40] sm:$0xf] %v3882
        %4011 = vst [vmem:[%s294 + $0x44] sm:$0xf] %v3883
        %4012 = vst [vmem:[%s294 + $0x48] sm:$0xf] %v3884
        %4013 = vst [vmem:[%s294 + $0x4c] sm:$0xf] %v3885
        %4014 = vst [vmem:[%s294 + $0x50] sm:$0xf] %v3886
        %4015 = vst [vmem:[%s294 + $0x54] sm:$0xf] %v3887
        %4016 = vst [vmem:[%s294 + $0x58] sm:$0xf] %v3888
        %4017 = vst [vmem:[%s294 + $0x5c] sm:$0xf] %v3889
        %4018 = vst [vmem:[%s294 + $0x60] sm:$0xf] %v3890
        %4019 = vst [vmem:[%s294 + $0x64] sm:$0xf] %v3891
        %4020 = vst [vmem:[%s294 + $0x68] sm:$0xf] %v3892
        %4021 = vst [vmem:[%s294 + $0x6c] sm:$0xf] %v3893
        %4022 = vst [vmem:[%s294 + $0x70] sm:$0xf] %v3894
        %4023 = vst [vmem:[%s294 + $0x74] sm:$0xf] %v3895
        %4024 = vst [vmem:[%s294 + $0x78] sm:$0xf] %v3896
        %4025 = vst [vmem:[%s294 + $0x7c] sm:$0xf] %v3897
        %4026 = vst [vmem:[%s294 + $0x80] sm:$0xf] %v3898
        %4027 = vst [vmem:[%s294 + $0x84] sm:$0xf] %v3899
        %4028 = vst [vmem:[%s294 + $0x88] sm:$0xf] %v3900
        %4029 = vst [vmem:[%s294 + $0x8c] sm:$0xf] %v3901
        %4030 = vst [vmem:[%s294 + $0x90] sm:$0xf] %v3902
        %4031 = vst [vmem:[%s294 + $0x94] sm:$0xf] %v3903
        %4032 = vst [vmem:[%s294 + $0x98] sm:$0xf] %v3904
        %4033 = vst [vmem:[%s294 + $0x9c] sm:$0xf] %v3905
        %4034 = vst [vmem:[%s294 + $0xa0] sm:$0xf] %v3906
        %4035 = vst [vmem:[%s294 + $0xa4] sm:$0xf] %v3907
        %4036 = vst [vmem:[%s294 + $0xa8] sm:$0xf] %v3908
        %4037 = vst [vmem:[%s294 + $0xac] sm:$0xf] %v3909
        %4038 = vst [vmem:[%s294 + $0xb0] sm:$0xf] %v3910
        %4039 = vst [vmem:[%s294 + $0xb4] sm:$0xf] %v3911
        %4040 = vst [vmem:[%s294 + $0xb8] sm:$0xf] %v3912
        %4041 = vst [vmem:[%s294 + $0xbc] sm:$0xf] %v3913
        %4042 = vst [vmem:[%s294 + $0xc0] sm:$0xf] %v3914
        %4043 = vst [vmem:[%s294 + $0xc4] sm:$0xf] %v3915
        %4044 = vst [vmem:[%s294 + $0xc8] sm:$0xf] %v3916
        %4045 = vst [vmem:[%s294 + $0xcc] sm:$0xf] %v3917
        %4046 = vst [vmem:[%s294 + $0xd0] sm:$0xf] %v3918
        %4047 = vst [vmem:[%s294 + $0xd4] sm:$0xf] %v3919
        %4048 = vst [vmem:[%s294 + $0xd8] sm:$0xf] %v3920
        %4049 = vst [vmem:[%s294 + $0xdc] sm:$0xf] %v3921
        %4050 = vst [vmem:[%s294 + $0xe0] sm:$0xf] %v3922
        %4051 = vst [vmem:[%s294 + $0xe4] sm:$0xf] %v3923
        %4052 = vst [vmem:[%s294 + $0xe8] sm:$0xf] %v3924
        %4053 = vst [vmem:[%s294 + $0xec] sm:$0xf] %v3925
        %4054 = vst [vmem:[%s294 + $0xf0] sm:$0xf] %v3926
        %4055 = vst [vmem:[%s294 + $0xf4] sm:$0xf] %v3927
        %4056 = vst [vmem:[%s294 + $0xf8] sm:$0xf] %v3928
        %4057 = vst [vmem:[%s294 + $0xfc] sm:$0xf] %v3929
        %s4058 = sand.u32 %s131, 1
        %s4059 = scalar_lea.sflag [#allocation4], %s4058
        %s4060 = sand.u32 %s131, 1
        %s4061 = smul.addr %s4060, 256
        %s4062 = scalar_lea.vmem [#allocation10], %s4061
        // Predicated region
        $region53: #{bottleneck_block_forward.4} parent=35 // pred_check
          %p4063 = pneg %p141
        $region54: #{bottleneck_block_forward.4} parent=35 // pred_check_branch
          %4065 = sbr.rel (%p4063) target = $region56
        $region55: #{bottleneck_block_forward.4} parent=35 // pred_region
          %s4066 = smul.u32 64, %s25
          %s4068 = ssub.s32 4096, 4096
          %4069 = vsyncadd %s4059, %s4068
          %s4070 = smul.addr %s4066, 64
          %s4071 = scalar_lea.hbm %s4, %s4070
          %s4072 = sshll.u32 %s4062, 4
          %s4073 = int_to_ptr.vmem [resolvable:$true] %s4072
          %4078 = dma.vmem_to_hbm [thread:$0]  %s4073, 4096, %s4071, %s4059, 64, 64, 4
        $region56: #{bottleneck_block_forward.4} parent=35 // pred_fallthru
          _
      $region36: #{bottleneck_block_forward.4} parent=5 // pred_fallthru
        _
      %p4079 = scmp.le.s32.totalorder 2, %s20
      // Predicated region
      $region57: #{bottleneck_block_forward.4} parent=5 // pred_check
        %p4080 = pneg %p4079
      $region58: #{bottleneck_block_forward.4} parent=5 // pred_check_branch
        %4082 = sbr.rel (%p4080) target = $region60
      $region59: #{bottleneck_block_forward.4} parent=5 // pred_region
        %s4083 = ssub.s32 %s20, 2
        // Predicated region
        $region61: #{bottleneck_block_forward.4} parent=59 // pred_check
          %p4084 = pneg %p147
        $region62: #{bottleneck_block_forward.4} parent=59 // pred_check_branch
          %4086 = sbr.rel (%p4084) target = $region64
        $region63: #{bottleneck_block_forward.4} parent=59 // pred_region
          %s4087 = sand.u32 %s132, 1
          %s4088 = scalar_lea.sflag [#allocation4], %s4087
          %s4089 = sand.u32 %s132, 1
          %s4090 = smul.addr %s4089, 256
          %s4091 = scalar_lea.vmem [#allocation10], %s4090
          %4092 = dma.done %s4088, 4096
        $region64: #{bottleneck_block_forward.4} parent=59 // pred_fallthru
          _
      $region60: #{bottleneck_block_forward.4} parent=5 // pred_fallthru
        _
    $region6: #{bottleneck_block_forward.4} parent=1 // loop_footer
      %s24 = sadd.s32 1, %s20
    $region7: #{bottleneck_block_forward.4} parent=1 // loop_footer_branch
      %19 = sbr.rel target = $region3
    $region8: #{bottleneck_block_forward.4} parent=1 // loop_exit
      _
    %4093 = vsyncpa [#allocation3], 1
    %s4094 = scalar_lea.sflag [#allocation3], 1
    %4095 = vsyncpa %s4094, 1
    %4096 = vsyncpa [#allocation6], 1
    %s4097 = scalar_lea.sflag [#allocation6], 1
    %4098 = vsyncpa %s4097, 1
    %4099 = vsyncpa [#allocation9], 1
    %4100 = vsyncpa [#allocation4], 1
    %s4101 = scalar_lea.sflag [#allocation4], 1
    %4102 = vsyncpa %s4101, 1

// kernel: bottleneck_block_forward.5
$region0: #{bottleneck_block_forward.5}
  #allocation0 [shape = 'u32[]', space=smem, size = 0x4, offset = 0x4, fixed_abs, tag = 'smem constant byte address 0x4 - core index']
  #allocation1 [shape = 'u32[144,128]{1,0:T(1,128)}', space=vmem, size = 0x12000, scoped, tag = 'internal scratch']
  %s0 = inlined_call_operand.hbm [shape: bf16[512,128], index: 0, kind: input, shape index: {}]
  %s1 = inlined_call_operand.hbm [shape: bf16[512,128], index: 1, kind: input, shape index: {}]
  %s2 = inlined_call_operand.hbm [shape: bf16[128,128], index: 2, kind: input, shape index: {}]
  %s3 = inlined_call_operand.hbm [shape: bf16[128,128], index: 3, kind: input, shape index: {}]
  %s4 = inlined_call_operand.hbm [shape: f32[4,128], index: 4, kind: input, shape index: {}]
  %s5 = inlined_call_operand.hbm [shape: bf16[512,128], index: 5, kind: output, shape index: {}]
  %s6 = sld [smem:[#allocation0]]
  $region50: #{bottleneck_block_forward.5} parent=0
    _
  %s8 = ssub.s32 1, %s6
  %s9 = scalar_select 0, %s8, %s6
  $region1: #{bottleneck_block_forward.5} parent=0
    #allocation2 [shape = 'u8[131072]{0}', space=vmem, size = 0x20000, scoped, tag = 'input window, operand 0, single buffered']
    #allocation3 [shape = 's32[1]{0}', space=sflag, size = 0x4, scoped, tag = 'scoped memory for bottleneck_block_forward.5']
    #allocation4 [shape = 's32[1]{0}', space=sflag, size = 0x4, scoped, tag = 'scoped memory for bottleneck_block_forward.5']
    #allocation5 [shape = 'u8[131072]{0}', space=vmem, size = 0x20000, scoped, tag = 'input window, operand 1, single buffered']
    #allocation6 [shape = 's32[1]{0}', space=sflag, size = 0x4, scoped, tag = 'scoped memory for bottleneck_block_forward.5']
    #allocation7 [shape = 'u8[32768]{0}', space=vmem, size = 0x8000, scoped, tag = 'input window, operand 2, single buffered']
    #allocation8 [shape = 'u8[32768]{0}', space=vmem, size = 0x8000, scoped, tag = 'input window, operand 3, single buffered']
    #allocation9 [shape = 's32[1]{0}', space=sflag, size = 0x4, scoped, tag = 'scoped memory for bottleneck_block_forward.5']
    #allocation10 [shape = 'u8[2048]{0}', space=vmem, size = 0x800, scoped, tag = 'input window, operand 4, single buffered']
    #allocation11 [shape = 'u8[131072]{0}', space=vmem, size = 0x20000, scoped, tag = 'output window, operand 0, single buffered']
    %10 = vsyncpa [#allocation3], 0
    %11 = vsyncpa [#allocation6], 0
    %12 = vsyncpa [#allocation9], 0
    %13 = vsyncpa [#allocation4], 0
    // Predicated region
    $region2: #{bottleneck_block_forward.5} parent=1 // pred_check
      _
    $region3: #{bottleneck_block_forward.5} parent=1 // pred_check_branch
      %15 = sbr.rel (0) target = $region5
    $region4: #{bottleneck_block_forward.5} parent=1 // pred_region
      %s17 = ssub.s32 4096, 4096
      %18 = vsyncadd [#allocation3], %s17
      %s19 = sshll.u32 [#allocation2], 4
      %s20 = int_to_ptr.vmem [resolvable:$true] %s19
      %25 = dma.hbm_to_vmem [thread:$0]  %s0, 4096, %s20, [#allocation3], 64, 64, 4
    $region5: #{bottleneck_block_forward.5} parent=1 // pred_fallthru
      _
    // Predicated region
    $region6: #{bottleneck_block_forward.5} parent=1 // pred_check
      _
    $region7: #{bottleneck_block_forward.5} parent=1 // pred_check_branch
      %27 = sbr.rel (0) target = $region9
    $region8: #{bottleneck_block_forward.5} parent=1 // pred_region
      %s29 = ssub.s32 4096, 4096
      %30 = vsyncadd [#allocation6], %s29
      %s31 = sshll.u32 [#allocation5], 4
      %s32 = int_to_ptr.vmem [resolvable:$true] %s31
      %37 = dma.hbm_to_vmem [thread:$0]  %s1, 4096, %s32, [#allocation6], 64, 64, 4
    $region9: #{bottleneck_block_forward.5} parent=1 // pred_fallthru
      _
    // Predicated region
    $region10: #{bottleneck_block_forward.5} parent=1 // pred_check
      _
    $region11: #{bottleneck_block_forward.5} parent=1 // pred_check_branch
      %39 = sbr.rel (0) target = $region13
    $region12: #{bottleneck_block_forward.5} parent=1 // pred_region
      %s41 = ssub.s32 1024, 1024
      %42 = vsyncadd [#allocation6], %s41
      %s43 = sshll.u32 [#allocation7], 4
      %s44 = int_to_ptr.vmem [resolvable:$true] %s43
      %49 = dma.hbm_to_vmem [thread:$0]  %s2, 1024, %s44, [#allocation6], 64, 64, 4
    $region13: #{bottleneck_block_forward.5} parent=1 // pred_fallthru
      _
    // Predicated region
    $region14: #{bottleneck_block_forward.5} parent=1 // pred_check
      _
    $region15: #{bottleneck_block_forward.5} parent=1 // pred_check_branch
      %51 = sbr.rel (0) target = $region17
    $region16: #{bottleneck_block_forward.5} parent=1 // pred_region
      %s53 = ssub.s32 1024, 1024
      %54 = vsyncadd [#allocation9], %s53
      %s55 = sshll.u32 [#allocation8], 4
      %s56 = int_to_ptr.vmem [resolvable:$true] %s55
      %61 = dma.hbm_to_vmem [thread:$0]  %s3, 1024, %s56, [#allocation9], 64, 64, 4
    $region17: #{bottleneck_block_forward.5} parent=1 // pred_fallthru
      _
    // Predicated region
    $region18: #{bottleneck_block_forward.5} parent=1 // pred_check
      _
    $region19: #{bottleneck_block_forward.5} parent=1 // pred_check_branch
      %63 = sbr.rel (0) target = $region21
    $region20: #{bottleneck_block_forward.5} parent=1 // pred_region
      %s65 = ssub.s32 64, 64
      %66 = vsyncadd [#allocation9], %s65
      %s68 = sshll.u32 [#allocation10], 4
      %s69 = int_to_ptr.vmem [resolvable:$true] %s68
      %71 = dma.hbm_to_vmem [thread:$0]  %s4, 64, %s69, [#allocation9]
    $region21: #{bottleneck_block_forward.5} parent=1 // pred_fallthru
      _
    // Predicated region
    $region22: #{bottleneck_block_forward.5} parent=1 // pred_check
      _
    $region23: #{bottleneck_block_forward.5} parent=1 // pred_check_branch
      %73 = sbr.rel (0) target = $region25
    $region24: #{bottleneck_block_forward.5} parent=1 // pred_region
      %74 = dma.done [#allocation3], 4096
    $region25: #{bottleneck_block_forward.5} parent=1 // pred_fallthru
      _
    // Predicated region
    $region26: #{bottleneck_block_forward.5} parent=1 // pred_check
      _
    $region27: #{bottleneck_block_forward.5} parent=1 // pred_check_branch
      %76 = sbr.rel (0) target = $region29
    $region28: #{bottleneck_block_forward.5} parent=1 // pred_region
      %77 = dma.done [#allocation6], 4096
    $region29: #{bottleneck_block_forward.5} parent=1 // pred_fallthru
      _
    // Predicated region
    $region30: #{bottleneck_block_forward.5} parent=1 // pred_check
      _
    $region31: #{bottleneck_block_forward.5} parent=1 // pred_check_branch
      %79 = sbr.rel (0) target = $region33
    $region32: #{bottleneck_block_forward.5} parent=1 // pred_region
      %80 = dma.done [#allocation6], 1024
    $region33: #{bottleneck_block_forward.5} parent=1 // pred_fallthru
      _
    // Predicated region
    $region34: #{bottleneck_block_forward.5} parent=1 // pred_check
      _
    $region35: #{bottleneck_block_forward.5} parent=1 // pred_check_branch
      %82 = sbr.rel (0) target = $region37
    $region36: #{bottleneck_block_forward.5} parent=1 // pred_region
      %83 = dma.done [#allocation9], 1024
    $region37: #{bottleneck_block_forward.5} parent=1 // pred_fallthru
      _
    // Predicated region
    $region38: #{bottleneck_block_forward.5} parent=1 // pred_check
      _
    $region39: #{bottleneck_block_forward.5} parent=1 // pred_check_branch
      %85 = sbr.rel (0) target = $region41
    $region40: #{bottleneck_block_forward.5} parent=1 // pred_region
      %86 = dma.done [#allocation9], 64
    $region41: #{bottleneck_block_forward.5} parent=1 // pred_fallthru
      _
    %v88 = vld [vmem:[#allocation10] sm:$0x1]
    %v89 = vld [vmem:[#allocation10 + $0x1] sm:$0x1]
    %v90 = vld [vmem:[#allocation10 + $0x2] sm:$0x1]
    %v91 = vld [vmem:[#allocation10 + $0x3] sm:$0x1]
    %v92 = vld [vmem:[#allocation2] sm:$0xf]
    %v93 = vld [vmem:[#allocation2 + $0x4] sm:$0xf]
    %v94 = vld [vmem:[#allocation2 + $0x8] sm:$0xf]
    %v95 = vld [vmem:[#allocation2 + $0xc] sm:$0xf]
    %v96 = vld [vmem:[#allocation2 + $0x10] sm:$0xf]
    %v97 = vld [vmem:[#allocation2 + $0x14] sm:$0xf]
    %v98 = vld [vmem:[#allocation2 + $0x18] sm:$0xf]
    %v99 = vld [vmem:[#allocation2 + $0x1c] sm:$0xf]
    %v100 = vld [vmem:[#allocation2 + $0x20] sm:$0xf]
    %v101 = vld [vmem:[#allocation2 + $0x24] sm:$0xf]
    %v102 = vld [vmem:[#allocation2 + $0x28] sm:$0xf]
    %v103 = vld [vmem:[#allocation2 + $0x2c] sm:$0xf]
    %v104 = vld [vmem:[#allocation2 + $0x30] sm:$0xf]
    %v105 = vld [vmem:[#allocation2 + $0x34] sm:$0xf]
    %v106 = vld [vmem:[#allocation2 + $0x38] sm:$0xf]
    %v107 = vld [vmem:[#allocation2 + $0x3c] sm:$0xf]
    %v108 = vld [vmem:[#allocation2 + $0x40] sm:$0xf]
    %v109 = vld [vmem:[#allocation2 + $0x44] sm:$0xf]
    %v110 = vld [vmem:[#allocation2 + $0x48] sm:$0xf]
    %v111 = vld [vmem:[#allocation2 + $0x4c] sm:$0xf]
    %v112 = vld [vmem:[#allocation2 + $0x50] sm:$0xf]
    %v113 = vld [vmem:[#allocation2 + $0x54] sm:$0xf]
    %v114 = vld [vmem:[#allocation2 + $0x58] sm:$0xf]
    %v115 = vld [vmem:[#allocation2 + $0x5c] sm:$0xf]
    %v116 = vld [vmem:[#allocation2 + $0x60] sm:$0xf]
    %v117 = vld [vmem:[#allocation2 + $0x64] sm:$0xf]
    %v118 = vld [vmem:[#allocation2 + $0x68] sm:$0xf]
    %v119 = vld [vmem:[#allocation2 + $0x6c] sm:$0xf]
    %v120 = vld [vmem:[#allocation2 + $0x70] sm:$0xf]
    %v121 = vld [vmem:[#allocation2 + $0x74] sm:$0xf]
    %v122 = vld [vmem:[#allocation2 + $0x78] sm:$0xf]
    %v123 = vld [vmem:[#allocation2 + $0x7c] sm:$0xf]
    %v124 = vld [vmem:[#allocation2 + $0x80] sm:$0xf]
    %v125 = vld [vmem:[#allocation2 + $0x84] sm:$0xf]
    %v126 = vld [vmem:[#allocation2 + $0x88] sm:$0xf]
    %v127 = vld [vmem:[#allocation2 + $0x8c] sm:$0xf]
    %v128 = vld [vmem:[#allocation2 + $0x90] sm:$0xf]
    %v129 = vld [vmem:[#allocation2 + $0x94] sm:$0xf]
    %v130 = vld [vmem:[#allocation2 + $0x98] sm:$0xf]
    %v131 = vld [vmem:[#allocation2 + $0x9c] sm:$0xf]
    %v132 = vld [vmem:[#allocation2 + $0xa0] sm:$0xf]
    %v133 = vld [vmem:[#allocation2 + $0xa4] sm:$0xf]
    %v134 = vld [vmem:[#allocation2 + $0xa8] sm:$0xf]
    %v135 = vld [vmem:[#allocation2 + $0xac] sm:$0xf]
    %v136 = vld [vmem:[#allocation2 + $0xb0] sm:$0xf]
    %v137 = vld [vmem:[#allocation2 + $0xb4] sm:$0xf]
    %v138 = vld [vmem:[#allocation2 + $0xb8] sm:$0xf]
    %v139 = vld [vmem:[#allocation2 + $0xbc] sm:$0xf]
    %v140 = vld [vmem:[#allocation2 + $0xc0] sm:$0xf]
    %v141 = vld [vmem:[#allocation2 + $0xc4] sm:$0xf]
    %v142 = vld [vmem:[#allocation2 + $0xc8] sm:$0xf]
    %v143 = vld [vmem:[#allocation2 + $0xcc] sm:$0xf]
    %v144 = vld [vmem:[#allocation2 + $0xd0] sm:$0xf]
    %v145 = vld [vmem:[#allocation2 + $0xd4] sm:$0xf]
    %v146 = vld [vmem:[#allocation2 + $0xd8] sm:$0xf]
    %v147 = vld [vmem:[#allocation2 + $0xdc] sm:$0xf]
    %v148 = vld [vmem:[#allocation2 + $0xe0] sm:$0xf]
    %v149 = vld [vmem:[#allocation2 + $0xe4] sm:$0xf]
    %v150 = vld [vmem:[#allocation2 + $0xe8] sm:$0xf]
    %v151 = vld [vmem:[#allocation2 + $0xec] sm:$0xf]
    %v152 = vld [vmem:[#allocation2 + $0xf0] sm:$0xf]
    %v153 = vld [vmem:[#allocation2 + $0xf4] sm:$0xf]
    %v154 = vld [vmem:[#allocation2 + $0xf8] sm:$0xf]
    %v155 = vld [vmem:[#allocation2 + $0xfc] sm:$0xf]
    %v156 = vld [vmem:[#allocation7] sm:$0xf]
    %v157 = vld [vmem:[#allocation7 + $0x4] sm:$0xf]
    %v158 = vld [vmem:[#allocation7 + $0x8] sm:$0xf]
    %v159 = vld [vmem:[#allocation7 + $0xc] sm:$0xf]
    %v160 = vld [vmem:[#allocation7 + $0x10] sm:$0xf]
    %v161 = vld [vmem:[#allocation7 + $0x14] sm:$0xf]
    %v162 = vld [vmem:[#allocation7 + $0x18] sm:$0xf]
    %v163 = vld [vmem:[#allocation7 + $0x1c] sm:$0xf]
    %v164 = vld [vmem:[#allocation7 + $0x20] sm:$0xf]
    %v165 = vld [vmem:[#allocation7 + $0x24] sm:$0xf]
    %v166 = vld [vmem:[#allocation7 + $0x28] sm:$0xf]
    %v167 = vld [vmem:[#allocation7 + $0x2c] sm:$0xf]
    %v168 = vld [vmem:[#allocation7 + $0x30] sm:$0xf]
    %v169 = vld [vmem:[#allocation7 + $0x34] sm:$0xf]
    %v170 = vld [vmem:[#allocation7 + $0x38] sm:$0xf]
    %v171 = vld [vmem:[#allocation7 + $0x3c] sm:$0xf]
    %v236 = vunpack.c.l.b16 %v92
    %v237 = vunpack.c.l.b16 %v93
    %v238 = vunpack.c.l.b16 %v94
    %v239 = vunpack.c.l.b16 %v95
    %v240 = vunpack.c.l.b16 %v96
    %v241 = vunpack.c.l.b16 %v97
    %v242 = vunpack.c.l.b16 %v98
    %v243 = vunpack.c.l.b16 %v99
    %v244 = vunpack.c.l.b16 %v100
    %v245 = vunpack.c.l.b16 %v101
    %v246 = vunpack.c.l.b16 %v102
    %v247 = vunpack.c.l.b16 %v103
    %v248 = vunpack.c.l.b16 %v104
    %v249 = vunpack.c.l.b16 %v105
    %v250 = vunpack.c.l.b16 %v106
    %v251 = vunpack.c.l.b16 %v107
    %v252 = vunpack.c.l.b16 %v108
    %v253 = vunpack.c.l.b16 %v109
    %v254 = vunpack.c.l.b16 %v110
    %v255 = vunpack.c.l.b16 %v111
    %v256 = vunpack.c.l.b16 %v112
    %v257 = vunpack.c.l.b16 %v113
    %v258 = vunpack.c.l.b16 %v114
    %v259 = vunpack.c.l.b16 %v115
    %v260 = vunpack.c.l.b16 %v116
    %v261 = vunpack.c.l.b16 %v117
    %v262 = vunpack.c.l.b16 %v118
    %v263 = vunpack.c.l.b16 %v119
    %v264 = vunpack.c.l.b16 %v120
    %v265 = vunpack.c.l.b16 %v121
    %v266 = vunpack.c.l.b16 %v122
    %v267 = vunpack.c.l.b16 %v123
    %v268 = vunpack.c.l.b16 %v124
    %v269 = vunpack.c.l.b16 %v125
    %v270 = vunpack.c.l.b16 %v126
    %v271 = vunpack.c.l.b16 %v127
    %v272 = vunpack.c.l.b16 %v128
    %v273 = vunpack.c.l.b16 %v129
    %v274 = vunpack.c.l.b16 %v130
    %v275 = vunpack.c.l.b16 %v131
    %v276 = vunpack.c.l.b16 %v132
    %v277 = vunpack.c.l.b16 %v133
    %v278 = vunpack.c.l.b16 %v134
    %v279 = vunpack.c.l.b16 %v135
    %v280 = vunpack.c.l.b16 %v136
    %v281 = vunpack.c.l.b16 %v137
    %v282 = vunpack.c.l.b16 %v138
    %v283 = vunpack.c.l.b16 %v139
    %v284 = vunpack.c.l.b16 %v140
    %v285 = vunpack.c.l.b16 %v141
    %v286 = vunpack.c.l.b16 %v142
    %v287 = vunpack.c.l.b16 %v143
    %v288 = vunpack.c.l.b16 %v144
    %v289 = vunpack.c.l.b16 %v145
    %v290 = vunpack.c.l.b16 %v146
    %v291 = vunpack.c.l.b16 %v147
    %v292 = vunpack.c.l.b16 %v148
    %v293 = vunpack.c.l.b16 %v149
    %v294 = vunpack.c.l.b16 %v150
    %v295 = vunpack.c.l.b16 %v151
    %v296 = vunpack.c.l.b16 %v152
    %v297 = vunpack.c.l.b16 %v153
    %v298 = vunpack.c.l.b16 %v154
    %v299 = vunpack.c.l.b16 %v155
    %v300 = vpack.c.b16 %v237, %v236
    %v301 = vpack.c.b16 %v239, %v238
    %v302 = vpack.c.b16 %v241, %v240
    %v303 = vpack.c.b16 %v243, %v242
    %v304 = vpack.c.b16 %v245, %v244
    %v305 = vpack.c.b16 %v247, %v246
    %v306 = vpack.c.b16 %v249, %v248
    %v307 = vpack.c.b16 %v251, %v250
    %v308 = vpack.c.b16 %v253, %v252
    %v309 = vpack.c.b16 %v255, %v254
    %v310 = vpack.c.b16 %v257, %v256
    %v311 = vpack.c.b16 %v259, %v258
    %v312 = vpack.c.b16 %v261, %v260
    %v313 = vpack.c.b16 %v263, %v262
    %v314 = vpack.c.b16 %v265, %v264
    %v315 = vpack.c.b16 %v267, %v266
    %v316 = vpack.c.b16 %v269, %v268
    %v317 = vpack.c.b16 %v271, %v270
    %v318 = vpack.c.b16 %v273, %v272
    %v319 = vpack.c.b16 %v275, %v274
    %v320 = vpack.c.b16 %v277, %v276
    %v321 = vpack.c.b16 %v279, %v278
    %v322 = vpack.c.b16 %v281, %v280
    %v323 = vpack.c.b16 %v283, %v282
    %v324 = vpack.c.b16 %v285, %v284
    %v325 = vpack.c.b16 %v287, %v286
    %v326 = vpack.c.b16 %v289, %v288
    %v327 = vpack.c.b16 %v291, %v290
    %v328 = vpack.c.b16 %v293, %v292
    %v329 = vpack.c.b16 %v295, %v294
    %v330 = vpack.c.b16 %v297, %v296
    %v331 = vpack.c.b16 %v299, %v298
    %v380 = vunpack.c.l.b16 %v156
    %v381 = vunpack.c.l.b16 %v157
    %v382 = vunpack.c.l.b16 %v158
    %v383 = vunpack.c.l.b16 %v159
    %v384 = vunpack.c.l.b16 %v160
    %v385 = vunpack.c.l.b16 %v161
    %v386 = vunpack.c.l.b16 %v162
    %v387 = vunpack.c.l.b16 %v163
    %v388 = vunpack.c.l.b16 %v164
    %v389 = vunpack.c.l.b16 %v165
    %v390 = vunpack.c.l.b16 %v166
    %v391 = vunpack.c.l.b16 %v167
    %v392 = vunpack.c.l.b16 %v168
    %v393 = vunpack.c.l.b16 %v169
    %v394 = vunpack.c.l.b16 %v170
    %v395 = vunpack.c.l.b16 %v171
    %v396 = vpack.c.b16 %v381, %v380
    %v397 = vpack.c.b16 %v383, %v382
    %v398 = vpack.c.b16 %v385, %v384
    %v399 = vpack.c.b16 %v387, %v386
    %v400 = vpack.c.b16 %v389, %v388
    %v401 = vpack.c.b16 %v391, %v390
    %v402 = vpack.c.b16 %v393, %v392
    %v403 = vpack.c.b16 %v395, %v394
    %412 = vmatprep.subr.bf16.mxu0 0
    %413 = vmatpush1.bf16.msra.mxu0 %v396
    %414 = vmatprep.subr.bf16.mxu0 0
    %415 = vmatpush1.bf16.msra.mxu0 %v397
    %416 = vmatprep.subr.bf16.mxu0 0
    %417 = vmatpush1.bf16.msra.mxu0 %v398
    %418 = vmatprep.subr.bf16.mxu0 0
    %419 = vmatpush1.bf16.msra.mxu0 %v399
    %420 = vmatprep.subr.bf16.mxu0 0
    %421 = vmatpush1.bf16.msra.mxu0 %v400
    %422 = vmatprep.subr.bf16.mxu0 0
    %423 = vmatpush1.bf16.msra.mxu0 %v401
    %424 = vmatprep.subr.bf16.mxu0 0
    %425 = vmatpush1.bf16.msra.mxu0 %v402
    %426 = vmatprep.subr.bf16.mxu0 0
    %427 = vmatpush1.bf16.msra.mxu0 %v403
    %428 = vmatprep.subr.bf16.mxu0 0
    %429 = vmatpush1.bf16.msra.mxu0 0
    %430 = vmatprep.subr.bf16.mxu0 0
    %431 = vmatpush1.bf16.msra.mxu0 0
    %432 = vmatprep.subr.bf16.mxu0 0
    %433 = vmatpush1.bf16.msra.mxu0 0
    %434 = vmatprep.subr.bf16.mxu0 0
    %435 = vmatpush1.bf16.msra.mxu0 0
    %436 = vmatprep.subr.bf16.mxu0 0
    %437 = vmatpush1.bf16.msra.mxu0 0
    %438 = vmatprep.subr.bf16.mxu0 0
    %439 = vmatpush1.bf16.msra.mxu0 0
    %440 = vmatprep.subr.bf16.mxu0 0
    %441 = vmatpush1.bf16.msra.mxu0 0
    %442 = vmatprep.subr.bf16.mxu0 0
    %443 = vmatpush1.bf16.msra.mxu0 0
    %444 = vmatprep.mubr.bf16.mxu0 0
    %445 = vmatmul.mubr.bf16.gmra.mrb[0].mxu0 %v300
    %v446 = vpop.f32.mrb[0].mxu0
    %v447 = vadd.f32 0.0, %v446
    %v448 = vpop.f32.mrb[0].mxu0
    %v449 = vpop.f32.mrb[0].mxu0
    %v450 = vadd.f32 0.0, %v449
    %v451 = vpop.f32.mrb[0].mxu0
    %452 = vmatprep.mubr.bf16.mxu0 0
    %453 = vmatmul.mubr.bf16.gmra.mrb[0].mxu0 %v301
    %v454 = vpop.f32.mrb[0].mxu0
    %v455 = vadd.f32 0.0, %v454
    %v456 = vpop.f32.mrb[0].mxu0
    %v457 = vpop.f32.mrb[0].mxu0
    %v458 = vadd.f32 0.0, %v457
    %v459 = vpop.f32.mrb[0].mxu0
    %460 = vmatprep.mubr.bf16.mxu0 0
    %461 = vmatmul.mubr.bf16.gmra.mrb[0].mxu0 %v302
    %v462 = vpop.f32.mrb[0].mxu0
    %v463 = vadd.f32 0.0, %v462
    %v464 = vpop.f32.mrb[0].mxu0
    %v465 = vpop.f32.mrb[0].mxu0
    %v466 = vadd.f32 0.0, %v465
    %v467 = vpop.f32.mrb[0].mxu0
    %468 = vmatprep.mubr.bf16.mxu0 0
    %469 = vmatmul.mubr.bf16.gmra.mrb[0].mxu0 %v303
    %v470 = vpop.f32.mrb[0].mxu0
    %v471 = vadd.f32 0.0, %v470
    %v472 = vpop.f32.mrb[0].mxu0
    %v473 = vpop.f32.mrb[0].mxu0
    %v474 = vadd.f32 0.0, %v473
    %v475 = vpop.f32.mrb[0].mxu0
    %476 = vmatprep.mubr.bf16.mxu0 0
    %477 = vmatmul.mubr.bf16.gmra.mrb[0].mxu0 %v304
    %v478 = vpop.f32.mrb[0].mxu0
    %v479 = vadd.f32 0.0, %v478
    %v480 = vpop.f32.mrb[0].mxu0
    %v481 = vpop.f32.mrb[0].mxu0
    %v482 = vadd.f32 0.0, %v481
    %v483 = vpop.f32.mrb[0].mxu0
    %484 = vmatprep.mubr.bf16.mxu0 0
    %485 = vmatmul.mubr.bf16.gmra.mrb[0].mxu0 %v305
    %v486 = vpop.f32.mrb[0].mxu0
    %v487 = vadd.f32 0.0, %v486
    %v488 = vpop.f32.mrb[0].mxu0
    %v489 = vpop.f32.mrb[0].mxu0
    %v490 = vadd.f32 0.0, %v489
    %v491 = vpop.f32.mrb[0].mxu0
    %492 = vmatprep.mubr.bf16.mxu0 0
    %493 = vmatmul.mubr.bf16.gmra.mrb[0].mxu0 %v306
    %v494 = vpop.f32.mrb[0].mxu0
    %v495 = vadd.f32 0.0, %v494
    %v496 = vpop.f32.mrb[0].mxu0
    %v497 = vpop.f32.mrb[0].mxu0
    %v498 = vadd.f32 0.0, %v497
    %v499 = vpop.f32.mrb[0].mxu0
    %500 = vmatprep.mubr.bf16.mxu0 0
    %501 = vmatmul.mubr.bf16.gmra.mrb[0].mxu0 %v307
    %v502 = vpop.f32.mrb[0].mxu0
    %v503 = vadd.f32 0.0, %v502
    %v504 = vpop.f32.mrb[0].mxu0
    %v505 = vpop.f32.mrb[0].mxu0
    %v506 = vadd.f32 0.0, %v505
    %v507 = vpop.f32.mrb[0].mxu0
    %508 = vmatprep.mubr.bf16.mxu0 0
    %509 = vmatmul.mubr.bf16.gmra.mrb[0].mxu0 %v308
    %v510 = vpop.f32.mrb[0].mxu0
    %v511 = vadd.f32 0.0, %v510
    %v512 = vpop.f32.mrb[0].mxu0
    %v513 = vpop.f32.mrb[0].mxu0
    %v514 = vadd.f32 0.0, %v513
    %v515 = vpop.f32.mrb[0].mxu0
    %516 = vmatprep.mubr.bf16.mxu0 0
    %517 = vmatmul.mubr.bf16.gmra.mrb[0].mxu0 %v309
    %v518 = vpop.f32.mrb[0].mxu0
    %v519 = vadd.f32 0.0, %v518
    %v520 = vpop.f32.mrb[0].mxu0
    %v521 = vpop.f32.mrb[0].mxu0
    %v522 = vadd.f32 0.0, %v521
    %v523 = vpop.f32.mrb[0].mxu0
    %524 = vmatprep.mubr.bf16.mxu0 0
    %525 = vmatmul.mubr.bf16.gmra.mrb[0].mxu0 %v310
    %v526 = vpop.f32.mrb[0].mxu0
    %v527 = vadd.f32 0.0, %v526
    %v528 = vpop.f32.mrb[0].mxu0
    %v529 = vpop.f32.mrb[0].mxu0
    %v530 = vadd.f32 0.0, %v529
    %v531 = vpop.f32.mrb[0].mxu0
    %532 = vmatprep.mubr.bf16.mxu0 0
    %533 = vmatmul.mubr.bf16.gmra.mrb[0].mxu0 %v311
    %v534 = vpop.f32.mrb[0].mxu0
    %v535 = vadd.f32 0.0, %v534
    %v536 = vpop.f32.mrb[0].mxu0
    %v537 = vpop.f32.mrb[0].mxu0
    %v538 = vadd.f32 0.0, %v537
    %v539 = vpop.f32.mrb[0].mxu0
    %540 = vmatprep.mubr.bf16.mxu0 0
    %541 = vmatmul.mubr.bf16.gmra.mrb[0].mxu0 %v312
    %v542 = vpop.f32.mrb[0].mxu0
    %v543 = vadd.f32 0.0, %v542
    %v544 = vpop.f32.mrb[0].mxu0
    %v545 = vpop.f32.mrb[0].mxu0
    %v546 = vadd.f32 0.0, %v545
    %v547 = vpop.f32.mrb[0].mxu0
    %548 = vmatprep.mubr.bf16.mxu0 0
    %549 = vmatmul.mubr.bf16.gmra.mrb[0].mxu0 %v313
    %v550 = vpop.f32.mrb[0].mxu0
    %v551 = vadd.f32 0.0, %v550
    %v552 = vpop.f32.mrb[0].mxu0
    %v553 = vpop.f32.mrb[0].mxu0
    %v554 = vadd.f32 0.0, %v553
    %v555 = vpop.f32.mrb[0].mxu0
    %556 = vmatprep.mubr.bf16.mxu0 0
    %557 = vmatmul.mubr.bf16.gmra.mrb[0].mxu0 %v314
    %v558 = vpop.f32.mrb[0].mxu0
    %v559 = vadd.f32 0.0, %v558
    %v560 = vpop.f32.mrb[0].mxu0
    %v561 = vpop.f32.mrb[0].mxu0
    %v562 = vadd.f32 0.0, %v561
    %v563 = vpop.f32.mrb[0].mxu0
    %564 = vmatprep.mubr.bf16.mxu0 0
    %565 = vmatmul.mubr.bf16.gmra.mrb[0].mxu0 %v315
    %v566 = vpop.f32.mrb[0].mxu0
    %v567 = vadd.f32 0.0, %v566
    %v568 = vpop.f32.mrb[0].mxu0
    %v569 = vpop.f32.mrb[0].mxu0
    %v570 = vadd.f32 0.0, %v569
    %v571 = vpop.f32.mrb[0].mxu0
    %572 = vmatprep.mubr.bf16.mxu0 0
    %573 = vmatmul.mubr.bf16.gmra.mrb[0].mxu0 %v316
    %v574 = vpop.f32.mrb[0].mxu0
    %v575 = vadd.f32 0.0, %v574
    %v576 = vpop.f32.mrb[0].mxu0
    %v577 = vpop.f32.mrb[0].mxu0
    %v578 = vadd.f32 0.0, %v577
    %v579 = vpop.f32.mrb[0].mxu0
    %580 = vmatprep.mubr.bf16.mxu0 0
    %581 = vmatmul.mubr.bf16.gmra.mrb[0].mxu0 %v317
    %v582 = vpop.f32.mrb[0].mxu0
    %v583 = vadd.f32 0.0, %v582
    %v584 = vpop.f32.mrb[0].mxu0
    %v585 = vpop.f32.mrb[0].mxu0
    %v586 = vadd.f32 0.0, %v585
    %v587 = vpop.f32.mrb[0].mxu0
    %588 = vmatprep.mubr.bf16.mxu0 0
    %589 = vmatmul.mubr.bf16.gmra.mrb[0].mxu0 %v318
    %v590 = vpop.f32.mrb[0].mxu0
    %v591 = vadd.f32 0.0, %v590
    %v592 = vpop.f32.mrb[0].mxu0
    %v593 = vpop.f32.mrb[0].mxu0
    %v594 = vadd.f32 0.0, %v593
    %v595 = vpop.f32.mrb[0].mxu0
    %596 = vmatprep.mubr.bf16.mxu0 0
    %597 = vmatmul.mubr.bf16.gmra.mrb[0].mxu0 %v319
    %v598 = vpop.f32.mrb[0].mxu0
    %v599 = vadd.f32 0.0, %v598
    %v600 = vpop.f32.mrb[0].mxu0
    %v601 = vpop.f32.mrb[0].mxu0
    %v602 = vadd.f32 0.0, %v601
    %v603 = vpop.f32.mrb[0].mxu0
    %604 = vmatprep.mubr.bf16.mxu0 0
    %605 = vmatmul.mubr.bf16.gmra.mrb[0].mxu0 %v320
    %v606 = vpop.f32.mrb[0].mxu0
    %v607 = vadd.f32 0.0, %v606
    %v608 = vpop.f32.mrb[0].mxu0
    %v609 = vpop.f32.mrb[0].mxu0
    %v610 = vadd.f32 0.0, %v609
    %v611 = vpop.f32.mrb[0].mxu0
    %612 = vmatprep.mubr.bf16.mxu0 0
    %613 = vmatmul.mubr.bf16.gmra.mrb[0].mxu0 %v321
    %v614 = vpop.f32.mrb[0].mxu0
    %v615 = vadd.f32 0.0, %v614
    %v616 = vpop.f32.mrb[0].mxu0
    %v617 = vpop.f32.mrb[0].mxu0
    %v618 = vadd.f32 0.0, %v617
    %v619 = vpop.f32.mrb[0].mxu0
    %620 = vmatprep.mubr.bf16.mxu0 0
    %621 = vmatmul.mubr.bf16.gmra.mrb[0].mxu0 %v322
    %v622 = vpop.f32.mrb[0].mxu0
    %v623 = vadd.f32 0.0, %v622
    %v624 = vpop.f32.mrb[0].mxu0
    %v625 = vpop.f32.mrb[0].mxu0
    %v626 = vadd.f32 0.0, %v625
    %v627 = vpop.f32.mrb[0].mxu0
    %628 = vmatprep.mubr.bf16.mxu0 0
    %629 = vmatmul.mubr.bf16.gmra.mrb[0].mxu0 %v323
    %v630 = vpop.f32.mrb[0].mxu0
    %v631 = vadd.f32 0.0, %v630
    %v632 = vpop.f32.mrb[0].mxu0
    %v633 = vpop.f32.mrb[0].mxu0
    %v634 = vadd.f32 0.0, %v633
    %v635 = vpop.f32.mrb[0].mxu0
    %636 = vmatprep.mubr.bf16.mxu0 0
    %637 = vmatmul.mubr.bf16.gmra.mrb[0].mxu0 %v324
    %v638 = vpop.f32.mrb[0].mxu0
    %v639 = vadd.f32 0.0, %v638
    %v640 = vpop.f32.mrb[0].mxu0
    %v641 = vpop.f32.mrb[0].mxu0
    %v642 = vadd.f32 0.0, %v641
    %v643 = vpop.f32.mrb[0].mxu0
    %644 = vmatprep.mubr.bf16.mxu0 0
    %645 = vmatmul.mubr.bf16.gmra.mrb[0].mxu0 %v325
    %v646 = vpop.f32.mrb[0].mxu0
    %v647 = vadd.f32 0.0, %v646
    %v648 = vpop.f32.mrb[0].mxu0
    %v649 = vpop.f32.mrb[0].mxu0
    %v650 = vadd.f32 0.0, %v649
    %v651 = vpop.f32.mrb[0].mxu0
    %652 = vmatprep.mubr.bf16.mxu0 0
    %653 = vmatmul.mubr.bf16.gmra.mrb[0].mxu0 %v326
    %v654 = vpop.f32.mrb[0].mxu0
    %v655 = vadd.f32 0.0, %v654
    %v656 = vpop.f32.mrb[0].mxu0
    %v657 = vpop.f32.mrb[0].mxu0
    %v658 = vadd.f32 0.0, %v657
    %v659 = vpop.f32.mrb[0].mxu0
    %660 = vmatprep.mubr.bf16.mxu0 0
    %661 = vmatmul.mubr.bf16.gmra.mrb[0].mxu0 %v327
    %v662 = vpop.f32.mrb[0].mxu0
    %v663 = vadd.f32 0.0, %v662
    %v664 = vpop.f32.mrb[0].mxu0
    %v665 = vpop.f32.mrb[0].mxu0
    %v666 = vadd.f32 0.0, %v665
    %v667 = vpop.f32.mrb[0].mxu0
    %668 = vmatprep.mubr.bf16.mxu0 0
    %669 = vmatmul.mubr.bf16.gmra.mrb[0].mxu0 %v328
    %v670 = vpop.f32.mrb[0].mxu0
    %v671 = vadd.f32 0.0, %v670
    %v672 = vpop.f32.mrb[0].mxu0
    %v673 = vpop.f32.mrb[0].mxu0
    %v674 = vadd.f32 0.0, %v673
    %v675 = vpop.f32.mrb[0].mxu0
    %676 = vmatprep.mubr.bf16.mxu0 0
    %677 = vmatmul.mubr.bf16.gmra.mrb[0].mxu0 %v329
    %v678 = vpop.f32.mrb[0].mxu0
    %v679 = vadd.f32 0.0, %v678
    %v680 = vpop.f32.mrb[0].mxu0
    %v681 = vpop.f32.mrb[0].mxu0
    %v682 = vadd.f32 0.0, %v681
    %v683 = vpop.f32.mrb[0].mxu0
    %684 = vmatprep.mubr.bf16.mxu0 0
    %685 = vmatmul.mubr.bf16.gmra.mrb[0].mxu0 %v330
    %v686 = vpop.f32.mrb[0].mxu0
    %v687 = vadd.f32 0.0, %v686
    %v688 = vpop.f32.mrb[0].mxu0
    %v689 = vpop.f32.mrb[0].mxu0
    %v690 = vadd.f32 0.0, %v689
    %v691 = vpop.f32.mrb[0].mxu0
    %692 = vmatprep.mubr.bf16.mxu0 0
    %693 = vmatmul.mubr.bf16.gmra.mrb[0].mxu0 %v331
    %v694 = vpop.f32.mrb[0].mxu0
    %v695 = vadd.f32 0.0, %v694
    %v696 = vpop.f32.mrb[0].mxu0
    %v697 = vpop.f32.mrb[0].mxu0
    %v698 = vadd.f32 0.0, %v697
    %v699 = vpop.f32.mrb[0].mxu0
    %700 = vdwg.mxu0
    %v701 = vld [vmem:[#allocation5] sm:$0xf]
    %v702 = vld [vmem:[#allocation5 + $0x4] sm:$0xf]
    %v703 = vld [vmem:[#allocation5 + $0x8] sm:$0xf]
    %v704 = vld [vmem:[#allocation5 + $0xc] sm:$0xf]
    %v705 = vld [vmem:[#allocation5 + $0x10] sm:$0xf]
    %v706 = vld [vmem:[#allocation5 + $0x14] sm:$0xf]
    %v707 = vld [vmem:[#allocation5 + $0x18] sm:$0xf]
    %v708 = vld [vmem:[#allocation5 + $0x1c] sm:$0xf]
    %v709 = vld [vmem:[#allocation5 + $0x20] sm:$0xf]
    %v710 = vld [vmem:[#allocation5 + $0x24] sm:$0xf]
    %v711 = vld [vmem:[#allocation5 + $0x28] sm:$0xf]
    %v712 = vld [vmem:[#allocation5 + $0x2c] sm:$0xf]
    %v713 = vld [vmem:[#allocation5 + $0x30] sm:$0xf]
    %v714 = vld [vmem:[#allocation5 + $0x34] sm:$0xf]
    %v715 = vld [vmem:[#allocation5 + $0x38] sm:$0xf]
    %v716 = vld [vmem:[#allocation5 + $0x3c] sm:$0xf]
    %v717 = vld [vmem:[#allocation5 + $0x40] sm:$0xf]
    %v718 = vld [vmem:[#allocation5 + $0x44] sm:$0xf]
    %v719 = vld [vmem:[#allocation5 + $0x48] sm:$0xf]
    %v720 = vld [vmem:[#allocation5 + $0x4c] sm:$0xf]
    %v721 = vld [vmem:[#allocation5 + $0x50] sm:$0xf]
    %v722 = vld [vmem:[#allocation5 + $0x54] sm:$0xf]
    %v723 = vld [vmem:[#allocation5 + $0x58] sm:$0xf]
    %v724 = vld [vmem:[#allocation5 + $0x5c] sm:$0xf]
    %v725 = vld [vmem:[#allocation5 + $0x60] sm:$0xf]
    %v726 = vld [vmem:[#allocation5 + $0x64] sm:$0xf]
    %v727 = vld [vmem:[#allocation5 + $0x68] sm:$0xf]
    %v728 = vld [vmem:[#allocation5 + $0x6c] sm:$0xf]
    %v729 = vld [vmem:[#allocation5 + $0x70] sm:$0xf]
    %v730 = vld [vmem:[#allocation5 + $0x74] sm:$0xf]
    %v731 = vld [vmem:[#allocation5 + $0x78] sm:$0xf]
    %v732 = vld [vmem:[#allocation5 + $0x7c] sm:$0xf]
    %v733 = vld [vmem:[#allocation5 + $0x80] sm:$0xf]
    %v734 = vld [vmem:[#allocation5 + $0x84] sm:$0xf]
    %v735 = vld [vmem:[#allocation5 + $0x88] sm:$0xf]
    %v736 = vld [vmem:[#allocation5 + $0x8c] sm:$0xf]
    %v737 = vld [vmem:[#allocation5 + $0x90] sm:$0xf]
    %v738 = vld [vmem:[#allocation5 + $0x94] sm:$0xf]
    %v739 = vld [vmem:[#allocation5 + $0x98] sm:$0xf]
    %v740 = vld [vmem:[#allocation5 + $0x9c] sm:$0xf]
    %v741 = vld [vmem:[#allocation5 + $0xa0] sm:$0xf]
    %v742 = vld [vmem:[#allocation5 + $0xa4] sm:$0xf]
    %v743 = vld [vmem:[#allocation5 + $0xa8] sm:$0xf]
    %v744 = vld [vmem:[#allocation5 + $0xac] sm:$0xf]
    %v745 = vld [vmem:[#allocation5 + $0xb0] sm:$0xf]
    %v746 = vld [vmem:[#allocation5 + $0xb4] sm:$0xf]
    %v747 = vld [vmem:[#allocation5 + $0xb8] sm:$0xf]
    %v748 = vld [vmem:[#allocation5 + $0xbc] sm:$0xf]
    %v749 = vld [vmem:[#allocation5 + $0xc0] sm:$0xf]
    %v750 = vld [vmem:[#allocation5 + $0xc4] sm:$0xf]
    %v751 = vld [vmem:[#allocation5 + $0xc8] sm:$0xf]
    %v752 = vld [vmem:[#allocation5 + $0xcc] sm:$0xf]
    %v753 = vld [vmem:[#allocation5 + $0xd0] sm:$0xf]
    %v754 = vld [vmem:[#allocation5 + $0xd4] sm:$0xf]
    %v755 = vld [vmem:[#allocation5 + $0xd8] sm:$0xf]
    %v756 = vld [vmem:[#allocation5 + $0xdc] sm:$0xf]
    %v757 = vld [vmem:[#allocation5 + $0xe0] sm:$0xf]
    %v758 = vld [vmem:[#allocation5 + $0xe4] sm:$0xf]
    %v759 = vld [vmem:[#allocation5 + $0xe8] sm:$0xf]
    %v760 = vld [vmem:[#allocation5 + $0xec] sm:$0xf]
    %v761 = vld [vmem:[#allocation5 + $0xf0] sm:$0xf]
    %v762 = vld [vmem:[#allocation5 + $0xf4] sm:$0xf]
    %v763 = vld [vmem:[#allocation5 + $0xf8] sm:$0xf]
    %v764 = vld [vmem:[#allocation5 + $0xfc] sm:$0xf]
    %v765 = vld [vmem:[#allocation8] sm:$0xf]
    %v766 = vld [vmem:[#allocation8 + $0x4] sm:$0xf]
    %v767 = vld [vmem:[#allocation8 + $0x8] sm:$0xf]
    %v768 = vld [vmem:[#allocation8 + $0xc] sm:$0xf]
    %v769 = vld [vmem:[#allocation8 + $0x10] sm:$0xf]
    %v770 = vld [vmem:[#allocation8 + $0x14] sm:$0xf]
    %v771 = vld [vmem:[#allocation8 + $0x18] sm:$0xf]
    %v772 = vld [vmem:[#allocation8 + $0x1c] sm:$0xf]
    %v773 = vld [vmem:[#allocation8 + $0x20] sm:$0xf]
    %v774 = vld [vmem:[#allocation8 + $0x24] sm:$0xf]
    %v775 = vld [vmem:[#allocation8 + $0x28] sm:$0xf]
    %v776 = vld [vmem:[#allocation8 + $0x2c] sm:$0xf]
    %v777 = vld [vmem:[#allocation8 + $0x30] sm:$0xf]
    %v778 = vld [vmem:[#allocation8 + $0x34] sm:$0xf]
    %v779 = vld [vmem:[#allocation8 + $0x38] sm:$0xf]
    %v780 = vld [vmem:[#allocation8 + $0x3c] sm:$0xf]
    %v845 = vunpack.c.l.b16 %v701
    %v846 = vunpack.c.l.b16 %v702
    %v847 = vunpack.c.l.b16 %v703
    %v848 = vunpack.c.l.b16 %v704
    %v849 = vunpack.c.l.b16 %v705
    %v850 = vunpack.c.l.b16 %v706
    %v851 = vunpack.c.l.b16 %v707
    %v852 = vunpack.c.l.b16 %v708
    %v853 = vunpack.c.l.b16 %v709
    %v854 = vunpack.c.l.b16 %v710
    %v855 = vunpack.c.l.b16 %v711
    %v856 = vunpack.c.l.b16 %v712
    %v857 = vunpack.c.l.b16 %v713
    %v858 = vunpack.c.l.b16 %v714
    %v859 = vunpack.c.l.b16 %v715
    %v860 = vunpack.c.l.b16 %v716
    %v861 = vunpack.c.l.b16 %v717
    %v862 = vunpack.c.l.b16 %v718
    %v863 = vunpack.c.l.b16 %v719
    %v864 = vunpack.c.l.b16 %v720
    %v865 = vunpack.c.l.b16 %v721
    %v866 = vunpack.c.l.b16 %v722
    %v867 = vunpack.c.l.b16 %v723
    %v868 = vunpack.c.l.b16 %v724
    %v869 = vunpack.c.l.b16 %v725
    %v870 = vunpack.c.l.b16 %v726
    %v871 = vunpack.c.l.b16 %v727
    %v872 = vunpack.c.l.b16 %v728
    %v873 = vunpack.c.l.b16 %v729
    %v874 = vunpack.c.l.b16 %v730
    %v875 = vunpack.c.l.b16 %v731
    %v876 = vunpack.c.l.b16 %v732
    %v877 = vunpack.c.l.b16 %v733
    %v878 = vunpack.c.l.b16 %v734
    %v879 = vunpack.c.l.b16 %v735
    %v880 = vunpack.c.l.b16 %v736
    %v881 = vunpack.c.l.b16 %v737
    %v882 = vunpack.c.l.b16 %v738
    %v883 = vunpack.c.l.b16 %v739
    %v884 = vunpack.c.l.b16 %v740
    %v885 = vunpack.c.l.b16 %v741
    %v886 = vunpack.c.l.b16 %v742
    %v887 = vunpack.c.l.b16 %v743
    %v888 = vunpack.c.l.b16 %v744
    %v889 = vunpack.c.l.b16 %v745
    %v890 = vunpack.c.l.b16 %v746
    %v891 = vunpack.c.l.b16 %v747
    %v892 = vunpack.c.l.b16 %v748
    %v893 = vunpack.c.l.b16 %v749
    %v894 = vunpack.c.l.b16 %v750
    %v895 = vunpack.c.l.b16 %v751
    %v896 = vunpack.c.l.b16 %v752
    %v897 = vunpack.c.l.b16 %v753
    %v898 = vunpack.c.l.b16 %v754
    %v899 = vunpack.c.l.b16 %v755
    %v900 = vunpack.c.l.b16 %v756
    %v901 = vunpack.c.l.b16 %v757
    %v902 = vunpack.c.l.b16 %v758
    %v903 = vunpack.c.l.b16 %v759
    %v904 = vunpack.c.l.b16 %v760
    %v905 = vunpack.c.l.b16 %v761
    %v906 = vunpack.c.l.b16 %v762
    %v907 = vunpack.c.l.b16 %v763
    %v908 = vunpack.c.l.b16 %v764
    %v909 = vpack.c.b16 %v846, %v845
    %v910 = vpack.c.b16 %v848, %v847
    %v911 = vpack.c.b16 %v850, %v849
    %v912 = vpack.c.b16 %v852, %v851
    %v913 = vpack.c.b16 %v854, %v853
    %v914 = vpack.c.b16 %v856, %v855
    %v915 = vpack.c.b16 %v858, %v857
    %v916 = vpack.c.b16 %v860, %v859
    %v917 = vpack.c.b16 %v862, %v861
    %v918 = vpack.c.b16 %v864, %v863
    %v919 = vpack.c.b16 %v866, %v865
    %v920 = vpack.c.b16 %v868, %v867
    %v921 = vpack.c.b16 %v870, %v869
    %v922 = vpack.c.b16 %v872, %v871
    %v923 = vpack.c.b16 %v874, %v873
    %v924 = vpack.c.b16 %v876, %v875
    %v925 = vpack.c.b16 %v878, %v877
    %v926 = vpack.c.b16 %v880, %v879
    %v927 = vpack.c.b16 %v882, %v881
    %v928 = vpack.c.b16 %v884, %v883
    %v929 = vpack.c.b16 %v886, %v885
    %v930 = vpack.c.b16 %v888, %v887
    %v931 = vpack.c.b16 %v890, %v889
    %v932 = vpack.c.b16 %v892, %v891
    %v933 = vpack.c.b16 %v894, %v893
    %v934 = vpack.c.b16 %v896, %v895
    %v935 = vpack.c.b16 %v898, %v897
    %v936 = vpack.c.b16 %v900, %v899
    %v937 = vpack.c.b16 %v902, %v901
    %v938 = vpack.c.b16 %v904, %v903
    %v939 = vpack.c.b16 %v906, %v905
    %v940 = vpack.c.b16 %v908, %v907
    %v989 = vunpack.c.l.b16 %v765
    %v990 = vunpack.c.l.b16 %v766
    %v991 = vunpack.c.l.b16 %v767
    %v992 = vunpack.c.l.b16 %v768
    %v993 = vunpack.c.l.b16 %v769
    %v994 = vunpack.c.l.b16 %v770
    %v995 = vunpack.c.l.b16 %v771
    %v996 = vunpack.c.l.b16 %v772
    %v997 = vunpack.c.l.b16 %v773
    %v998 = vunpack.c.l.b16 %v774
    %v999 = vunpack.c.l.b16 %v775
    %v1000 = vunpack.c.l.b16 %v776
    %v1001 = vunpack.c.l.b16 %v777
    %v1002 = vunpack.c.l.b16 %v778
    %v1003 = vunpack.c.l.b16 %v779
    %v1004 = vunpack.c.l.b16 %v780
    %v1005 = vpack.c.b16 %v990, %v989
    %v1006 = vpack.c.b16 %v992, %v991
    %v1007 = vpack.c.b16 %v994, %v993
    %v1008 = vpack.c.b16 %v996, %v995
    %v1009 = vpack.c.b16 %v998, %v997
    %v1010 = vpack.c.b16 %v1000, %v999
    %v1011 = vpack.c.b16 %v1002, %v1001
    %v1012 = vpack.c.b16 %v1004, %v1003
    %1021 = vmatprep.subr.bf16.mxu0 0
    %1022 = vmatpush1.bf16.msra.mxu0 %v1005
    %1023 = vmatprep.subr.bf16.mxu0 0
    %1024 = vmatpush1.bf16.msra.mxu0 %v1006
    %1025 = vmatprep.subr.bf16.mxu0 0
    %1026 = vmatpush1.bf16.msra.mxu0 %v1007
    %1027 = vmatprep.subr.bf16.mxu0 0
    %1028 = vmatpush1.bf16.msra.mxu0 %v1008
    %1029 = vmatprep.subr.bf16.mxu0 0
    %1030 = vmatpush1.bf16.msra.mxu0 %v1009
    %1031 = vmatprep.subr.bf16.mxu0 0
    %1032 = vmatpush1.bf16.msra.mxu0 %v1010
    %1033 = vmatprep.subr.bf16.mxu0 0
    %1034 = vmatpush1.bf16.msra.mxu0 %v1011
    %1035 = vmatprep.subr.bf16.mxu0 0
    %1036 = vmatpush1.bf16.msra.mxu0 %v1012
    %1037 = vmatprep.subr.bf16.mxu0 0
    %1038 = vmatpush1.bf16.msra.mxu0 0
    %1039 = vmatprep.subr.bf16.mxu0 0
    %1040 = vmatpush1.bf16.msra.mxu0 0
    %1041 = vmatprep.subr.bf16.mxu0 0
    %1042 = vmatpush1.bf16.msra.mxu0 0
    %1043 = vmatprep.subr.bf16.mxu0 0
    %1044 = vmatpush1.bf16.msra.mxu0 0
    %1045 = vmatprep.subr.bf16.mxu0 0
    %1046 = vmatpush1.bf16.msra.mxu0 0
    %1047 = vmatprep.subr.bf16.mxu0 0
    %1048 = vmatpush1.bf16.msra.mxu0 0
    %1049 = vmatprep.subr.bf16.mxu0 0
    %1050 = vmatpush1.bf16.msra.mxu0 0
    %1051 = vmatprep.subr.bf16.mxu0 0
    %1052 = vmatpush1.bf16.msra.mxu0 0
    %1053 = vmatprep.mubr.bf16.mxu0 0
    %1054 = vmatmul.mubr.bf16.gmra.mrb[0].mxu0 %v909
    %v1055 = vpop.f32.mrb[0].mxu0
    %v1056 = vadd.f32 0.0, %v1055
    %v1057 = vpop.f32.mrb[0].mxu0
    %v1058 = vpop.f32.mrb[0].mxu0
    %v1059 = vadd.f32 0.0, %v1058
    %v1060 = vpop.f32.mrb[0].mxu0
    %1061 = vmatprep.mubr.bf16.mxu0 0
    %1062 = vmatmul.mubr.bf16.gmra.mrb[0].mxu0 %v910
    %v1063 = vpop.f32.mrb[0].mxu0
    %v1064 = vadd.f32 0.0, %v1063
    %v1065 = vpop.f32.mrb[0].mxu0
    %v1066 = vpop.f32.mrb[0].mxu0
    %v1067 = vadd.f32 0.0, %v1066
    %v1068 = vpop.f32.mrb[0].mxu0
    %1069 = vmatprep.mubr.bf16.mxu0 0
    %1070 = vmatmul.mubr.bf16.gmra.mrb[0].mxu0 %v911
    %v1071 = vpop.f32.mrb[0].mxu0
    %v1072 = vadd.f32 0.0, %v1071
    %v1073 = vpop.f32.mrb[0].mxu0
    %v1074 = vpop.f32.mrb[0].mxu0
    %v1075 = vadd.f32 0.0, %v1074
    %v1076 = vpop.f32.mrb[0].mxu0
    %1077 = vmatprep.mubr.bf16.mxu0 0
    %1078 = vmatmul.mubr.bf16.gmra.mrb[0].mxu0 %v912
    %v1079 = vpop.f32.mrb[0].mxu0
    %v1080 = vadd.f32 0.0, %v1079
    %v1081 = vpop.f32.mrb[0].mxu0
    %v1082 = vpop.f32.mrb[0].mxu0
    %v1083 = vadd.f32 0.0, %v1082
    %v1084 = vpop.f32.mrb[0].mxu0
    %1085 = vmatprep.mubr.bf16.mxu0 0
    %1086 = vmatmul.mubr.bf16.gmra.mrb[0].mxu0 %v913
    %v1087 = vpop.f32.mrb[0].mxu0
    %v1088 = vadd.f32 0.0, %v1087
    %v1089 = vpop.f32.mrb[0].mxu0
    %v1090 = vpop.f32.mrb[0].mxu0
    %v1091 = vadd.f32 0.0, %v1090
    %v1092 = vpop.f32.mrb[0].mxu0
    %1093 = vmatprep.mubr.bf16.mxu0 0
    %1094 = vmatmul.mubr.bf16.gmra.mrb[0].mxu0 %v914
    %v1095 = vpop.f32.mrb[0].mxu0
    %v1096 = vadd.f32 0.0, %v1095
    %v1097 = vpop.f32.mrb[0].mxu0
    %v1098 = vpop.f32.mrb[0].mxu0
    %v1099 = vadd.f32 0.0, %v1098
    %v1100 = vpop.f32.mrb[0].mxu0
    %1101 = vmatprep.mubr.bf16.mxu0 0
    %1102 = vmatmul.mubr.bf16.gmra.mrb[0].mxu0 %v915
    %v1103 = vpop.f32.mrb[0].mxu0
    %v1104 = vadd.f32 0.0, %v1103
    %v1105 = vpop.f32.mrb[0].mxu0
    %v1106 = vpop.f32.mrb[0].mxu0
    %v1107 = vadd.f32 0.0, %v1106
    %v1108 = vpop.f32.mrb[0].mxu0
    %1109 = vmatprep.mubr.bf16.mxu0 0
    %1110 = vmatmul.mubr.bf16.gmra.mrb[0].mxu0 %v916
    %v1111 = vpop.f32.mrb[0].mxu0
    %v1112 = vadd.f32 0.0, %v1111
    %v1113 = vpop.f32.mrb[0].mxu0
    %v1114 = vpop.f32.mrb[0].mxu0
    %v1115 = vadd.f32 0.0, %v1114
    %v1116 = vpop.f32.mrb[0].mxu0
    %1117 = vmatprep.mubr.bf16.mxu0 0
    %1118 = vmatmul.mubr.bf16.gmra.mrb[0].mxu0 %v917
    %v1119 = vpop.f32.mrb[0].mxu0
    %v1120 = vadd.f32 0.0, %v1119
    %v1121 = vpop.f32.mrb[0].mxu0
    %v1122 = vpop.f32.mrb[0].mxu0
    %v1123 = vadd.f32 0.0, %v1122
    %v1124 = vpop.f32.mrb[0].mxu0
    %1125 = vmatprep.mubr.bf16.mxu0 0
    %1126 = vmatmul.mubr.bf16.gmra.mrb[0].mxu0 %v918
    %v1127 = vpop.f32.mrb[0].mxu0
    %v1128 = vadd.f32 0.0, %v1127
    %v1129 = vpop.f32.mrb[0].mxu0
    %v1130 = vpop.f32.mrb[0].mxu0
    %v1131 = vadd.f32 0.0, %v1130
    %v1132 = vpop.f32.mrb[0].mxu0
    %1133 = vmatprep.mubr.bf16.mxu0 0
    %1134 = vmatmul.mubr.bf16.gmra.mrb[0].mxu0 %v919
    %v1135 = vpop.f32.mrb[0].mxu0
    %v1136 = vadd.f32 0.0, %v1135
    %v1137 = vpop.f32.mrb[0].mxu0
    %v1138 = vpop.f32.mrb[0].mxu0
    %v1139 = vadd.f32 0.0, %v1138
    %v1140 = vpop.f32.mrb[0].mxu0
    %1141 = vmatprep.mubr.bf16.mxu0 0
    %1142 = vmatmul.mubr.bf16.gmra.mrb[0].mxu0 %v920
    %v1143 = vpop.f32.mrb[0].mxu0
    %v1144 = vadd.f32 0.0, %v1143
    %v1145 = vpop.f32.mrb[0].mxu0
    %v1146 = vpop.f32.mrb[0].mxu0
    %v1147 = vadd.f32 0.0, %v1146
    %v1148 = vpop.f32.mrb[0].mxu0
    %1149 = vmatprep.mubr.bf16.mxu0 0
    %1150 = vmatmul.mubr.bf16.gmra.mrb[0].mxu0 %v921
    %v1151 = vpop.f32.mrb[0].mxu0
    %v1152 = vadd.f32 0.0, %v1151
    %v1153 = vpop.f32.mrb[0].mxu0
    %v1154 = vpop.f32.mrb[0].mxu0
    %v1155 = vadd.f32 0.0, %v1154
    %v1156 = vpop.f32.mrb[0].mxu0
    %1157 = vmatprep.mubr.bf16.mxu0 0
    %1158 = vmatmul.mubr.bf16.gmra.mrb[0].mxu0 %v922
    %v1159 = vpop.f32.mrb[0].mxu0
    %v1160 = vadd.f32 0.0, %v1159
    %v1161 = vpop.f32.mrb[0].mxu0
    %v1162 = vpop.f32.mrb[0].mxu0
    %v1163 = vadd.f32 0.0, %v1162
    %v1164 = vpop.f32.mrb[0].mxu0
    %1165 = vmatprep.mubr.bf16.mxu0 0
    %1166 = vmatmul.mubr.bf16.gmra.mrb[0].mxu0 %v923
    %v1167 = vpop.f32.mrb[0].mxu0
    %v1168 = vadd.f32 0.0, %v1167
    %v1169 = vpop.f32.mrb[0].mxu0
    %v1170 = vpop.f32.mrb[0].mxu0
    %v1171 = vadd.f32 0.0, %v1170
    %v1172 = vpop.f32.mrb[0].mxu0
    %1173 = vmatprep.mubr.bf16.mxu0 0
    %1174 = vmatmul.mubr.bf16.gmra.mrb[0].mxu0 %v924
    %v1175 = vpop.f32.mrb[0].mxu0
    %v1176 = vadd.f32 0.0, %v1175
    %v1177 = vpop.f32.mrb[0].mxu0
    %v1178 = vpop.f32.mrb[0].mxu0
    %v1179 = vadd.f32 0.0, %v1178
    %v1180 = vpop.f32.mrb[0].mxu0
    %1181 = vmatprep.mubr.bf16.mxu0 0
    %1182 = vmatmul.mubr.bf16.gmra.mrb[0].mxu0 %v925
    %v1183 = vpop.f32.mrb[0].mxu0
    %v1184 = vadd.f32 0.0, %v1183
    %v1185 = vpop.f32.mrb[0].mxu0
    %v1186 = vpop.f32.mrb[0].mxu0
    %v1187 = vadd.f32 0.0, %v1186
    %v1188 = vpop.f32.mrb[0].mxu0
    %1189 = vmatprep.mubr.bf16.mxu0 0
    %1190 = vmatmul.mubr.bf16.gmra.mrb[0].mxu0 %v926
    %v1191 = vpop.f32.mrb[0].mxu0
    %v1192 = vadd.f32 0.0, %v1191
    %v1193 = vpop.f32.mrb[0].mxu0
    %v1194 = vpop.f32.mrb[0].mxu0
    %v1195 = vadd.f32 0.0, %v1194
    %v1196 = vpop.f32.mrb[0].mxu0
    %1197 = vmatprep.mubr.bf16.mxu0 0
    %1198 = vmatmul.mubr.bf16.gmra.mrb[0].mxu0 %v927
    %v1199 = vpop.f32.mrb[0].mxu0
    %v1200 = vadd.f32 0.0, %v1199
    %v1201 = vpop.f32.mrb[0].mxu0
    %v1202 = vpop.f32.mrb[0].mxu0
    %v1203 = vadd.f32 0.0, %v1202
    %v1204 = vpop.f32.mrb[0].mxu0
    %1205 = vmatprep.mubr.bf16.mxu0 0
    %1206 = vmatmul.mubr.bf16.gmra.mrb[0].mxu0 %v928
    %v1207 = vpop.f32.mrb[0].mxu0
    %v1208 = vadd.f32 0.0, %v1207
    %v1209 = vpop.f32.mrb[0].mxu0
    %v1210 = vpop.f32.mrb[0].mxu0
    %v1211 = vadd.f32 0.0, %v1210
    %v1212 = vpop.f32.mrb[0].mxu0
    %1213 = vmatprep.mubr.bf16.mxu0 0
    %1214 = vmatmul.mubr.bf16.gmra.mrb[0].mxu0 %v929
    %v1215 = vpop.f32.mrb[0].mxu0
    %v1216 = vadd.f32 0.0, %v1215
    %v1217 = vpop.f32.mrb[0].mxu0
    %v1218 = vpop.f32.mrb[0].mxu0
    %v1219 = vadd.f32 0.0, %v1218
    %v1220 = vpop.f32.mrb[0].mxu0
    %1221 = vmatprep.mubr.bf16.mxu0 0
    %1222 = vmatmul.mubr.bf16.gmra.mrb[0].mxu0 %v930
    %v1223 = vpop.f32.mrb[0].mxu0
    %v1224 = vadd.f32 0.0, %v1223
    %v1225 = vpop.f32.mrb[0].mxu0
    %v1226 = vpop.f32.mrb[0].mxu0
    %v1227 = vadd.f32 0.0, %v1226
    %v1228 = vpop.f32.mrb[0].mxu0
    %1229 = vmatprep.mubr.bf16.mxu0 0
    %1230 = vmatmul.mubr.bf16.gmra.mrb[0].mxu0 %v931
    %v1231 = vpop.f32.mrb[0].mxu0
    %v1232 = vadd.f32 0.0, %v1231
    %v1233 = vpop.f32.mrb[0].mxu0
    %v1234 = vpop.f32.mrb[0].mxu0
    %v1235 = vadd.f32 0.0, %v1234
    %v1236 = vpop.f32.mrb[0].mxu0
    %1237 = vmatprep.mubr.bf16.mxu0 0
    %1238 = vmatmul.mubr.bf16.gmra.mrb[0].mxu0 %v932
    %v1239 = vpop.f32.mrb[0].mxu0
    %v1240 = vadd.f32 0.0, %v1239
    %v1241 = vpop.f32.mrb[0].mxu0
    %v1242 = vpop.f32.mrb[0].mxu0
    %v1243 = vadd.f32 0.0, %v1242
    %v1244 = vpop.f32.mrb[0].mxu0
    %1245 = vmatprep.mubr.bf16.mxu0 0
    %1246 = vmatmul.mubr.bf16.gmra.mrb[0].mxu0 %v933
    %v1247 = vpop.f32.mrb[0].mxu0
    %v1248 = vadd.f32 0.0, %v1247
    %v1249 = vpop.f32.mrb[0].mxu0
    %v1250 = vpop.f32.mrb[0].mxu0
    %v1251 = vadd.f32 0.0, %v1250
    %v1252 = vpop.f32.mrb[0].mxu0
    %1253 = vmatprep.mubr.bf16.mxu0 0
    %1254 = vmatmul.mubr.bf16.gmra.mrb[0].mxu0 %v934
    %v1255 = vpop.f32.mrb[0].mxu0
    %v1256 = vadd.f32 0.0, %v1255
    %v1257 = vpop.f32.mrb[0].mxu0
    %v1258 = vpop.f32.mrb[0].mxu0
    %v1259 = vadd.f32 0.0, %v1258
    %v1260 = vpop.f32.mrb[0].mxu0
    %1261 = vmatprep.mubr.bf16.mxu0 0
    %1262 = vmatmul.mubr.bf16.gmra.mrb[0].mxu0 %v935
    %v1263 = vpop.f32.mrb[0].mxu0
    %v1264 = vadd.f32 0.0, %v1263
    %v1265 = vpop.f32.mrb[0].mxu0
    %v1266 = vpop.f32.mrb[0].mxu0
    %v1267 = vadd.f32 0.0, %v1266
    %v1268 = vpop.f32.mrb[0].mxu0
    %1269 = vmatprep.mubr.bf16.mxu0 0
    %1270 = vmatmul.mubr.bf16.gmra.mrb[0].mxu0 %v936
    %v1271 = vpop.f32.mrb[0].mxu0
    %v1272 = vadd.f32 0.0, %v1271
    %v1273 = vpop.f32.mrb[0].mxu0
    %v1274 = vpop.f32.mrb[0].mxu0
    %v1275 = vadd.f32 0.0, %v1274
    %v1276 = vpop.f32.mrb[0].mxu0
    %1277 = vmatprep.mubr.bf16.mxu0 0
    %1278 = vmatmul.mubr.bf16.gmra.mrb[0].mxu0 %v937
    %v1279 = vpop.f32.mrb[0].mxu0
    %v1280 = vadd.f32 0.0, %v1279
    %v1281 = vpop.f32.mrb[0].mxu0
    %v1282 = vpop.f32.mrb[0].mxu0
    %v1283 = vadd.f32 0.0, %v1282
    %v1284 = vpop.f32.mrb[0].mxu0
    %1285 = vmatprep.mubr.bf16.mxu0 0
    %1286 = vmatmul.mubr.bf16.gmra.mrb[0].mxu0 %v938
    %v1287 = vpop.f32.mrb[0].mxu0
    %v1288 = vadd.f32 0.0, %v1287
    %v1289 = vpop.f32.mrb[0].mxu0
    %v1290 = vpop.f32.mrb[0].mxu0
    %v1291 = vadd.f32 0.0, %v1290
    %v1292 = vpop.f32.mrb[0].mxu0
    %1293 = vmatprep.mubr.bf16.mxu0 0
    %1294 = vmatmul.mubr.bf16.gmra.mrb[0].mxu0 %v939
    %v1295 = vpop.f32.mrb[0].mxu0
    %v1296 = vadd.f32 0.0, %v1295
    %v1297 = vpop.f32.mrb[0].mxu0
    %v1298 = vpop.f32.mrb[0].mxu0
    %v1299 = vadd.f32 0.0, %v1298
    %v1300 = vpop.f32.mrb[0].mxu0
    %1301 = vmatprep.mubr.bf16.mxu0 0
    %1302 = vmatmul.mubr.bf16.gmra.mrb[0].mxu0 %v940
    %v1303 = vpop.f32.mrb[0].mxu0
    %v1304 = vadd.f32 0.0, %v1303
    %v1305 = vpop.f32.mrb[0].mxu0
    %v1306 = vpop.f32.mrb[0].mxu0
    %v1307 = vadd.f32 0.0, %v1306
    %v1308 = vpop.f32.mrb[0].mxu0
    %1309 = vdwg.mxu0
    %v1310 = vlaneseq
    %v1311 = vshrl.u32 %v1310, 7
    %v1312 = vsub.s32 0, %v1311
    %v1313 = vrot.slane %v88, %v1312
    %v1314 = vmul.f32 %v447, %v1313
    %v1315 = vmul.f32 %v450, %v1313
    %v1316 = vmul.f32 %v455, %v1313
    %v1317 = vmul.f32 %v458, %v1313
    %v1318 = vmul.f32 %v463, %v1313
    %v1319 = vmul.f32 %v466, %v1313
    %v1320 = vmul.f32 %v471, %v1313
    %v1321 = vmul.f32 %v474, %v1313
    %v1322 = vmul.f32 %v479, %v1313
    %v1323 = vmul.f32 %v482, %v1313
    %v1324 = vmul.f32 %v487, %v1313
    %v1325 = vmul.f32 %v490, %v1313
    %v1326 = vmul.f32 %v495, %v1313
    %v1327 = vmul.f32 %v498, %v1313
    %v1328 = vmul.f32 %v503, %v1313
    %v1329 = vmul.f32 %v506, %v1313
    %v1330 = vmul.f32 %v511, %v1313
    %v1331 = vmul.f32 %v514, %v1313
    %v1332 = vmul.f32 %v519, %v1313
    %v1333 = vmul.f32 %v522, %v1313
    %v1334 = vmul.f32 %v527, %v1313
    %v1335 = vmul.f32 %v530, %v1313
    %v1336 = vmul.f32 %v535, %v1313
    %v1337 = vmul.f32 %v538, %v1313
    %v1338 = vmul.f32 %v543, %v1313
    %v1339 = vmul.f32 %v546, %v1313
    %v1340 = vmul.f32 %v551, %v1313
    %v1341 = vmul.f32 %v554, %v1313
    %v1342 = vmul.f32 %v559, %v1313
    %v1343 = vmul.f32 %v562, %v1313
    %v1344 = vmul.f32 %v567, %v1313
    %v1345 = vmul.f32 %v570, %v1313
    %v1346 = vmul.f32 %v575, %v1313
    %v1347 = vmul.f32 %v578, %v1313
    %v1348 = vmul.f32 %v583, %v1313
    %v1349 = vmul.f32 %v586, %v1313
    %v1350 = vmul.f32 %v591, %v1313
    %v1351 = vmul.f32 %v594, %v1313
    %v1352 = vmul.f32 %v599, %v1313
    %v1353 = vmul.f32 %v602, %v1313
    %v1354 = vmul.f32 %v607, %v1313
    %v1355 = vmul.f32 %v610, %v1313
    %v1356 = vmul.f32 %v615, %v1313
    %v1357 = vmul.f32 %v618, %v1313
    %v1358 = vmul.f32 %v623, %v1313
    %v1359 = vmul.f32 %v626, %v1313
    %v1360 = vmul.f32 %v631, %v1313
    %v1361 = vmul.f32 %v634, %v1313
    %v1362 = vmul.f32 %v639, %v1313
    %v1363 = vmul.f32 %v642, %v1313
    %v1364 = vmul.f32 %v647, %v1313
    %v1365 = vmul.f32 %v650, %v1313
    %v1366 = vmul.f32 %v655, %v1313
    %v1367 = vmul.f32 %v658, %v1313
    %v1368 = vmul.f32 %v663, %v1313
    %v1369 = vmul.f32 %v666, %v1313
    %v1370 = vmul.f32 %v671, %v1313
    %v1371 = vmul.f32 %v674, %v1313
    %v1372 = vmul.f32 %v679, %v1313
    %v1373 = vmul.f32 %v682, %v1313
    %v1374 = vmul.f32 %v687, %v1313
    %v1375 = vmul.f32 %v690, %v1313
    %v1376 = vmul.f32 %v695, %v1313
    %v1377 = vmul.f32 %v698, %v1313
    %v1378 = vlaneseq
    %v1379 = vshrl.u32 %v1378, 7
    %v1380 = vsub.s32 0, %v1379
    %v1381 = vrot.slane %v89, %v1380
    %v1382 = vadd.f32 %v1314, %v1381
    %v1383 = vadd.f32 %v1315, %v1381
    %v1384 = vadd.f32 %v1316, %v1381
    %v1385 = vadd.f32 %v1317, %v1381
    %v1386 = vadd.f32 %v1318, %v1381
    %v1387 = vadd.f32 %v1319, %v1381
    %v1388 = vadd.f32 %v1320, %v1381
    %v1389 = vadd.f32 %v1321, %v1381
    %v1390 = vadd.f32 %v1322, %v1381
    %v1391 = vadd.f32 %v1323, %v1381
    %v1392 = vadd.f32 %v1324, %v1381
    %v1393 = vadd.f32 %v1325, %v1381
    %v1394 = vadd.f32 %v1326, %v1381
    %v1395 = vadd.f32 %v1327, %v1381
    %v1396 = vadd.f32 %v1328, %v1381
    %v1397 = vadd.f32 %v1329, %v1381
    %v1398 = vadd.f32 %v1330, %v1381
    %v1399 = vadd.f32 %v1331, %v1381
    %v1400 = vadd.f32 %v1332, %v1381
    %v1401 = vadd.f32 %v1333, %v1381
    %v1402 = vadd.f32 %v1334, %v1381
    %v1403 = vadd.f32 %v1335, %v1381
    %v1404 = vadd.f32 %v1336, %v1381
    %v1405 = vadd.f32 %v1337, %v1381
    %v1406 = vadd.f32 %v1338, %v1381
    %v1407 = vadd.f32 %v1339, %v1381
    %v1408 = vadd.f32 %v1340, %v1381
    %v1409 = vadd.f32 %v1341, %v1381
    %v1410 = vadd.f32 %v1342, %v1381
    %v1411 = vadd.f32 %v1343, %v1381
    %v1412 = vadd.f32 %v1344, %v1381
    %v1413 = vadd.f32 %v1345, %v1381
    %v1414 = vadd.f32 %v1346, %v1381
    %v1415 = vadd.f32 %v1347, %v1381
    %v1416 = vadd.f32 %v1348, %v1381
    %v1417 = vadd.f32 %v1349, %v1381
    %v1418 = vadd.f32 %v1350, %v1381
    %v1419 = vadd.f32 %v1351, %v1381
    %v1420 = vadd.f32 %v1352, %v1381
    %v1421 = vadd.f32 %v1353, %v1381
    %v1422 = vadd.f32 %v1354, %v1381
    %v1423 = vadd.f32 %v1355, %v1381
    %v1424 = vadd.f32 %v1356, %v1381
    %v1425 = vadd.f32 %v1357, %v1381
    %v1426 = vadd.f32 %v1358, %v1381
    %v1427 = vadd.f32 %v1359, %v1381
    %v1428 = vadd.f32 %v1360, %v1381
    %v1429 = vadd.f32 %v1361, %v1381
    %v1430 = vadd.f32 %v1362, %v1381
    %v1431 = vadd.f32 %v1363, %v1381
    %v1432 = vadd.f32 %v1364, %v1381
    %v1433 = vadd.f32 %v1365, %v1381
    %v1434 = vadd.f32 %v1366, %v1381
    %v1435 = vadd.f32 %v1367, %v1381
    %v1436 = vadd.f32 %v1368, %v1381
    %v1437 = vadd.f32 %v1369, %v1381
    %v1438 = vadd.f32 %v1370, %v1381
    %v1439 = vadd.f32 %v1371, %v1381
    %v1440 = vadd.f32 %v1372, %v1381
    %v1441 = vadd.f32 %v1373, %v1381
    %v1442 = vadd.f32 %v1374, %v1381
    %v1443 = vadd.f32 %v1375, %v1381
    %v1444 = vadd.f32 %v1376, %v1381
    %v1445 = vadd.f32 %v1377, %v1381
    %v1446 = vlaneseq
    %v1447 = vshrl.u32 %v1446, 7
    %v1448 = vsub.s32 0, %v1447
    %v1449 = vrot.slane %v90, %v1448
    %v1450 = vmul.f32 %v1056, %v1449
    %v1451 = vmul.f32 %v1059, %v1449
    %v1452 = vmul.f32 %v1064, %v1449
    %v1453 = vmul.f32 %v1067, %v1449
    %v1454 = vmul.f32 %v1072, %v1449
    %v1455 = vmul.f32 %v1075, %v1449
    %v1456 = vmul.f32 %v1080, %v1449
    %v1457 = vmul.f32 %v1083, %v1449
    %v1458 = vmul.f32 %v1088, %v1449
    %v1459 = vmul.f32 %v1091, %v1449
    %v1460 = vmul.f32 %v1096, %v1449
    %v1461 = vmul.f32 %v1099, %v1449
    %v1462 = vmul.f32 %v1104, %v1449
    %v1463 = vmul.f32 %v1107, %v1449
    %v1464 = vmul.f32 %v1112, %v1449
    %v1465 = vmul.f32 %v1115, %v1449
    %v1466 = vmul.f32 %v1120, %v1449
    %v1467 = vmul.f32 %v1123, %v1449
    %v1468 = vmul.f32 %v1128, %v1449
    %v1469 = vmul.f32 %v1131, %v1449
    %v1470 = vmul.f32 %v1136, %v1449
    %v1471 = vmul.f32 %v1139, %v1449
    %v1472 = vmul.f32 %v1144, %v1449
    %v1473 = vmul.f32 %v1147, %v1449
    %v1474 = vmul.f32 %v1152, %v1449
    %v1475 = vmul.f32 %v1155, %v1449
    %v1476 = vmul.f32 %v1160, %v1449
    %v1477 = vmul.f32 %v1163, %v1449
    %v1478 = vmul.f32 %v1168, %v1449
    %v1479 = vmul.f32 %v1171, %v1449
    %v1480 = vmul.f32 %v1176, %v1449
    %v1481 = vmul.f32 %v1179, %v1449
    %v1482 = vmul.f32 %v1184, %v1449
    %v1483 = vmul.f32 %v1187, %v1449
    %v1484 = vmul.f32 %v1192, %v1449
    %v1485 = vmul.f32 %v1195, %v1449
    %v1486 = vmul.f32 %v1200, %v1449
    %v1487 = vmul.f32 %v1203, %v1449
    %v1488 = vmul.f32 %v1208, %v1449
    %v1489 = vmul.f32 %v1211, %v1449
    %v1490 = vmul.f32 %v1216, %v1449
    %v1491 = vmul.f32 %v1219, %v1449
    %v1492 = vmul.f32 %v1224, %v1449
    %v1493 = vmul.f32 %v1227, %v1449
    %v1494 = vmul.f32 %v1232, %v1449
    %v1495 = vmul.f32 %v1235, %v1449
    %v1496 = vmul.f32 %v1240, %v1449
    %v1497 = vmul.f32 %v1243, %v1449
    %v1498 = vmul.f32 %v1248, %v1449
    %v1499 = vmul.f32 %v1251, %v1449
    %v1500 = vmul.f32 %v1256, %v1449
    %v1501 = vmul.f32 %v1259, %v1449
    %v1502 = vmul.f32 %v1264, %v1449
    %v1503 = vmul.f32 %v1267, %v1449
    %v1504 = vmul.f32 %v1272, %v1449
    %v1505 = vmul.f32 %v1275, %v1449
    %v1506 = vmul.f32 %v1280, %v1449
    %v1507 = vmul.f32 %v1283, %v1449
    %v1508 = vmul.f32 %v1288, %v1449
    %v1509 = vmul.f32 %v1291, %v1449
    %v1510 = vmul.f32 %v1296, %v1449
    %v1511 = vmul.f32 %v1299, %v1449
    %v1512 = vmul.f32 %v1304, %v1449
    %v1513 = vmul.f32 %v1307, %v1449
    %v1514 = vadd.f32 %v1382, %v1450
    %v1515 = vadd.f32 %v1383, %v1451
    %v1516 = vadd.f32 %v1384, %v1452
    %v1517 = vadd.f32 %v1385, %v1453
    %v1518 = vadd.f32 %v1386, %v1454
    %v1519 = vadd.f32 %v1387, %v1455
    %v1520 = vadd.f32 %v1388, %v1456
    %v1521 = vadd.f32 %v1389, %v1457
    %v1522 = vadd.f32 %v1390, %v1458
    %v1523 = vadd.f32 %v1391, %v1459
    %v1524 = vadd.f32 %v1392, %v1460
    %v1525 = vadd.f32 %v1393, %v1461
    %v1526 = vadd.f32 %v1394, %v1462
    %v1527 = vadd.f32 %v1395, %v1463
    %v1528 = vadd.f32 %v1396, %v1464
    %v1529 = vadd.f32 %v1397, %v1465
    %v1530 = vadd.f32 %v1398, %v1466
    %v1531 = vadd.f32 %v1399, %v1467
    %v1532 = vadd.f32 %v1400, %v1468
    %v1533 = vadd.f32 %v1401, %v1469
    %v1534 = vadd.f32 %v1402, %v1470
    %v1535 = vadd.f32 %v1403, %v1471
    %v1536 = vadd.f32 %v1404, %v1472
    %v1537 = vadd.f32 %v1405, %v1473
    %v1538 = vadd.f32 %v1406, %v1474
    %v1539 = vadd.f32 %v1407, %v1475
    %v1540 = vadd.f32 %v1408, %v1476
    %v1541 = vadd.f32 %v1409, %v1477
    %v1542 = vadd.f32 %v1410, %v1478
    %v1543 = vadd.f32 %v1411, %v1479
    %v1544 = vadd.f32 %v1412, %v1480
    %v1545 = vadd.f32 %v1413, %v1481
    %v1546 = vadd.f32 %v1414, %v1482
    %v1547 = vadd.f32 %v1415, %v1483
    %v1548 = vadd.f32 %v1416, %v1484
    %v1549 = vadd.f32 %v1417, %v1485
    %v1550 = vadd.f32 %v1418, %v1486
    %v1551 = vadd.f32 %v1419, %v1487
    %v1552 = vadd.f32 %v1420, %v1488
    %v1553 = vadd.f32 %v1421, %v1489
    %v1554 = vadd.f32 %v1422, %v1490
    %v1555 = vadd.f32 %v1423, %v1491
    %v1556 = vadd.f32 %v1424, %v1492
    %v1557 = vadd.f32 %v1425, %v1493
    %v1558 = vadd.f32 %v1426, %v1494
    %v1559 = vadd.f32 %v1427, %v1495
    %v1560 = vadd.f32 %v1428, %v1496
    %v1561 = vadd.f32 %v1429, %v1497
    %v1562 = vadd.f32 %v1430, %v1498
    %v1563 = vadd.f32 %v1431, %v1499
    %v1564 = vadd.f32 %v1432, %v1500
    %v1565 = vadd.f32 %v1433, %v1501
    %v1566 = vadd.f32 %v1434, %v1502
    %v1567 = vadd.f32 %v1435, %v1503
    %v1568 = vadd.f32 %v1436, %v1504
    %v1569 = vadd.f32 %v1437, %v1505
    %v1570 = vadd.f32 %v1438, %v1506
    %v1571 = vadd.f32 %v1439, %v1507
    %v1572 = vadd.f32 %v1440, %v1508
    %v1573 = vadd.f32 %v1441, %v1509
    %v1574 = vadd.f32 %v1442, %v1510
    %v1575 = vadd.f32 %v1443, %v1511
    %v1576 = vadd.f32 %v1444, %v1512
    %v1577 = vadd.f32 %v1445, %v1513
    %v1578 = vlaneseq
    %v1579 = vshrl.u32 %v1578, 7
    %v1580 = vsub.s32 0, %v1579
    %v1581 = vrot.slane %v91, %v1580
    %v1582 = vadd.f32 %v1514, %v1581
    %v1583 = vadd.f32 %v1515, %v1581
    %v1584 = vadd.f32 %v1516, %v1581
    %v1585 = vadd.f32 %v1517, %v1581
    %v1586 = vadd.f32 %v1518, %v1581
    %v1587 = vadd.f32 %v1519, %v1581
    %v1588 = vadd.f32 %v1520, %v1581
    %v1589 = vadd.f32 %v1521, %v1581
    %v1590 = vadd.f32 %v1522, %v1581
    %v1591 = vadd.f32 %v1523, %v1581
    %v1592 = vadd.f32 %v1524, %v1581
    %v1593 = vadd.f32 %v1525, %v1581
    %v1594 = vadd.f32 %v1526, %v1581
    %v1595 = vadd.f32 %v1527, %v1581
    %v1596 = vadd.f32 %v1528, %v1581
    %v1597 = vadd.f32 %v1529, %v1581
    %v1598 = vadd.f32 %v1530, %v1581
    %v1599 = vadd.f32 %v1531, %v1581
    %v1600 = vadd.f32 %v1532, %v1581
    %v1601 = vadd.f32 %v1533, %v1581
    %v1602 = vadd.f32 %v1534, %v1581
    %v1603 = vadd.f32 %v1535, %v1581
    %v1604 = vadd.f32 %v1536, %v1581
    %v1605 = vadd.f32 %v1537, %v1581
    %v1606 = vadd.f32 %v1538, %v1581
    %v1607 = vadd.f32 %v1539, %v1581
    %v1608 = vadd.f32 %v1540, %v1581
    %v1609 = vadd.f32 %v1541, %v1581
    %v1610 = vadd.f32 %v1542, %v1581
    %v1611 = vadd.f32 %v1543, %v1581
    %v1612 = vadd.f32 %v1544, %v1581
    %v1613 = vadd.f32 %v1545, %v1581
    %v1614 = vadd.f32 %v1546, %v1581
    %v1615 = vadd.f32 %v1547, %v1581
    %v1616 = vadd.f32 %v1548, %v1581
    %v1617 = vadd.f32 %v1549, %v1581
    %v1618 = vadd.f32 %v1550, %v1581
    %v1619 = vadd.f32 %v1551, %v1581
    %v1620 = vadd.f32 %v1552, %v1581
    %v1621 = vadd.f32 %v1553, %v1581
    %v1622 = vadd.f32 %v1554, %v1581
    %v1623 = vadd.f32 %v1555, %v1581
    %v1624 = vadd.f32 %v1556, %v1581
    %v1625 = vadd.f32 %v1557, %v1581
    %v1626 = vadd.f32 %v1558, %v1581
    %v1627 = vadd.f32 %v1559, %v1581
    %v1628 = vadd.f32 %v1560, %v1581
    %v1629 = vadd.f32 %v1561, %v1581
    %v1630 = vadd.f32 %v1562, %v1581
    %v1631 = vadd.f32 %v1563, %v1581
    %v1632 = vadd.f32 %v1564, %v1581
    %v1633 = vadd.f32 %v1565, %v1581
    %v1634 = vadd.f32 %v1566, %v1581
    %v1635 = vadd.f32 %v1567, %v1581
    %v1636 = vadd.f32 %v1568, %v1581
    %v1637 = vadd.f32 %v1569, %v1581
    %v1638 = vadd.f32 %v1570, %v1581
    %v1639 = vadd.f32 %v1571, %v1581
    %v1640 = vadd.f32 %v1572, %v1581
    %v1641 = vadd.f32 %v1573, %v1581
    %v1642 = vadd.f32 %v1574, %v1581
    %v1643 = vadd.f32 %v1575, %v1581
    %v1644 = vadd.f32 %v1576, %v1581
    %v1645 = vadd.f32 %v1577, %v1581
    %v1646 = vmax.f32 %v1582, 0.0
    %v1647 = vmax.f32 %v1583, 0.0
    %v1648 = vmax.f32 %v1584, 0.0
    %v1649 = vmax.f32 %v1585, 0.0
    %v1650 = vmax.f32 %v1586, 0.0
    %v1651 = vmax.f32 %v1587, 0.0
    %v1652 = vmax.f32 %v1588, 0.0
    %v1653 = vmax.f32 %v1589, 0.0
    %v1654 = vmax.f32 %v1590, 0.0
    %v1655 = vmax.f32 %v1591, 0.0
    %v1656 = vmax.f32 %v1592, 0.0
    %v1657 = vmax.f32 %v1593, 0.0
    %v1658 = vmax.f32 %v1594, 0.0
    %v1659 = vmax.f32 %v1595, 0.0
    %v1660 = vmax.f32 %v1596, 0.0
    %v1661 = vmax.f32 %v1597, 0.0
    %v1662 = vmax.f32 %v1598, 0.0
    %v1663 = vmax.f32 %v1599, 0.0
    %v1664 = vmax.f32 %v1600, 0.0
    %v1665 = vmax.f32 %v1601, 0.0
    %v1666 = vmax.f32 %v1602, 0.0
    %v1667 = vmax.f32 %v1603, 0.0
    %v1668 = vmax.f32 %v1604, 0.0
    %v1669 = vmax.f32 %v1605, 0.0
    %v1670 = vmax.f32 %v1606, 0.0
    %v1671 = vmax.f32 %v1607, 0.0
    %v1672 = vmax.f32 %v1608, 0.0
    %v1673 = vmax.f32 %v1609, 0.0
    %v1674 = vmax.f32 %v1610, 0.0
    %v1675 = vmax.f32 %v1611, 0.0
    %v1676 = vmax.f32 %v1612, 0.0
    %v1677 = vmax.f32 %v1613, 0.0
    %v1678 = vmax.f32 %v1614, 0.0
    %v1679 = vmax.f32 %v1615, 0.0
    %v1680 = vmax.f32 %v1616, 0.0
    %v1681 = vmax.f32 %v1617, 0.0
    %v1682 = vmax.f32 %v1618, 0.0
    %v1683 = vmax.f32 %v1619, 0.0
    %v1684 = vmax.f32 %v1620, 0.0
    %v1685 = vmax.f32 %v1621, 0.0
    %v1686 = vmax.f32 %v1622, 0.0
    %v1687 = vmax.f32 %v1623, 0.0
    %v1688 = vmax.f32 %v1624, 0.0
    %v1689 = vmax.f32 %v1625, 0.0
    %v1690 = vmax.f32 %v1626, 0.0
    %v1691 = vmax.f32 %v1627, 0.0
    %v1692 = vmax.f32 %v1628, 0.0
    %v1693 = vmax.f32 %v1629, 0.0
    %v1694 = vmax.f32 %v1630, 0.0
    %v1695 = vmax.f32 %v1631, 0.0
    %v1696 = vmax.f32 %v1632, 0.0
    %v1697 = vmax.f32 %v1633, 0.0
    %v1698 = vmax.f32 %v1634, 0.0
    %v1699 = vmax.f32 %v1635, 0.0
    %v1700 = vmax.f32 %v1636, 0.0
    %v1701 = vmax.f32 %v1637, 0.0
    %v1702 = vmax.f32 %v1638, 0.0
    %v1703 = vmax.f32 %v1639, 0.0
    %v1704 = vmax.f32 %v1640, 0.0
    %v1705 = vmax.f32 %v1641, 0.0
    %v1706 = vmax.f32 %v1642, 0.0
    %v1707 = vmax.f32 %v1643, 0.0
    %v1708 = vmax.f32 %v1644, 0.0
    %v1709 = vmax.f32 %v1645, 0.0
    %v1710 = vpack.c.bf16 %v1647, %v1646
    %v1711 = vpack.c.bf16 %v1649, %v1648
    %v1712 = vpack.c.bf16 %v1651, %v1650
    %v1713 = vpack.c.bf16 %v1653, %v1652
    %v1714 = vpack.c.bf16 %v1655, %v1654
    %v1715 = vpack.c.bf16 %v1657, %v1656
    %v1716 = vpack.c.bf16 %v1659, %v1658
    %v1717 = vpack.c.bf16 %v1661, %v1660
    %v1718 = vpack.c.bf16 %v1663, %v1662
    %v1719 = vpack.c.bf16 %v1665, %v1664
    %v1720 = vpack.c.bf16 %v1667, %v1666
    %v1721 = vpack.c.bf16 %v1669, %v1668
    %v1722 = vpack.c.bf16 %v1671, %v1670
    %v1723 = vpack.c.bf16 %v1673, %v1672
    %v1724 = vpack.c.bf16 %v1675, %v1674
    %v1725 = vpack.c.bf16 %v1677, %v1676
    %v1726 = vpack.c.bf16 %v1679, %v1678
    %v1727 = vpack.c.bf16 %v1681, %v1680
    %v1728 = vpack.c.bf16 %v1683, %v1682
    %v1729 = vpack.c.bf16 %v1685, %v1684
    %v1730 = vpack.c.bf16 %v1687, %v1686
    %v1731 = vpack.c.bf16 %v1689, %v1688
    %v1732 = vpack.c.bf16 %v1691, %v1690
    %v1733 = vpack.c.bf16 %v1693, %v1692
    %v1734 = vpack.c.bf16 %v1695, %v1694
    %v1735 = vpack.c.bf16 %v1697, %v1696
    %v1736 = vpack.c.bf16 %v1699, %v1698
    %v1737 = vpack.c.bf16 %v1701, %v1700
    %v1738 = vpack.c.bf16 %v1703, %v1702
    %v1739 = vpack.c.bf16 %v1705, %v1704
    %v1740 = vpack.c.bf16 %v1707, %v1706
    %v1741 = vpack.c.bf16 %v1709, %v1708
    %v1774 = vunpack.c.l.b16 %v1710
    %v1775 = vunpack.c.h.b16 %v1710
    %v1776 = vunpack.c.l.b16 %v1711
    %v1777 = vunpack.c.h.b16 %v1711
    %v1778 = vunpack.c.l.b16 %v1712
    %v1779 = vunpack.c.h.b16 %v1712
    %v1780 = vunpack.c.l.b16 %v1713
    %v1781 = vunpack.c.h.b16 %v1713
    %v1782 = vunpack.c.l.b16 %v1714
    %v1783 = vunpack.c.h.b16 %v1714
    %v1784 = vunpack.c.l.b16 %v1715
    %v1785 = vunpack.c.h.b16 %v1715
    %v1786 = vunpack.c.l.b16 %v1716
    %v1787 = vunpack.c.h.b16 %v1716
    %v1788 = vunpack.c.l.b16 %v1717
    %v1789 = vunpack.c.h.b16 %v1717
    %v1790 = vunpack.c.l.b16 %v1718
    %v1791 = vunpack.c.h.b16 %v1718
    %v1792 = vunpack.c.l.b16 %v1719
    %v1793 = vunpack.c.h.b16 %v1719
    %v1794 = vunpack.c.l.b16 %v1720
    %v1795 = vunpack.c.h.b16 %v1720
    %v1796 = vunpack.c.l.b16 %v1721
    %v1797 = vunpack.c.h.b16 %v1721
    %v1798 = vunpack.c.l.b16 %v1722
    %v1799 = vunpack.c.h.b16 %v1722
    %v1800 = vunpack.c.l.b16 %v1723
    %v1801 = vunpack.c.h.b16 %v1723
    %v1802 = vunpack.c.l.b16 %v1724
    %v1803 = vunpack.c.h.b16 %v1724
    %v1804 = vunpack.c.l.b16 %v1725
    %v1805 = vunpack.c.h.b16 %v1725
    %v1806 = vunpack.c.l.b16 %v1726
    %v1807 = vunpack.c.h.b16 %v1726
    %v1808 = vunpack.c.l.b16 %v1727
    %v1809 = vunpack.c.h.b16 %v1727
    %v1810 = vunpack.c.l.b16 %v1728
    %v1811 = vunpack.c.h.b16 %v1728
    %v1812 = vunpack.c.l.b16 %v1729
    %v1813 = vunpack.c.h.b16 %v1729
    %v1814 = vunpack.c.l.b16 %v1730
    %v1815 = vunpack.c.h.b16 %v1730
    %v1816 = vunpack.c.l.b16 %v1731
    %v1817 = vunpack.c.h.b16 %v1731
    %v1818 = vunpack.c.l.b16 %v1732
    %v1819 = vunpack.c.h.b16 %v1732
    %v1820 = vunpack.c.l.b16 %v1733
    %v1821 = vunpack.c.h.b16 %v1733
    %v1822 = vunpack.c.l.b16 %v1734
    %v1823 = vunpack.c.h.b16 %v1734
    %v1824 = vunpack.c.l.b16 %v1735
    %v1825 = vunpack.c.h.b16 %v1735
    %v1826 = vunpack.c.l.b16 %v1736
    %v1827 = vunpack.c.h.b16 %v1736
    %v1828 = vunpack.c.l.b16 %v1737
    %v1829 = vunpack.c.h.b16 %v1737
    %v1830 = vunpack.c.l.b16 %v1738
    %v1831 = vunpack.c.h.b16 %v1738
    %v1832 = vunpack.c.l.b16 %v1739
    %v1833 = vunpack.c.h.b16 %v1739
    %v1834 = vunpack.c.l.b16 %v1740
    %v1835 = vunpack.c.h.b16 %v1740
    %v1836 = vunpack.c.l.b16 %v1741
    %v1837 = vunpack.c.h.b16 %v1741
    %v1838 = vpack.c.b16 %v1774, %v1774
    %v1839 = vpack.c.b16 %v1775, %v1775
    %v1840 = vpack.c.b16 %v1776, %v1776
    %v1841 = vpack.c.b16 %v1777, %v1777
    %v1842 = vpack.c.b16 %v1778, %v1778
    %v1843 = vpack.c.b16 %v1779, %v1779
    %v1844 = vpack.c.b16 %v1780, %v1780
    %v1845 = vpack.c.b16 %v1781, %v1781
    %v1846 = vpack.c.b16 %v1782, %v1782
    %v1847 = vpack.c.b16 %v1783, %v1783
    %v1848 = vpack.c.b16 %v1784, %v1784
    %v1849 = vpack.c.b16 %v1785, %v1785
    %v1850 = vpack.c.b16 %v1786, %v1786
    %v1851 = vpack.c.b16 %v1787, %v1787
    %v1852 = vpack.c.b16 %v1788, %v1788
    %v1853 = vpack.c.b16 %v1789, %v1789
    %v1854 = vpack.c.b16 %v1790, %v1790
    %v1855 = vpack.c.b16 %v1791, %v1791
    %v1856 = vpack.c.b16 %v1792, %v1792
    %v1857 = vpack.c.b16 %v1793, %v1793
    %v1858 = vpack.c.b16 %v1794, %v1794
    %v1859 = vpack.c.b16 %v1795, %v1795
    %v1860 = vpack.c.b16 %v1796, %v1796
    %v1861 = vpack.c.b16 %v1797, %v1797
    %v1862 = vpack.c.b16 %v1798, %v1798
    %v1863 = vpack.c.b16 %v1799, %v1799
    %v1864 = vpack.c.b16 %v1800, %v1800
    %v1865 = vpack.c.b16 %v1801, %v1801
    %v1866 = vpack.c.b16 %v1802, %v1802
    %v1867 = vpack.c.b16 %v1803, %v1803
    %v1868 = vpack.c.b16 %v1804, %v1804
    %v1869 = vpack.c.b16 %v1805, %v1805
    %v1870 = vpack.c.b16 %v1806, %v1806
    %v1871 = vpack.c.b16 %v1807, %v1807
    %v1872 = vpack.c.b16 %v1808, %v1808
    %v1873 = vpack.c.b16 %v1809, %v1809
    %v1874 = vpack.c.b16 %v1810, %v1810
    %v1875 = vpack.c.b16 %v1811, %v1811
    %v1876 = vpack.c.b16 %v1812, %v1812
    %v1877 = vpack.c.b16 %v1813, %v1813
    %v1878 = vpack.c.b16 %v1814, %v1814
    %v1879 = vpack.c.b16 %v1815, %v1815
    %v1880 = vpack.c.b16 %v1816, %v1816
    %v1881 = vpack.c.b16 %v1817, %v1817
    %v1882 = vpack.c.b16 %v1818, %v1818
    %v1883 = vpack.c.b16 %v1819, %v1819
    %v1884 = vpack.c.b16 %v1820, %v1820
    %v1885 = vpack.c.b16 %v1821, %v1821
    %v1886 = vpack.c.b16 %v1822, %v1822
    %v1887 = vpack.c.b16 %v1823, %v1823
    %v1888 = vpack.c.b16 %v1824, %v1824
    %v1889 = vpack.c.b16 %v1825, %v1825
    %v1890 = vpack.c.b16 %v1826, %v1826
    %v1891 = vpack.c.b16 %v1827, %v1827
    %v1892 = vpack.c.b16 %v1828, %v1828
    %v1893 = vpack.c.b16 %v1829, %v1829
    %v1894 = vpack.c.b16 %v1830, %v1830
    %v1895 = vpack.c.b16 %v1831, %v1831
    %v1896 = vpack.c.b16 %v1832, %v1832
    %v1897 = vpack.c.b16 %v1833, %v1833
    %v1898 = vpack.c.b16 %v1834, %v1834
    %v1899 = vpack.c.b16 %v1835, %v1835
    %v1900 = vpack.c.b16 %v1836, %v1836
    %v1901 = vpack.c.b16 %v1837, %v1837
    %1966 = vst [vmem:[#allocation11] sm:$0xf] %v1838
    %1967 = vst [vmem:[#allocation11 + $0x4] sm:$0xf] %v1839
    %1968 = vst [vmem:[#allocation11 + $0x8] sm:$0xf] %v1840
    %1969 = vst [vmem:[#allocation11 + $0xc] sm:$0xf] %v1841
    %1970 = vst [vmem:[#allocation11 + $0x10] sm:$0xf] %v1842
    %1971 = vst [vmem:[#allocation11 + $0x14] sm:$0xf] %v1843
    %1972 = vst [vmem:[#allocation11 + $0x18] sm:$0xf] %v1844
    %1973 = vst [vmem:[#allocation11 + $0x1c] sm:$0xf] %v1845
    %1974 = vst [vmem:[#allocation11 + $0x20] sm:$0xf] %v1846
    %1975 = vst [vmem:[#allocation11 + $0x24] sm:$0xf] %v1847
    %1976 = vst [vmem:[#allocation11 + $0x28] sm:$0xf] %v1848
    %1977 = vst [vmem:[#allocation11 + $0x2c] sm:$0xf] %v1849
    %1978 = vst [vmem:[#allocation11 + $0x30] sm:$0xf] %v1850
    %1979 = vst [vmem:[#allocation11 + $0x34] sm:$0xf] %v1851
    %1980 = vst [vmem:[#allocation11 + $0x38] sm:$0xf] %v1852
    %1981 = vst [vmem:[#allocation11 + $0x3c] sm:$0xf] %v1853
    %1982 = vst [vmem:[#allocation11 + $0x40] sm:$0xf] %v1854
    %1983 = vst [vmem:[#allocation11 + $0x44] sm:$0xf] %v1855
    %1984 = vst [vmem:[#allocation11 + $0x48] sm:$0xf] %v1856
    %1985 = vst [vmem:[#allocation11 + $0x4c] sm:$0xf] %v1857
    %1986 = vst [vmem:[#allocation11 + $0x50] sm:$0xf] %v1858
    %1987 = vst [vmem:[#allocation11 + $0x54] sm:$0xf] %v1859
    %1988 = vst [vmem:[#allocation11 + $0x58] sm:$0xf] %v1860
    %1989 = vst [vmem:[#allocation11 + $0x5c] sm:$0xf] %v1861
    %1990 = vst [vmem:[#allocation11 + $0x60] sm:$0xf] %v1862
    %1991 = vst [vmem:[#allocation11 + $0x64] sm:$0xf] %v1863
    %1992 = vst [vmem:[#allocation11 + $0x68] sm:$0xf] %v1864
    %1993 = vst [vmem:[#allocation11 + $0x6c] sm:$0xf] %v1865
    %1994 = vst [vmem:[#allocation11 + $0x70] sm:$0xf] %v1866
    %1995 = vst [vmem:[#allocation11 + $0x74] sm:$0xf] %v1867
    %1996 = vst [vmem:[#allocation11 + $0x78] sm:$0xf] %v1868
    %1997 = vst [vmem:[#allocation11 + $0x7c] sm:$0xf] %v1869
    %1998 = vst [vmem:[#allocation11 + $0x80] sm:$0xf] %v1870
    %1999 = vst [vmem:[#allocation11 + $0x84] sm:$0xf] %v1871
    %2000 = vst [vmem:[#allocation11 + $0x88] sm:$0xf] %v1872
    %2001 = vst [vmem:[#allocation11 + $0x8c] sm:$0xf] %v1873
    %2002 = vst [vmem:[#allocation11 + $0x90] sm:$0xf] %v1874
    %2003 = vst [vmem:[#allocation11 + $0x94] sm:$0xf] %v1875
    %2004 = vst [vmem:[#allocation11 + $0x98] sm:$0xf] %v1876
    %2005 = vst [vmem:[#allocation11 + $0x9c] sm:$0xf] %v1877
    %2006 = vst [vmem:[#allocation11 + $0xa0] sm:$0xf] %v1878
    %2007 = vst [vmem:[#allocation11 + $0xa4] sm:$0xf] %v1879
    %2008 = vst [vmem:[#allocation11 + $0xa8] sm:$0xf] %v1880
    %2009 = vst [vmem:[#allocation11 + $0xac] sm:$0xf] %v1881
    %2010 = vst [vmem:[#allocation11 + $0xb0] sm:$0xf] %v1882
    %2011 = vst [vmem:[#allocation11 + $0xb4] sm:$0xf] %v1883
    %2012 = vst [vmem:[#allocation11 + $0xb8] sm:$0xf] %v1884
    %2013 = vst [vmem:[#allocation11 + $0xbc] sm:$0xf] %v1885
    %2014 = vst [vmem:[#allocation11 + $0xc0] sm:$0xf] %v1886
    %2015 = vst [vmem:[#allocation11 + $0xc4] sm:$0xf] %v1887
    %2016 = vst [vmem:[#allocation11 + $0xc8] sm:$0xf] %v1888
    %2017 = vst [vmem:[#allocation11 + $0xcc] sm:$0xf] %v1889
    %2018 = vst [vmem:[#allocation11 + $0xd0] sm:$0xf] %v1890
    %2019 = vst [vmem:[#allocation11 + $0xd4] sm:$0xf] %v1891
    %2020 = vst [vmem:[#allocation11 + $0xd8] sm:$0xf] %v1892
    %2021 = vst [vmem:[#allocation11 + $0xdc] sm:$0xf] %v1893
    %2022 = vst [vmem:[#allocation11 + $0xe0] sm:$0xf] %v1894
    %2023 = vst [vmem:[#allocation11 + $0xe4] sm:$0xf] %v1895
    %2024 = vst [vmem:[#allocation11 + $0xe8] sm:$0xf] %v1896
    %2025 = vst [vmem:[#allocation11 + $0xec] sm:$0xf] %v1897
    %2026 = vst [vmem:[#allocation11 + $0xf0] sm:$0xf] %v1898
    %2027 = vst [vmem:[#allocation11 + $0xf4] sm:$0xf] %v1899
    %2028 = vst [vmem:[#allocation11 + $0xf8] sm:$0xf] %v1900
    %2029 = vst [vmem:[#allocation11 + $0xfc] sm:$0xf] %v1901
    // Predicated region
    $region42: #{bottleneck_block_forward.5} parent=1 // pred_check
      _
    $region43: #{bottleneck_block_forward.5} parent=1 // pred_check_branch
      %2031 = sbr.rel (0) target = $region45
    $region44: #{bottleneck_block_forward.5} parent=1 // pred_region
      %s2033 = ssub.s32 4096, 4096
      %2034 = vsyncadd [#allocation4], %s2033
      %s2035 = sshll.u32 [#allocation11], 4
      %s2036 = int_to_ptr.vmem [resolvable:$true] %s2035
      %2041 = dma.vmem_to_hbm [thread:$0]  %s2036, 4096, %s5, [#allocation4], 64, 64, 4
    $region45: #{bottleneck_block_forward.5} parent=1 // pred_fallthru
      _
    // Predicated region
    $region46: #{bottleneck_block_forward.5} parent=1 // pred_check
      _
    $region47: #{bottleneck_block_forward.5} parent=1 // pred_check_branch
      %2043 = sbr.rel (0) target = $region49
    $region48: #{bottleneck_block_forward.5} parent=1 // pred_region
      %2044 = dma.done [#allocation4], 4096
    $region49: #{bottleneck_block_forward.5} parent=1 // pred_fallthru
      _
    %2045 = vsyncpa [#allocation3], 1
    %2046 = vsyncpa [#allocation6], 1
    %2047 = vsyncpa [#allocation9], 1
    %2048 = vsyncpa [#allocation4], 1

</llo_original>
